<compile_context>
chip_gen: v7x
topology: tpu7x:2x2x1
jax: 0.10.0
libtpu: 0.0.40
codegen_flags: <defaults>
</compile_context>

<pallas_src>
import numpy as np
import jax
import jax.numpy as jnp
from jax import lax
from jax.experimental import pallas as pl
from jax.experimental.pallas import tpu as pltpu

# ---------------- problem sizes (small, deterministic) ----------------
N_WAY   = 4          # n  : classes per episode
K_SHOT  = 3          # k  : support samples per class (forward arg k)
Q_QUERY = 6          # q  : query samples per class   (forward arg q)
TOPK    = 5          # self.k : mutual top-k over query-query similarity
BETA    = 0.5        # self.beta
TAO     = 10.0       # self.tao (nn.Parameter init value)

C_IN, H, W = 3, 16, 16
KH = KW    = 3
C_OUT      = 64                          # encoder feature dim D
N_IMG      = N_WAY * (K_SHOT + Q_QUERY)  # 36
NQ         = N_WAY * Q_QUERY             # 24
NK         = N_WAY * K_SHOT              # 12
D          = C_OUT
NEG        = -1e30

KK       = C_IN * KH * KW                # 27   im2col contraction depth
NPIX     = H * W                         # 256  conv output pixels per image (pad=1)
NPIX_ALL = N_IMG * NPIX                  # 9216


# ======================================================================
# Single fused kernel: conv3x3 (one im2col matmul) + bias + ReLU +
# global avg pool + power-norm + prototypes + masked-softmax proto/query
# adaptation + mutual top-k + final cosine scores scaled by tao.
# ======================================================================
def _fused_kernel(tao_ref, cols_ref, w_ref, b_ref, colimg_ref,
                  sel_s_ref, sel_q_ref, out_ref):
    # ---------------- encoder ----------------
    # conv3x3(pad=1) + bias + ReLU as ONE im2col matmul: [64,27] @ [27, 9216]
    act = jnp.dot(w_ref[...], cols_ref[...],
                  preferred_element_type=jnp.float32)             # [C_OUT, NPIX_ALL]
    act = jnp.maximum(act + b_ref[...], 0.0)                      # bias + ReLU (one broadcast)

    # global average pool of each image's 256 pixels: one matmul against a
    # block-diagonal [N_IMG, NPIX_ALL] pooling matrix built in VMEM (iota + eq,
    # no HBM pool matrix, one dense result instead of per-image row stores).
    img_id = lax.broadcasted_iota(jnp.int32, (N_IMG, NPIX_ALL), 0)
    pool = jnp.where(img_id == colimg_ref[...], 1.0 / NPIX, 0.0)  # [N_IMG, NPIX_ALL]
    feats = lax.dot_general(pool, act, (((1,), (1,)), ((), ())),
                            preferred_element_type=jnp.float32)   # [N_IMG, C_OUT]

    # ---------------- episode head ----------------
    # power_norm_transform: epsilon == beta (reproducing the original call).
    eps = BETA
    if BETA == 0.5:
        p = jnp.sqrt(feats + eps)          # (a + eps) ** 0.5, beta is static
    elif BETA != 0.0:
        p = jnp.exp(BETA * jnp.log(feats + eps))
    else:
        p = jnp.log(feats + eps)
    feats_p = p * lax.rsqrt(jnp.sum(p * p, axis=1, keepdims=True))   # unit rows

    # reshape(n, k+q, -1) + split  ==  row selection (class-major sup / qry)
    sup_p = jnp.dot(sel_s_ref[...], feats_p, preferred_element_type=jnp.float32)  # [NK, D]
    qry_p = jnp.dot(sel_q_ref[...], feats_p, preferred_element_type=jnp.float32)  # [NQ, D]

    def l2n(a):
        return a * lax.rsqrt(jnp.sum(a * a, axis=1, keepdims=True))

    def cos_ab(a, b):                      # a[m,D], b[r,D] -> a @ b.T
        return lax.dot_general(a, b, (((1,), (1,)), ((), ())),
                               preferred_element_type=jnp.float32)

    # proto = per-class mean of its support rows (block-averaging matmul)
    row_c = lax.broadcasted_iota(jnp.int32, (N_WAY, NK), 0)
    col_c = lax.broadcasted_iota(jnp.int32, (N_WAY, NK), 1)
    own = (col_c >= row_c * K_SHOT) & (col_c < (row_c + 1) * K_SHOT)   # [N, NK]
    avg = jnp.where(own, 1.0 / K_SHOT, 0.0)
    proto = jnp.dot(avg, sup_p, preferred_element_type=jnp.float32)    # [N, D]

    pn = l2n(proto)
    qn = qry_p                            # pnorm output already has unit rows
    sn = sup_p

    # pre_sim, class-major orientation: [N, NQ]
    pre_sim = cos_ab(pn, qn)
    # first-argmax over classes per query (matches torch.argmax tie-break)
    colmax = jnp.max(pre_sim, axis=0, keepdims=True)
    rci = lax.broadcasted_iota(jnp.int32, (N_WAY, NQ), 0).astype(jnp.float32)
    cand = jnp.where(pre_sim == colmax, rci, float(N_WAY))
    argc = jnp.min(cand, axis=0, keepdims=True)
    assigned = (rci == argc)                                            # [N, NQ]

    # adapted prototypes: softmax over {assigned queries} U {own support}
    left = jnp.where(assigned, pre_sim, NEG)          # [N, NQ]
    cross = cos_ab(pn, sn)                            # [N, NK]
    right = jnp.where(own, cross, NEG)                # [N, NK]
    mmax = jnp.maximum(jnp.max(left, axis=1, keepdims=True),
                       jnp.max(right, axis=1, keepdims=True))
    el = jnp.exp(left - mmax)
    er = jnp.exp(right - mmax)
    den = jnp.sum(el, axis=1, keepdims=True) + jnp.sum(er, axis=1, keepdims=True)
    adapted_proto = (jnp.dot(el / den, qry_p, preferred_element_type=jnp.float32) +
                     jnp.dot(er / den, sup_p, preferred_element_type=jnp.float32))

    # adapted queries: mutual top-k neighbourhood softmax over query_sim.
    # S is symmetric, so the column k-th maxima equal the row k-th maxima; only
    # the row elimination loop is run, and the column thresholds are recovered
    # via a masked axis-0 reduction (a cheap "transpose" of the [NQ,1] vector).
    # TODO(synk): exact-tie behaviour of torch.topk is not reproduced when several
    # similarities are exactly equal to the running k-th maximum.
    S = cos_ab(qn, qn)                                # [NQ, NQ], symmetric
    cur = S
    thr = jnp.max(cur, axis=1, keepdims=True)
    for _ in range(1, TOPK):                          # k-th largest per row
        cur = jnp.where(cur == thr, NEG, cur)
        thr = jnp.max(cur, axis=1, keepdims=True)
    qi = lax.broadcasted_iota(jnp.int32, (NQ, NQ), 0)
    qj = lax.broadcasted_iota(jnp.int32, (NQ, NQ), 1)
    thr_c = jnp.max(jnp.where(qi == qj, thr, NEG), axis=0, keepdims=True)  # == thr.T
    mutual = (S >= thr) & (S >= thr_c)                # == (mask + mask.T == 2)
    lq = jnp.where(mutual, S, NEG)
    mq = jnp.max(lq, axis=1, keepdims=True)
    eq = jnp.exp(lq - mq)
    wq = eq / jnp.sum(eq, axis=1, keepdims=True)
    adapted_query = jnp.dot(wq, qry_p, preferred_element_type=jnp.float32)   # [NQ, D]

    sim = cos_ab(l2n(adapted_query), l2n(adapted_proto))                     # [NQ, N]
    out_ref[...] = tao_ref[0] * sim


def pt_paper_forward(x, conv_w, conv_b, tao):
    # ---- wrapper-side im2col: 9 static slices of the padded ~110 KB input ----
    # cols[c*9 + dy*3 + dx, n*256 + h*16 + w] = xpad[n, c, h+dy, w+dx]
    xp = jnp.pad(x, ((0, 0), (0, 0), (1, 1), (1, 1)))                  # [N, C, H+2, W+2]
    patches = jnp.stack([xp[:, :, dy:dy + H, dx:dx + W]
                         for dy in range(KH) for dx in range(KW)],
                        axis=0)                                        # [9, N, C, H, W]
    cols = patches.transpose(2, 0, 1, 3, 4).reshape(KK, NPIX_ALL)      # [27, 9216]
    cols = cols.astype(jnp.float32)                                    # f32 MXU operands
    w_flat = conv_w.reshape(C_OUT, KK).astype(jnp.float32)             # [64, 27]
    b_r = conv_b.reshape(C_OUT, 1).astype(jnp.float32)

    # per-column image id (for the in-kernel block-diagonal pooling matrix)
    col_img = np.repeat(np.arange(N_IMG, dtype=np.int32), NPIX)[None, :]   # [1, 9216]

    # constant 0/1 row-selection matrices (class-major support / query rows)
    sel_s = np.zeros((NK, N_IMG), np.float32)
    sel_q = np.zeros((NQ, N_IMG), np.float32)
    for c in range(N_WAY):
        for j in range(K_SHOT):
            sel_s[c * K_SHOT + j, c * (K_SHOT + Q_QUERY) + j] = 1.0
        for j in range(Q_QUERY):
            sel_q[c * Q_QUERY + j, c * (K_SHOT + Q_QUERY) + K_SHOT + j] = 1.0

    tao_arr = jnp.asarray(tao, jnp.float32).reshape(1)
    vmem = pltpu.MemorySpace.VMEM
    return pl.pallas_call(
        _fused_kernel,
        out_shape=jax.ShapeDtypeStruct((NQ, N_WAY), jnp.float32),
        in_specs=[pl.BlockSpec(memory_space=pltpu.MemorySpace.SMEM),   # tao
                  pl.BlockSpec(memory_space=vmem),                     # im2col slab
                  pl.BlockSpec(memory_space=vmem),                     # conv weights [64,27]
                  pl.BlockSpec(memory_space=vmem),                     # conv bias   [64,1]
                  pl.BlockSpec(memory_space=vmem),                     # column image ids
                  pl.BlockSpec(memory_space=vmem),                     # support selector
                  pl.BlockSpec(memory_space=vmem)],                    # query selector
        out_specs=pl.BlockSpec(memory_space=vmem),
    )(tao_arr, cols, w_flat, b_r, jnp.asarray(col_img),
      jnp.asarray(sel_s), jnp.asarray(sel_q))


if __name__ == "__main__":
    key = jax.random.PRNGKey(0)
    kx, kw = jax.random.split(key, 2)
    # episode images: index = class * (k + q) + sample, NCHW like PyTorch
    x = jax.random.normal(kx, (N_IMG, C_IN, H, W), jnp.float32)
    fan_in = C_IN * KH * KW
    conv_w = jax.random.normal(kw, (C_OUT, C_IN, KH, KW), jnp.float32) / jnp.sqrt(fan_in)
    conv_b = jnp.zeros((C_OUT,), jnp.float32)

    out = jax.jit(pt_paper_forward)(x, conv_w, conv_b, TAO)
    out = jax.block_until_ready(out)
    assert out.shape == (NQ, N_WAY), out.shape
    assert bool(jnp.all(jnp.isfinite(out)))
    print("KERNEL_OK")
</pallas_src>

<mosaic_0001>
module attributes {stable_mosaic.version = 11 : i64} {
  func.func @_fused_kernel(%arg0: memref<1xf32, #tpu.memory_space<smem>>, %arg1: memref<27x9216xf32, #tpu.memory_space<vmem>>, %arg2: memref<64x27xf32, #tpu.memory_space<vmem>>, %arg3: memref<64x1xf32, #tpu.memory_space<vmem>>, %arg4: memref<1x9216xi32, #tpu.memory_space<vmem>>, %arg5: memref<12x36xf32, #tpu.memory_space<vmem>>, %arg6: memref<24x36xf32, #tpu.memory_space<vmem>>, %arg7: memref<24x4xf32, #tpu.memory_space<vmem>>) attributes {dimension_semantics = [], scalar_prefetch = 0 : i64, scratch_operands = 0 : i64, tpu.core_type = #tpu.core_type<tc>} {
    %c0 = arith.constant 0 : index
    %c0_0 = arith.constant 0 : index
    %0 = vector.load %arg2[%c0, %c0_0] : memref<64x27xf32, #tpu.memory_space<vmem>>, vector<64x27xf32>
    %c0_1 = arith.constant 0 : index
    %c0_2 = arith.constant 0 : index
    %1 = vector.load %arg1[%c0_1, %c0_2] : memref<27x9216xf32, #tpu.memory_space<vmem>>, vector<27x9216xf32>
    %cst = arith.constant dense<0.000000e+00> : vector<64x9216xf32>
    %2 = tpu.matmul %0, %1, %cst {dimension_numbers = #tpu.dot_dimension_numbers<[1], [0], [0], [1], [0, 0, 1, 1], [], []>} : vector<64x27xf32>, vector<27x9216xf32>, vector<64x9216xf32> -> vector<64x9216xf32>
    %c0_3 = arith.constant 0 : index
    %c0_4 = arith.constant 0 : index
    %3 = vector.load %arg3[%c0_3, %c0_4] : memref<64x1xf32, #tpu.memory_space<vmem>>, vector<64x1xf32>
    %4 = vector.broadcast %3 : vector<64x1xf32> to vector<64x9216xf32>
    %5 = arith.addf %2, %4 : vector<64x9216xf32>
    %cst_5 = arith.constant 0.000000e+00 : f32
    %6 = vector.broadcast %cst_5 : f32 to vector<64x9216xf32>
    %7 = arith.maximumf %5, %6 : vector<64x9216xf32>
    %8 = tpu.iota {dimensions = array<i32: 0>} : vector<36x9216xi32>
    %c0_6 = arith.constant 0 : index
    %c0_7 = arith.constant 0 : index
    %9 = vector.load %arg4[%c0_6, %c0_7] : memref<1x9216xi32, #tpu.memory_space<vmem>>, vector<1x9216xi32>
    %10 = vector.broadcast %9 : vector<1x9216xi32> to vector<36x9216xi32>
    %11 = arith.cmpi eq, %8, %10 : vector<36x9216xi32>
    %cst_8 = arith.constant 3.906250e-03 : f32
    %cst_9 = arith.constant 0.000000e+00 : f32
    %12 = vector.broadcast %cst_8 : f32 to vector<36x9216xf32>
    %13 = vector.broadcast %cst_9 : f32 to vector<36x9216xf32>
    %14 = arith.select %11, %12, %13 : vector<36x9216xi1>, vector<36x9216xf32>
    %cst_10 = arith.constant dense<0.000000e+00> : vector<36x64xf32>
    %15 = tpu.matmul %14, %7, %cst_10 {dimension_numbers = #tpu.dot_dimension_numbers<[1], [1], [0], [0], [0, 0, 1, 0], [], []>} : vector<36x9216xf32>, vector<64x9216xf32>, vector<36x64xf32> -> vector<36x64xf32>
    %cst_11 = arith.constant 5.000000e-01 : f32
    %16 = vector.broadcast %cst_11 : f32 to vector<36x64xf32>
    %17 = arith.addf %15, %16 : vector<36x64xf32>
    %18 = math.sqrt %17 : vector<36x64xf32>
    %19 = arith.mulf %18, %18 : vector<36x64xf32>
    %cst_12 = arith.constant dense<0.000000e+00> : vector<36xf32>
    %20 = vector.multi_reduction <add>, %19, %cst_12 [1] : vector<36x64xf32> to vector<36xf32>
    %21 = vector.shape_cast %20 : vector<36xf32> to vector<36x1xf32>
    %22 = math.rsqrt %21 : vector<36x1xf32>
    %23 = vector.broadcast %22 : vector<36x1xf32> to vector<36x64xf32>
    %24 = arith.mulf %18, %23 : vector<36x64xf32>
    %c0_13 = arith.constant 0 : index
    %c0_14 = arith.constant 0 : index
    %25 = vector.load %arg5[%c0_13, %c0_14] : memref<12x36xf32, #tpu.memory_space<vmem>>, vector<12x36xf32>
    %cst_15 = arith.constant dense<0.000000e+00> : vector<12x64xf32>
    %26 = tpu.matmul %25, %24, %cst_15 {dimension_numbers = #tpu.dot_dimension_numbers<[1], [0], [0], [1], [0, 0, 1, 1], [], []>} : vector<12x36xf32>, vector<36x64xf32>, vector<12x64xf32> -> vector<12x64xf32>
    %c0_16 = arith.constant 0 : index
    %c0_17 = arith.constant 0 : index
    %27 = vector.load %arg6[%c0_16, %c0_17] : memref<24x36xf32, #tpu.memory_space<vmem>>, vector<24x36xf32>
    %cst_18 = arith.constant dense<0.000000e+00> : vector<24x64xf32>
    %28 = tpu.matmul %27, %24, %cst_18 {dimension_numbers = #tpu.dot_dimension_numbers<[1], [0], [0], [1], [0, 0, 1, 1], [], []>} : vector<24x36xf32>, vector<36x64xf32>, vector<24x64xf32> -> vector<24x64xf32>
    %29 = tpu.iota {dimensions = array<i32: 0>} : vector<4x12xi32>
    %30 = tpu.iota {dimensions = array<i32: 1>} : vector<4x12xi32>
    %c3_i32 = arith.constant 3 : i32
    %31 = vector.broadcast %c3_i32 : i32 to vector<4x12xi32>
    %32 = arith.muli %29, %31 : vector<4x12xi32>
    %33 = arith.cmpi sge, %30, %32 : vector<4x12xi32>
    %c1_i32 = arith.constant 1 : i32
    %34 = vector.broadcast %c1_i32 : i32 to vector<4x12xi32>
    %35 = arith.addi %29, %34 : vector<4x12xi32>
    %c3_i32_19 = arith.constant 3 : i32
    %36 = vector.broadcast %c3_i32_19 : i32 to vector<4x12xi32>
    %37 = arith.muli %35, %36 : vector<4x12xi32>
    %38 = arith.cmpi slt, %30, %37 : vector<4x12xi32>
    %39 = arith.andi %33, %38 : vector<4x12xi1>
    %cst_20 = arith.constant 0.333333343 : f32
    %cst_21 = arith.constant 0.000000e+00 : f32
    %40 = vector.broadcast %cst_20 : f32 to vector<4x12xf32>
    %41 = vector.broadcast %cst_21 : f32 to vector<4x12xf32>
    %42 = arith.select %39, %40, %41 : vector<4x12xi1>, vector<4x12xf32>
    %cst_22 = arith.constant dense<0.000000e+00> : vector<4x64xf32>
    %43 = tpu.matmul %42, %26, %cst_22 {dimension_numbers = #tpu.dot_dimension_numbers<[1], [0], [0], [1], [0, 0, 1, 1], [], []>} : vector<4x12xf32>, vector<12x64xf32>, vector<4x64xf32> -> vector<4x64xf32>
    %44 = arith.mulf %43, %43 : vector<4x64xf32>
    %cst_23 = arith.constant dense<0.000000e+00> : vector<4xf32>
    %45 = vector.multi_reduction <add>, %44, %cst_23 [1] : vector<4x64xf32> to vector<4xf32>
    %46 = vector.shape_cast %45 : vector<4xf32> to vector<4x1xf32>
    %47 = math.rsqrt %46 : vector<4x1xf32>
    %48 = vector.broadcast %47 : vector<4x1xf32> to vector<4x64xf32>
    %49 = arith.mulf %43, %48 : vector<4x64xf32>
    %cst_24 = arith.constant dense<0.000000e+00> : vector<4x24xf32>
    %50 = tpu.matmul %49, %28, %cst_24 {dimension_numbers = #tpu.dot_dimension_numbers<[1], [1], [0], [0], [0, 0, 1, 0], [], []>} : vector<4x64xf32>, vector<24x64xf32>, vector<4x24xf32> -> vector<4x24xf32>
    %cst_25 = arith.constant dense<0xFF800000> : vector<24xf32>
    %51 = vector.multi_reduction <maximumf>, %50, %cst_25 [0] : vector<4x24xf32> to vector<24xf32>
    %52 = vector.shape_cast %51 : vector<24xf32> to vector<1x24xf32>
    %53 = tpu.iota {dimensions = array<i32: 0>} : vector<4x24xi32>
    %54 = arith.sitofp %53 : vector<4x24xi32> to vector<4x24xf32>
    %55 = vector.broadcast %52 : vector<1x24xf32> to vector<4x24xf32>
    %56 = arith.cmpf oeq, %50, %55 : vector<4x24xf32>
    %cst_26 = arith.constant 4.000000e+00 : f32
    %57 = vector.broadcast %cst_26 : f32 to vector<4x24xf32>
    %58 = arith.select %56, %54, %57 : vector<4x24xi1>, vector<4x24xf32>
    %cst_27 = arith.constant dense<0x7F800000> : vector<24xf32>
    %59 = vector.multi_reduction <minimumf>, %58, %cst_27 [0] : vector<4x24xf32> to vector<24xf32>
    %60 = vector.shape_cast %59 : vector<24xf32> to vector<1x24xf32>
    %61 = vector.broadcast %60 : vector<1x24xf32> to vector<4x24xf32>
    %62 = arith.cmpf oeq, %54, %61 : vector<4x24xf32>
    %cst_28 = arith.constant -1.000000e+30 : f32
    %63 = vector.broadcast %cst_28 : f32 to vector<4x24xf32>
    %64 = arith.select %62, %50, %63 : vector<4x24xi1>, vector<4x24xf32>
    %cst_29 = arith.constant dense<0.000000e+00> : vector<4x12xf32>
    %65 = tpu.matmul %49, %26, %cst_29 {dimension_numbers = #tpu.dot_dimension_numbers<[1], [1], [0], [0], [0, 0, 1, 0], [], []>} : vector<4x64xf32>, vector<12x64xf32>, vector<4x12xf32> -> vector<4x12xf32>
    %cst_30 = arith.constant -1.000000e+30 : f32
    %66 = vector.broadcast %cst_30 : f32 to vector<4x12xf32>
    %67 = arith.select %39, %65, %66 : vector<4x12xi1>, vector<4x12xf32>
    %cst_31 = arith.constant dense<0xFF800000> : vector<4xf32>
    %68 = vector.multi_reduction <maximumf>, %64, %cst_31 [1] : vector<4x24xf32> to vector<4xf32>
    %69 = vector.shape_cast %68 : vector<4xf32> to vector<4x1xf32>
    %cst_32 = arith.constant dense<0xFF800000> : vector<4xf32>
    %70 = vector.multi_reduction <maximumf>, %67, %cst_32 [1] : vector<4x12xf32> to vector<4xf32>
    %71 = vector.shape_cast %70 : vector<4xf32> to vector<4x1xf32>
    %72 = arith.maximumf %69, %71 : vector<4x1xf32>
    %73 = vector.broadcast %72 : vector<4x1xf32> to vector<4x24xf32>
    %74 = arith.subf %64, %73 : vector<4x24xf32>
    %75 = math.exp %74 : vector<4x24xf32>
    %76 = vector.broadcast %72 : vector<4x1xf32> to vector<4x12xf32>
    %77 = arith.subf %67, %76 : vector<4x12xf32>
    %78 = math.exp %77 : vector<4x12xf32>
    %cst_33 = arith.constant dense<0.000000e+00> : vector<4xf32>
    %79 = vector.multi_reduction <add>, %75, %cst_33 [1] : vector<4x24xf32> to vector<4xf32>
    %80 = vector.shape_cast %79 : vector<4xf32> to vector<4x1xf32>
    %cst_34 = arith.constant dense<0.000000e+00> : vector<4xf32>
    %81 = vector.multi_reduction <add>, %78, %cst_34 [1] : vector<4x12xf32> to vector<4xf32>
    %82 = vector.shape_cast %81 : vector<4xf32> to vector<4x1xf32>
    %83 = arith.addf %80, %82 : vector<4x1xf32>
    %84 = vector.broadcast %83 : vector<4x1xf32> to vector<4x24xf32>
    %85 = arith.divf %75, %84 : vector<4x24xf32>
    %cst_35 = arith.constant dense<0.000000e+00> : vector<4x64xf32>
    %86 = tpu.matmul %85, %28, %cst_35 {dimension_numbers = #tpu.dot_dimension_numbers<[1], [0], [0], [1], [0, 0, 1, 1], [], []>} : vector<4x24xf32>, vector<24x64xf32>, vector<4x64xf32> -> vector<4x64xf32>
    %87 = vector.broadcast %83 : vector<4x1xf32> to vector<4x12xf32>
    %88 = arith.divf %78, %87 : vector<4x12xf32>
    %cst_36 = arith.constant dense<0.000000e+00> : vector<4x64xf32>
    %89 = tpu.matmul %88, %26, %cst_36 {dimension_numbers = #tpu.dot_dimension_numbers<[1], [0], [0], [1], [0, 0, 1, 1], [], []>} : vector<4x12xf32>, vector<12x64xf32>, vector<4x64xf32> -> vector<4x64xf32>
    %90 = arith.addf %86, %89 : vector<4x64xf32>
    %cst_37 = arith.constant dense<0.000000e+00> : vector<24x24xf32>
    %91 = tpu.matmul %28, %28, %cst_37 {dimension_numbers = #tpu.dot_dimension_numbers<[1], [1], [0], [0], [0, 0, 1, 0], [], []>} : vector<24x64xf32>, vector<24x64xf32>, vector<24x24xf32> -> vector<24x24xf32>
    %cst_38 = arith.constant dense<0xFF800000> : vector<24xf32>
    %92 = vector.multi_reduction <maximumf>, %91, %cst_38 [1] : vector<24x24xf32> to vector<24xf32>
    %93 = vector.shape_cast %92 : vector<24xf32> to vector<24x1xf32>
    %94 = vector.broadcast %93 : vector<24x1xf32> to vector<24x24xf32>
    %95 = arith.cmpf oeq, %91, %94 : vector<24x24xf32>
    %cst_39 = arith.constant -1.000000e+30 : f32
    %96 = vector.broadcast %cst_39 : f32 to vector<24x24xf32>
    %97 = arith.select %95, %96, %91 : vector<24x24xi1>, vector<24x24xf32>
    %cst_40 = arith.constant dense<0xFF800000> : vector<24xf32>
    %98 = vector.multi_reduction <maximumf>, %97, %cst_40 [1] : vector<24x24xf32> to vector<24xf32>
    %99 = vector.shape_cast %98 : vector<24xf32> to vector<24x1xf32>
    %100 = vector.broadcast %99 : vector<24x1xf32> to vector<24x24xf32>
    %101 = arith.cmpf oeq, %97, %100 : vector<24x24xf32>
    %cst_41 = arith.constant -1.000000e+30 : f32
    %102 = vector.broadcast %cst_41 : f32 to vector<24x24xf32>
    %103 = arith.select %101, %102, %97 : vector<24x24xi1>, vector<24x24xf32>
    %cst_42 = arith.constant dense<0xFF800000> : vector<24xf32>
    %104 = vector.multi_reduction <maximumf>, %103, %cst_42 [1] : vector<24x24xf32> to vector<24xf32>
    %105 = vector.shape_cast %104 : vector<24xf32> to vector<24x1xf32>
    %106 = vector.broadcast %105 : vector<24x1xf32> to vector<24x24xf32>
    %107 = arith.cmpf oeq, %103, %106 : vector<24x24xf32>
    %cst_43 = arith.constant -1.000000e+30 : f32
    %108 = vector.broadcast %cst_43 : f32 to vector<24x24xf32>
    %109 = arith.select %107, %108, %103 : vector<24x24xi1>, vector<24x24xf32>
    %cst_44 = arith.constant dense<0xFF800000> : vector<24xf32>
    %110 = vector.multi_reduction <maximumf>, %109, %cst_44 [1] : vector<24x24xf32> to vector<24xf32>
    %111 = vector.shape_cast %110 : vector<24xf32> to vector<24x1xf32>
    %112 = vector.broadcast %111 : vector<24x1xf32> to vector<24x24xf32>
    %113 = arith.cmpf oeq, %109, %112 : vector<24x24xf32>
    %cst_45 = arith.constant -1.000000e+30 : f32
    %114 = vector.broadcast %cst_45 : f32 to vector<24x24xf32>
    %115 = arith.select %113, %114, %109 : vector<24x24xi1>, vector<24x24xf32>
    %cst_46 = arith.constant dense<0xFF800000> : vector<24xf32>
    %116 = vector.multi_reduction <maximumf>, %115, %cst_46 [1] : vector<24x24xf32> to vector<24xf32>
    %117 = vector.shape_cast %116 : vector<24xf32> to vector<24x1xf32>
    %118 = tpu.iota {dimensions = array<i32: 0>} : vector<24x24xi32>
    %119 = tpu.iota {dimensions = array<i32: 1>} : vector<24x24xi32>
    %120 = arith.cmpi eq, %118, %119 : vector<24x24xi32>
    %cst_47 = arith.constant -1.000000e+30 : f32
    %121 = vector.shape_cast %117 : vector<24x1xf32> to vector<24x1xf32>
    %122 = vector.broadcast %121 : vector<24x1xf32> to vector<24x24xf32>
    %123 = vector.broadcast %cst_47 : f32 to vector<24x24xf32>
    %124 = arith.select %120, %122, %123 : vector<24x24xi1>, vector<24x24xf32>
    %cst_48 = arith.constant dense<0xFF800000> : vector<24xf32>
    %125 = vector.multi_reduction <maximumf>, %124, %cst_48 [0] : vector<24x24xf32> to vector<24xf32>
    %126 = vector.shape_cast %125 : vector<24xf32> to vector<1x24xf32>
    %127 = vector.broadcast %117 : vector<24x1xf32> to vector<24x24xf32>
    %128 = arith.cmpf oge, %91, %127 : vector<24x24xf32>
    %129 = vector.broadcast %126 : vector<1x24xf32> to vector<24x24xf32>
    %130 = arith.cmpf oge, %91, %129 : vector<24x24xf32>
    %131 = arith.andi %128, %130 : vector<24x24xi1>
    %cst_49 = arith.constant -1.000000e+30 : f32
    %132 = vector.broadcast %cst_49 : f32 to vector<24x24xf32>
    %133 = arith.select %131, %91, %132 : vector<24x24xi1>, vector<24x24xf32>
    %cst_50 = arith.constant dense<0xFF800000> : vector<24xf32>
    %134 = vector.multi_reduction <maximumf>, %133, %cst_50 [1] : vector<24x24xf32> to vector<24xf32>
    %135 = vector.shape_cast %134 : vector<24xf32> to vector<24x1xf32>
    %136 = vector.broadcast %135 : vector<24x1xf32> to vector<24x24xf32>
    %137 = arith.subf %133, %136 : vector<24x24xf32>
    %138 = math.exp %137 : vector<24x24xf32>
    %cst_51 = arith.constant dense<0.000000e+00> : vector<24xf32>
    %139 = vector.multi_reduction <add>, %138, %cst_51 [1] : vector<24x24xf32> to vector<24xf32>
    %140 = vector.shape_cast %139 : vector<24xf32> to vector<24x1xf32>
    %141 = vector.broadcast %140 : vector<24x1xf32> to vector<24x24xf32>
    %142 = arith.divf %138, %141 : vector<24x24xf32>
    %cst_52 = arith.constant dense<0.000000e+00> : vector<24x64xf32>
    %143 = tpu.matmul %142, %28, %cst_52 {dimension_numbers = #tpu.dot_dimension_numbers<[1], [0], [0], [1], [0, 0, 1, 1], [], []>} : vector<24x24xf32>, vector<24x64xf32>, vector<24x64xf32> -> vector<24x64xf32>
    %144 = arith.mulf %143, %143 : vector<24x64xf32>
    %cst_53 = arith.constant dense<0.000000e+00> : vector<24xf32>
    %145 = vector.multi_reduction <add>, %144, %cst_53 [1] : vector<24x64xf32> to vector<24xf32>
    %146 = vector.shape_cast %145 : vector<24xf32> to vector<24x1xf32>
    %147 = math.rsqrt %146 : vector<24x1xf32>
    %148 = vector.broadcast %147 : vector<24x1xf32> to vector<24x64xf32>
    %149 = arith.mulf %143, %148 : vector<24x64xf32>
    %150 = arith.mulf %90, %90 : vector<4x64xf32>
    %cst_54 = arith.constant dense<0.000000e+00> : vector<4xf32>
    %151 = vector.multi_reduction <add>, %150, %cst_54 [1] : vector<4x64xf32> to vector<4xf32>
    %152 = vector.shape_cast %151 : vector<4xf32> to vector<4x1xf32>
    %153 = math.rsqrt %152 : vector<4x1xf32>
    %154 = vector.broadcast %153 : vector<4x1xf32> to vector<4x64xf32>
    %155 = arith.mulf %90, %154 : vector<4x64xf32>
    %cst_55 = arith.constant dense<0.000000e+00> : vector<24x4xf32>
    %156 = tpu.matmul %149, %155, %cst_55 {dimension_numbers = #tpu.dot_dimension_numbers<[1], [1], [0], [0], [0, 0, 1, 0], [], []>} : vector<24x64xf32>, vector<4x64xf32>, vector<24x4xf32> -> vector<24x4xf32>
    %c0_56 = arith.constant 0 : index
    %157 = memref.load %arg0[%c0_56] : memref<1xf32, #tpu.memory_space<smem>>
    %158 = vector.broadcast %157 : f32 to vector<24x4xf32>
    %159 = arith.mulf %158, %156 : vector<24x4xf32>
    %c0_57 = arith.constant 0 : index
    %c0_58 = arith.constant 0 : index
    %160 = vector.load %arg7[%c0_57, %c0_58] : memref<24x4xf32, #tpu.memory_space<vmem>>, vector<24x4xf32>
    tpu.vector_store %arg7[%c0_57, %c0_58], %159 {strides = array<i32>} : memref<24x4xf32, #tpu.memory_space<vmem>>, vector<24x4xf32>,
    return
  }
}

</mosaic_0001>

<llo_original>
// kernel: pt_paper_forward.1
$region0: #{pt_paper_forward.1}
  #allocation0 [shape = 'u32[]', space=smem, size = 0x4, offset = 0x4, fixed_abs, tag = 'smem constant byte address 0x4 - core index']
  #allocation1 [shape = 'u32[144,128]{1,0:T(1,128)}', space=vmem, size = 0x12000, scoped, tag = 'internal scratch']
  #allocation2 [shape = 'f32[1]{0:T(128)S(6)}', space=smem, size = 0x200, scoped, tag = 'scoped memory for pt_paper_forward.1']
  %s0 = inlined_call_operand.<no memory space> [shape: f32[1], index: 0, kind: input, shape index: {}]
  %s1 = inlined_call_operand.vmem [shape: f32[27,9216], index: 1, kind: input, shape index: {}]
  %s2 = inlined_call_operand.vmem [shape: f32[64,27], index: 2, kind: input, shape index: {}]
  %s3 = inlined_call_operand.vmem [shape: f32[64,1], index: 3, kind: input, shape index: {}]
  %s4 = inlined_call_operand.vmem [shape: s32[1,9216], index: 4, kind: input, shape index: {}]
  %s5 = inlined_call_operand.vmem [shape: f32[12,36], index: 5, kind: input, shape index: {}]
  %s6 = inlined_call_operand.vmem [shape: f32[24,36], index: 6, kind: input, shape index: {}]
  %s7 = inlined_call_operand.vmem [shape: f32[24,4], index: 7, kind: output, shape index: {}]
  %s8 = sld [smem:[#allocation0]]
  $region38: #{pt_paper_forward.1} parent=0
    _
  %s10 = ssub.s32 1, %s8
  %s11 = scalar_select 0, %s10, %s8
  %12 = sst [smem:[#allocation2]] %s0
  // Predicated region
  $region2: #{pt_paper_forward.1} parent=0 // pred_check
    _
  $region3: #{pt_paper_forward.1} parent=0 // pred_check_branch
    %14 = sbr.rel (0) target = $region5
  $region4: #{pt_paper_forward.1} parent=0 // pred_region
    _
  $region5: #{pt_paper_forward.1} parent=0 // pred_fallthru
    _
  // Predicated region
  $region6: #{pt_paper_forward.1} parent=0 // pred_check
    _
  $region7: #{pt_paper_forward.1} parent=0 // pred_check_branch
    %16 = sbr.rel (0) target = $region9
  $region8: #{pt_paper_forward.1} parent=0 // pred_region
    _
  $region9: #{pt_paper_forward.1} parent=0 // pred_fallthru
    _
  // Predicated region
  $region10: #{pt_paper_forward.1} parent=0 // pred_check
    _
  $region11: #{pt_paper_forward.1} parent=0 // pred_check_branch
    %18 = sbr.rel (0) target = $region13
  $region12: #{pt_paper_forward.1} parent=0 // pred_region
    _
  $region13: #{pt_paper_forward.1} parent=0 // pred_fallthru
    _
  // Predicated region
  $region14: #{pt_paper_forward.1} parent=0 // pred_check
    _
  $region15: #{pt_paper_forward.1} parent=0 // pred_check_branch
    %20 = sbr.rel (0) target = $region17
  $region16: #{pt_paper_forward.1} parent=0 // pred_region
    _
  $region17: #{pt_paper_forward.1} parent=0 // pred_fallthru
    _
  // Predicated region
  $region18: #{pt_paper_forward.1} parent=0 // pred_check
    _
  $region19: #{pt_paper_forward.1} parent=0 // pred_check_branch
    %22 = sbr.rel (0) target = $region21
  $region20: #{pt_paper_forward.1} parent=0 // pred_region
    _
  $region21: #{pt_paper_forward.1} parent=0 // pred_fallthru
    _
  // Predicated region
  $region22: #{pt_paper_forward.1} parent=0 // pred_check
    _
  $region23: #{pt_paper_forward.1} parent=0 // pred_check_branch
    %24 = sbr.rel (0) target = $region25
  $region24: #{pt_paper_forward.1} parent=0 // pred_region
    _
  $region25: #{pt_paper_forward.1} parent=0 // pred_fallthru
    _
  // Predicated region
  $region26: #{pt_paper_forward.1} parent=0 // pred_check
    _
  $region27: #{pt_paper_forward.1} parent=0 // pred_check_branch
    %26 = sbr.rel (0) target = $region29
  $region28: #{pt_paper_forward.1} parent=0 // pred_region
    _
  $region29: #{pt_paper_forward.1} parent=0 // pred_fallthru
    _
  %v27 = vld [vmem:[%s2] sm:$0xff]
  %v28 = vld [vmem:[%s2 + $0x8] sm:$0xff]
  %v29 = vld [vmem:[%s2 + $0x10] sm:$0xff]
  %v30 = vld [vmem:[%s2 + $0x18] sm:$0xff]
  %v31 = vld [vmem:[%s2 + $0x20] sm:$0xff]
  %v32 = vld [vmem:[%s2 + $0x28] sm:$0xff]
  %v33 = vld [vmem:[%s2 + $0x30] sm:$0xff]
  %v34 = vld [vmem:[%s2 + $0x38] sm:$0xff]
  %v35 = vld [vmem:[%s1] sm:$0xff]
  %v36 = vld [vmem:[%s1 + $0x8] sm:$0xff]
  %v37 = vld [vmem:[%s1 + $0x10] sm:$0xff]
  %v38 = vld [vmem:[%s1 + $0x18] sm:$0xff]
  %v39 = vld [vmem:[%s1 + $0x20] sm:$0xff]
  %v40 = vld [vmem:[%s1 + $0x28] sm:$0xff]
  %v41 = vld [vmem:[%s1 + $0x30] sm:$0xff]
  %v42 = vld [vmem:[%s1 + $0x38] sm:$0xff]
  %v43 = vld [vmem:[%s1 + $0x40] sm:$0xff]
  %v44 = vld [vmem:[%s1 + $0x48] sm:$0xff]
  %v45 = vld [vmem:[%s1 + $0x50] sm:$0xff]
  %v46 = vld [vmem:[%s1 + $0x58] sm:$0xff]
  %v47 = vld [vmem:[%s1 + $0x60] sm:$0xff]
  %v48 = vld [vmem:[%s1 + $0x68] sm:$0xff]
  %v49 = vld [vmem:[%s1 + $0x70] sm:$0xff]
  %v50 = vld [vmem:[%s1 + $0x78] sm:$0xff]
  %v51 = vld [vmem:[%s1 + $0x80] sm:$0xff]
  %v52 = vld [vmem:[%s1 + $0x88] sm:$0xff]
  %v53 = vld [vmem:[%s1 + $0x90] sm:$0xff]
  %v54 = vld [vmem:[%s1 + $0x98] sm:$0xff]
  %v55 = vld [vmem:[%s1 + $0xa0] sm:$0xff]
  %v56 = vld [vmem:[%s1 + $0xa8] sm:$0xff]
  %v57 = vld [vmem:[%s1 + $0xb0] sm:$0xff]
  %v58 = vld [vmem:[%s1 + $0xb8] sm:$0xff]
  %v59 = vld [vmem:[%s1 + $0xc0] sm:$0xff]
  %v60 = vld [vmem:[%s1 + $0xc8] sm:$0xff]
  %v61 = vld [vmem:[%s1 + $0xd0] sm:$0xff]
  %v62 = vld [vmem:[%s1 + $0xd8] sm:$0xff]
  %v63 = vld [vmem:[%s1 + $0xe0] sm:$0xff]
  %v64 = vld [vmem:[%s1 + $0xe8] sm:$0xff]
  %v65 = vld [vmem:[%s1 + $0xf0] sm:$0xff]
  %v66 = vld [vmem:[%s1 + $0xf8] sm:$0xff]
  %v67 = vld [vmem:[%s1 + $0x100] sm:$0xff]
  %v68 = vld [vmem:[%s1 + $0x108] sm:$0xff]
  %v69 = vld [vmem:[%s1 + $0x110] sm:$0xff]
  %v70 = vld [vmem:[%s1 + $0x118] sm:$0xff]
  %v71 = vld [vmem:[%s1 + $0x120] sm:$0xff]
  %v72 = vld [vmem:[%s1 + $0x128] sm:$0xff]
  %v73 = vld [vmem:[%s1 + $0x130] sm:$0xff]
  %v74 = vld [vmem:[%s1 + $0x138] sm:$0xff]
  %v75 = vld [vmem:[%s1 + $0x140] sm:$0xff]
  %v76 = vld [vmem:[%s1 + $0x148] sm:$0xff]
  %v77 = vld [vmem:[%s1 + $0x150] sm:$0xff]
  %v78 = vld [vmem:[%s1 + $0x158] sm:$0xff]
  %v79 = vld [vmem:[%s1 + $0x160] sm:$0xff]
  %v80 = vld [vmem:[%s1 + $0x168] sm:$0xff]
  %v81 = vld [vmem:[%s1 + $0x170] sm:$0xff]
  %v82 = vld [vmem:[%s1 + $0x178] sm:$0xff]
  %v83 = vld [vmem:[%s1 + $0x180] sm:$0xff]
  %v84 = vld [vmem:[%s1 + $0x188] sm:$0xff]
  %v85 = vld [vmem:[%s1 + $0x190] sm:$0xff]
  %v86 = vld [vmem:[%s1 + $0x198] sm:$0xff]
  %v87 = vld [vmem:[%s1 + $0x1a0] sm:$0xff]
  %v88 = vld [vmem:[%s1 + $0x1a8] sm:$0xff]
  %v89 = vld [vmem:[%s1 + $0x1b0] sm:$0xff]
  %v90 = vld [vmem:[%s1 + $0x1b8] sm:$0xff]
  %v91 = vld [vmem:[%s1 + $0x1c0] sm:$0xff]
  %v92 = vld [vmem:[%s1 + $0x1c8] sm:$0xff]
  %v93 = vld [vmem:[%s1 + $0x1d0] sm:$0xff]
  %v94 = vld [vmem:[%s1 + $0x1d8] sm:$0xff]
  %v95 = vld [vmem:[%s1 + $0x1e0] sm:$0xff]
  %v96 = vld [vmem:[%s1 + $0x1e8] sm:$0xff]
  %v97 = vld [vmem:[%s1 + $0x1f0] sm:$0xff]
  %v98 = vld [vmem:[%s1 + $0x1f8] sm:$0xff]
  %v99 = vld [vmem:[%s1 + $0x200] sm:$0xff]
  %v100 = vld [vmem:[%s1 + $0x208] sm:$0xff]
  %v101 = vld [vmem:[%s1 + $0x210] sm:$0xff]
  %v102 = vld [vmem:[%s1 + $0x218] sm:$0xff]
  %v103 = vld [vmem:[%s1 + $0x220] sm:$0xff]
  %v104 = vld [vmem:[%s1 + $0x228] sm:$0xff]
  %v105 = vld [vmem:[%s1 + $0x230] sm:$0xff]
  %v106 = vld [vmem:[%s1 + $0x238] sm:$0xff]
  %v107 = vld [vmem:[%s1 + $0x240] sm:$0xff]
  %v108 = vld [vmem:[%s1 + $0x248] sm:$0xff]
  %v109 = vld [vmem:[%s1 + $0x250] sm:$0xff]
  %v110 = vld [vmem:[%s1 + $0x258] sm:$0xff]
  %v111 = vld [vmem:[%s1 + $0x260] sm:$0xff]
  %v112 = vld [vmem:[%s1 + $0x268] sm:$0xff]
  %v113 = vld [vmem:[%s1 + $0x270] sm:$0xff]
  %v114 = vld [vmem:[%s1 + $0x278] sm:$0xff]
  %v115 = vld [vmem:[%s1 + $0x280] sm:$0xff]
  %v116 = vld [vmem:[%s1 + $0x288] sm:$0xff]
  %v117 = vld [vmem:[%s1 + $0x290] sm:$0xff]
  %v118 = vld [vmem:[%s1 + $0x298] sm:$0xff]
  %v119 = vld [vmem:[%s1 + $0x2a0] sm:$0xff]
  %v120 = vld [vmem:[%s1 + $0x2a8] sm:$0xff]
  %v121 = vld [vmem:[%s1 + $0x2b0] sm:$0xff]
  %v122 = vld [vmem:[%s1 + $0x2b8] sm:$0xff]
  %v123 = vld [vmem:[%s1 + $0x2c0] sm:$0xff]
  %v124 = vld [vmem:[%s1 + $0x2c8] sm:$0xff]
  %v125 = vld [vmem:[%s1 + $0x2d0] sm:$0xff]
  %v126 = vld [vmem:[%s1 + $0x2d8] sm:$0xff]
  %v127 = vld [vmem:[%s1 + $0x2e0] sm:$0xff]
  %v128 = vld [vmem:[%s1 + $0x2e8] sm:$0xff]
  %v129 = vld [vmem:[%s1 + $0x2f0] sm:$0xff]
  %v130 = vld [vmem:[%s1 + $0x2f8] sm:$0xff]
  %v131 = vld [vmem:[%s1 + $0x300] sm:$0xff]
  %v132 = vld [vmem:[%s1 + $0x308] sm:$0xff]
  %v133 = vld [vmem:[%s1 + $0x310] sm:$0xff]
  %v134 = vld [vmem:[%s1 + $0x318] sm:$0xff]
  %v135 = vld [vmem:[%s1 + $0x320] sm:$0xff]
  %v136 = vld [vmem:[%s1 + $0x328] sm:$0xff]
  %v137 = vld [vmem:[%s1 + $0x330] sm:$0xff]
  %v138 = vld [vmem:[%s1 + $0x338] sm:$0xff]
  %v139 = vld [vmem:[%s1 + $0x340] sm:$0xff]
  %v140 = vld [vmem:[%s1 + $0x348] sm:$0xff]
  %v141 = vld [vmem:[%s1 + $0x350] sm:$0xff]
  %v142 = vld [vmem:[%s1 + $0x358] sm:$0xff]
  %v143 = vld [vmem:[%s1 + $0x360] sm:$0xff]
  %v144 = vld [vmem:[%s1 + $0x368] sm:$0xff]
  %v145 = vld [vmem:[%s1 + $0x370] sm:$0xff]
  %v146 = vld [vmem:[%s1 + $0x378] sm:$0xff]
  %v147 = vld [vmem:[%s1 + $0x380] sm:$0xff]
  %v148 = vld [vmem:[%s1 + $0x388] sm:$0xff]
  %v149 = vld [vmem:[%s1 + $0x390] sm:$0xff]
  %v150 = vld [vmem:[%s1 + $0x398] sm:$0xff]
  %v151 = vld [vmem:[%s1 + $0x3a0] sm:$0xff]
  %v152 = vld [vmem:[%s1 + $0x3a8] sm:$0xff]
  %v153 = vld [vmem:[%s1 + $0x3b0] sm:$0xff]
  %v154 = vld [vmem:[%s1 + $0x3b8] sm:$0xff]
  %v155 = vld [vmem:[%s1 + $0x3c0] sm:$0xff]
  %v156 = vld [vmem:[%s1 + $0x3c8] sm:$0xff]
  %v157 = vld [vmem:[%s1 + $0x3d0] sm:$0xff]
  %v158 = vld [vmem:[%s1 + $0x3d8] sm:$0xff]
  %v159 = vld [vmem:[%s1 + $0x3e0] sm:$0xff]
  %v160 = vld [vmem:[%s1 + $0x3e8] sm:$0xff]
  %v161 = vld [vmem:[%s1 + $0x3f0] sm:$0xff]
  %v162 = vld [vmem:[%s1 + $0x3f8] sm:$0xff]
  %v163 = vld [vmem:[%s1 + $0x400] sm:$0xff]
  %v164 = vld [vmem:[%s1 + $0x408] sm:$0xff]
  %v165 = vld [vmem:[%s1 + $0x410] sm:$0xff]
  %v166 = vld [vmem:[%s1 + $0x418] sm:$0xff]
  %v167 = vld [vmem:[%s1 + $0x420] sm:$0xff]
  %v168 = vld [vmem:[%s1 + $0x428] sm:$0xff]
  %v169 = vld [vmem:[%s1 + $0x430] sm:$0xff]
  %v170 = vld [vmem:[%s1 + $0x438] sm:$0xff]
  %v171 = vld [vmem:[%s1 + $0x440] sm:$0xff]
  %v172 = vld [vmem:[%s1 + $0x448] sm:$0xff]
  %v173 = vld [vmem:[%s1 + $0x450] sm:$0xff]
  %v174 = vld [vmem:[%s1 + $0x458] sm:$0xff]
  %v175 = vld [vmem:[%s1 + $0x460] sm:$0xff]
  %v176 = vld [vmem:[%s1 + $0x468] sm:$0xff]
  %v177 = vld [vmem:[%s1 + $0x470] sm:$0xff]
  %v178 = vld [vmem:[%s1 + $0x478] sm:$0xff]
  %v179 = vld [vmem:[%s1 + $0x480] sm:$0xff]
  %v180 = vld [vmem:[%s1 + $0x488] sm:$0xff]
  %v181 = vld [vmem:[%s1 + $0x490] sm:$0xff]
  %v182 = vld [vmem:[%s1 + $0x498] sm:$0xff]
  %v183 = vld [vmem:[%s1 + $0x4a0] sm:$0xff]
  %v184 = vld [vmem:[%s1 + $0x4a8] sm:$0xff]
  %v185 = vld [vmem:[%s1 + $0x4b0] sm:$0xff]
  %v186 = vld [vmem:[%s1 + $0x4b8] sm:$0xff]
  %v187 = vld [vmem:[%s1 + $0x4c0] sm:$0xff]
  %v188 = vld [vmem:[%s1 + $0x4c8] sm:$0xff]
  %v189 = vld [vmem:[%s1 + $0x4d0] sm:$0xff]
  %v190 = vld [vmem:[%s1 + $0x4d8] sm:$0xff]
  %v191 = vld [vmem:[%s1 + $0x4e0] sm:$0xff]
  %v192 = vld [vmem:[%s1 + $0x4e8] sm:$0xff]
  %v193 = vld [vmem:[%s1 + $0x4f0] sm:$0xff]
  %v194 = vld [vmem:[%s1 + $0x4f8] sm:$0xff]
  %v195 = vld [vmem:[%s1 + $0x500] sm:$0xff]
  %v196 = vld [vmem:[%s1 + $0x508] sm:$0xff]
  %v197 = vld [vmem:[%s1 + $0x510] sm:$0xff]
  %v198 = vld [vmem:[%s1 + $0x518] sm:$0xff]
  %v199 = vld [vmem:[%s1 + $0x520] sm:$0xff]
  %v200 = vld [vmem:[%s1 + $0x528] sm:$0xff]
  %v201 = vld [vmem:[%s1 + $0x530] sm:$0xff]
  %v202 = vld [vmem:[%s1 + $0x538] sm:$0xff]
  %v203 = vld [vmem:[%s1 + $0x540] sm:$0xff]
  %v204 = vld [vmem:[%s1 + $0x548] sm:$0xff]
  %v205 = vld [vmem:[%s1 + $0x550] sm:$0xff]
  %v206 = vld [vmem:[%s1 + $0x558] sm:$0xff]
  %v207 = vld [vmem:[%s1 + $0x560] sm:$0xff]
  %v208 = vld [vmem:[%s1 + $0x568] sm:$0xff]
  %v209 = vld [vmem:[%s1 + $0x570] sm:$0xff]
  %v210 = vld [vmem:[%s1 + $0x578] sm:$0xff]
  %v211 = vld [vmem:[%s1 + $0x580] sm:$0xff]
  %v212 = vld [vmem:[%s1 + $0x588] sm:$0xff]
  %v213 = vld [vmem:[%s1 + $0x590] sm:$0xff]
  %v214 = vld [vmem:[%s1 + $0x598] sm:$0xff]
  %v215 = vld [vmem:[%s1 + $0x5a0] sm:$0xff]
  %v216 = vld [vmem:[%s1 + $0x5a8] sm:$0xff]
  %v217 = vld [vmem:[%s1 + $0x5b0] sm:$0xff]
  %v218 = vld [vmem:[%s1 + $0x5b8] sm:$0xff]
  %v219 = vld [vmem:[%s1 + $0x5c0] sm:$0xff]
  %v220 = vld [vmem:[%s1 + $0x5c8] sm:$0xff]
  %v221 = vld [vmem:[%s1 + $0x5d0] sm:$0xff]
  %v222 = vld [vmem:[%s1 + $0x5d8] sm:$0xff]
  %v223 = vld [vmem:[%s1 + $0x5e0] sm:$0xff]
  %v224 = vld [vmem:[%s1 + $0x5e8] sm:$0xff]
  %v225 = vld [vmem:[%s1 + $0x5f0] sm:$0xff]
  %v226 = vld [vmem:[%s1 + $0x5f8] sm:$0xff]
  %v227 = vld [vmem:[%s1 + $0x600] sm:$0xff]
  %v228 = vld [vmem:[%s1 + $0x608] sm:$0xff]
  %v229 = vld [vmem:[%s1 + $0x610] sm:$0xff]
  %v230 = vld [vmem:[%s1 + $0x618] sm:$0xff]
  %v231 = vld [vmem:[%s1 + $0x620] sm:$0xff]
  %v232 = vld [vmem:[%s1 + $0x628] sm:$0xff]
  %v233 = vld [vmem:[%s1 + $0x630] sm:$0xff]
  %v234 = vld [vmem:[%s1 + $0x638] sm:$0xff]
  %v235 = vld [vmem:[%s1 + $0x640] sm:$0xff]
  %v236 = vld [vmem:[%s1 + $0x648] sm:$0xff]
  %v237 = vld [vmem:[%s1 + $0x650] sm:$0xff]
  %v238 = vld [vmem:[%s1 + $0x658] sm:$0xff]
  %v239 = vld [vmem:[%s1 + $0x660] sm:$0xff]
  %v240 = vld [vmem:[%s1 + $0x668] sm:$0xff]
  %v241 = vld [vmem:[%s1 + $0x670] sm:$0xff]
  %v242 = vld [vmem:[%s1 + $0x678] sm:$0xff]
  %v243 = vld [vmem:[%s1 + $0x680] sm:$0xff]
  %v244 = vld [vmem:[%s1 + $0x688] sm:$0xff]
  %v245 = vld [vmem:[%s1 + $0x690] sm:$0xff]
  %v246 = vld [vmem:[%s1 + $0x698] sm:$0xff]
  %v247 = vld [vmem:[%s1 + $0x6a0] sm:$0xff]
  %v248 = vld [vmem:[%s1 + $0x6a8] sm:$0xff]
  %v249 = vld [vmem:[%s1 + $0x6b0] sm:$0xff]
  %v250 = vld [vmem:[%s1 + $0x6b8] sm:$0xff]
  %v251 = vld [vmem:[%s1 + $0x6c0] sm:$0x7]
  %v252 = vld [vmem:[%s1 + $0x6c8] sm:$0x7]
  %v253 = vld [vmem:[%s1 + $0x6d0] sm:$0x7]
  %v254 = vld [vmem:[%s1 + $0x6d8] sm:$0x7]
  %v255 = vld [vmem:[%s1 + $0x6e0] sm:$0x7]
  %v256 = vld [vmem:[%s1 + $0x6e8] sm:$0x7]
  %v257 = vld [vmem:[%s1 + $0x6f0] sm:$0x7]
  %v258 = vld [vmem:[%s1 + $0x6f8] sm:$0x7]
  %v259 = vld [vmem:[%s1 + $0x700] sm:$0x7]
  %v260 = vld [vmem:[%s1 + $0x708] sm:$0x7]
  %v261 = vld [vmem:[%s1 + $0x710] sm:$0x7]
  %v262 = vld [vmem:[%s1 + $0x718] sm:$0x7]
  %v263 = vld [vmem:[%s1 + $0x720] sm:$0x7]
  %v264 = vld [vmem:[%s1 + $0x728] sm:$0x7]
  %v265 = vld [vmem:[%s1 + $0x730] sm:$0x7]
  %v266 = vld [vmem:[%s1 + $0x738] sm:$0x7]
  %v267 = vld [vmem:[%s1 + $0x740] sm:$0x7]
  %v268 = vld [vmem:[%s1 + $0x748] sm:$0x7]
  %v269 = vld [vmem:[%s1 + $0x750] sm:$0x7]
  %v270 = vld [vmem:[%s1 + $0x758] sm:$0x7]
  %v271 = vld [vmem:[%s1 + $0x760] sm:$0x7]
  %v272 = vld [vmem:[%s1 + $0x768] sm:$0x7]
  %v273 = vld [vmem:[%s1 + $0x770] sm:$0x7]
  %v274 = vld [vmem:[%s1 + $0x778] sm:$0x7]
  %v275 = vld [vmem:[%s1 + $0x780] sm:$0x7]
  %v276 = vld [vmem:[%s1 + $0x788] sm:$0x7]
  %v277 = vld [vmem:[%s1 + $0x790] sm:$0x7]
  %v278 = vld [vmem:[%s1 + $0x798] sm:$0x7]
  %v279 = vld [vmem:[%s1 + $0x7a0] sm:$0x7]
  %v280 = vld [vmem:[%s1 + $0x7a8] sm:$0x7]
  %v281 = vld [vmem:[%s1 + $0x7b0] sm:$0x7]
  %v282 = vld [vmem:[%s1 + $0x7b8] sm:$0x7]
  %v283 = vld [vmem:[%s1 + $0x7c0] sm:$0x7]
  %v284 = vld [vmem:[%s1 + $0x7c8] sm:$0x7]
  %v285 = vld [vmem:[%s1 + $0x7d0] sm:$0x7]
  %v286 = vld [vmem:[%s1 + $0x7d8] sm:$0x7]
  %v287 = vld [vmem:[%s1 + $0x7e0] sm:$0x7]
  %v288 = vld [vmem:[%s1 + $0x7e8] sm:$0x7]
  %v289 = vld [vmem:[%s1 + $0x7f0] sm:$0x7]
  %v290 = vld [vmem:[%s1 + $0x7f8] sm:$0x7]
  %v291 = vld [vmem:[%s1 + $0x800] sm:$0x7]
  %v292 = vld [vmem:[%s1 + $0x808] sm:$0x7]
  %v293 = vld [vmem:[%s1 + $0x810] sm:$0x7]
  %v294 = vld [vmem:[%s1 + $0x818] sm:$0x7]
  %v295 = vld [vmem:[%s1 + $0x820] sm:$0x7]
  %v296 = vld [vmem:[%s1 + $0x828] sm:$0x7]
  %v297 = vld [vmem:[%s1 + $0x830] sm:$0x7]
  %v298 = vld [vmem:[%s1 + $0x838] sm:$0x7]
  %v299 = vld [vmem:[%s1 + $0x840] sm:$0x7]
  %v300 = vld [vmem:[%s1 + $0x848] sm:$0x7]
  %v301 = vld [vmem:[%s1 + $0x850] sm:$0x7]
  %v302 = vld [vmem:[%s1 + $0x858] sm:$0x7]
  %v303 = vld [vmem:[%s1 + $0x860] sm:$0x7]
  %v304 = vld [vmem:[%s1 + $0x868] sm:$0x7]
  %v305 = vld [vmem:[%s1 + $0x870] sm:$0x7]
  %v306 = vld [vmem:[%s1 + $0x878] sm:$0x7]
  %v307 = vld [vmem:[%s1 + $0x880] sm:$0x7]
  %v308 = vld [vmem:[%s1 + $0x888] sm:$0x7]
  %v309 = vld [vmem:[%s1 + $0x890] sm:$0x7]
  %v310 = vld [vmem:[%s1 + $0x898] sm:$0x7]
  %v311 = vld [vmem:[%s1 + $0x8a0] sm:$0x7]
  %v312 = vld [vmem:[%s1 + $0x8a8] sm:$0x7]
  %v313 = vld [vmem:[%s1 + $0x8b0] sm:$0x7]
  %v314 = vld [vmem:[%s1 + $0x8b8] sm:$0x7]
  %v315 = vld [vmem:[%s1 + $0x8c0] sm:$0x7]
  %v316 = vld [vmem:[%s1 + $0x8c8] sm:$0x7]
  %v317 = vld [vmem:[%s1 + $0x8d0] sm:$0x7]
  %v318 = vld [vmem:[%s1 + $0x8d8] sm:$0x7]
  %v319 = vld [vmem:[%s1 + $0x8e0] sm:$0x7]
  %v320 = vld [vmem:[%s1 + $0x8e8] sm:$0x7]
  %v321 = vld [vmem:[%s1 + $0x8f0] sm:$0x7]
  %v322 = vld [vmem:[%s1 + $0x8f8] sm:$0x7]
  %v323 = vld [vmem:[%s3] sm:$0xff]
  %v324 = vld [vmem:[%s3 + $0x8] sm:$0xff]
  %v325 = vld [vmem:[%s3 + $0x10] sm:$0xff]
  %v326 = vld [vmem:[%s3 + $0x18] sm:$0xff]
  %v327 = vld [vmem:[%s3 + $0x20] sm:$0xff]
  %v328 = vld [vmem:[%s3 + $0x28] sm:$0xff]
  %v329 = vld [vmem:[%s3 + $0x30] sm:$0xff]
  %v330 = vld [vmem:[%s3 + $0x38] sm:$0xff]
  %332 = vset.pattern.permute.xlu0 0
  %333 = vperm.xlu0 %332, %v323
  %v334 = vpop.permute.xlu0 %333
  %337 = vset.pattern.permute.xlu0 0
  %338 = vperm.xlu0 %337, %v324
  %v339 = vpop.permute.xlu0 %338
  %342 = vset.pattern.permute.xlu0 0
  %343 = vperm.xlu0 %342, %v325
  %v344 = vpop.permute.xlu0 %343
  %347 = vset.pattern.permute.xlu0 0
  %348 = vperm.xlu0 %347, %v326
  %v349 = vpop.permute.xlu0 %348
  %352 = vset.pattern.permute.xlu0 0
  %353 = vperm.xlu0 %352, %v327
  %v354 = vpop.permute.xlu0 %353
  %357 = vset.pattern.permute.xlu0 0
  %358 = vperm.xlu0 %357, %v328
  %v359 = vpop.permute.xlu0 %358
  %362 = vset.pattern.permute.xlu0 0
  %363 = vperm.xlu0 %362, %v329
  %v364 = vpop.permute.xlu0 %363
  %367 = vset.pattern.permute.xlu0 0
  %368 = vperm.xlu0 %367, %v330
  %v369 = vpop.permute.xlu0 %368
  %vm371 = vcmask 220160
  %v373 = vsel %vm371, %v27, 0
  %v376 = vsel %vm371, %v28, 0
  %v379 = vsel %vm371, %v29, 0
  %v382 = vsel %vm371, %v30, 0
  %v385 = vsel %vm371, %v31, 0
  %v388 = vsel %vm371, %v32, 0
  %v391 = vsel %vm371, %v33, 0
  %v394 = vsel %vm371, %v34, 0
  %vm396 = vcmask 1042432
  %v398 = vsel %vm396, %v251, 0
  %v401 = vsel %vm396, %v252, 0
  %v404 = vsel %vm396, %v253, 0
  %v407 = vsel %vm396, %v254, 0
  %v410 = vsel %vm396, %v255, 0
  %v413 = vsel %vm396, %v256, 0
  %v416 = vsel %vm396, %v257, 0
  %v419 = vsel %vm396, %v258, 0
  %v422 = vsel %vm396, %v259, 0
  %v425 = vsel %vm396, %v260, 0
  %v428 = vsel %vm396, %v261, 0
  %v431 = vsel %vm396, %v262, 0
  %v434 = vsel %vm396, %v263, 0
  %v437 = vsel %vm396, %v264, 0
  %v440 = vsel %vm396, %v265, 0
  %v443 = vsel %vm396, %v266, 0
  %v446 = vsel %vm396, %v267, 0
  %v449 = vsel %vm396, %v268, 0
  %v452 = vsel %vm396, %v269, 0
  %v455 = vsel %vm396, %v270, 0
  %v458 = vsel %vm396, %v271, 0
  %v461 = vsel %vm396, %v272, 0
  %v464 = vsel %vm396, %v273, 0
  %v467 = vsel %vm396, %v274, 0
  %v470 = vsel %vm396, %v275, 0
  %v473 = vsel %vm396, %v276, 0
  %v476 = vsel %vm396, %v277, 0
  %v479 = vsel %vm396, %v278, 0
  %v482 = vsel %vm396, %v279, 0
  %v485 = vsel %vm396, %v280, 0
  %v488 = vsel %vm396, %v281, 0
  %v491 = vsel %vm396, %v282, 0
  %v494 = vsel %vm396, %v283, 0
  %v497 = vsel %vm396, %v284, 0
  %v500 = vsel %vm396, %v285, 0
  %v503 = vsel %vm396, %v286, 0
  %v506 = vsel %vm396, %v287, 0
  %v509 = vsel %vm396, %v288, 0
  %v512 = vsel %vm396, %v289, 0
  %v515 = vsel %vm396, %v290, 0
  %v518 = vsel %vm396, %v291, 0
  %v521 = vsel %vm396, %v292, 0
  %v524 = vsel %vm396, %v293, 0
  %v527 = vsel %vm396, %v294, 0
  %v530 = vsel %vm396, %v295, 0
  %v533 = vsel %vm396, %v296, 0
  %v536 = vsel %vm396, %v297, 0
  %v539 = vsel %vm396, %v298, 0
  %v542 = vsel %vm396, %v299, 0
  %v545 = vsel %vm396, %v300, 0
  %v548 = vsel %vm396, %v301, 0
  %v551 = vsel %vm396, %v302, 0
  %v554 = vsel %vm396, %v303, 0
  %v557 = vsel %vm396, %v304, 0
  %v560 = vsel %vm396, %v305, 0
  %v563 = vsel %vm396, %v306, 0
  %v566 = vsel %vm396, %v307, 0
  %v569 = vsel %vm396, %v308, 0
  %v572 = vsel %vm396, %v309, 0
  %v575 = vsel %vm396, %v310, 0
  %v578 = vsel %vm396, %v311, 0
  %v581 = vsel %vm396, %v312, 0
  %v584 = vsel %vm396, %v313, 0
  %v587 = vsel %vm396, %v314, 0
  %v590 = vsel %vm396, %v315, 0
  %v593 = vsel %vm396, %v316, 0
  %v596 = vsel %vm396, %v317, 0
  %v599 = vsel %vm396, %v318, 0
  %v602 = vsel %vm396, %v319, 0
  %v605 = vsel %vm396, %v320, 0
  %v608 = vsel %vm396, %v321, 0
  %v611 = vsel %vm396, %v322, 0
  %613 = vmatprep.subr.mxu0 %v36
  %614 = vmatpush1.msra.mxu0 %v35
  %615 = vmatprep.subr.mxu0 %v108
  %616 = vmatpush1.msra.mxu0 %v107
  %617 = vmatprep.subr.mxu0 %v180
  %618 = vmatpush1.msra.mxu0 %v179
  %619 = vmatprep.subr.mxu0 %v401
  %620 = vmatpush1.msra.mxu0 %v398
  %621 = vmatprep.subr.mxu0 0.0
  %622 = vmatpush1.msra.mxu0 0.0
  %623 = vmatprep.subr.mxu0 0.0
  %624 = vmatpush1.msra.mxu0 0.0
  %625 = vmatprep.subr.mxu0 0.0
  %626 = vmatpush1.msra.mxu0 0.0
  %627 = vmatprep.subr.mxu0 0.0
  %628 = vmatpush1.msra.mxu0 0.0
  %629 = vmatprep.subr.mxu0 0.0
  %630 = vmatpush1.msra.mxu0 0.0
  %631 = vmatprep.subr.mxu0 0.0
  %632 = vmatpush1.msra.mxu0 0.0
  %633 = vmatprep.subr.mxu0 0.0
  %634 = vmatpush1.msra.mxu0 0.0
  %635 = vmatprep.subr.mxu0 0.0
  %636 = vmatpush1.msra.mxu0 0.0
  %637 = vmatprep.subr.mxu0 0.0
  %638 = vmatpush1.msra.mxu0 0.0
  %639 = vmatprep.subr.mxu0 0.0
  %640 = vmatpush1.msra.mxu0 0.0
  %641 = vmatprep.subr.mxu0 0.0
  %642 = vmatpush1.msra.mxu0 0.0
  %643 = vmatprep.subr.mxu0 0.0
  %644 = vmatpush1.msra.mxu0 0.0
  %645 = vmatprep.subr.mxu0 0.0
  %646 = vmatpush1.msra.mxu0 0.0
  %647 = vmatprep.subr.mxu0 0.0
  %648 = vmatpush1.msra.mxu0 0.0
  %649 = vmatprep.subr.mxu0 0.0
  %650 = vmatpush1.msra.mxu0 0.0
  %651 = vmatprep.subr.mxu0 0.0
  %652 = vmatpush1.msra.mxu0 0.0
  %653 = vmatprep.subr.mxu0 0.0
  %654 = vmatpush1.msra.mxu0 0.0
  %655 = vmatprep.subr.mxu0 0.0
  %656 = vmatpush1.msra.mxu0 0.0
  %657 = vmatprep.subr.mxu0 0.0
  %658 = vmatpush1.msra.mxu0 0.0
  %659 = vmatprep.subr.mxu0 0.0
  %660 = vmatpush1.msra.mxu0 0.0
  %661 = vmatprep.subr.mxu0 0.0
  %662 = vmatpush1.msra.mxu0 0.0
  %663 = vmatprep.subr.mxu0 0.0
  %664 = vmatpush1.msra.mxu0 0.0
  %665 = vmatprep.subr.mxu0 0.0
  %666 = vmatpush1.msra.mxu0 0.0
  %667 = vmatprep.subr.mxu0 0.0
  %668 = vmatpush1.msra.mxu0 0.0
  %669 = vmatprep.subr.mxu0 0.0
  %670 = vmatpush1.msra.mxu0 0.0
  %671 = vmatprep.subr.mxu0 0.0
  %672 = vmatpush1.msra.mxu0 0.0
  %673 = vmatprep.subr.mxu0 0.0
  %674 = vmatpush1.msra.mxu0 0.0
  %675 = vmatprep.subr.mxu0 0.0
  %676 = vmatpush1.msra.mxu0 0.0
  %677 = vmatprep.mubr.f32.mxu0 0.0
  %678 = vmatmul.mubr.f32.gmra.mrb[0].mxu0 %v373
  %v679 = vpop.f32.mrb[0].mxu0
  %v680 = vadd.f32 %v334, %v679
  %v681 = vpop.f32.mrb[0].mxu0
  %v682 = vadd.f32 %v334, %v681
  %683 = vmatprep.mubr.f32.mxu0 0.0
  %684 = vmatmul.mubr.f32.gmra.mrb[0].mxu0 %v376
  %v685 = vpop.f32.mrb[0].mxu0
  %v686 = vadd.f32 %v339, %v685
  %v687 = vpop.f32.mrb[0].mxu0
  %v688 = vadd.f32 %v339, %v687
  %689 = vmatprep.mubr.f32.mxu0 0.0
  %690 = vmatmul.mubr.f32.gmra.mrb[0].mxu0 %v379
  %v691 = vpop.f32.mrb[0].mxu0
  %v692 = vadd.f32 %v344, %v691
  %v693 = vpop.f32.mrb[0].mxu0
  %v694 = vadd.f32 %v344, %v693
  %695 = vmatprep.mubr.f32.mxu0 0.0
  %696 = vmatmul.mubr.f32.gmra.mrb[0].mxu0 %v382
  %v697 = vpop.f32.mrb[0].mxu0
  %v698 = vadd.f32 %v349, %v697
  %v699 = vpop.f32.mrb[0].mxu0
  %v700 = vadd.f32 %v349, %v699
  %701 = vmatprep.mubr.f32.mxu0 0.0
  %702 = vmatmul.mubr.f32.gmra.mrb[0].mxu0 %v385
  %v703 = vpop.f32.mrb[0].mxu0
  %v704 = vadd.f32 %v354, %v703
  %v705 = vpop.f32.mrb[0].mxu0
  %v706 = vadd.f32 %v354, %v705
  %707 = vmatprep.mubr.f32.mxu0 0.0
  %708 = vmatmul.mubr.f32.gmra.mrb[0].mxu0 %v388
  %v709 = vpop.f32.mrb[0].mxu0
  %v710 = vadd.f32 %v359, %v709
  %v711 = vpop.f32.mrb[0].mxu0
  %v712 = vadd.f32 %v359, %v711
  %713 = vmatprep.mubr.f32.mxu0 0.0
  %714 = vmatmul.mubr.f32.gmra.mrb[0].mxu0 %v391
  %v715 = vpop.f32.mrb[0].mxu0
  %v716 = vadd.f32 %v364, %v715
  %v717 = vpop.f32.mrb[0].mxu0
  %v718 = vadd.f32 %v364, %v717
  %719 = vmatprep.mubr.f32.mxu0 0.0
  %720 = vmatmul.mubr.f32.gmra.mrb[0].mxu0 %v394
  %v721 = vpop.f32.mrb[0].mxu0
  %v722 = vadd.f32 %v369, %v721
  %v723 = vpop.f32.mrb[0].mxu0
  %v724 = vadd.f32 %v369, %v723
  %725 = vdwg.mxu0
  %726 = vmatprep.subr.mxu0 %v38
  %727 = vmatpush1.msra.mxu0 %v37
  %728 = vmatprep.subr.mxu0 %v110
  %729 = vmatpush1.msra.mxu0 %v109
  %730 = vmatprep.subr.mxu0 %v182
  %731 = vmatpush1.msra.mxu0 %v181
  %732 = vmatprep.subr.mxu0 %v407
  %733 = vmatpush1.msra.mxu0 %v404
  %734 = vmatprep.subr.mxu0 0.0
  %735 = vmatpush1.msra.mxu0 0.0
  %736 = vmatprep.subr.mxu0 0.0
  %737 = vmatpush1.msra.mxu0 0.0
  %738 = vmatprep.subr.mxu0 0.0
  %739 = vmatpush1.msra.mxu0 0.0
  %740 = vmatprep.subr.mxu0 0.0
  %741 = vmatpush1.msra.mxu0 0.0
  %742 = vmatprep.subr.mxu0 0.0
  %743 = vmatpush1.msra.mxu0 0.0
  %744 = vmatprep.subr.mxu0 0.0
  %745 = vmatpush1.msra.mxu0 0.0
  %746 = vmatprep.subr.mxu0 0.0
  %747 = vmatpush1.msra.mxu0 0.0
  %748 = vmatprep.subr.mxu0 0.0
  %749 = vmatpush1.msra.mxu0 0.0
  %750 = vmatprep.subr.mxu0 0.0
  %751 = vmatpush1.msra.mxu0 0.0
  %752 = vmatprep.subr.mxu0 0.0
  %753 = vmatpush1.msra.mxu0 0.0
  %754 = vmatprep.subr.mxu0 0.0
  %755 = vmatpush1.msra.mxu0 0.0
  %756 = vmatprep.subr.mxu0 0.0
  %757 = vmatpush1.msra.mxu0 0.0
  %758 = vmatprep.subr.mxu0 0.0
  %759 = vmatpush1.msra.mxu0 0.0
  %760 = vmatprep.subr.mxu0 0.0
  %761 = vmatpush1.msra.mxu0 0.0
  %762 = vmatprep.subr.mxu0 0.0
  %763 = vmatpush1.msra.mxu0 0.0
  %764 = vmatprep.subr.mxu0 0.0
  %765 = vmatpush1.msra.mxu0 0.0
  %766 = vmatprep.subr.mxu0 0.0
  %767 = vmatpush1.msra.mxu0 0.0
  %768 = vmatprep.subr.mxu0 0.0
  %769 = vmatpush1.msra.mxu0 0.0
  %770 = vmatprep.subr.mxu0 0.0
  %771 = vmatpush1.msra.mxu0 0.0
  %772 = vmatprep.subr.mxu0 0.0
  %773 = vmatpush1.msra.mxu0 0.0
  %774 = vmatprep.subr.mxu0 0.0
  %775 = vmatpush1.msra.mxu0 0.0
  %776 = vmatprep.subr.mxu0 0.0
  %777 = vmatpush1.msra.mxu0 0.0
  %778 = vmatprep.subr.mxu0 0.0
  %779 = vmatpush1.msra.mxu0 0.0
  %780 = vmatprep.subr.mxu0 0.0
  %781 = vmatpush1.msra.mxu0 0.0
  %782 = vmatprep.subr.mxu0 0.0
  %783 = vmatpush1.msra.mxu0 0.0
  %784 = vmatprep.subr.mxu0 0.0
  %785 = vmatpush1.msra.mxu0 0.0
  %786 = vmatprep.subr.mxu0 0.0
  %787 = vmatpush1.msra.mxu0 0.0
  %788 = vmatprep.subr.mxu0 0.0
  %789 = vmatpush1.msra.mxu0 0.0
  %790 = vmatprep.mubr.f32.mxu0 0.0
  %791 = vmatmul.mubr.f32.gmra.mrb[0].mxu0 %v373
  %v792 = vpop.f32.mrb[0].mxu0
  %v793 = vadd.f32 %v334, %v792
  %v794 = vpop.f32.mrb[0].mxu0
  %v795 = vadd.f32 %v334, %v794
  %796 = vmatprep.mubr.f32.mxu0 0.0
  %797 = vmatmul.mubr.f32.gmra.mrb[0].mxu0 %v376
  %v798 = vpop.f32.mrb[0].mxu0
  %v799 = vadd.f32 %v339, %v798
  %v800 = vpop.f32.mrb[0].mxu0
  %v801 = vadd.f32 %v339, %v800
  %802 = vmatprep.mubr.f32.mxu0 0.0
  %803 = vmatmul.mubr.f32.gmra.mrb[0].mxu0 %v379
  %v804 = vpop.f32.mrb[0].mxu0
  %v805 = vadd.f32 %v344, %v804
  %v806 = vpop.f32.mrb[0].mxu0
  %v807 = vadd.f32 %v344, %v806
  %808 = vmatprep.mubr.f32.mxu0 0.0
  %809 = vmatmul.mubr.f32.gmra.mrb[0].mxu0 %v382
  %v810 = vpop.f32.mrb[0].mxu0
  %v811 = vadd.f32 %v349, %v810
  %v812 = vpop.f32.mrb[0].mxu0
  %v813 = vadd.f32 %v349, %v812
  %814 = vmatprep.mubr.f32.mxu0 0.0
  %815 = vmatmul.mubr.f32.gmra.mrb[0].mxu0 %v385
  %v816 = vpop.f32.mrb[0].mxu0
  %v817 = vadd.f32 %v354, %v816
  %v818 = vpop.f32.mrb[0].mxu0
  %v819 = vadd.f32 %v354, %v818
  %820 = vmatprep.mubr.f32.mxu0 0.0
  %821 = vmatmul.mubr.f32.gmra.mrb[0].mxu0 %v388
  %v822 = vpop.f32.mrb[0].mxu0
  %v823 = vadd.f32 %v359, %v822
  %v824 = vpop.f32.mrb[0].mxu0
  %v825 = vadd.f32 %v359, %v824
  %826 = vmatprep.mubr.f32.mxu0 0.0
  %827 = vmatmul.mubr.f32.gmra.mrb[0].mxu0 %v391
  %v828 = vpop.f32.mrb[0].mxu0
  %v829 = vadd.f32 %v364, %v828
  %v830 = vpop.f32.mrb[0].mxu0
  %v831 = vadd.f32 %v364, %v830
  %832 = vmatprep.mubr.f32.mxu0 0.0
  %833 = vmatmul.mubr.f32.gmra.mrb[0].mxu0 %v394
  %v834 = vpop.f32.mrb[0].mxu0
  %v835 = vadd.f32 %v369, %v834
  %v836 = vpop.f32.mrb[0].mxu0
  %v837 = vadd.f32 %v369, %v836
  %838 = vdwg.mxu0
  %839 = vmatprep.subr.mxu0 %v40
  %840 = vmatpush1.msra.mxu0 %v39
  %841 = vmatprep.subr.mxu0 %v112
  %842 = vmatpush1.msra.mxu0 %v111
  %843 = vmatprep.subr.mxu0 %v184
  %844 = vmatpush1.msra.mxu0 %v183
  %845 = vmatprep.subr.mxu0 %v413
  %846 = vmatpush1.msra.mxu0 %v410
  %847 = vmatprep.subr.mxu0 0.0
  %848 = vmatpush1.msra.mxu0 0.0
  %849 = vmatprep.subr.mxu0 0.0
  %850 = vmatpush1.msra.mxu0 0.0
  %851 = vmatprep.subr.mxu0 0.0
  %852 = vmatpush1.msra.mxu0 0.0
  %853 = vmatprep.subr.mxu0 0.0
  %854 = vmatpush1.msra.mxu0 0.0
  %855 = vmatprep.subr.mxu0 0.0
  %856 = vmatpush1.msra.mxu0 0.0
  %857 = vmatprep.subr.mxu0 0.0
  %858 = vmatpush1.msra.mxu0 0.0
  %859 = vmatprep.subr.mxu0 0.0
  %860 = vmatpush1.msra.mxu0 0.0
  %861 = vmatprep.subr.mxu0 0.0
  %862 = vmatpush1.msra.mxu0 0.0
  %863 = vmatprep.subr.mxu0 0.0
  %864 = vmatpush1.msra.mxu0 0.0
  %865 = vmatprep.subr.mxu0 0.0
  %866 = vmatpush1.msra.mxu0 0.0
  %867 = vmatprep.subr.mxu0 0.0
  %868 = vmatpush1.msra.mxu0 0.0
  %869 = vmatprep.subr.mxu0 0.0
  %870 = vmatpush1.msra.mxu0 0.0
  %871 = vmatprep.subr.mxu0 0.0
  %872 = vmatpush1.msra.mxu0 0.0
  %873 = vmatprep.subr.mxu0 0.0
  %874 = vmatpush1.msra.mxu0 0.0
  %875 = vmatprep.subr.mxu0 0.0
  %876 = vmatpush1.msra.mxu0 0.0
  %877 = vmatprep.subr.mxu0 0.0
  %878 = vmatpush1.msra.mxu0 0.0
  %879 = vmatprep.subr.mxu0 0.0
  %880 = vmatpush1.msra.mxu0 0.0
  %881 = vmatprep.subr.mxu0 0.0
  %882 = vmatpush1.msra.mxu0 0.0
  %883 = vmatprep.subr.mxu0 0.0
  %884 = vmatpush1.msra.mxu0 0.0
  %885 = vmatprep.subr.mxu0 0.0
  %886 = vmatpush1.msra.mxu0 0.0
  %887 = vmatprep.subr.mxu0 0.0
  %888 = vmatpush1.msra.mxu0 0.0
  %889 = vmatprep.subr.mxu0 0.0
  %890 = vmatpush1.msra.mxu0 0.0
  %891 = vmatprep.subr.mxu0 0.0
  %892 = vmatpush1.msra.mxu0 0.0
  %893 = vmatprep.subr.mxu0 0.0
  %894 = vmatpush1.msra.mxu0 0.0
  %895 = vmatprep.subr.mxu0 0.0
  %896 = vmatpush1.msra.mxu0 0.0
  %897 = vmatprep.subr.mxu0 0.0
  %898 = vmatpush1.msra.mxu0 0.0
  %899 = vmatprep.subr.mxu0 0.0
  %900 = vmatpush1.msra.mxu0 0.0
  %901 = vmatprep.subr.mxu0 0.0
  %902 = vmatpush1.msra.mxu0 0.0
  %903 = vmatprep.mubr.f32.mxu0 0.0
  %904 = vmatmul.mubr.f32.gmra.mrb[0].mxu0 %v373
  %v905 = vpop.f32.mrb[0].mxu0
  %v906 = vadd.f32 %v334, %v905
  %v907 = vpop.f32.mrb[0].mxu0
  %v908 = vadd.f32 %v334, %v907
  %909 = vmatprep.mubr.f32.mxu0 0.0
  %910 = vmatmul.mubr.f32.gmra.mrb[0].mxu0 %v376
  %v911 = vpop.f32.mrb[0].mxu0
  %v912 = vadd.f32 %v339, %v911
  %v913 = vpop.f32.mrb[0].mxu0
  %v914 = vadd.f32 %v339, %v913
  %915 = vmatprep.mubr.f32.mxu0 0.0
  %916 = vmatmul.mubr.f32.gmra.mrb[0].mxu0 %v379
  %v917 = vpop.f32.mrb[0].mxu0
  %v918 = vadd.f32 %v344, %v917
  %v919 = vpop.f32.mrb[0].mxu0
  %v920 = vadd.f32 %v344, %v919
  %921 = vmatprep.mubr.f32.mxu0 0.0
  %922 = vmatmul.mubr.f32.gmra.mrb[0].mxu0 %v382
  %v923 = vpop.f32.mrb[0].mxu0
  %v924 = vadd.f32 %v349, %v923
  %v925 = vpop.f32.mrb[0].mxu0
  %v926 = vadd.f32 %v349, %v925
  %927 = vmatprep.mubr.f32.mxu0 0.0
  %928 = vmatmul.mubr.f32.gmra.mrb[0].mxu0 %v385
  %v929 = vpop.f32.mrb[0].mxu0
  %v930 = vadd.f32 %v354, %v929
  %v931 = vpop.f32.mrb[0].mxu0
  %v932 = vadd.f32 %v354, %v931
  %933 = vmatprep.mubr.f32.mxu0 0.0
  %934 = vmatmul.mubr.f32.gmra.mrb[0].mxu0 %v388
  %v935 = vpop.f32.mrb[0].mxu0
  %v936 = vadd.f32 %v359, %v935
  %v937 = vpop.f32.mrb[0].mxu0
  %v938 = vadd.f32 %v359, %v937
  %939 = vmatprep.mubr.f32.mxu0 0.0
  %940 = vmatmul.mubr.f32.gmra.mrb[0].mxu0 %v391
  %v941 = vpop.f32.mrb[0].mxu0
  %v942 = vadd.f32 %v364, %v941
  %v943 = vpop.f32.mrb[0].mxu0
  %v944 = vadd.f32 %v364, %v943
  %945 = vmatprep.mubr.f32.mxu0 0.0
  %946 = vmatmul.mubr.f32.gmra.mrb[0].mxu0 %v394
  %v947 = vpop.f32.mrb[0].mxu0
  %v948 = vadd.f32 %v369, %v947
  %v949 = vpop.f32.mrb[0].mxu0
  %v950 = vadd.f32 %v369, %v949
  %951 = vdwg.mxu0
  %952 = vmatprep.subr.mxu0 %v42
  %953 = vmatpush1.msra.mxu0 %v41
  %954 = vmatprep.subr.mxu0 %v114
  %955 = vmatpush1.msra.mxu0 %v113
  %956 = vmatprep.subr.mxu0 %v186
  %957 = vmatpush1.msra.mxu0 %v185
  %958 = vmatprep.subr.mxu0 %v419
  %959 = vmatpush1.msra.mxu0 %v416
  %960 = vmatprep.subr.mxu0 0.0
  %961 = vmatpush1.msra.mxu0 0.0
  %962 = vmatprep.subr.mxu0 0.0
  %963 = vmatpush1.msra.mxu0 0.0
  %964 = vmatprep.subr.mxu0 0.0
  %965 = vmatpush1.msra.mxu0 0.0
  %966 = vmatprep.subr.mxu0 0.0
  %967 = vmatpush1.msra.mxu0 0.0
  %968 = vmatprep.subr.mxu0 0.0
  %969 = vmatpush1.msra.mxu0 0.0
  %970 = vmatprep.subr.mxu0 0.0
  %971 = vmatpush1.msra.mxu0 0.0
  %972 = vmatprep.subr.mxu0 0.0
  %973 = vmatpush1.msra.mxu0 0.0
  %974 = vmatprep.subr.mxu0 0.0
  %975 = vmatpush1.msra.mxu0 0.0
  %976 = vmatprep.subr.mxu0 0.0
  %977 = vmatpush1.msra.mxu0 0.0
  %978 = vmatprep.subr.mxu0 0.0
  %979 = vmatpush1.msra.mxu0 0.0
  %980 = vmatprep.subr.mxu0 0.0
  %981 = vmatpush1.msra.mxu0 0.0
  %982 = vmatprep.subr.mxu0 0.0
  %983 = vmatpush1.msra.mxu0 0.0
  %984 = vmatprep.subr.mxu0 0.0
  %985 = vmatpush1.msra.mxu0 0.0
  %986 = vmatprep.subr.mxu0 0.0
  %987 = vmatpush1.msra.mxu0 0.0
  %988 = vmatprep.subr.mxu0 0.0
  %989 = vmatpush1.msra.mxu0 0.0
  %990 = vmatprep.subr.mxu0 0.0
  %991 = vmatpush1.msra.mxu0 0.0
  %992 = vmatprep.subr.mxu0 0.0
  %993 = vmatpush1.msra.mxu0 0.0
  %994 = vmatprep.subr.mxu0 0.0
  %995 = vmatpush1.msra.mxu0 0.0
  %996 = vmatprep.subr.mxu0 0.0
  %997 = vmatpush1.msra.mxu0 0.0
  %998 = vmatprep.subr.mxu0 0.0
  %999 = vmatpush1.msra.mxu0 0.0
  %1000 = vmatprep.subr.mxu0 0.0
  %1001 = vmatpush1.msra.mxu0 0.0
  %1002 = vmatprep.subr.mxu0 0.0
  %1003 = vmatpush1.msra.mxu0 0.0
  %1004 = vmatprep.subr.mxu0 0.0
  %1005 = vmatpush1.msra.mxu0 0.0
  %1006 = vmatprep.subr.mxu0 0.0
  %1007 = vmatpush1.msra.mxu0 0.0
  %1008 = vmatprep.subr.mxu0 0.0
  %1009 = vmatpush1.msra.mxu0 0.0
  %1010 = vmatprep.subr.mxu0 0.0
  %1011 = vmatpush1.msra.mxu0 0.0
  %1012 = vmatprep.subr.mxu0 0.0
  %1013 = vmatpush1.msra.mxu0 0.0
  %1014 = vmatprep.subr.mxu0 0.0
  %1015 = vmatpush1.msra.mxu0 0.0
  %1016 = vmatprep.mubr.f32.mxu0 0.0
  %1017 = vmatmul.mubr.f32.gmra.mrb[0].mxu0 %v373
  %v1018 = vpop.f32.mrb[0].mxu0
  %v1019 = vadd.f32 %v334, %v1018
  %v1020 = vpop.f32.mrb[0].mxu0
  %v1021 = vadd.f32 %v334, %v1020
  %1022 = vmatprep.mubr.f32.mxu0 0.0
  %1023 = vmatmul.mubr.f32.gmra.mrb[0].mxu0 %v376
  %v1024 = vpop.f32.mrb[0].mxu0
  %v1025 = vadd.f32 %v339, %v1024
  %v1026 = vpop.f32.mrb[0].mxu0
  %v1027 = vadd.f32 %v339, %v1026
  %1028 = vmatprep.mubr.f32.mxu0 0.0
  %1029 = vmatmul.mubr.f32.gmra.mrb[0].mxu0 %v379
  %v1030 = vpop.f32.mrb[0].mxu0
  %v1031 = vadd.f32 %v344, %v1030
  %v1032 = vpop.f32.mrb[0].mxu0
  %v1033 = vadd.f32 %v344, %v1032
  %1034 = vmatprep.mubr.f32.mxu0 0.0
  %1035 = vmatmul.mubr.f32.gmra.mrb[0].mxu0 %v382
  %v1036 = vpop.f32.mrb[0].mxu0
  %v1037 = vadd.f32 %v349, %v1036
  %v1038 = vpop.f32.mrb[0].mxu0
  %v1039 = vadd.f32 %v349, %v1038
  %1040 = vmatprep.mubr.f32.mxu0 0.0
  %1041 = vmatmul.mubr.f32.gmra.mrb[0].mxu0 %v385
  %v1042 = vpop.f32.mrb[0].mxu0
  %v1043 = vadd.f32 %v354, %v1042
  %v1044 = vpop.f32.mrb[0].mxu0
  %v1045 = vadd.f32 %v354, %v1044
  %1046 = vmatprep.mubr.f32.mxu0 0.0
  %1047 = vmatmul.mubr.f32.gmra.mrb[0].mxu0 %v388
  %v1048 = vpop.f32.mrb[0].mxu0
  %v1049 = vadd.f32 %v359, %v1048
  %v1050 = vpop.f32.mrb[0].mxu0
  %v1051 = vadd.f32 %v359, %v1050
  %1052 = vmatprep.mubr.f32.mxu0 0.0
  %1053 = vmatmul.mubr.f32.gmra.mrb[0].mxu0 %v391
  %v1054 = vpop.f32.mrb[0].mxu0
  %v1055 = vadd.f32 %v364, %v1054
  %v1056 = vpop.f32.mrb[0].mxu0
  %v1057 = vadd.f32 %v364, %v1056
  %1058 = vmatprep.mubr.f32.mxu0 0.0
  %1059 = vmatmul.mubr.f32.gmra.mrb[0].mxu0 %v394
  %v1060 = vpop.f32.mrb[0].mxu0
  %v1061 = vadd.f32 %v369, %v1060
  %v1062 = vpop.f32.mrb[0].mxu0
  %v1063 = vadd.f32 %v369, %v1062
  %1064 = vdwg.mxu0
  %1065 = vmatprep.subr.mxu0 %v44
  %1066 = vmatpush1.msra.mxu0 %v43
  %1067 = vmatprep.subr.mxu0 %v116
  %1068 = vmatpush1.msra.mxu0 %v115
  %1069 = vmatprep.subr.mxu0 %v188
  %1070 = vmatpush1.msra.mxu0 %v187
  %1071 = vmatprep.subr.mxu0 %v425
  %1072 = vmatpush1.msra.mxu0 %v422
  %1073 = vmatprep.subr.mxu0 0.0
  %1074 = vmatpush1.msra.mxu0 0.0
  %1075 = vmatprep.subr.mxu0 0.0
  %1076 = vmatpush1.msra.mxu0 0.0
  %1077 = vmatprep.subr.mxu0 0.0
  %1078 = vmatpush1.msra.mxu0 0.0
  %1079 = vmatprep.subr.mxu0 0.0
  %1080 = vmatpush1.msra.mxu0 0.0
  %1081 = vmatprep.subr.mxu0 0.0
  %1082 = vmatpush1.msra.mxu0 0.0
  %1083 = vmatprep.subr.mxu0 0.0
  %1084 = vmatpush1.msra.mxu0 0.0
  %1085 = vmatprep.subr.mxu0 0.0
  %1086 = vmatpush1.msra.mxu0 0.0
  %1087 = vmatprep.subr.mxu0 0.0
  %1088 = vmatpush1.msra.mxu0 0.0
  %1089 = vmatprep.subr.mxu0 0.0
  %1090 = vmatpush1.msra.mxu0 0.0
  %1091 = vmatprep.subr.mxu0 0.0
  %1092 = vmatpush1.msra.mxu0 0.0
  %1093 = vmatprep.subr.mxu0 0.0
  %1094 = vmatpush1.msra.mxu0 0.0
  %1095 = vmatprep.subr.mxu0 0.0
  %1096 = vmatpush1.msra.mxu0 0.0
  %1097 = vmatprep.subr.mxu0 0.0
  %1098 = vmatpush1.msra.mxu0 0.0
  %1099 = vmatprep.subr.mxu0 0.0
  %1100 = vmatpush1.msra.mxu0 0.0
  %1101 = vmatprep.subr.mxu0 0.0
  %1102 = vmatpush1.msra.mxu0 0.0
  %1103 = vmatprep.subr.mxu0 0.0
  %1104 = vmatpush1.msra.mxu0 0.0
  %1105 = vmatprep.subr.mxu0 0.0
  %1106 = vmatpush1.msra.mxu0 0.0
  %1107 = vmatprep.subr.mxu0 0.0
  %1108 = vmatpush1.msra.mxu0 0.0
  %1109 = vmatprep.subr.mxu0 0.0
  %1110 = vmatpush1.msra.mxu0 0.0
  %1111 = vmatprep.subr.mxu0 0.0
  %1112 = vmatpush1.msra.mxu0 0.0
  %1113 = vmatprep.subr.mxu0 0.0
  %1114 = vmatpush1.msra.mxu0 0.0
  %1115 = vmatprep.subr.mxu0 0.0
  %1116 = vmatpush1.msra.mxu0 0.0
  %1117 = vmatprep.subr.mxu0 0.0
  %1118 = vmatpush1.msra.mxu0 0.0
  %1119 = vmatprep.subr.mxu0 0.0
  %1120 = vmatpush1.msra.mxu0 0.0
  %1121 = vmatprep.subr.mxu0 0.0
  %1122 = vmatpush1.msra.mxu0 0.0
  %1123 = vmatprep.subr.mxu0 0.0
  %1124 = vmatpush1.msra.mxu0 0.0
  %1125 = vmatprep.subr.mxu0 0.0
  %1126 = vmatpush1.msra.mxu0 0.0
  %1127 = vmatprep.subr.mxu0 0.0
  %1128 = vmatpush1.msra.mxu0 0.0
  %1129 = vmatprep.mubr.f32.mxu0 0.0
  %1130 = vmatmul.mubr.f32.gmra.mrb[0].mxu0 %v373
  %v1131 = vpop.f32.mrb[0].mxu0
  %v1132 = vadd.f32 %v334, %v1131
  %v1133 = vpop.f32.mrb[0].mxu0
  %v1134 = vadd.f32 %v334, %v1133
  %1135 = vmatprep.mubr.f32.mxu0 0.0
  %1136 = vmatmul.mubr.f32.gmra.mrb[0].mxu0 %v376
  %v1137 = vpop.f32.mrb[0].mxu0
  %v1138 = vadd.f32 %v339, %v1137
  %v1139 = vpop.f32.mrb[0].mxu0
  %v1140 = vadd.f32 %v339, %v1139
  %1141 = vmatprep.mubr.f32.mxu0 0.0
  %1142 = vmatmul.mubr.f32.gmra.mrb[0].mxu0 %v379
  %v1143 = vpop.f32.mrb[0].mxu0
  %v1144 = vadd.f32 %v344, %v1143
  %v1145 = vpop.f32.mrb[0].mxu0
  %v1146 = vadd.f32 %v344, %v1145
  %1147 = vmatprep.mubr.f32.mxu0 0.0
  %1148 = vmatmul.mubr.f32.gmra.mrb[0].mxu0 %v382
  %v1149 = vpop.f32.mrb[0].mxu0
  %v1150 = vadd.f32 %v349, %v1149
  %v1151 = vpop.f32.mrb[0].mxu0
  %v1152 = vadd.f32 %v349, %v1151
  %1153 = vmatprep.mubr.f32.mxu0 0.0
  %1154 = vmatmul.mubr.f32.gmra.mrb[0].mxu0 %v385
  %v1155 = vpop.f32.mrb[0].mxu0
  %v1156 = vadd.f32 %v354, %v1155
  %v1157 = vpop.f32.mrb[0].mxu0
  %v1158 = vadd.f32 %v354, %v1157
  %1159 = vmatprep.mubr.f32.mxu0 0.0
  %1160 = vmatmul.mubr.f32.gmra.mrb[0].mxu0 %v388
  %v1161 = vpop.f32.mrb[0].mxu0
  %v1162 = vadd.f32 %v359, %v1161
  %v1163 = vpop.f32.mrb[0].mxu0
  %v1164 = vadd.f32 %v359, %v1163
  %1165 = vmatprep.mubr.f32.mxu0 0.0
  %1166 = vmatmul.mubr.f32.gmra.mrb[0].mxu0 %v391
  %v1167 = vpop.f32.mrb[0].mxu0
  %v1168 = vadd.f32 %v364, %v1167
  %v1169 = vpop.f32.mrb[0].mxu0
  %v1170 = vadd.f32 %v364, %v1169
  %1171 = vmatprep.mubr.f32.mxu0 0.0
  %1172 = vmatmul.mubr.f32.gmra.mrb[0].mxu0 %v394
  %v1173 = vpop.f32.mrb[0].mxu0
  %v1174 = vadd.f32 %v369, %v1173
  %v1175 = vpop.f32.mrb[0].mxu0
  %v1176 = vadd.f32 %v369, %v1175
  %1177 = vdwg.mxu0
  %1178 = vmatprep.subr.mxu0 %v46
  %1179 = vmatpush1.msra.mxu0 %v45
  %1180 = vmatprep.subr.mxu0 %v118
  %1181 = vmatpush1.msra.mxu0 %v117
  %1182 = vmatprep.subr.mxu0 %v190
  %1183 = vmatpush1.msra.mxu0 %v189
  %1184 = vmatprep.subr.mxu0 %v431
  %1185 = vmatpush1.msra.mxu0 %v428
  %1186 = vmatprep.subr.mxu0 0.0
  %1187 = vmatpush1.msra.mxu0 0.0
  %1188 = vmatprep.subr.mxu0 0.0
  %1189 = vmatpush1.msra.mxu0 0.0
  %1190 = vmatprep.subr.mxu0 0.0
  %1191 = vmatpush1.msra.mxu0 0.0
  %1192 = vmatprep.subr.mxu0 0.0
  %1193 = vmatpush1.msra.mxu0 0.0
  %1194 = vmatprep.subr.mxu0 0.0
  %1195 = vmatpush1.msra.mxu0 0.0
  %1196 = vmatprep.subr.mxu0 0.0
  %1197 = vmatpush1.msra.mxu0 0.0
  %1198 = vmatprep.subr.mxu0 0.0
  %1199 = vmatpush1.msra.mxu0 0.0
  %1200 = vmatprep.subr.mxu0 0.0
  %1201 = vmatpush1.msra.mxu0 0.0
  %1202 = vmatprep.subr.mxu0 0.0
  %1203 = vmatpush1.msra.mxu0 0.0
  %1204 = vmatprep.subr.mxu0 0.0
  %1205 = vmatpush1.msra.mxu0 0.0
  %1206 = vmatprep.subr.mxu0 0.0
  %1207 = vmatpush1.msra.mxu0 0.0
  %1208 = vmatprep.subr.mxu0 0.0
  %1209 = vmatpush1.msra.mxu0 0.0
  %1210 = vmatprep.subr.mxu0 0.0
  %1211 = vmatpush1.msra.mxu0 0.0
  %1212 = vmatprep.subr.mxu0 0.0
  %1213 = vmatpush1.msra.mxu0 0.0
  %1214 = vmatprep.subr.mxu0 0.0
  %1215 = vmatpush1.msra.mxu0 0.0
  %1216 = vmatprep.subr.mxu0 0.0
  %1217 = vmatpush1.msra.mxu0 0.0
  %1218 = vmatprep.subr.mxu0 0.0
  %1219 = vmatpush1.msra.mxu0 0.0
  %1220 = vmatprep.subr.mxu0 0.0
  %1221 = vmatpush1.msra.mxu0 0.0
  %1222 = vmatprep.subr.mxu0 0.0
  %1223 = vmatpush1.msra.mxu0 0.0
  %1224 = vmatprep.subr.mxu0 0.0
  %1225 = vmatpush1.msra.mxu0 0.0
  %1226 = vmatprep.subr.mxu0 0.0
  %1227 = vmatpush1.msra.mxu0 0.0
  %1228 = vmatprep.subr.mxu0 0.0
  %1229 = vmatpush1.msra.mxu0 0.0
  %1230 = vmatprep.subr.mxu0 0.0
  %1231 = vmatpush1.msra.mxu0 0.0
  %1232 = vmatprep.subr.mxu0 0.0
  %1233 = vmatpush1.msra.mxu0 0.0
  %1234 = vmatprep.subr.mxu0 0.0
  %1235 = vmatpush1.msra.mxu0 0.0
  %1236 = vmatprep.subr.mxu0 0.0
  %1237 = vmatpush1.msra.mxu0 0.0
  %1238 = vmatprep.subr.mxu0 0.0
  %1239 = vmatpush1.msra.mxu0 0.0
  %1240 = vmatprep.subr.mxu0 0.0
  %1241 = vmatpush1.msra.mxu0 0.0
  %1242 = vmatprep.mubr.f32.mxu0 0.0
  %1243 = vmatmul.mubr.f32.gmra.mrb[0].mxu0 %v373
  %v1244 = vpop.f32.mrb[0].mxu0
  %v1245 = vadd.f32 %v334, %v1244
  %v1246 = vpop.f32.mrb[0].mxu0
  %v1247 = vadd.f32 %v334, %v1246
  %1248 = vmatprep.mubr.f32.mxu0 0.0
  %1249 = vmatmul.mubr.f32.gmra.mrb[0].mxu0 %v376
  %v1250 = vpop.f32.mrb[0].mxu0
  %v1251 = vadd.f32 %v339, %v1250
  %v1252 = vpop.f32.mrb[0].mxu0
  %v1253 = vadd.f32 %v339, %v1252
  %1254 = vmatprep.mubr.f32.mxu0 0.0
  %1255 = vmatmul.mubr.f32.gmra.mrb[0].mxu0 %v379
  %v1256 = vpop.f32.mrb[0].mxu0
  %v1257 = vadd.f32 %v344, %v1256
  %v1258 = vpop.f32.mrb[0].mxu0
  %v1259 = vadd.f32 %v344, %v1258
  %1260 = vmatprep.mubr.f32.mxu0 0.0
  %1261 = vmatmul.mubr.f32.gmra.mrb[0].mxu0 %v382
  %v1262 = vpop.f32.mrb[0].mxu0
  %v1263 = vadd.f32 %v349, %v1262
  %v1264 = vpop.f32.mrb[0].mxu0
  %v1265 = vadd.f32 %v349, %v1264
  %1266 = vmatprep.mubr.f32.mxu0 0.0
  %1267 = vmatmul.mubr.f32.gmra.mrb[0].mxu0 %v385
  %v1268 = vpop.f32.mrb[0].mxu0
  %v1269 = vadd.f32 %v354, %v1268
  %v1270 = vpop.f32.mrb[0].mxu0
  %v1271 = vadd.f32 %v354, %v1270
  %1272 = vmatprep.mubr.f32.mxu0 0.0
  %1273 = vmatmul.mubr.f32.gmra.mrb[0].mxu0 %v388
  %v1274 = vpop.f32.mrb[0].mxu0
  %v1275 = vadd.f32 %v359, %v1274
  %v1276 = vpop.f32.mrb[0].mxu0
  %v1277 = vadd.f32 %v359, %v1276
  %1278 = vmatprep.mubr.f32.mxu0 0.0
  %1279 = vmatmul.mubr.f32.gmra.mrb[0].mxu0 %v391
  %v1280 = vpop.f32.mrb[0].mxu0
  %v1281 = vadd.f32 %v364, %v1280
  %v1282 = vpop.f32.mrb[0].mxu0
  %v1283 = vadd.f32 %v364, %v1282
  %1284 = vmatprep.mubr.f32.mxu0 0.0
  %1285 = vmatmul.mubr.f32.gmra.mrb[0].mxu0 %v394
  %v1286 = vpop.f32.mrb[0].mxu0
  %v1287 = vadd.f32 %v369, %v1286
  %v1288 = vpop.f32.mrb[0].mxu0
  %v1289 = vadd.f32 %v369, %v1288
  %1290 = vdwg.mxu0
  %1291 = vmatprep.subr.mxu0 %v48
  %1292 = vmatpush1.msra.mxu0 %v47
  %1293 = vmatprep.subr.mxu0 %v120
  %1294 = vmatpush1.msra.mxu0 %v119
  %1295 = vmatprep.subr.mxu0 %v192
  %1296 = vmatpush1.msra.mxu0 %v191
  %1297 = vmatprep.subr.mxu0 %v437
  %1298 = vmatpush1.msra.mxu0 %v434
  %1299 = vmatprep.subr.mxu0 0.0
  %1300 = vmatpush1.msra.mxu0 0.0
  %1301 = vmatprep.subr.mxu0 0.0
  %1302 = vmatpush1.msra.mxu0 0.0
  %1303 = vmatprep.subr.mxu0 0.0
  %1304 = vmatpush1.msra.mxu0 0.0
  %1305 = vmatprep.subr.mxu0 0.0
  %1306 = vmatpush1.msra.mxu0 0.0
  %1307 = vmatprep.subr.mxu0 0.0
  %1308 = vmatpush1.msra.mxu0 0.0
  %1309 = vmatprep.subr.mxu0 0.0
  %1310 = vmatpush1.msra.mxu0 0.0
  %1311 = vmatprep.subr.mxu0 0.0
  %1312 = vmatpush1.msra.mxu0 0.0
  %1313 = vmatprep.subr.mxu0 0.0
  %1314 = vmatpush1.msra.mxu0 0.0
  %1315 = vmatprep.subr.mxu0 0.0
  %1316 = vmatpush1.msra.mxu0 0.0
  %1317 = vmatprep.subr.mxu0 0.0
  %1318 = vmatpush1.msra.mxu0 0.0
  %1319 = vmatprep.subr.mxu0 0.0
  %1320 = vmatpush1.msra.mxu0 0.0
  %1321 = vmatprep.subr.mxu0 0.0
  %1322 = vmatpush1.msra.mxu0 0.0
  %1323 = vmatprep.subr.mxu0 0.0
  %1324 = vmatpush1.msra.mxu0 0.0
  %1325 = vmatprep.subr.mxu0 0.0
  %1326 = vmatpush1.msra.mxu0 0.0
  %1327 = vmatprep.subr.mxu0 0.0
  %1328 = vmatpush1.msra.mxu0 0.0
  %1329 = vmatprep.subr.mxu0 0.0
  %1330 = vmatpush1.msra.mxu0 0.0
  %1331 = vmatprep.subr.mxu0 0.0
  %1332 = vmatpush1.msra.mxu0 0.0
  %1333 = vmatprep.subr.mxu0 0.0
  %1334 = vmatpush1.msra.mxu0 0.0
  %1335 = vmatprep.subr.mxu0 0.0
  %1336 = vmatpush1.msra.mxu0 0.0
  %1337 = vmatprep.subr.mxu0 0.0
  %1338 = vmatpush1.msra.mxu0 0.0
  %1339 = vmatprep.subr.mxu0 0.0
  %1340 = vmatpush1.msra.mxu0 0.0
  %1341 = vmatprep.subr.mxu0 0.0
  %1342 = vmatpush1.msra.mxu0 0.0
  %1343 = vmatprep.subr.mxu0 0.0
  %1344 = vmatpush1.msra.mxu0 0.0
  %1345 = vmatprep.subr.mxu0 0.0
  %1346 = vmatpush1.msra.mxu0 0.0
  %1347 = vmatprep.subr.mxu0 0.0
  %1348 = vmatpush1.msra.mxu0 0.0
  %1349 = vmatprep.subr.mxu0 0.0
  %1350 = vmatpush1.msra.mxu0 0.0
  %1351 = vmatprep.subr.mxu0 0.0
  %1352 = vmatpush1.msra.mxu0 0.0
  %1353 = vmatprep.subr.mxu0 0.0
  %1354 = vmatpush1.msra.mxu0 0.0
  %1355 = vmatprep.mubr.f32.mxu0 0.0
  %1356 = vmatmul.mubr.f32.gmra.mrb[0].mxu0 %v373
  %v1357 = vpop.f32.mrb[0].mxu0
  %v1358 = vadd.f32 %v334, %v1357
  %v1359 = vpop.f32.mrb[0].mxu0
  %v1360 = vadd.f32 %v334, %v1359
  %1361 = vmatprep.mubr.f32.mxu0 0.0
  %1362 = vmatmul.mubr.f32.gmra.mrb[0].mxu0 %v376
  %v1363 = vpop.f32.mrb[0].mxu0
  %v1364 = vadd.f32 %v339, %v1363
  %v1365 = vpop.f32.mrb[0].mxu0
  %v1366 = vadd.f32 %v339, %v1365
  %1367 = vmatprep.mubr.f32.mxu0 0.0
  %1368 = vmatmul.mubr.f32.gmra.mrb[0].mxu0 %v379
  %v1369 = vpop.f32.mrb[0].mxu0
  %v1370 = vadd.f32 %v344, %v1369
  %v1371 = vpop.f32.mrb[0].mxu0
  %v1372 = vadd.f32 %v344, %v1371
  %1373 = vmatprep.mubr.f32.mxu0 0.0
  %1374 = vmatmul.mubr.f32.gmra.mrb[0].mxu0 %v382
  %v1375 = vpop.f32.mrb[0].mxu0
  %v1376 = vadd.f32 %v349, %v1375
  %v1377 = vpop.f32.mrb[0].mxu0
  %v1378 = vadd.f32 %v349, %v1377
  %1379 = vmatprep.mubr.f32.mxu0 0.0
  %1380 = vmatmul.mubr.f32.gmra.mrb[0].mxu0 %v385
  %v1381 = vpop.f32.mrb[0].mxu0
  %v1382 = vadd.f32 %v354, %v1381
  %v1383 = vpop.f32.mrb[0].mxu0
  %v1384 = vadd.f32 %v354, %v1383
  %1385 = vmatprep.mubr.f32.mxu0 0.0
  %1386 = vmatmul.mubr.f32.gmra.mrb[0].mxu0 %v388
  %v1387 = vpop.f32.mrb[0].mxu0
  %v1388 = vadd.f32 %v359, %v1387
  %v1389 = vpop.f32.mrb[0].mxu0
  %v1390 = vadd.f32 %v359, %v1389
  %1391 = vmatprep.mubr.f32.mxu0 0.0
  %1392 = vmatmul.mubr.f32.gmra.mrb[0].mxu0 %v391
  %v1393 = vpop.f32.mrb[0].mxu0
  %v1394 = vadd.f32 %v364, %v1393
  %v1395 = vpop.f32.mrb[0].mxu0
  %v1396 = vadd.f32 %v364, %v1395
  %1397 = vmatprep.mubr.f32.mxu0 0.0
  %1398 = vmatmul.mubr.f32.gmra.mrb[0].mxu0 %v394
  %v1399 = vpop.f32.mrb[0].mxu0
  %v1400 = vadd.f32 %v369, %v1399
  %v1401 = vpop.f32.mrb[0].mxu0
  %v1402 = vadd.f32 %v369, %v1401
  %1403 = vdwg.mxu0
  %1404 = vmatprep.subr.mxu0 %v50
  %1405 = vmatpush1.msra.mxu0 %v49
  %1406 = vmatprep.subr.mxu0 %v122
  %1407 = vmatpush1.msra.mxu0 %v121
  %1408 = vmatprep.subr.mxu0 %v194
  %1409 = vmatpush1.msra.mxu0 %v193
  %1410 = vmatprep.subr.mxu0 %v443
  %1411 = vmatpush1.msra.mxu0 %v440
  %1412 = vmatprep.subr.mxu0 0.0
  %1413 = vmatpush1.msra.mxu0 0.0
  %1414 = vmatprep.subr.mxu0 0.0
  %1415 = vmatpush1.msra.mxu0 0.0
  %1416 = vmatprep.subr.mxu0 0.0
  %1417 = vmatpush1.msra.mxu0 0.0
  %1418 = vmatprep.subr.mxu0 0.0
  %1419 = vmatpush1.msra.mxu0 0.0
  %1420 = vmatprep.subr.mxu0 0.0
  %1421 = vmatpush1.msra.mxu0 0.0
  %1422 = vmatprep.subr.mxu0 0.0
  %1423 = vmatpush1.msra.mxu0 0.0
  %1424 = vmatprep.subr.mxu0 0.0
  %1425 = vmatpush1.msra.mxu0 0.0
  %1426 = vmatprep.subr.mxu0 0.0
  %1427 = vmatpush1.msra.mxu0 0.0
  %1428 = vmatprep.subr.mxu0 0.0
  %1429 = vmatpush1.msra.mxu0 0.0
  %1430 = vmatprep.subr.mxu0 0.0
  %1431 = vmatpush1.msra.mxu0 0.0
  %1432 = vmatprep.subr.mxu0 0.0
  %1433 = vmatpush1.msra.mxu0 0.0
  %1434 = vmatprep.subr.mxu0 0.0
  %1435 = vmatpush1.msra.mxu0 0.0
  %1436 = vmatprep.subr.mxu0 0.0
  %1437 = vmatpush1.msra.mxu0 0.0
  %1438 = vmatprep.subr.mxu0 0.0
  %1439 = vmatpush1.msra.mxu0 0.0
  %1440 = vmatprep.subr.mxu0 0.0
  %1441 = vmatpush1.msra.mxu0 0.0
  %1442 = vmatprep.subr.mxu0 0.0
  %1443 = vmatpush1.msra.mxu0 0.0
  %1444 = vmatprep.subr.mxu0 0.0
  %1445 = vmatpush1.msra.mxu0 0.0
  %1446 = vmatprep.subr.mxu0 0.0
  %1447 = vmatpush1.msra.mxu0 0.0
  %1448 = vmatprep.subr.mxu0 0.0
  %1449 = vmatpush1.msra.mxu0 0.0
  %1450 = vmatprep.subr.mxu0 0.0
  %1451 = vmatpush1.msra.mxu0 0.0
  %1452 = vmatprep.subr.mxu0 0.0
  %1453 = vmatpush1.msra.mxu0 0.0
  %1454 = vmatprep.subr.mxu0 0.0
  %1455 = vmatpush1.msra.mxu0 0.0
  %1456 = vmatprep.subr.mxu0 0.0
  %1457 = vmatpush1.msra.mxu0 0.0
  %1458 = vmatprep.subr.mxu0 0.0
  %1459 = vmatpush1.msra.mxu0 0.0
  %1460 = vmatprep.subr.mxu0 0.0
  %1461 = vmatpush1.msra.mxu0 0.0
  %1462 = vmatprep.subr.mxu0 0.0
  %1463 = vmatpush1.msra.mxu0 0.0
  %1464 = vmatprep.subr.mxu0 0.0
  %1465 = vmatpush1.msra.mxu0 0.0
  %1466 = vmatprep.subr.mxu0 0.0
  %1467 = vmatpush1.msra.mxu0 0.0
  %1468 = vmatprep.mubr.f32.mxu0 0.0
  %1469 = vmatmul.mubr.f32.gmra.mrb[0].mxu0 %v373
  %v1470 = vpop.f32.mrb[0].mxu0
  %v1471 = vadd.f32 %v334, %v1470
  %v1472 = vpop.f32.mrb[0].mxu0
  %v1473 = vadd.f32 %v334, %v1472
  %1474 = vmatprep.mubr.f32.mxu0 0.0
  %1475 = vmatmul.mubr.f32.gmra.mrb[0].mxu0 %v376
  %v1476 = vpop.f32.mrb[0].mxu0
  %v1477 = vadd.f32 %v339, %v1476
  %v1478 = vpop.f32.mrb[0].mxu0
  %v1479 = vadd.f32 %v339, %v1478
  %1480 = vmatprep.mubr.f32.mxu0 0.0
  %1481 = vmatmul.mubr.f32.gmra.mrb[0].mxu0 %v379
  %v1482 = vpop.f32.mrb[0].mxu0
  %v1483 = vadd.f32 %v344, %v1482
  %v1484 = vpop.f32.mrb[0].mxu0
  %v1485 = vadd.f32 %v344, %v1484
  %1486 = vmatprep.mubr.f32.mxu0 0.0
  %1487 = vmatmul.mubr.f32.gmra.mrb[0].mxu0 %v382
  %v1488 = vpop.f32.mrb[0].mxu0
  %v1489 = vadd.f32 %v349, %v1488
  %v1490 = vpop.f32.mrb[0].mxu0
  %v1491 = vadd.f32 %v349, %v1490
  %1492 = vmatprep.mubr.f32.mxu0 0.0
  %1493 = vmatmul.mubr.f32.gmra.mrb[0].mxu0 %v385
  %v1494 = vpop.f32.mrb[0].mxu0
  %v1495 = vadd.f32 %v354, %v1494
  %v1496 = vpop.f32.mrb[0].mxu0
  %v1497 = vadd.f32 %v354, %v1496
  %1498 = vmatprep.mubr.f32.mxu0 0.0
  %1499 = vmatmul.mubr.f32.gmra.mrb[0].mxu0 %v388
  %v1500 = vpop.f32.mrb[0].mxu0
  %v1501 = vadd.f32 %v359, %v1500
  %v1502 = vpop.f32.mrb[0].mxu0
  %v1503 = vadd.f32 %v359, %v1502
  %1504 = vmatprep.mubr.f32.mxu0 0.0
  %1505 = vmatmul.mubr.f32.gmra.mrb[0].mxu0 %v391
  %v1506 = vpop.f32.mrb[0].mxu0
  %v1507 = vadd.f32 %v364, %v1506
  %v1508 = vpop.f32.mrb[0].mxu0
  %v1509 = vadd.f32 %v364, %v1508
  %1510 = vmatprep.mubr.f32.mxu0 0.0
  %1511 = vmatmul.mubr.f32.gmra.mrb[0].mxu0 %v394
  %v1512 = vpop.f32.mrb[0].mxu0
  %v1513 = vadd.f32 %v369, %v1512
  %v1514 = vpop.f32.mrb[0].mxu0
  %v1515 = vadd.f32 %v369, %v1514
  %1516 = vdwg.mxu0
  %1517 = vmatprep.subr.mxu0 %v52
  %1518 = vmatpush1.msra.mxu0 %v51
  %1519 = vmatprep.subr.mxu0 %v124
  %1520 = vmatpush1.msra.mxu0 %v123
  %1521 = vmatprep.subr.mxu0 %v196
  %1522 = vmatpush1.msra.mxu0 %v195
  %1523 = vmatprep.subr.mxu0 %v449
  %1524 = vmatpush1.msra.mxu0 %v446
  %1525 = vmatprep.subr.mxu0 0.0
  %1526 = vmatpush1.msra.mxu0 0.0
  %1527 = vmatprep.subr.mxu0 0.0
  %1528 = vmatpush1.msra.mxu0 0.0
  %1529 = vmatprep.subr.mxu0 0.0
  %1530 = vmatpush1.msra.mxu0 0.0
  %1531 = vmatprep.subr.mxu0 0.0
  %1532 = vmatpush1.msra.mxu0 0.0
  %1533 = vmatprep.subr.mxu0 0.0
  %1534 = vmatpush1.msra.mxu0 0.0
  %1535 = vmatprep.subr.mxu0 0.0
  %1536 = vmatpush1.msra.mxu0 0.0
  %1537 = vmatprep.subr.mxu0 0.0
  %1538 = vmatpush1.msra.mxu0 0.0
  %1539 = vmatprep.subr.mxu0 0.0
  %1540 = vmatpush1.msra.mxu0 0.0
  %1541 = vmatprep.subr.mxu0 0.0
  %1542 = vmatpush1.msra.mxu0 0.0
  %1543 = vmatprep.subr.mxu0 0.0
  %1544 = vmatpush1.msra.mxu0 0.0
  %1545 = vmatprep.subr.mxu0 0.0
  %1546 = vmatpush1.msra.mxu0 0.0
  %1547 = vmatprep.subr.mxu0 0.0
  %1548 = vmatpush1.msra.mxu0 0.0
  %1549 = vmatprep.subr.mxu0 0.0
  %1550 = vmatpush1.msra.mxu0 0.0
  %1551 = vmatprep.subr.mxu0 0.0
  %1552 = vmatpush1.msra.mxu0 0.0
  %1553 = vmatprep.subr.mxu0 0.0
  %1554 = vmatpush1.msra.mxu0 0.0
  %1555 = vmatprep.subr.mxu0 0.0
  %1556 = vmatpush1.msra.mxu0 0.0
  %1557 = vmatprep.subr.mxu0 0.0
  %1558 = vmatpush1.msra.mxu0 0.0
  %1559 = vmatprep.subr.mxu0 0.0
  %1560 = vmatpush1.msra.mxu0 0.0
  %1561 = vmatprep.subr.mxu0 0.0
  %1562 = vmatpush1.msra.mxu0 0.0
  %1563 = vmatprep.subr.mxu0 0.0
  %1564 = vmatpush1.msra.mxu0 0.0
  %1565 = vmatprep.subr.mxu0 0.0
  %1566 = vmatpush1.msra.mxu0 0.0
  %1567 = vmatprep.subr.mxu0 0.0
  %1568 = vmatpush1.msra.mxu0 0.0
  %1569 = vmatprep.subr.mxu0 0.0
  %1570 = vmatpush1.msra.mxu0 0.0
  %1571 = vmatprep.subr.mxu0 0.0
  %1572 = vmatpush1.msra.mxu0 0.0
  %1573 = vmatprep.subr.mxu0 0.0
  %1574 = vmatpush1.msra.mxu0 0.0
  %1575 = vmatprep.subr.mxu0 0.0
  %1576 = vmatpush1.msra.mxu0 0.0
  %1577 = vmatprep.subr.mxu0 0.0
  %1578 = vmatpush1.msra.mxu0 0.0
  %1579 = vmatprep.subr.mxu0 0.0
  %1580 = vmatpush1.msra.mxu0 0.0
  %1581 = vmatprep.mubr.f32.mxu0 0.0
  %1582 = vmatmul.mubr.f32.gmra.mrb[0].mxu0 %v373
  %v1583 = vpop.f32.mrb[0].mxu0
  %v1584 = vadd.f32 %v334, %v1583
  %v1585 = vpop.f32.mrb[0].mxu0
  %v1586 = vadd.f32 %v334, %v1585
  %1587 = vmatprep.mubr.f32.mxu0 0.0
  %1588 = vmatmul.mubr.f32.gmra.mrb[0].mxu0 %v376
  %v1589 = vpop.f32.mrb[0].mxu0
  %v1590 = vadd.f32 %v339, %v1589
  %v1591 = vpop.f32.mrb[0].mxu0
  %v1592 = vadd.f32 %v339, %v1591
  %1593 = vmatprep.mubr.f32.mxu0 0.0
  %1594 = vmatmul.mubr.f32.gmra.mrb[0].mxu0 %v379
  %v1595 = vpop.f32.mrb[0].mxu0
  %v1596 = vadd.f32 %v344, %v1595
  %v1597 = vpop.f32.mrb[0].mxu0
  %v1598 = vadd.f32 %v344, %v1597
  %1599 = vmatprep.mubr.f32.mxu0 0.0
  %1600 = vmatmul.mubr.f32.gmra.mrb[0].mxu0 %v382
  %v1601 = vpop.f32.mrb[0].mxu0
  %v1602 = vadd.f32 %v349, %v1601
  %v1603 = vpop.f32.mrb[0].mxu0
  %v1604 = vadd.f32 %v349, %v1603
  %1605 = vmatprep.mubr.f32.mxu0 0.0
  %1606 = vmatmul.mubr.f32.gmra.mrb[0].mxu0 %v385
  %v1607 = vpop.f32.mrb[0].mxu0
  %v1608 = vadd.f32 %v354, %v1607
  %v1609 = vpop.f32.mrb[0].mxu0
  %v1610 = vadd.f32 %v354, %v1609
  %1611 = vmatprep.mubr.f32.mxu0 0.0
  %1612 = vmatmul.mubr.f32.gmra.mrb[0].mxu0 %v388
  %v1613 = vpop.f32.mrb[0].mxu0
  %v1614 = vadd.f32 %v359, %v1613
  %v1615 = vpop.f32.mrb[0].mxu0
  %v1616 = vadd.f32 %v359, %v1615
  %1617 = vmatprep.mubr.f32.mxu0 0.0
  %1618 = vmatmul.mubr.f32.gmra.mrb[0].mxu0 %v391
  %v1619 = vpop.f32.mrb[0].mxu0
  %v1620 = vadd.f32 %v364, %v1619
  %v1621 = vpop.f32.mrb[0].mxu0
  %v1622 = vadd.f32 %v364, %v1621
  %1623 = vmatprep.mubr.f32.mxu0 0.0
  %1624 = vmatmul.mubr.f32.gmra.mrb[0].mxu0 %v394
  %v1625 = vpop.f32.mrb[0].mxu0
  %v1626 = vadd.f32 %v369, %v1625
  %v1627 = vpop.f32.mrb[0].mxu0
  %v1628 = vadd.f32 %v369, %v1627
  %1629 = vdwg.mxu0
  %1630 = vmatprep.subr.mxu0 %v54
  %1631 = vmatpush1.msra.mxu0 %v53
  %1632 = vmatprep.subr.mxu0 %v126
  %1633 = vmatpush1.msra.mxu0 %v125
  %1634 = vmatprep.subr.mxu0 %v198
  %1635 = vmatpush1.msra.mxu0 %v197
  %1636 = vmatprep.subr.mxu0 %v455
  %1637 = vmatpush1.msra.mxu0 %v452
  %1638 = vmatprep.subr.mxu0 0.0
  %1639 = vmatpush1.msra.mxu0 0.0
  %1640 = vmatprep.subr.mxu0 0.0
  %1641 = vmatpush1.msra.mxu0 0.0
  %1642 = vmatprep.subr.mxu0 0.0
  %1643 = vmatpush1.msra.mxu0 0.0
  %1644 = vmatprep.subr.mxu0 0.0
  %1645 = vmatpush1.msra.mxu0 0.0
  %1646 = vmatprep.subr.mxu0 0.0
  %1647 = vmatpush1.msra.mxu0 0.0
  %1648 = vmatprep.subr.mxu0 0.0
  %1649 = vmatpush1.msra.mxu0 0.0
  %1650 = vmatprep.subr.mxu0 0.0
  %1651 = vmatpush1.msra.mxu0 0.0
  %1652 = vmatprep.subr.mxu0 0.0
  %1653 = vmatpush1.msra.mxu0 0.0
  %1654 = vmatprep.subr.mxu0 0.0
  %1655 = vmatpush1.msra.mxu0 0.0
  %1656 = vmatprep.subr.mxu0 0.0
  %1657 = vmatpush1.msra.mxu0 0.0
  %1658 = vmatprep.subr.mxu0 0.0
  %1659 = vmatpush1.msra.mxu0 0.0
  %1660 = vmatprep.subr.mxu0 0.0
  %1661 = vmatpush1.msra.mxu0 0.0
  %1662 = vmatprep.subr.mxu0 0.0
  %1663 = vmatpush1.msra.mxu0 0.0
  %1664 = vmatprep.subr.mxu0 0.0
  %1665 = vmatpush1.msra.mxu0 0.0
  %1666 = vmatprep.subr.mxu0 0.0
  %1667 = vmatpush1.msra.mxu0 0.0
  %1668 = vmatprep.subr.mxu0 0.0
  %1669 = vmatpush1.msra.mxu0 0.0
  %1670 = vmatprep.subr.mxu0 0.0
  %1671 = vmatpush1.msra.mxu0 0.0
  %1672 = vmatprep.subr.mxu0 0.0
  %1673 = vmatpush1.msra.mxu0 0.0
  %1674 = vmatprep.subr.mxu0 0.0
  %1675 = vmatpush1.msra.mxu0 0.0
  %1676 = vmatprep.subr.mxu0 0.0
  %1677 = vmatpush1.msra.mxu0 0.0
  %1678 = vmatprep.subr.mxu0 0.0
  %1679 = vmatpush1.msra.mxu0 0.0
  %1680 = vmatprep.subr.mxu0 0.0
  %1681 = vmatpush1.msra.mxu0 0.0
  %1682 = vmatprep.subr.mxu0 0.0
  %1683 = vmatpush1.msra.mxu0 0.0
  %1684 = vmatprep.subr.mxu0 0.0
  %1685 = vmatpush1.msra.mxu0 0.0
  %1686 = vmatprep.subr.mxu0 0.0
  %1687 = vmatpush1.msra.mxu0 0.0
  %1688 = vmatprep.subr.mxu0 0.0
  %1689 = vmatpush1.msra.mxu0 0.0
  %1690 = vmatprep.subr.mxu0 0.0
  %1691 = vmatpush1.msra.mxu0 0.0
  %1692 = vmatprep.subr.mxu0 0.0
  %1693 = vmatpush1.msra.mxu0 0.0
  %1694 = vmatprep.mubr.f32.mxu0 0.0
  %1695 = vmatmul.mubr.f32.gmra.mrb[0].mxu0 %v373
  %v1696 = vpop.f32.mrb[0].mxu0
  %v1697 = vadd.f32 %v334, %v1696
  %v1698 = vpop.f32.mrb[0].mxu0
  %v1699 = vadd.f32 %v334, %v1698
  %1700 = vmatprep.mubr.f32.mxu0 0.0
  %1701 = vmatmul.mubr.f32.gmra.mrb[0].mxu0 %v376
  %v1702 = vpop.f32.mrb[0].mxu0
  %v1703 = vadd.f32 %v339, %v1702
  %v1704 = vpop.f32.mrb[0].mxu0
  %v1705 = vadd.f32 %v339, %v1704
  %1706 = vmatprep.mubr.f32.mxu0 0.0
  %1707 = vmatmul.mubr.f32.gmra.mrb[0].mxu0 %v379
  %v1708 = vpop.f32.mrb[0].mxu0
  %v1709 = vadd.f32 %v344, %v1708
  %v1710 = vpop.f32.mrb[0].mxu0
  %v1711 = vadd.f32 %v344, %v1710
  %1712 = vmatprep.mubr.f32.mxu0 0.0
  %1713 = vmatmul.mubr.f32.gmra.mrb[0].mxu0 %v382
  %v1714 = vpop.f32.mrb[0].mxu0
  %v1715 = vadd.f32 %v349, %v1714
  %v1716 = vpop.f32.mrb[0].mxu0
  %v1717 = vadd.f32 %v349, %v1716
  %1718 = vmatprep.mubr.f32.mxu0 0.0
  %1719 = vmatmul.mubr.f32.gmra.mrb[0].mxu0 %v385
  %v1720 = vpop.f32.mrb[0].mxu0
  %v1721 = vadd.f32 %v354, %v1720
  %v1722 = vpop.f32.mrb[0].mxu0
  %v1723 = vadd.f32 %v354, %v1722
  %1724 = vmatprep.mubr.f32.mxu0 0.0
  %1725 = vmatmul.mubr.f32.gmra.mrb[0].mxu0 %v388
  %v1726 = vpop.f32.mrb[0].mxu0
  %v1727 = vadd.f32 %v359, %v1726
  %v1728 = vpop.f32.mrb[0].mxu0
  %v1729 = vadd.f32 %v359, %v1728
  %1730 = vmatprep.mubr.f32.mxu0 0.0
  %1731 = vmatmul.mubr.f32.gmra.mrb[0].mxu0 %v391
  %v1732 = vpop.f32.mrb[0].mxu0
  %v1733 = vadd.f32 %v364, %v1732
  %v1734 = vpop.f32.mrb[0].mxu0
  %v1735 = vadd.f32 %v364, %v1734
  %1736 = vmatprep.mubr.f32.mxu0 0.0
  %1737 = vmatmul.mubr.f32.gmra.mrb[0].mxu0 %v394
  %v1738 = vpop.f32.mrb[0].mxu0
  %v1739 = vadd.f32 %v369, %v1738
  %v1740 = vpop.f32.mrb[0].mxu0
  %v1741 = vadd.f32 %v369, %v1740
  %1742 = vdwg.mxu0
  %1743 = vmatprep.subr.mxu0 %v56
  %1744 = vmatpush1.msra.mxu0 %v55
  %1745 = vmatprep.subr.mxu0 %v128
  %1746 = vmatpush1.msra.mxu0 %v127
  %1747 = vmatprep.subr.mxu0 %v200
  %1748 = vmatpush1.msra.mxu0 %v199
  %1749 = vmatprep.subr.mxu0 %v461
  %1750 = vmatpush1.msra.mxu0 %v458
  %1751 = vmatprep.subr.mxu0 0.0
  %1752 = vmatpush1.msra.mxu0 0.0
  %1753 = vmatprep.subr.mxu0 0.0
  %1754 = vmatpush1.msra.mxu0 0.0
  %1755 = vmatprep.subr.mxu0 0.0
  %1756 = vmatpush1.msra.mxu0 0.0
  %1757 = vmatprep.subr.mxu0 0.0
  %1758 = vmatpush1.msra.mxu0 0.0
  %1759 = vmatprep.subr.mxu0 0.0
  %1760 = vmatpush1.msra.mxu0 0.0
  %1761 = vmatprep.subr.mxu0 0.0
  %1762 = vmatpush1.msra.mxu0 0.0
  %1763 = vmatprep.subr.mxu0 0.0
  %1764 = vmatpush1.msra.mxu0 0.0
  %1765 = vmatprep.subr.mxu0 0.0
  %1766 = vmatpush1.msra.mxu0 0.0
  %1767 = vmatprep.subr.mxu0 0.0
  %1768 = vmatpush1.msra.mxu0 0.0
  %1769 = vmatprep.subr.mxu0 0.0
  %1770 = vmatpush1.msra.mxu0 0.0
  %1771 = vmatprep.subr.mxu0 0.0
  %1772 = vmatpush1.msra.mxu0 0.0
  %1773 = vmatprep.subr.mxu0 0.0
  %1774 = vmatpush1.msra.mxu0 0.0
  %1775 = vmatprep.subr.mxu0 0.0
  %1776 = vmatpush1.msra.mxu0 0.0
  %1777 = vmatprep.subr.mxu0 0.0
  %1778 = vmatpush1.msra.mxu0 0.0
  %1779 = vmatprep.subr.mxu0 0.0
  %1780 = vmatpush1.msra.mxu0 0.0
  %1781 = vmatprep.subr.mxu0 0.0
  %1782 = vmatpush1.msra.mxu0 0.0
  %1783 = vmatprep.subr.mxu0 0.0
  %1784 = vmatpush1.msra.mxu0 0.0
  %1785 = vmatprep.subr.mxu0 0.0
  %1786 = vmatpush1.msra.mxu0 0.0
  %1787 = vmatprep.subr.mxu0 0.0
  %1788 = vmatpush1.msra.mxu0 0.0
  %1789 = vmatprep.subr.mxu0 0.0
  %1790 = vmatpush1.msra.mxu0 0.0
  %1791 = vmatprep.subr.mxu0 0.0
  %1792 = vmatpush1.msra.mxu0 0.0
  %1793 = vmatprep.subr.mxu0 0.0
  %1794 = vmatpush1.msra.mxu0 0.0
  %1795 = vmatprep.subr.mxu0 0.0
  %1796 = vmatpush1.msra.mxu0 0.0
  %1797 = vmatprep.subr.mxu0 0.0
  %1798 = vmatpush1.msra.mxu0 0.0
  %1799 = vmatprep.subr.mxu0 0.0
  %1800 = vmatpush1.msra.mxu0 0.0
  %1801 = vmatprep.subr.mxu0 0.0
  %1802 = vmatpush1.msra.mxu0 0.0
  %1803 = vmatprep.subr.mxu0 0.0
  %1804 = vmatpush1.msra.mxu0 0.0
  %1805 = vmatprep.subr.mxu0 0.0
  %1806 = vmatpush1.msra.mxu0 0.0
  %1807 = vmatprep.mubr.f32.mxu0 0.0
  %1808 = vmatmul.mubr.f32.gmra.mrb[0].mxu0 %v373
  %v1809 = vpop.f32.mrb[0].mxu0
  %v1810 = vadd.f32 %v334, %v1809
  %v1811 = vpop.f32.mrb[0].mxu0
  %v1812 = vadd.f32 %v334, %v1811
  %1813 = vmatprep.mubr.f32.mxu0 0.0
  %1814 = vmatmul.mubr.f32.gmra.mrb[0].mxu0 %v376
  %v1815 = vpop.f32.mrb[0].mxu0
  %v1816 = vadd.f32 %v339, %v1815
  %v1817 = vpop.f32.mrb[0].mxu0
  %v1818 = vadd.f32 %v339, %v1817
  %1819 = vmatprep.mubr.f32.mxu0 0.0
  %1820 = vmatmul.mubr.f32.gmra.mrb[0].mxu0 %v379
  %v1821 = vpop.f32.mrb[0].mxu0
  %v1822 = vadd.f32 %v344, %v1821
  %v1823 = vpop.f32.mrb[0].mxu0
  %v1824 = vadd.f32 %v344, %v1823
  %1825 = vmatprep.mubr.f32.mxu0 0.0
  %1826 = vmatmul.mubr.f32.gmra.mrb[0].mxu0 %v382
  %v1827 = vpop.f32.mrb[0].mxu0
  %v1828 = vadd.f32 %v349, %v1827
  %v1829 = vpop.f32.mrb[0].mxu0
  %v1830 = vadd.f32 %v349, %v1829
  %1831 = vmatprep.mubr.f32.mxu0 0.0
  %1832 = vmatmul.mubr.f32.gmra.mrb[0].mxu0 %v385
  %v1833 = vpop.f32.mrb[0].mxu0
  %v1834 = vadd.f32 %v354, %v1833
  %v1835 = vpop.f32.mrb[0].mxu0
  %v1836 = vadd.f32 %v354, %v1835
  %1837 = vmatprep.mubr.f32.mxu0 0.0
  %1838 = vmatmul.mubr.f32.gmra.mrb[0].mxu0 %v388
  %v1839 = vpop.f32.mrb[0].mxu0
  %v1840 = vadd.f32 %v359, %v1839
  %v1841 = vpop.f32.mrb[0].mxu0
  %v1842 = vadd.f32 %v359, %v1841
  %1843 = vmatprep.mubr.f32.mxu0 0.0
  %1844 = vmatmul.mubr.f32.gmra.mrb[0].mxu0 %v391
  %v1845 = vpop.f32.mrb[0].mxu0
  %v1846 = vadd.f32 %v364, %v1845
  %v1847 = vpop.f32.mrb[0].mxu0
  %v1848 = vadd.f32 %v364, %v1847
  %1849 = vmatprep.mubr.f32.mxu0 0.0
  %1850 = vmatmul.mubr.f32.gmra.mrb[0].mxu0 %v394
  %v1851 = vpop.f32.mrb[0].mxu0
  %v1852 = vadd.f32 %v369, %v1851
  %v1853 = vpop.f32.mrb[0].mxu0
  %v1854 = vadd.f32 %v369, %v1853
  %1855 = vdwg.mxu0
  %1856 = vmatprep.subr.mxu0 %v58
  %1857 = vmatpush1.msra.mxu0 %v57
  %1858 = vmatprep.subr.mxu0 %v130
  %1859 = vmatpush1.msra.mxu0 %v129
  %1860 = vmatprep.subr.mxu0 %v202
  %1861 = vmatpush1.msra.mxu0 %v201
  %1862 = vmatprep.subr.mxu0 %v467
  %1863 = vmatpush1.msra.mxu0 %v464
  %1864 = vmatprep.subr.mxu0 0.0
  %1865 = vmatpush1.msra.mxu0 0.0
  %1866 = vmatprep.subr.mxu0 0.0
  %1867 = vmatpush1.msra.mxu0 0.0
  %1868 = vmatprep.subr.mxu0 0.0
  %1869 = vmatpush1.msra.mxu0 0.0
  %1870 = vmatprep.subr.mxu0 0.0
  %1871 = vmatpush1.msra.mxu0 0.0
  %1872 = vmatprep.subr.mxu0 0.0
  %1873 = vmatpush1.msra.mxu0 0.0
  %1874 = vmatprep.subr.mxu0 0.0
  %1875 = vmatpush1.msra.mxu0 0.0
  %1876 = vmatprep.subr.mxu0 0.0
  %1877 = vmatpush1.msra.mxu0 0.0
  %1878 = vmatprep.subr.mxu0 0.0
  %1879 = vmatpush1.msra.mxu0 0.0
  %1880 = vmatprep.subr.mxu0 0.0
  %1881 = vmatpush1.msra.mxu0 0.0
  %1882 = vmatprep.subr.mxu0 0.0
  %1883 = vmatpush1.msra.mxu0 0.0
  %1884 = vmatprep.subr.mxu0 0.0
  %1885 = vmatpush1.msra.mxu0 0.0
  %1886 = vmatprep.subr.mxu0 0.0
  %1887 = vmatpush1.msra.mxu0 0.0
  %1888 = vmatprep.subr.mxu0 0.0
  %1889 = vmatpush1.msra.mxu0 0.0
  %1890 = vmatprep.subr.mxu0 0.0
  %1891 = vmatpush1.msra.mxu0 0.0
  %1892 = vmatprep.subr.mxu0 0.0
  %1893 = vmatpush1.msra.mxu0 0.0
  %1894 = vmatprep.subr.mxu0 0.0
  %1895 = vmatpush1.msra.mxu0 0.0
  %1896 = vmatprep.subr.mxu0 0.0
  %1897 = vmatpush1.msra.mxu0 0.0
  %1898 = vmatprep.subr.mxu0 0.0
  %1899 = vmatpush1.msra.mxu0 0.0
  %1900 = vmatprep.subr.mxu0 0.0
  %1901 = vmatpush1.msra.mxu0 0.0
  %1902 = vmatprep.subr.mxu0 0.0
  %1903 = vmatpush1.msra.mxu0 0.0
  %1904 = vmatprep.subr.mxu0 0.0
  %1905 = vmatpush1.msra.mxu0 0.0
  %1906 = vmatprep.subr.mxu0 0.0
  %1907 = vmatpush1.msra.mxu0 0.0
  %1908 = vmatprep.subr.mxu0 0.0
  %1909 = vmatpush1.msra.mxu0 0.0
  %1910 = vmatprep.subr.mxu0 0.0
  %1911 = vmatpush1.msra.mxu0 0.0
  %1912 = vmatprep.subr.mxu0 0.0
  %1913 = vmatpush1.msra.mxu0 0.0
  %1914 = vmatprep.subr.mxu0 0.0
  %1915 = vmatpush1.msra.mxu0 0.0
  %1916 = vmatprep.subr.mxu0 0.0
  %1917 = vmatpush1.msra.mxu0 0.0
  %1918 = vmatprep.subr.mxu0 0.0
  %1919 = vmatpush1.msra.mxu0 0.0
  %1920 = vmatprep.mubr.f32.mxu0 0.0
  %1921 = vmatmul.mubr.f32.gmra.mrb[0].mxu0 %v373
  %v1922 = vpop.f32.mrb[0].mxu0
  %v1923 = vadd.f32 %v334, %v1922
  %v1924 = vpop.f32.mrb[0].mxu0
  %v1925 = vadd.f32 %v334, %v1924
  %1926 = vmatprep.mubr.f32.mxu0 0.0
  %1927 = vmatmul.mubr.f32.gmra.mrb[0].mxu0 %v376
  %v1928 = vpop.f32.mrb[0].mxu0
  %v1929 = vadd.f32 %v339, %v1928
  %v1930 = vpop.f32.mrb[0].mxu0
  %v1931 = vadd.f32 %v339, %v1930
  %1932 = vmatprep.mubr.f32.mxu0 0.0
  %1933 = vmatmul.mubr.f32.gmra.mrb[0].mxu0 %v379
  %v1934 = vpop.f32.mrb[0].mxu0
  %v1935 = vadd.f32 %v344, %v1934
  %v1936 = vpop.f32.mrb[0].mxu0
  %v1937 = vadd.f32 %v344, %v1936
  %1938 = vmatprep.mubr.f32.mxu0 0.0
  %1939 = vmatmul.mubr.f32.gmra.mrb[0].mxu0 %v382
  %v1940 = vpop.f32.mrb[0].mxu0
  %v1941 = vadd.f32 %v349, %v1940
  %v1942 = vpop.f32.mrb[0].mxu0
  %v1943 = vadd.f32 %v349, %v1942
  %1944 = vmatprep.mubr.f32.mxu0 0.0
  %1945 = vmatmul.mubr.f32.gmra.mrb[0].mxu0 %v385
  %v1946 = vpop.f32.mrb[0].mxu0
  %v1947 = vadd.f32 %v354, %v1946
  %v1948 = vpop.f32.mrb[0].mxu0
  %v1949 = vadd.f32 %v354, %v1948
  %1950 = vmatprep.mubr.f32.mxu0 0.0
  %1951 = vmatmul.mubr.f32.gmra.mrb[0].mxu0 %v388
  %v1952 = vpop.f32.mrb[0].mxu0
  %v1953 = vadd.f32 %v359, %v1952
  %v1954 = vpop.f32.mrb[0].mxu0
  %v1955 = vadd.f32 %v359, %v1954
  %1956 = vmatprep.mubr.f32.mxu0 0.0
  %1957 = vmatmul.mubr.f32.gmra.mrb[0].mxu0 %v391
  %v1958 = vpop.f32.mrb[0].mxu0
  %v1959 = vadd.f32 %v364, %v1958
  %v1960 = vpop.f32.mrb[0].mxu0
  %v1961 = vadd.f32 %v364, %v1960
  %1962 = vmatprep.mubr.f32.mxu0 0.0
  %1963 = vmatmul.mubr.f32.gmra.mrb[0].mxu0 %v394
  %v1964 = vpop.f32.mrb[0].mxu0
  %v1965 = vadd.f32 %v369, %v1964
  %v1966 = vpop.f32.mrb[0].mxu0
  %v1967 = vadd.f32 %v369, %v1966
  %1968 = vdwg.mxu0
  %1969 = vmatprep.subr.mxu0 %v60
  %1970 = vmatpush1.msra.mxu0 %v59
  %1971 = vmatprep.subr.mxu0 %v132
  %1972 = vmatpush1.msra.mxu0 %v131
  %1973 = vmatprep.subr.mxu0 %v204
  %1974 = vmatpush1.msra.mxu0 %v203
  %1975 = vmatprep.subr.mxu0 %v473
  %1976 = vmatpush1.msra.mxu0 %v470
  %1977 = vmatprep.subr.mxu0 0.0
  %1978 = vmatpush1.msra.mxu0 0.0
  %1979 = vmatprep.subr.mxu0 0.0
  %1980 = vmatpush1.msra.mxu0 0.0
  %1981 = vmatprep.subr.mxu0 0.0
  %1982 = vmatpush1.msra.mxu0 0.0
  %1983 = vmatprep.subr.mxu0 0.0
  %1984 = vmatpush1.msra.mxu0 0.0
  %1985 = vmatprep.subr.mxu0 0.0
  %1986 = vmatpush1.msra.mxu0 0.0
  %1987 = vmatprep.subr.mxu0 0.0
  %1988 = vmatpush1.msra.mxu0 0.0
  %1989 = vmatprep.subr.mxu0 0.0
  %1990 = vmatpush1.msra.mxu0 0.0
  %1991 = vmatprep.subr.mxu0 0.0
  %1992 = vmatpush1.msra.mxu0 0.0
  %1993 = vmatprep.subr.mxu0 0.0
  %1994 = vmatpush1.msra.mxu0 0.0
  %1995 = vmatprep.subr.mxu0 0.0
  %1996 = vmatpush1.msra.mxu0 0.0
  %1997 = vmatprep.subr.mxu0 0.0
  %1998 = vmatpush1.msra.mxu0 0.0
  %1999 = vmatprep.subr.mxu0 0.0
  %2000 = vmatpush1.msra.mxu0 0.0
  %2001 = vmatprep.subr.mxu0 0.0
  %2002 = vmatpush1.msra.mxu0 0.0
  %2003 = vmatprep.subr.mxu0 0.0
  %2004 = vmatpush1.msra.mxu0 0.0
  %2005 = vmatprep.subr.mxu0 0.0
  %2006 = vmatpush1.msra.mxu0 0.0
  %2007 = vmatprep.subr.mxu0 0.0
  %2008 = vmatpush1.msra.mxu0 0.0
  %2009 = vmatprep.subr.mxu0 0.0
  %2010 = vmatpush1.msra.mxu0 0.0
  %2011 = vmatprep.subr.mxu0 0.0
  %2012 = vmatpush1.msra.mxu0 0.0
  %2013 = vmatprep.subr.mxu0 0.0
  %2014 = vmatpush1.msra.mxu0 0.0
  %2015 = vmatprep.subr.mxu0 0.0
  %2016 = vmatpush1.msra.mxu0 0.0
  %2017 = vmatprep.subr.mxu0 0.0
  %2018 = vmatpush1.msra.mxu0 0.0
  %2019 = vmatprep.subr.mxu0 0.0
  %2020 = vmatpush1.msra.mxu0 0.0
  %2021 = vmatprep.subr.mxu0 0.0
  %2022 = vmatpush1.msra.mxu0 0.0
  %2023 = vmatprep.subr.mxu0 0.0
  %2024 = vmatpush1.msra.mxu0 0.0
  %2025 = vmatprep.subr.mxu0 0.0
  %2026 = vmatpush1.msra.mxu0 0.0
  %2027 = vmatprep.subr.mxu0 0.0
  %2028 = vmatpush1.msra.mxu0 0.0
  %2029 = vmatprep.subr.mxu0 0.0
  %2030 = vmatpush1.msra.mxu0 0.0
  %2031 = vmatprep.subr.mxu0 0.0
  %2032 = vmatpush1.msra.mxu0 0.0
  %2033 = vmatprep.mubr.f32.mxu0 0.0
  %2034 = vmatmul.mubr.f32.gmra.mrb[0].mxu0 %v373
  %v2035 = vpop.f32.mrb[0].mxu0
  %v2036 = vadd.f32 %v334, %v2035
  %v2037 = vpop.f32.mrb[0].mxu0
  %v2038 = vadd.f32 %v334, %v2037
  %2039 = vmatprep.mubr.f32.mxu0 0.0
  %2040 = vmatmul.mubr.f32.gmra.mrb[0].mxu0 %v376
  %v2041 = vpop.f32.mrb[0].mxu0
  %v2042 = vadd.f32 %v339, %v2041
  %v2043 = vpop.f32.mrb[0].mxu0
  %v2044 = vadd.f32 %v339, %v2043
  %2045 = vmatprep.mubr.f32.mxu0 0.0
  %2046 = vmatmul.mubr.f32.gmra.mrb[0].mxu0 %v379
  %v2047 = vpop.f32.mrb[0].mxu0
  %v2048 = vadd.f32 %v344, %v2047
  %v2049 = vpop.f32.mrb[0].mxu0
  %v2050 = vadd.f32 %v344, %v2049
  %2051 = vmatprep.mubr.f32.mxu0 0.0
  %2052 = vmatmul.mubr.f32.gmra.mrb[0].mxu0 %v382
  %v2053 = vpop.f32.mrb[0].mxu0
  %v2054 = vadd.f32 %v349, %v2053
  %v2055 = vpop.f32.mrb[0].mxu0
  %v2056 = vadd.f32 %v349, %v2055
  %2057 = vmatprep.mubr.f32.mxu0 0.0
  %2058 = vmatmul.mubr.f32.gmra.mrb[0].mxu0 %v385
  %v2059 = vpop.f32.mrb[0].mxu0
  %v2060 = vadd.f32 %v354, %v2059
  %v2061 = vpop.f32.mrb[0].mxu0
  %v2062 = vadd.f32 %v354, %v2061
  %2063 = vmatprep.mubr.f32.mxu0 0.0
  %2064 = vmatmul.mubr.f32.gmra.mrb[0].mxu0 %v388
  %v2065 = vpop.f32.mrb[0].mxu0
  %v2066 = vadd.f32 %v359, %v2065
  %v2067 = vpop.f32.mrb[0].mxu0
  %v2068 = vadd.f32 %v359, %v2067
  %2069 = vmatprep.mubr.f32.mxu0 0.0
  %2070 = vmatmul.mubr.f32.gmra.mrb[0].mxu0 %v391
  %v2071 = vpop.f32.mrb[0].mxu0
  %v2072 = vadd.f32 %v364, %v2071
  %v2073 = vpop.f32.mrb[0].mxu0
  %v2074 = vadd.f32 %v364, %v2073
  %2075 = vmatprep.mubr.f32.mxu0 0.0
  %2076 = vmatmul.mubr.f32.gmra.mrb[0].mxu0 %v394
  %v2077 = vpop.f32.mrb[0].mxu0
  %v2078 = vadd.f32 %v369, %v2077
  %v2079 = vpop.f32.mrb[0].mxu0
  %v2080 = vadd.f32 %v369, %v2079
  %2081 = vdwg.mxu0
  %2082 = vmatprep.subr.mxu0 %v62
  %2083 = vmatpush1.msra.mxu0 %v61
  %2084 = vmatprep.subr.mxu0 %v134
  %2085 = vmatpush1.msra.mxu0 %v133
  %2086 = vmatprep.subr.mxu0 %v206
  %2087 = vmatpush1.msra.mxu0 %v205
  %2088 = vmatprep.subr.mxu0 %v479
  %2089 = vmatpush1.msra.mxu0 %v476
  %2090 = vmatprep.subr.mxu0 0.0
  %2091 = vmatpush1.msra.mxu0 0.0
  %2092 = vmatprep.subr.mxu0 0.0
  %2093 = vmatpush1.msra.mxu0 0.0
  %2094 = vmatprep.subr.mxu0 0.0
  %2095 = vmatpush1.msra.mxu0 0.0
  %2096 = vmatprep.subr.mxu0 0.0
  %2097 = vmatpush1.msra.mxu0 0.0
  %2098 = vmatprep.subr.mxu0 0.0
  %2099 = vmatpush1.msra.mxu0 0.0
  %2100 = vmatprep.subr.mxu0 0.0
  %2101 = vmatpush1.msra.mxu0 0.0
  %2102 = vmatprep.subr.mxu0 0.0
  %2103 = vmatpush1.msra.mxu0 0.0
  %2104 = vmatprep.subr.mxu0 0.0
  %2105 = vmatpush1.msra.mxu0 0.0
  %2106 = vmatprep.subr.mxu0 0.0
  %2107 = vmatpush1.msra.mxu0 0.0
  %2108 = vmatprep.subr.mxu0 0.0
  %2109 = vmatpush1.msra.mxu0 0.0
  %2110 = vmatprep.subr.mxu0 0.0
  %2111 = vmatpush1.msra.mxu0 0.0
  %2112 = vmatprep.subr.mxu0 0.0
  %2113 = vmatpush1.msra.mxu0 0.0
  %2114 = vmatprep.subr.mxu0 0.0
  %2115 = vmatpush1.msra.mxu0 0.0
  %2116 = vmatprep.subr.mxu0 0.0
  %2117 = vmatpush1.msra.mxu0 0.0
  %2118 = vmatprep.subr.mxu0 0.0
  %2119 = vmatpush1.msra.mxu0 0.0
  %2120 = vmatprep.subr.mxu0 0.0
  %2121 = vmatpush1.msra.mxu0 0.0
  %2122 = vmatprep.subr.mxu0 0.0
  %2123 = vmatpush1.msra.mxu0 0.0
  %2124 = vmatprep.subr.mxu0 0.0
  %2125 = vmatpush1.msra.mxu0 0.0
  %2126 = vmatprep.subr.mxu0 0.0
  %2127 = vmatpush1.msra.mxu0 0.0
  %2128 = vmatprep.subr.mxu0 0.0
  %2129 = vmatpush1.msra.mxu0 0.0
  %2130 = vmatprep.subr.mxu0 0.0
  %2131 = vmatpush1.msra.mxu0 0.0
  %2132 = vmatprep.subr.mxu0 0.0
  %2133 = vmatpush1.msra.mxu0 0.0
  %2134 = vmatprep.subr.mxu0 0.0
  %2135 = vmatpush1.msra.mxu0 0.0
  %2136 = vmatprep.subr.mxu0 0.0
  %2137 = vmatpush1.msra.mxu0 0.0
  %2138 = vmatprep.subr.mxu0 0.0
  %2139 = vmatpush1.msra.mxu0 0.0
  %2140 = vmatprep.subr.mxu0 0.0
  %2141 = vmatpush1.msra.mxu0 0.0
  %2142 = vmatprep.subr.mxu0 0.0
  %2143 = vmatpush1.msra.mxu0 0.0
  %2144 = vmatprep.subr.mxu0 0.0
  %2145 = vmatpush1.msra.mxu0 0.0
  %2146 = vmatprep.mubr.f32.mxu0 0.0
  %2147 = vmatmul.mubr.f32.gmra.mrb[0].mxu0 %v373
  %v2148 = vpop.f32.mrb[0].mxu0
  %v2149 = vadd.f32 %v334, %v2148
  %v2150 = vpop.f32.mrb[0].mxu0
  %v2151 = vadd.f32 %v334, %v2150
  %2152 = vmatprep.mubr.f32.mxu0 0.0
  %2153 = vmatmul.mubr.f32.gmra.mrb[0].mxu0 %v376
  %v2154 = vpop.f32.mrb[0].mxu0
  %v2155 = vadd.f32 %v339, %v2154
  %v2156 = vpop.f32.mrb[0].mxu0
  %v2157 = vadd.f32 %v339, %v2156
  %2158 = vmatprep.mubr.f32.mxu0 0.0
  %2159 = vmatmul.mubr.f32.gmra.mrb[0].mxu0 %v379
  %v2160 = vpop.f32.mrb[0].mxu0
  %v2161 = vadd.f32 %v344, %v2160
  %v2162 = vpop.f32.mrb[0].mxu0
  %v2163 = vadd.f32 %v344, %v2162
  %2164 = vmatprep.mubr.f32.mxu0 0.0
  %2165 = vmatmul.mubr.f32.gmra.mrb[0].mxu0 %v382
  %v2166 = vpop.f32.mrb[0].mxu0
  %v2167 = vadd.f32 %v349, %v2166
  %v2168 = vpop.f32.mrb[0].mxu0
  %v2169 = vadd.f32 %v349, %v2168
  %2170 = vmatprep.mubr.f32.mxu0 0.0
  %2171 = vmatmul.mubr.f32.gmra.mrb[0].mxu0 %v385
  %v2172 = vpop.f32.mrb[0].mxu0
  %v2173 = vadd.f32 %v354, %v2172
  %v2174 = vpop.f32.mrb[0].mxu0
  %v2175 = vadd.f32 %v354, %v2174
  %2176 = vmatprep.mubr.f32.mxu0 0.0
  %2177 = vmatmul.mubr.f32.gmra.mrb[0].mxu0 %v388
  %v2178 = vpop.f32.mrb[0].mxu0
  %v2179 = vadd.f32 %v359, %v2178
  %v2180 = vpop.f32.mrb[0].mxu0
  %v2181 = vadd.f32 %v359, %v2180
  %2182 = vmatprep.mubr.f32.mxu0 0.0
  %2183 = vmatmul.mubr.f32.gmra.mrb[0].mxu0 %v391
  %v2184 = vpop.f32.mrb[0].mxu0
  %v2185 = vadd.f32 %v364, %v2184
  %v2186 = vpop.f32.mrb[0].mxu0
  %v2187 = vadd.f32 %v364, %v2186
  %2188 = vmatprep.mubr.f32.mxu0 0.0
  %2189 = vmatmul.mubr.f32.gmra.mrb[0].mxu0 %v394
  %v2190 = vpop.f32.mrb[0].mxu0
  %v2191 = vadd.f32 %v369, %v2190
  %v2192 = vpop.f32.mrb[0].mxu0
  %v2193 = vadd.f32 %v369, %v2192
  %2194 = vdwg.mxu0
  %2195 = vmatprep.subr.mxu0 %v64
  %2196 = vmatpush1.msra.mxu0 %v63
  %2197 = vmatprep.subr.mxu0 %v136
  %2198 = vmatpush1.msra.mxu0 %v135
  %2199 = vmatprep.subr.mxu0 %v208
  %2200 = vmatpush1.msra.mxu0 %v207
  %2201 = vmatprep.subr.mxu0 %v485
  %2202 = vmatpush1.msra.mxu0 %v482
  %2203 = vmatprep.subr.mxu0 0.0
  %2204 = vmatpush1.msra.mxu0 0.0
  %2205 = vmatprep.subr.mxu0 0.0
  %2206 = vmatpush1.msra.mxu0 0.0
  %2207 = vmatprep.subr.mxu0 0.0
  %2208 = vmatpush1.msra.mxu0 0.0
  %2209 = vmatprep.subr.mxu0 0.0
  %2210 = vmatpush1.msra.mxu0 0.0
  %2211 = vmatprep.subr.mxu0 0.0
  %2212 = vmatpush1.msra.mxu0 0.0
  %2213 = vmatprep.subr.mxu0 0.0
  %2214 = vmatpush1.msra.mxu0 0.0
  %2215 = vmatprep.subr.mxu0 0.0
  %2216 = vmatpush1.msra.mxu0 0.0
  %2217 = vmatprep.subr.mxu0 0.0
  %2218 = vmatpush1.msra.mxu0 0.0
  %2219 = vmatprep.subr.mxu0 0.0
  %2220 = vmatpush1.msra.mxu0 0.0
  %2221 = vmatprep.subr.mxu0 0.0
  %2222 = vmatpush1.msra.mxu0 0.0
  %2223 = vmatprep.subr.mxu0 0.0
  %2224 = vmatpush1.msra.mxu0 0.0
  %2225 = vmatprep.subr.mxu0 0.0
  %2226 = vmatpush1.msra.mxu0 0.0
  %2227 = vmatprep.subr.mxu0 0.0
  %2228 = vmatpush1.msra.mxu0 0.0
  %2229 = vmatprep.subr.mxu0 0.0
  %2230 = vmatpush1.msra.mxu0 0.0
  %2231 = vmatprep.subr.mxu0 0.0
  %2232 = vmatpush1.msra.mxu0 0.0
  %2233 = vmatprep.subr.mxu0 0.0
  %2234 = vmatpush1.msra.mxu0 0.0
  %2235 = vmatprep.subr.mxu0 0.0
  %2236 = vmatpush1.msra.mxu0 0.0
  %2237 = vmatprep.subr.mxu0 0.0
  %2238 = vmatpush1.msra.mxu0 0.0
  %2239 = vmatprep.subr.mxu0 0.0
  %2240 = vmatpush1.msra.mxu0 0.0
  %2241 = vmatprep.subr.mxu0 0.0
  %2242 = vmatpush1.msra.mxu0 0.0
  %2243 = vmatprep.subr.mxu0 0.0
  %2244 = vmatpush1.msra.mxu0 0.0
  %2245 = vmatprep.subr.mxu0 0.0
  %2246 = vmatpush1.msra.mxu0 0.0
  %2247 = vmatprep.subr.mxu0 0.0
  %2248 = vmatpush1.msra.mxu0 0.0
  %2249 = vmatprep.subr.mxu0 0.0
  %2250 = vmatpush1.msra.mxu0 0.0
  %2251 = vmatprep.subr.mxu0 0.0
  %2252 = vmatpush1.msra.mxu0 0.0
  %2253 = vmatprep.subr.mxu0 0.0
  %2254 = vmatpush1.msra.mxu0 0.0
  %2255 = vmatprep.subr.mxu0 0.0
  %2256 = vmatpush1.msra.mxu0 0.0
  %2257 = vmatprep.subr.mxu0 0.0
  %2258 = vmatpush1.msra.mxu0 0.0
  %2259 = vmatprep.mubr.f32.mxu0 0.0
  %2260 = vmatmul.mubr.f32.gmra.mrb[0].mxu0 %v373
  %v2261 = vpop.f32.mrb[0].mxu0
  %v2262 = vadd.f32 %v334, %v2261
  %v2263 = vpop.f32.mrb[0].mxu0
  %v2264 = vadd.f32 %v334, %v2263
  %2265 = vmatprep.mubr.f32.mxu0 0.0
  %2266 = vmatmul.mubr.f32.gmra.mrb[0].mxu0 %v376
  %v2267 = vpop.f32.mrb[0].mxu0
  %v2268 = vadd.f32 %v339, %v2267
  %v2269 = vpop.f32.mrb[0].mxu0
  %v2270 = vadd.f32 %v339, %v2269
  %2271 = vmatprep.mubr.f32.mxu0 0.0
  %2272 = vmatmul.mubr.f32.gmra.mrb[0].mxu0 %v379
  %v2273 = vpop.f32.mrb[0].mxu0
  %v2274 = vadd.f32 %v344, %v2273
  %v2275 = vpop.f32.mrb[0].mxu0
  %v2276 = vadd.f32 %v344, %v2275
  %2277 = vmatprep.mubr.f32.mxu0 0.0
  %2278 = vmatmul.mubr.f32.gmra.mrb[0].mxu0 %v382
  %v2279 = vpop.f32.mrb[0].mxu0
  %v2280 = vadd.f32 %v349, %v2279
  %v2281 = vpop.f32.mrb[0].mxu0
  %v2282 = vadd.f32 %v349, %v2281
  %2283 = vmatprep.mubr.f32.mxu0 0.0
  %2284 = vmatmul.mubr.f32.gmra.mrb[0].mxu0 %v385
  %v2285 = vpop.f32.mrb[0].mxu0
  %v2286 = vadd.f32 %v354, %v2285
  %v2287 = vpop.f32.mrb[0].mxu0
  %v2288 = vadd.f32 %v354, %v2287
  %2289 = vmatprep.mubr.f32.mxu0 0.0
  %2290 = vmatmul.mubr.f32.gmra.mrb[0].mxu0 %v388
  %v2291 = vpop.f32.mrb[0].mxu0
  %v2292 = vadd.f32 %v359, %v2291
  %v2293 = vpop.f32.mrb[0].mxu0
  %v2294 = vadd.f32 %v359, %v2293
  %2295 = vmatprep.mubr.f32.mxu0 0.0
  %2296 = vmatmul.mubr.f32.gmra.mrb[0].mxu0 %v391
  %v2297 = vpop.f32.mrb[0].mxu0
  %v2298 = vadd.f32 %v364, %v2297
  %v2299 = vpop.f32.mrb[0].mxu0
  %v2300 = vadd.f32 %v364, %v2299
  %2301 = vmatprep.mubr.f32.mxu0 0.0
  %2302 = vmatmul.mubr.f32.gmra.mrb[0].mxu0 %v394
  %v2303 = vpop.f32.mrb[0].mxu0
  %v2304 = vadd.f32 %v369, %v2303
  %v2305 = vpop.f32.mrb[0].mxu0
  %v2306 = vadd.f32 %v369, %v2305
  %2307 = vdwg.mxu0
  %2308 = vmatprep.subr.mxu0 %v66
  %2309 = vmatpush1.msra.mxu0 %v65
  %2310 = vmatprep.subr.mxu0 %v138
  %2311 = vmatpush1.msra.mxu0 %v137
  %2312 = vmatprep.subr.mxu0 %v210
  %2313 = vmatpush1.msra.mxu0 %v209
  %2314 = vmatprep.subr.mxu0 %v491
  %2315 = vmatpush1.msra.mxu0 %v488
  %2316 = vmatprep.subr.mxu0 0.0
  %2317 = vmatpush1.msra.mxu0 0.0
  %2318 = vmatprep.subr.mxu0 0.0
  %2319 = vmatpush1.msra.mxu0 0.0
  %2320 = vmatprep.subr.mxu0 0.0
  %2321 = vmatpush1.msra.mxu0 0.0
  %2322 = vmatprep.subr.mxu0 0.0
  %2323 = vmatpush1.msra.mxu0 0.0
  %2324 = vmatprep.subr.mxu0 0.0
  %2325 = vmatpush1.msra.mxu0 0.0
  %2326 = vmatprep.subr.mxu0 0.0
  %2327 = vmatpush1.msra.mxu0 0.0
  %2328 = vmatprep.subr.mxu0 0.0
  %2329 = vmatpush1.msra.mxu0 0.0
  %2330 = vmatprep.subr.mxu0 0.0
  %2331 = vmatpush1.msra.mxu0 0.0
  %2332 = vmatprep.subr.mxu0 0.0
  %2333 = vmatpush1.msra.mxu0 0.0
  %2334 = vmatprep.subr.mxu0 0.0
  %2335 = vmatpush1.msra.mxu0 0.0
  %2336 = vmatprep.subr.mxu0 0.0
  %2337 = vmatpush1.msra.mxu0 0.0
  %2338 = vmatprep.subr.mxu0 0.0
  %2339 = vmatpush1.msra.mxu0 0.0
  %2340 = vmatprep.subr.mxu0 0.0
  %2341 = vmatpush1.msra.mxu0 0.0
  %2342 = vmatprep.subr.mxu0 0.0
  %2343 = vmatpush1.msra.mxu0 0.0
  %2344 = vmatprep.subr.mxu0 0.0
  %2345 = vmatpush1.msra.mxu0 0.0
  %2346 = vmatprep.subr.mxu0 0.0
  %2347 = vmatpush1.msra.mxu0 0.0
  %2348 = vmatprep.subr.mxu0 0.0
  %2349 = vmatpush1.msra.mxu0 0.0
  %2350 = vmatprep.subr.mxu0 0.0
  %2351 = vmatpush1.msra.mxu0 0.0
  %2352 = vmatprep.subr.mxu0 0.0
  %2353 = vmatpush1.msra.mxu0 0.0
  %2354 = vmatprep.subr.mxu0 0.0
  %2355 = vmatpush1.msra.mxu0 0.0
  %2356 = vmatprep.subr.mxu0 0.0
  %2357 = vmatpush1.msra.mxu0 0.0
  %2358 = vmatprep.subr.mxu0 0.0
  %2359 = vmatpush1.msra.mxu0 0.0
  %2360 = vmatprep.subr.mxu0 0.0
  %2361 = vmatpush1.msra.mxu0 0.0
  %2362 = vmatprep.subr.mxu0 0.0
  %2363 = vmatpush1.msra.mxu0 0.0
  %2364 = vmatprep.subr.mxu0 0.0
  %2365 = vmatpush1.msra.mxu0 0.0
  %2366 = vmatprep.subr.mxu0 0.0
  %2367 = vmatpush1.msra.mxu0 0.0
  %2368 = vmatprep.subr.mxu0 0.0
  %2369 = vmatpush1.msra.mxu0 0.0
  %2370 = vmatprep.subr.mxu0 0.0
  %2371 = vmatpush1.msra.mxu0 0.0
  %2372 = vmatprep.mubr.f32.mxu0 0.0
  %2373 = vmatmul.mubr.f32.gmra.mrb[0].mxu0 %v373
  %v2374 = vpop.f32.mrb[0].mxu0
  %v2375 = vadd.f32 %v334, %v2374
  %v2376 = vpop.f32.mrb[0].mxu0
  %v2377 = vadd.f32 %v334, %v2376
  %2378 = vmatprep.mubr.f32.mxu0 0.0
  %2379 = vmatmul.mubr.f32.gmra.mrb[0].mxu0 %v376
  %v2380 = vpop.f32.mrb[0].mxu0
  %v2381 = vadd.f32 %v339, %v2380
  %v2382 = vpop.f32.mrb[0].mxu0
  %v2383 = vadd.f32 %v339, %v2382
  %2384 = vmatprep.mubr.f32.mxu0 0.0
  %2385 = vmatmul.mubr.f32.gmra.mrb[0].mxu0 %v379
  %v2386 = vpop.f32.mrb[0].mxu0
  %v2387 = vadd.f32 %v344, %v2386
  %v2388 = vpop.f32.mrb[0].mxu0
  %v2389 = vadd.f32 %v344, %v2388
  %2390 = vmatprep.mubr.f32.mxu0 0.0
  %2391 = vmatmul.mubr.f32.gmra.mrb[0].mxu0 %v382
  %v2392 = vpop.f32.mrb[0].mxu0
  %v2393 = vadd.f32 %v349, %v2392
  %v2394 = vpop.f32.mrb[0].mxu0
  %v2395 = vadd.f32 %v349, %v2394
  %2396 = vmatprep.mubr.f32.mxu0 0.0
  %2397 = vmatmul.mubr.f32.gmra.mrb[0].mxu0 %v385
  %v2398 = vpop.f32.mrb[0].mxu0
  %v2399 = vadd.f32 %v354, %v2398
  %v2400 = vpop.f32.mrb[0].mxu0
  %v2401 = vadd.f32 %v354, %v2400
  %2402 = vmatprep.mubr.f32.mxu0 0.0
  %2403 = vmatmul.mubr.f32.gmra.mrb[0].mxu0 %v388
  %v2404 = vpop.f32.mrb[0].mxu0
  %v2405 = vadd.f32 %v359, %v2404
  %v2406 = vpop.f32.mrb[0].mxu0
  %v2407 = vadd.f32 %v359, %v2406
  %2408 = vmatprep.mubr.f32.mxu0 0.0
  %2409 = vmatmul.mubr.f32.gmra.mrb[0].mxu0 %v391
  %v2410 = vpop.f32.mrb[0].mxu0
  %v2411 = vadd.f32 %v364, %v2410
  %v2412 = vpop.f32.mrb[0].mxu0
  %v2413 = vadd.f32 %v364, %v2412
  %2414 = vmatprep.mubr.f32.mxu0 0.0
  %2415 = vmatmul.mubr.f32.gmra.mrb[0].mxu0 %v394
  %v2416 = vpop.f32.mrb[0].mxu0
  %v2417 = vadd.f32 %v369, %v2416
  %v2418 = vpop.f32.mrb[0].mxu0
  %v2419 = vadd.f32 %v369, %v2418
  %2420 = vdwg.mxu0
  %2421 = vmatprep.subr.mxu0 %v68
  %2422 = vmatpush1.msra.mxu0 %v67
  %2423 = vmatprep.subr.mxu0 %v140
  %2424 = vmatpush1.msra.mxu0 %v139
  %2425 = vmatprep.subr.mxu0 %v212
  %2426 = vmatpush1.msra.mxu0 %v211
  %2427 = vmatprep.subr.mxu0 %v497
  %2428 = vmatpush1.msra.mxu0 %v494
  %2429 = vmatprep.subr.mxu0 0.0
  %2430 = vmatpush1.msra.mxu0 0.0
  %2431 = vmatprep.subr.mxu0 0.0
  %2432 = vmatpush1.msra.mxu0 0.0
  %2433 = vmatprep.subr.mxu0 0.0
  %2434 = vmatpush1.msra.mxu0 0.0
  %2435 = vmatprep.subr.mxu0 0.0
  %2436 = vmatpush1.msra.mxu0 0.0
  %2437 = vmatprep.subr.mxu0 0.0
  %2438 = vmatpush1.msra.mxu0 0.0
  %2439 = vmatprep.subr.mxu0 0.0
  %2440 = vmatpush1.msra.mxu0 0.0
  %2441 = vmatprep.subr.mxu0 0.0
  %2442 = vmatpush1.msra.mxu0 0.0
  %2443 = vmatprep.subr.mxu0 0.0
  %2444 = vmatpush1.msra.mxu0 0.0
  %2445 = vmatprep.subr.mxu0 0.0
  %2446 = vmatpush1.msra.mxu0 0.0
  %2447 = vmatprep.subr.mxu0 0.0
  %2448 = vmatpush1.msra.mxu0 0.0
  %2449 = vmatprep.subr.mxu0 0.0
  %2450 = vmatpush1.msra.mxu0 0.0
  %2451 = vmatprep.subr.mxu0 0.0
  %2452 = vmatpush1.msra.mxu0 0.0
  %2453 = vmatprep.subr.mxu0 0.0
  %2454 = vmatpush1.msra.mxu0 0.0
  %2455 = vmatprep.subr.mxu0 0.0
  %2456 = vmatpush1.msra.mxu0 0.0
  %2457 = vmatprep.subr.mxu0 0.0
  %2458 = vmatpush1.msra.mxu0 0.0
  %2459 = vmatprep.subr.mxu0 0.0
  %2460 = vmatpush1.msra.mxu0 0.0
  %2461 = vmatprep.subr.mxu0 0.0
  %2462 = vmatpush1.msra.mxu0 0.0
  %2463 = vmatprep.subr.mxu0 0.0
  %2464 = vmatpush1.msra.mxu0 0.0
  %2465 = vmatprep.subr.mxu0 0.0
  %2466 = vmatpush1.msra.mxu0 0.0
  %2467 = vmatprep.subr.mxu0 0.0
  %2468 = vmatpush1.msra.mxu0 0.0
  %2469 = vmatprep.subr.mxu0 0.0
  %2470 = vmatpush1.msra.mxu0 0.0
  %2471 = vmatprep.subr.mxu0 0.0
  %2472 = vmatpush1.msra.mxu0 0.0
  %2473 = vmatprep.subr.mxu0 0.0
  %2474 = vmatpush1.msra.mxu0 0.0
  %2475 = vmatprep.subr.mxu0 0.0
  %2476 = vmatpush1.msra.mxu0 0.0
  %2477 = vmatprep.subr.mxu0 0.0
  %2478 = vmatpush1.msra.mxu0 0.0
  %2479 = vmatprep.subr.mxu0 0.0
  %2480 = vmatpush1.msra.mxu0 0.0
  %2481 = vmatprep.subr.mxu0 0.0
  %2482 = vmatpush1.msra.mxu0 0.0
  %2483 = vmatprep.subr.mxu0 0.0
  %2484 = vmatpush1.msra.mxu0 0.0
  %2485 = vmatprep.mubr.f32.mxu0 0.0
  %2486 = vmatmul.mubr.f32.gmra.mrb[0].mxu0 %v373
  %v2487 = vpop.f32.mrb[0].mxu0
  %v2488 = vadd.f32 %v334, %v2487
  %v2489 = vpop.f32.mrb[0].mxu0
  %v2490 = vadd.f32 %v334, %v2489
  %2491 = vmatprep.mubr.f32.mxu0 0.0
  %2492 = vmatmul.mubr.f32.gmra.mrb[0].mxu0 %v376
  %v2493 = vpop.f32.mrb[0].mxu0
  %v2494 = vadd.f32 %v339, %v2493
  %v2495 = vpop.f32.mrb[0].mxu0
  %v2496 = vadd.f32 %v339, %v2495
  %2497 = vmatprep.mubr.f32.mxu0 0.0
  %2498 = vmatmul.mubr.f32.gmra.mrb[0].mxu0 %v379
  %v2499 = vpop.f32.mrb[0].mxu0
  %v2500 = vadd.f32 %v344, %v2499
  %v2501 = vpop.f32.mrb[0].mxu0
  %v2502 = vadd.f32 %v344, %v2501
  %2503 = vmatprep.mubr.f32.mxu0 0.0
  %2504 = vmatmul.mubr.f32.gmra.mrb[0].mxu0 %v382
  %v2505 = vpop.f32.mrb[0].mxu0
  %v2506 = vadd.f32 %v349, %v2505
  %v2507 = vpop.f32.mrb[0].mxu0
  %v2508 = vadd.f32 %v349, %v2507
  %2509 = vmatprep.mubr.f32.mxu0 0.0
  %2510 = vmatmul.mubr.f32.gmra.mrb[0].mxu0 %v385
  %v2511 = vpop.f32.mrb[0].mxu0
  %v2512 = vadd.f32 %v354, %v2511
  %v2513 = vpop.f32.mrb[0].mxu0
  %v2514 = vadd.f32 %v354, %v2513
  %2515 = vmatprep.mubr.f32.mxu0 0.0
  %2516 = vmatmul.mubr.f32.gmra.mrb[0].mxu0 %v388
  %v2517 = vpop.f32.mrb[0].mxu0
  %v2518 = vadd.f32 %v359, %v2517
  %v2519 = vpop.f32.mrb[0].mxu0
  %v2520 = vadd.f32 %v359, %v2519
  %2521 = vmatprep.mubr.f32.mxu0 0.0
  %2522 = vmatmul.mubr.f32.gmra.mrb[0].mxu0 %v391
  %v2523 = vpop.f32.mrb[0].mxu0
  %v2524 = vadd.f32 %v364, %v2523
  %v2525 = vpop.f32.mrb[0].mxu0
  %v2526 = vadd.f32 %v364, %v2525
  %2527 = vmatprep.mubr.f32.mxu0 0.0
  %2528 = vmatmul.mubr.f32.gmra.mrb[0].mxu0 %v394
  %v2529 = vpop.f32.mrb[0].mxu0
  %v2530 = vadd.f32 %v369, %v2529
  %v2531 = vpop.f32.mrb[0].mxu0
  %v2532 = vadd.f32 %v369, %v2531
  %2533 = vdwg.mxu0
  %2534 = vmatprep.subr.mxu0 %v70
  %2535 = vmatpush1.msra.mxu0 %v69
  %2536 = vmatprep.subr.mxu0 %v142
  %2537 = vmatpush1.msra.mxu0 %v141
  %2538 = vmatprep.subr.mxu0 %v214
  %2539 = vmatpush1.msra.mxu0 %v213
  %2540 = vmatprep.subr.mxu0 %v503
  %2541 = vmatpush1.msra.mxu0 %v500
  %2542 = vmatprep.subr.mxu0 0.0
  %2543 = vmatpush1.msra.mxu0 0.0
  %2544 = vmatprep.subr.mxu0 0.0
  %2545 = vmatpush1.msra.mxu0 0.0
  %2546 = vmatprep.subr.mxu0 0.0
  %2547 = vmatpush1.msra.mxu0 0.0
  %2548 = vmatprep.subr.mxu0 0.0
  %2549 = vmatpush1.msra.mxu0 0.0
  %2550 = vmatprep.subr.mxu0 0.0
  %2551 = vmatpush1.msra.mxu0 0.0
  %2552 = vmatprep.subr.mxu0 0.0
  %2553 = vmatpush1.msra.mxu0 0.0
  %2554 = vmatprep.subr.mxu0 0.0
  %2555 = vmatpush1.msra.mxu0 0.0
  %2556 = vmatprep.subr.mxu0 0.0
  %2557 = vmatpush1.msra.mxu0 0.0
  %2558 = vmatprep.subr.mxu0 0.0
  %2559 = vmatpush1.msra.mxu0 0.0
  %2560 = vmatprep.subr.mxu0 0.0
  %2561 = vmatpush1.msra.mxu0 0.0
  %2562 = vmatprep.subr.mxu0 0.0
  %2563 = vmatpush1.msra.mxu0 0.0
  %2564 = vmatprep.subr.mxu0 0.0
  %2565 = vmatpush1.msra.mxu0 0.0
  %2566 = vmatprep.subr.mxu0 0.0
  %2567 = vmatpush1.msra.mxu0 0.0
  %2568 = vmatprep.subr.mxu0 0.0
  %2569 = vmatpush1.msra.mxu0 0.0
  %2570 = vmatprep.subr.mxu0 0.0
  %2571 = vmatpush1.msra.mxu0 0.0
  %2572 = vmatprep.subr.mxu0 0.0
  %2573 = vmatpush1.msra.mxu0 0.0
  %2574 = vmatprep.subr.mxu0 0.0
  %2575 = vmatpush1.msra.mxu0 0.0
  %2576 = vmatprep.subr.mxu0 0.0
  %2577 = vmatpush1.msra.mxu0 0.0
  %2578 = vmatprep.subr.mxu0 0.0
  %2579 = vmatpush1.msra.mxu0 0.0
  %2580 = vmatprep.subr.mxu0 0.0
  %2581 = vmatpush1.msra.mxu0 0.0
  %2582 = vmatprep.subr.mxu0 0.0
  %2583 = vmatpush1.msra.mxu0 0.0
  %2584 = vmatprep.subr.mxu0 0.0
  %2585 = vmatpush1.msra.mxu0 0.0
  %2586 = vmatprep.subr.mxu0 0.0
  %2587 = vmatpush1.msra.mxu0 0.0
  %2588 = vmatprep.subr.mxu0 0.0
  %2589 = vmatpush1.msra.mxu0 0.0
  %2590 = vmatprep.subr.mxu0 0.0
  %2591 = vmatpush1.msra.mxu0 0.0
  %2592 = vmatprep.subr.mxu0 0.0
  %2593 = vmatpush1.msra.mxu0 0.0
  %2594 = vmatprep.subr.mxu0 0.0
  %2595 = vmatpush1.msra.mxu0 0.0
  %2596 = vmatprep.subr.mxu0 0.0
  %2597 = vmatpush1.msra.mxu0 0.0
  %2598 = vmatprep.mubr.f32.mxu0 0.0
  %2599 = vmatmul.mubr.f32.gmra.mrb[0].mxu0 %v373
  %v2600 = vpop.f32.mrb[0].mxu0
  %v2601 = vadd.f32 %v334, %v2600
  %v2602 = vpop.f32.mrb[0].mxu0
  %v2603 = vadd.f32 %v334, %v2602
  %2604 = vmatprep.mubr.f32.mxu0 0.0
  %2605 = vmatmul.mubr.f32.gmra.mrb[0].mxu0 %v376
  %v2606 = vpop.f32.mrb[0].mxu0
  %v2607 = vadd.f32 %v339, %v2606
  %v2608 = vpop.f32.mrb[0].mxu0
  %v2609 = vadd.f32 %v339, %v2608
  %2610 = vmatprep.mubr.f32.mxu0 0.0
  %2611 = vmatmul.mubr.f32.gmra.mrb[0].mxu0 %v379
  %v2612 = vpop.f32.mrb[0].mxu0
  %v2613 = vadd.f32 %v344, %v2612
  %v2614 = vpop.f32.mrb[0].mxu0
  %v2615 = vadd.f32 %v344, %v2614
  %2616 = vmatprep.mubr.f32.mxu0 0.0
  %2617 = vmatmul.mubr.f32.gmra.mrb[0].mxu0 %v382
  %v2618 = vpop.f32.mrb[0].mxu0
  %v2619 = vadd.f32 %v349, %v2618
  %v2620 = vpop.f32.mrb[0].mxu0
  %v2621 = vadd.f32 %v349, %v2620
  %2622 = vmatprep.mubr.f32.mxu0 0.0
  %2623 = vmatmul.mubr.f32.gmra.mrb[0].mxu0 %v385
  %v2624 = vpop.f32.mrb[0].mxu0
  %v2625 = vadd.f32 %v354, %v2624
  %v2626 = vpop.f32.mrb[0].mxu0
  %v2627 = vadd.f32 %v354, %v2626
  %2628 = vmatprep.mubr.f32.mxu0 0.0
  %2629 = vmatmul.mubr.f32.gmra.mrb[0].mxu0 %v388
  %v2630 = vpop.f32.mrb[0].mxu0
  %v2631 = vadd.f32 %v359, %v2630
  %v2632 = vpop.f32.mrb[0].mxu0
  %v2633 = vadd.f32 %v359, %v2632
  %2634 = vmatprep.mubr.f32.mxu0 0.0
  %2635 = vmatmul.mubr.f32.gmra.mrb[0].mxu0 %v391
  %v2636 = vpop.f32.mrb[0].mxu0
  %v2637 = vadd.f32 %v364, %v2636
  %v2638 = vpop.f32.mrb[0].mxu0
  %v2639 = vadd.f32 %v364, %v2638
  %2640 = vmatprep.mubr.f32.mxu0 0.0
  %2641 = vmatmul.mubr.f32.gmra.mrb[0].mxu0 %v394
  %v2642 = vpop.f32.mrb[0].mxu0
  %v2643 = vadd.f32 %v369, %v2642
  %v2644 = vpop.f32.mrb[0].mxu0
  %v2645 = vadd.f32 %v369, %v2644
  %2646 = vdwg.mxu0
  %2647 = vmatprep.subr.mxu0 %v72
  %2648 = vmatpush1.msra.mxu0 %v71
  %2649 = vmatprep.subr.mxu0 %v144
  %2650 = vmatpush1.msra.mxu0 %v143
  %2651 = vmatprep.subr.mxu0 %v216
  %2652 = vmatpush1.msra.mxu0 %v215
  %2653 = vmatprep.subr.mxu0 %v509
  %2654 = vmatpush1.msra.mxu0 %v506
  %2655 = vmatprep.subr.mxu0 0.0
  %2656 = vmatpush1.msra.mxu0 0.0
  %2657 = vmatprep.subr.mxu0 0.0
  %2658 = vmatpush1.msra.mxu0 0.0
  %2659 = vmatprep.subr.mxu0 0.0
  %2660 = vmatpush1.msra.mxu0 0.0
  %2661 = vmatprep.subr.mxu0 0.0
  %2662 = vmatpush1.msra.mxu0 0.0
  %2663 = vmatprep.subr.mxu0 0.0
  %2664 = vmatpush1.msra.mxu0 0.0
  %2665 = vmatprep.subr.mxu0 0.0
  %2666 = vmatpush1.msra.mxu0 0.0
  %2667 = vmatprep.subr.mxu0 0.0
  %2668 = vmatpush1.msra.mxu0 0.0
  %2669 = vmatprep.subr.mxu0 0.0
  %2670 = vmatpush1.msra.mxu0 0.0
  %2671 = vmatprep.subr.mxu0 0.0
  %2672 = vmatpush1.msra.mxu0 0.0
  %2673 = vmatprep.subr.mxu0 0.0
  %2674 = vmatpush1.msra.mxu0 0.0
  %2675 = vmatprep.subr.mxu0 0.0
  %2676 = vmatpush1.msra.mxu0 0.0
  %2677 = vmatprep.subr.mxu0 0.0
  %2678 = vmatpush1.msra.mxu0 0.0
  %2679 = vmatprep.subr.mxu0 0.0
  %2680 = vmatpush1.msra.mxu0 0.0
  %2681 = vmatprep.subr.mxu0 0.0
  %2682 = vmatpush1.msra.mxu0 0.0
  %2683 = vmatprep.subr.mxu0 0.0
  %2684 = vmatpush1.msra.mxu0 0.0
  %2685 = vmatprep.subr.mxu0 0.0
  %2686 = vmatpush1.msra.mxu0 0.0
  %2687 = vmatprep.subr.mxu0 0.0
  %2688 = vmatpush1.msra.mxu0 0.0
  %2689 = vmatprep.subr.mxu0 0.0
  %2690 = vmatpush1.msra.mxu0 0.0
  %2691 = vmatprep.subr.mxu0 0.0
  %2692 = vmatpush1.msra.mxu0 0.0
  %2693 = vmatprep.subr.mxu0 0.0
  %2694 = vmatpush1.msra.mxu0 0.0
  %2695 = vmatprep.subr.mxu0 0.0
  %2696 = vmatpush1.msra.mxu0 0.0
  %2697 = vmatprep.subr.mxu0 0.0
  %2698 = vmatpush1.msra.mxu0 0.0
  %2699 = vmatprep.subr.mxu0 0.0
  %2700 = vmatpush1.msra.mxu0 0.0
  %2701 = vmatprep.subr.mxu0 0.0
  %2702 = vmatpush1.msra.mxu0 0.0
  %2703 = vmatprep.subr.mxu0 0.0
  %2704 = vmatpush1.msra.mxu0 0.0
  %2705 = vmatprep.subr.mxu0 0.0
  %2706 = vmatpush1.msra.mxu0 0.0
  %2707 = vmatprep.subr.mxu0 0.0
  %2708 = vmatpush1.msra.mxu0 0.0
  %2709 = vmatprep.subr.mxu0 0.0
  %2710 = vmatpush1.msra.mxu0 0.0
  %2711 = vmatprep.mubr.f32.mxu0 0.0
  %2712 = vmatmul.mubr.f32.gmra.mrb[0].mxu0 %v373
  %v2713 = vpop.f32.mrb[0].mxu0
  %v2714 = vadd.f32 %v334, %v2713
  %v2715 = vpop.f32.mrb[0].mxu0
  %v2716 = vadd.f32 %v334, %v2715
  %2717 = vmatprep.mubr.f32.mxu0 0.0
  %2718 = vmatmul.mubr.f32.gmra.mrb[0].mxu0 %v376
  %v2719 = vpop.f32.mrb[0].mxu0
  %v2720 = vadd.f32 %v339, %v2719
  %v2721 = vpop.f32.mrb[0].mxu0
  %v2722 = vadd.f32 %v339, %v2721
  %2723 = vmatprep.mubr.f32.mxu0 0.0
  %2724 = vmatmul.mubr.f32.gmra.mrb[0].mxu0 %v379
  %v2725 = vpop.f32.mrb[0].mxu0
  %v2726 = vadd.f32 %v344, %v2725
  %v2727 = vpop.f32.mrb[0].mxu0
  %v2728 = vadd.f32 %v344, %v2727
  %2729 = vmatprep.mubr.f32.mxu0 0.0
  %2730 = vmatmul.mubr.f32.gmra.mrb[0].mxu0 %v382
  %v2731 = vpop.f32.mrb[0].mxu0
  %v2732 = vadd.f32 %v349, %v2731
  %v2733 = vpop.f32.mrb[0].mxu0
  %v2734 = vadd.f32 %v349, %v2733
  %2735 = vmatprep.mubr.f32.mxu0 0.0
  %2736 = vmatmul.mubr.f32.gmra.mrb[0].mxu0 %v385
  %v2737 = vpop.f32.mrb[0].mxu0
  %v2738 = vadd.f32 %v354, %v2737
  %v2739 = vpop.f32.mrb[0].mxu0
  %v2740 = vadd.f32 %v354, %v2739
  %2741 = vmatprep.mubr.f32.mxu0 0.0
  %2742 = vmatmul.mubr.f32.gmra.mrb[0].mxu0 %v388
  %v2743 = vpop.f32.mrb[0].mxu0
  %v2744 = vadd.f32 %v359, %v2743
  %v2745 = vpop.f32.mrb[0].mxu0
  %v2746 = vadd.f32 %v359, %v2745
  %2747 = vmatprep.mubr.f32.mxu0 0.0
  %2748 = vmatmul.mubr.f32.gmra.mrb[0].mxu0 %v391
  %v2749 = vpop.f32.mrb[0].mxu0
  %v2750 = vadd.f32 %v364, %v2749
  %v2751 = vpop.f32.mrb[0].mxu0
  %v2752 = vadd.f32 %v364, %v2751
  %2753 = vmatprep.mubr.f32.mxu0 0.0
  %2754 = vmatmul.mubr.f32.gmra.mrb[0].mxu0 %v394
  %v2755 = vpop.f32.mrb[0].mxu0
  %v2756 = vadd.f32 %v369, %v2755
  %v2757 = vpop.f32.mrb[0].mxu0
  %v2758 = vadd.f32 %v369, %v2757
  %2759 = vdwg.mxu0
  %2760 = vmatprep.subr.mxu0 %v74
  %2761 = vmatpush1.msra.mxu0 %v73
  %2762 = vmatprep.subr.mxu0 %v146
  %2763 = vmatpush1.msra.mxu0 %v145
  %2764 = vmatprep.subr.mxu0 %v218
  %2765 = vmatpush1.msra.mxu0 %v217
  %2766 = vmatprep.subr.mxu0 %v515
  %2767 = vmatpush1.msra.mxu0 %v512
  %2768 = vmatprep.subr.mxu0 0.0
  %2769 = vmatpush1.msra.mxu0 0.0
  %2770 = vmatprep.subr.mxu0 0.0
  %2771 = vmatpush1.msra.mxu0 0.0
  %2772 = vmatprep.subr.mxu0 0.0
  %2773 = vmatpush1.msra.mxu0 0.0
  %2774 = vmatprep.subr.mxu0 0.0
  %2775 = vmatpush1.msra.mxu0 0.0
  %2776 = vmatprep.subr.mxu0 0.0
  %2777 = vmatpush1.msra.mxu0 0.0
  %2778 = vmatprep.subr.mxu0 0.0
  %2779 = vmatpush1.msra.mxu0 0.0
  %2780 = vmatprep.subr.mxu0 0.0
  %2781 = vmatpush1.msra.mxu0 0.0
  %2782 = vmatprep.subr.mxu0 0.0
  %2783 = vmatpush1.msra.mxu0 0.0
  %2784 = vmatprep.subr.mxu0 0.0
  %2785 = vmatpush1.msra.mxu0 0.0
  %2786 = vmatprep.subr.mxu0 0.0
  %2787 = vmatpush1.msra.mxu0 0.0
  %2788 = vmatprep.subr.mxu0 0.0
  %2789 = vmatpush1.msra.mxu0 0.0
  %2790 = vmatprep.subr.mxu0 0.0
  %2791 = vmatpush1.msra.mxu0 0.0
  %2792 = vmatprep.subr.mxu0 0.0
  %2793 = vmatpush1.msra.mxu0 0.0
  %2794 = vmatprep.subr.mxu0 0.0
  %2795 = vmatpush1.msra.mxu0 0.0
  %2796 = vmatprep.subr.mxu0 0.0
  %2797 = vmatpush1.msra.mxu0 0.0
  %2798 = vmatprep.subr.mxu0 0.0
  %2799 = vmatpush1.msra.mxu0 0.0
  %2800 = vmatprep.subr.mxu0 0.0
  %2801 = vmatpush1.msra.mxu0 0.0
  %2802 = vmatprep.subr.mxu0 0.0
  %2803 = vmatpush1.msra.mxu0 0.0
  %2804 = vmatprep.subr.mxu0 0.0
  %2805 = vmatpush1.msra.mxu0 0.0
  %2806 = vmatprep.subr.mxu0 0.0
  %2807 = vmatpush1.msra.mxu0 0.0
  %2808 = vmatprep.subr.mxu0 0.0
  %2809 = vmatpush1.msra.mxu0 0.0
  %2810 = vmatprep.subr.mxu0 0.0
  %2811 = vmatpush1.msra.mxu0 0.0
  %2812 = vmatprep.subr.mxu0 0.0
  %2813 = vmatpush1.msra.mxu0 0.0
  %2814 = vmatprep.subr.mxu0 0.0
  %2815 = vmatpush1.msra.mxu0 0.0
  %2816 = vmatprep.subr.mxu0 0.0
  %2817 = vmatpush1.msra.mxu0 0.0
  %2818 = vmatprep.subr.mxu0 0.0
  %2819 = vmatpush1.msra.mxu0 0.0
  %2820 = vmatprep.subr.mxu0 0.0
  %2821 = vmatpush1.msra.mxu0 0.0
  %2822 = vmatprep.subr.mxu0 0.0
  %2823 = vmatpush1.msra.mxu0 0.0
  %2824 = vmatprep.mubr.f32.mxu0 0.0
  %2825 = vmatmul.mubr.f32.gmra.mrb[0].mxu0 %v373
  %v2826 = vpop.f32.mrb[0].mxu0
  %v2827 = vadd.f32 %v334, %v2826
  %v2828 = vpop.f32.mrb[0].mxu0
  %v2829 = vadd.f32 %v334, %v2828
  %2830 = vmatprep.mubr.f32.mxu0 0.0
  %2831 = vmatmul.mubr.f32.gmra.mrb[0].mxu0 %v376
  %v2832 = vpop.f32.mrb[0].mxu0
  %v2833 = vadd.f32 %v339, %v2832
  %v2834 = vpop.f32.mrb[0].mxu0
  %v2835 = vadd.f32 %v339, %v2834
  %2836 = vmatprep.mubr.f32.mxu0 0.0
  %2837 = vmatmul.mubr.f32.gmra.mrb[0].mxu0 %v379
  %v2838 = vpop.f32.mrb[0].mxu0
  %v2839 = vadd.f32 %v344, %v2838
  %v2840 = vpop.f32.mrb[0].mxu0
  %v2841 = vadd.f32 %v344, %v2840
  %2842 = vmatprep.mubr.f32.mxu0 0.0
  %2843 = vmatmul.mubr.f32.gmra.mrb[0].mxu0 %v382
  %v2844 = vpop.f32.mrb[0].mxu0
  %v2845 = vadd.f32 %v349, %v2844
  %v2846 = vpop.f32.mrb[0].mxu0
  %v2847 = vadd.f32 %v349, %v2846
  %2848 = vmatprep.mubr.f32.mxu0 0.0
  %2849 = vmatmul.mubr.f32.gmra.mrb[0].mxu0 %v385
  %v2850 = vpop.f32.mrb[0].mxu0
  %v2851 = vadd.f32 %v354, %v2850
  %v2852 = vpop.f32.mrb[0].mxu0
  %v2853 = vadd.f32 %v354, %v2852
  %2854 = vmatprep.mubr.f32.mxu0 0.0
  %2855 = vmatmul.mubr.f32.gmra.mrb[0].mxu0 %v388
  %v2856 = vpop.f32.mrb[0].mxu0
  %v2857 = vadd.f32 %v359, %v2856
  %v2858 = vpop.f32.mrb[0].mxu0
  %v2859 = vadd.f32 %v359, %v2858
  %2860 = vmatprep.mubr.f32.mxu0 0.0
  %2861 = vmatmul.mubr.f32.gmra.mrb[0].mxu0 %v391
  %v2862 = vpop.f32.mrb[0].mxu0
  %v2863 = vadd.f32 %v364, %v2862
  %v2864 = vpop.f32.mrb[0].mxu0
  %v2865 = vadd.f32 %v364, %v2864
  %2866 = vmatprep.mubr.f32.mxu0 0.0
  %2867 = vmatmul.mubr.f32.gmra.mrb[0].mxu0 %v394
  %v2868 = vpop.f32.mrb[0].mxu0
  %v2869 = vadd.f32 %v369, %v2868
  %v2870 = vpop.f32.mrb[0].mxu0
  %v2871 = vadd.f32 %v369, %v2870
  %2872 = vdwg.mxu0
  %2873 = vmatprep.subr.mxu0 %v76
  %2874 = vmatpush1.msra.mxu0 %v75
  %2875 = vmatprep.subr.mxu0 %v148
  %2876 = vmatpush1.msra.mxu0 %v147
  %2877 = vmatprep.subr.mxu0 %v220
  %2878 = vmatpush1.msra.mxu0 %v219
  %2879 = vmatprep.subr.mxu0 %v521
  %2880 = vmatpush1.msra.mxu0 %v518
  %2881 = vmatprep.subr.mxu0 0.0
  %2882 = vmatpush1.msra.mxu0 0.0
  %2883 = vmatprep.subr.mxu0 0.0
  %2884 = vmatpush1.msra.mxu0 0.0
  %2885 = vmatprep.subr.mxu0 0.0
  %2886 = vmatpush1.msra.mxu0 0.0
  %2887 = vmatprep.subr.mxu0 0.0
  %2888 = vmatpush1.msra.mxu0 0.0
  %2889 = vmatprep.subr.mxu0 0.0
  %2890 = vmatpush1.msra.mxu0 0.0
  %2891 = vmatprep.subr.mxu0 0.0
  %2892 = vmatpush1.msra.mxu0 0.0
  %2893 = vmatprep.subr.mxu0 0.0
  %2894 = vmatpush1.msra.mxu0 0.0
  %2895 = vmatprep.subr.mxu0 0.0
  %2896 = vmatpush1.msra.mxu0 0.0
  %2897 = vmatprep.subr.mxu0 0.0
  %2898 = vmatpush1.msra.mxu0 0.0
  %2899 = vmatprep.subr.mxu0 0.0
  %2900 = vmatpush1.msra.mxu0 0.0
  %2901 = vmatprep.subr.mxu0 0.0
  %2902 = vmatpush1.msra.mxu0 0.0
  %2903 = vmatprep.subr.mxu0 0.0
  %2904 = vmatpush1.msra.mxu0 0.0
  %2905 = vmatprep.subr.mxu0 0.0
  %2906 = vmatpush1.msra.mxu0 0.0
  %2907 = vmatprep.subr.mxu0 0.0
  %2908 = vmatpush1.msra.mxu0 0.0
  %2909 = vmatprep.subr.mxu0 0.0
  %2910 = vmatpush1.msra.mxu0 0.0
  %2911 = vmatprep.subr.mxu0 0.0
  %2912 = vmatpush1.msra.mxu0 0.0
  %2913 = vmatprep.subr.mxu0 0.0
  %2914 = vmatpush1.msra.mxu0 0.0
  %2915 = vmatprep.subr.mxu0 0.0
  %2916 = vmatpush1.msra.mxu0 0.0
  %2917 = vmatprep.subr.mxu0 0.0
  %2918 = vmatpush1.msra.mxu0 0.0
  %2919 = vmatprep.subr.mxu0 0.0
  %2920 = vmatpush1.msra.mxu0 0.0
  %2921 = vmatprep.subr.mxu0 0.0
  %2922 = vmatpush1.msra.mxu0 0.0
  %2923 = vmatprep.subr.mxu0 0.0
  %2924 = vmatpush1.msra.mxu0 0.0
  %2925 = vmatprep.subr.mxu0 0.0
  %2926 = vmatpush1.msra.mxu0 0.0
  %2927 = vmatprep.subr.mxu0 0.0
  %2928 = vmatpush1.msra.mxu0 0.0
  %2929 = vmatprep.subr.mxu0 0.0
  %2930 = vmatpush1.msra.mxu0 0.0
  %2931 = vmatprep.subr.mxu0 0.0
  %2932 = vmatpush1.msra.mxu0 0.0
  %2933 = vmatprep.subr.mxu0 0.0
  %2934 = vmatpush1.msra.mxu0 0.0
  %2935 = vmatprep.subr.mxu0 0.0
  %2936 = vmatpush1.msra.mxu0 0.0
  %2937 = vmatprep.mubr.f32.mxu0 0.0
  %2938 = vmatmul.mubr.f32.gmra.mrb[0].mxu0 %v373
  %v2939 = vpop.f32.mrb[0].mxu0
  %v2940 = vadd.f32 %v334, %v2939
  %v2941 = vpop.f32.mrb[0].mxu0
  %v2942 = vadd.f32 %v334, %v2941
  %2943 = vmatprep.mubr.f32.mxu0 0.0
  %2944 = vmatmul.mubr.f32.gmra.mrb[0].mxu0 %v376
  %v2945 = vpop.f32.mrb[0].mxu0
  %v2946 = vadd.f32 %v339, %v2945
  %v2947 = vpop.f32.mrb[0].mxu0
  %v2948 = vadd.f32 %v339, %v2947
  %2949 = vmatprep.mubr.f32.mxu0 0.0
  %2950 = vmatmul.mubr.f32.gmra.mrb[0].mxu0 %v379
  %v2951 = vpop.f32.mrb[0].mxu0
  %v2952 = vadd.f32 %v344, %v2951
  %v2953 = vpop.f32.mrb[0].mxu0
  %v2954 = vadd.f32 %v344, %v2953
  %2955 = vmatprep.mubr.f32.mxu0 0.0
  %2956 = vmatmul.mubr.f32.gmra.mrb[0].mxu0 %v382
  %v2957 = vpop.f32.mrb[0].mxu0
  %v2958 = vadd.f32 %v349, %v2957
  %v2959 = vpop.f32.mrb[0].mxu0
  %v2960 = vadd.f32 %v349, %v2959
  %2961 = vmatprep.mubr.f32.mxu0 0.0
  %2962 = vmatmul.mubr.f32.gmra.mrb[0].mxu0 %v385
  %v2963 = vpop.f32.mrb[0].mxu0
  %v2964 = vadd.f32 %v354, %v2963
  %v2965 = vpop.f32.mrb[0].mxu0
  %v2966 = vadd.f32 %v354, %v2965
  %2967 = vmatprep.mubr.f32.mxu0 0.0
  %2968 = vmatmul.mubr.f32.gmra.mrb[0].mxu0 %v388
  %v2969 = vpop.f32.mrb[0].mxu0
  %v2970 = vadd.f32 %v359, %v2969
  %v2971 = vpop.f32.mrb[0].mxu0
  %v2972 = vadd.f32 %v359, %v2971
  %2973 = vmatprep.mubr.f32.mxu0 0.0
  %2974 = vmatmul.mubr.f32.gmra.mrb[0].mxu0 %v391
  %v2975 = vpop.f32.mrb[0].mxu0
  %v2976 = vadd.f32 %v364, %v2975
  %v2977 = vpop.f32.mrb[0].mxu0
  %v2978 = vadd.f32 %v364, %v2977
  %2979 = vmatprep.mubr.f32.mxu0 0.0
  %2980 = vmatmul.mubr.f32.gmra.mrb[0].mxu0 %v394
  %v2981 = vpop.f32.mrb[0].mxu0
  %v2982 = vadd.f32 %v369, %v2981
  %v2983 = vpop.f32.mrb[0].mxu0
  %v2984 = vadd.f32 %v369, %v2983
  %2985 = vdwg.mxu0
  %2986 = vmatprep.subr.mxu0 %v78
  %2987 = vmatpush1.msra.mxu0 %v77
  %2988 = vmatprep.subr.mxu0 %v150
  %2989 = vmatpush1.msra.mxu0 %v149
  %2990 = vmatprep.subr.mxu0 %v222
  %2991 = vmatpush1.msra.mxu0 %v221
  %2992 = vmatprep.subr.mxu0 %v527
  %2993 = vmatpush1.msra.mxu0 %v524
  %2994 = vmatprep.subr.mxu0 0.0
  %2995 = vmatpush1.msra.mxu0 0.0
  %2996 = vmatprep.subr.mxu0 0.0
  %2997 = vmatpush1.msra.mxu0 0.0
  %2998 = vmatprep.subr.mxu0 0.0
  %2999 = vmatpush1.msra.mxu0 0.0
  %3000 = vmatprep.subr.mxu0 0.0
  %3001 = vmatpush1.msra.mxu0 0.0
  %3002 = vmatprep.subr.mxu0 0.0
  %3003 = vmatpush1.msra.mxu0 0.0
  %3004 = vmatprep.subr.mxu0 0.0
  %3005 = vmatpush1.msra.mxu0 0.0
  %3006 = vmatprep.subr.mxu0 0.0
  %3007 = vmatpush1.msra.mxu0 0.0
  %3008 = vmatprep.subr.mxu0 0.0
  %3009 = vmatpush1.msra.mxu0 0.0
  %3010 = vmatprep.subr.mxu0 0.0
  %3011 = vmatpush1.msra.mxu0 0.0
  %3012 = vmatprep.subr.mxu0 0.0
  %3013 = vmatpush1.msra.mxu0 0.0
  %3014 = vmatprep.subr.mxu0 0.0
  %3015 = vmatpush1.msra.mxu0 0.0
  %3016 = vmatprep.subr.mxu0 0.0
  %3017 = vmatpush1.msra.mxu0 0.0
  %3018 = vmatprep.subr.mxu0 0.0
  %3019 = vmatpush1.msra.mxu0 0.0
  %3020 = vmatprep.subr.mxu0 0.0
  %3021 = vmatpush1.msra.mxu0 0.0
  %3022 = vmatprep.subr.mxu0 0.0
  %3023 = vmatpush1.msra.mxu0 0.0
  %3024 = vmatprep.subr.mxu0 0.0
  %3025 = vmatpush1.msra.mxu0 0.0
  %3026 = vmatprep.subr.mxu0 0.0
  %3027 = vmatpush1.msra.mxu0 0.0
  %3028 = vmatprep.subr.mxu0 0.0
  %3029 = vmatpush1.msra.mxu0 0.0
  %3030 = vmatprep.subr.mxu0 0.0
  %3031 = vmatpush1.msra.mxu0 0.0
  %3032 = vmatprep.subr.mxu0 0.0
  %3033 = vmatpush1.msra.mxu0 0.0
  %3034 = vmatprep.subr.mxu0 0.0
  %3035 = vmatpush1.msra.mxu0 0.0
  %3036 = vmatprep.subr.mxu0 0.0
  %3037 = vmatpush1.msra.mxu0 0.0
  %3038 = vmatprep.subr.mxu0 0.0
  %3039 = vmatpush1.msra.mxu0 0.0
  %3040 = vmatprep.subr.mxu0 0.0
  %3041 = vmatpush1.msra.mxu0 0.0
  %3042 = vmatprep.subr.mxu0 0.0
  %3043 = vmatpush1.msra.mxu0 0.0
  %3044 = vmatprep.subr.mxu0 0.0
  %3045 = vmatpush1.msra.mxu0 0.0
  %3046 = vmatprep.subr.mxu0 0.0
  %3047 = vmatpush1.msra.mxu0 0.0
  %3048 = vmatprep.subr.mxu0 0.0
  %3049 = vmatpush1.msra.mxu0 0.0
  %3050 = vmatprep.mubr.f32.mxu0 0.0
  %3051 = vmatmul.mubr.f32.gmra.mrb[0].mxu0 %v373
  %v3052 = vpop.f32.mrb[0].mxu0
  %v3053 = vadd.f32 %v334, %v3052
  %v3054 = vpop.f32.mrb[0].mxu0
  %v3055 = vadd.f32 %v334, %v3054
  %3056 = vmatprep.mubr.f32.mxu0 0.0
  %3057 = vmatmul.mubr.f32.gmra.mrb[0].mxu0 %v376
  %v3058 = vpop.f32.mrb[0].mxu0
  %v3059 = vadd.f32 %v339, %v3058
  %v3060 = vpop.f32.mrb[0].mxu0
  %v3061 = vadd.f32 %v339, %v3060
  %3062 = vmatprep.mubr.f32.mxu0 0.0
  %3063 = vmatmul.mubr.f32.gmra.mrb[0].mxu0 %v379
  %v3064 = vpop.f32.mrb[0].mxu0
  %v3065 = vadd.f32 %v344, %v3064
  %v3066 = vpop.f32.mrb[0].mxu0
  %v3067 = vadd.f32 %v344, %v3066
  %3068 = vmatprep.mubr.f32.mxu0 0.0
  %3069 = vmatmul.mubr.f32.gmra.mrb[0].mxu0 %v382
  %v3070 = vpop.f32.mrb[0].mxu0
  %v3071 = vadd.f32 %v349, %v3070
  %v3072 = vpop.f32.mrb[0].mxu0
  %v3073 = vadd.f32 %v349, %v3072
  %3074 = vmatprep.mubr.f32.mxu0 0.0
  %3075 = vmatmul.mubr.f32.gmra.mrb[0].mxu0 %v385
  %v3076 = vpop.f32.mrb[0].mxu0
  %v3077 = vadd.f32 %v354, %v3076
  %v3078 = vpop.f32.mrb[0].mxu0
  %v3079 = vadd.f32 %v354, %v3078
  %3080 = vmatprep.mubr.f32.mxu0 0.0
  %3081 = vmatmul.mubr.f32.gmra.mrb[0].mxu0 %v388
  %v3082 = vpop.f32.mrb[0].mxu0
  %v3083 = vadd.f32 %v359, %v3082
  %v3084 = vpop.f32.mrb[0].mxu0
  %v3085 = vadd.f32 %v359, %v3084
  %3086 = vmatprep.mubr.f32.mxu0 0.0
  %3087 = vmatmul.mubr.f32.gmra.mrb[0].mxu0 %v391
  %v3088 = vpop.f32.mrb[0].mxu0
  %v3089 = vadd.f32 %v364, %v3088
  %v3090 = vpop.f32.mrb[0].mxu0
  %v3091 = vadd.f32 %v364, %v3090
  %3092 = vmatprep.mubr.f32.mxu0 0.0
  %3093 = vmatmul.mubr.f32.gmra.mrb[0].mxu0 %v394
  %v3094 = vpop.f32.mrb[0].mxu0
  %v3095 = vadd.f32 %v369, %v3094
  %v3096 = vpop.f32.mrb[0].mxu0
  %v3097 = vadd.f32 %v369, %v3096
  %3098 = vdwg.mxu0
  %3099 = vmatprep.subr.mxu0 %v80
  %3100 = vmatpush1.msra.mxu0 %v79
  %3101 = vmatprep.subr.mxu0 %v152
  %3102 = vmatpush1.msra.mxu0 %v151
  %3103 = vmatprep.subr.mxu0 %v224
  %3104 = vmatpush1.msra.mxu0 %v223
  %3105 = vmatprep.subr.mxu0 %v533
  %3106 = vmatpush1.msra.mxu0 %v530
  %3107 = vmatprep.subr.mxu0 0.0
  %3108 = vmatpush1.msra.mxu0 0.0
  %3109 = vmatprep.subr.mxu0 0.0
  %3110 = vmatpush1.msra.mxu0 0.0
  %3111 = vmatprep.subr.mxu0 0.0
  %3112 = vmatpush1.msra.mxu0 0.0
  %3113 = vmatprep.subr.mxu0 0.0
  %3114 = vmatpush1.msra.mxu0 0.0
  %3115 = vmatprep.subr.mxu0 0.0
  %3116 = vmatpush1.msra.mxu0 0.0
  %3117 = vmatprep.subr.mxu0 0.0
  %3118 = vmatpush1.msra.mxu0 0.0
  %3119 = vmatprep.subr.mxu0 0.0
  %3120 = vmatpush1.msra.mxu0 0.0
  %3121 = vmatprep.subr.mxu0 0.0
  %3122 = vmatpush1.msra.mxu0 0.0
  %3123 = vmatprep.subr.mxu0 0.0
  %3124 = vmatpush1.msra.mxu0 0.0
  %3125 = vmatprep.subr.mxu0 0.0
  %3126 = vmatpush1.msra.mxu0 0.0
  %3127 = vmatprep.subr.mxu0 0.0
  %3128 = vmatpush1.msra.mxu0 0.0
  %3129 = vmatprep.subr.mxu0 0.0
  %3130 = vmatpush1.msra.mxu0 0.0
  %3131 = vmatprep.subr.mxu0 0.0
  %3132 = vmatpush1.msra.mxu0 0.0
  %3133 = vmatprep.subr.mxu0 0.0
  %3134 = vmatpush1.msra.mxu0 0.0
  %3135 = vmatprep.subr.mxu0 0.0
  %3136 = vmatpush1.msra.mxu0 0.0
  %3137 = vmatprep.subr.mxu0 0.0
  %3138 = vmatpush1.msra.mxu0 0.0
  %3139 = vmatprep.subr.mxu0 0.0
  %3140 = vmatpush1.msra.mxu0 0.0
  %3141 = vmatprep.subr.mxu0 0.0
  %3142 = vmatpush1.msra.mxu0 0.0
  %3143 = vmatprep.subr.mxu0 0.0
  %3144 = vmatpush1.msra.mxu0 0.0
  %3145 = vmatprep.subr.mxu0 0.0
  %3146 = vmatpush1.msra.mxu0 0.0
  %3147 = vmatprep.subr.mxu0 0.0
  %3148 = vmatpush1.msra.mxu0 0.0
  %3149 = vmatprep.subr.mxu0 0.0
  %3150 = vmatpush1.msra.mxu0 0.0
  %3151 = vmatprep.subr.mxu0 0.0
  %3152 = vmatpush1.msra.mxu0 0.0
  %3153 = vmatprep.subr.mxu0 0.0
  %3154 = vmatpush1.msra.mxu0 0.0
  %3155 = vmatprep.subr.mxu0 0.0
  %3156 = vmatpush1.msra.mxu0 0.0
  %3157 = vmatprep.subr.mxu0 0.0
  %3158 = vmatpush1.msra.mxu0 0.0
  %3159 = vmatprep.subr.mxu0 0.0
  %3160 = vmatpush1.msra.mxu0 0.0
  %3161 = vmatprep.subr.mxu0 0.0
  %3162 = vmatpush1.msra.mxu0 0.0
  %3163 = vmatprep.mubr.f32.mxu0 0.0
  %3164 = vmatmul.mubr.f32.gmra.mrb[0].mxu0 %v373
  %v3165 = vpop.f32.mrb[0].mxu0
  %v3166 = vadd.f32 %v334, %v3165
  %v3167 = vpop.f32.mrb[0].mxu0
  %v3168 = vadd.f32 %v334, %v3167
  %3169 = vmatprep.mubr.f32.mxu0 0.0
  %3170 = vmatmul.mubr.f32.gmra.mrb[0].mxu0 %v376
  %v3171 = vpop.f32.mrb[0].mxu0
  %v3172 = vadd.f32 %v339, %v3171
  %v3173 = vpop.f32.mrb[0].mxu0
  %v3174 = vadd.f32 %v339, %v3173
  %3175 = vmatprep.mubr.f32.mxu0 0.0
  %3176 = vmatmul.mubr.f32.gmra.mrb[0].mxu0 %v379
  %v3177 = vpop.f32.mrb[0].mxu0
  %v3178 = vadd.f32 %v344, %v3177
  %v3179 = vpop.f32.mrb[0].mxu0
  %v3180 = vadd.f32 %v344, %v3179
  %3181 = vmatprep.mubr.f32.mxu0 0.0
  %3182 = vmatmul.mubr.f32.gmra.mrb[0].mxu0 %v382
  %v3183 = vpop.f32.mrb[0].mxu0
  %v3184 = vadd.f32 %v349, %v3183
  %v3185 = vpop.f32.mrb[0].mxu0
  %v3186 = vadd.f32 %v349, %v3185
  %3187 = vmatprep.mubr.f32.mxu0 0.0
  %3188 = vmatmul.mubr.f32.gmra.mrb[0].mxu0 %v385
  %v3189 = vpop.f32.mrb[0].mxu0
  %v3190 = vadd.f32 %v354, %v3189
  %v3191 = vpop.f32.mrb[0].mxu0
  %v3192 = vadd.f32 %v354, %v3191
  %3193 = vmatprep.mubr.f32.mxu0 0.0
  %3194 = vmatmul.mubr.f32.gmra.mrb[0].mxu0 %v388
  %v3195 = vpop.f32.mrb[0].mxu0
  %v3196 = vadd.f32 %v359, %v3195
  %v3197 = vpop.f32.mrb[0].mxu0
  %v3198 = vadd.f32 %v359, %v3197
  %3199 = vmatprep.mubr.f32.mxu0 0.0
  %3200 = vmatmul.mubr.f32.gmra.mrb[0].mxu0 %v391
  %v3201 = vpop.f32.mrb[0].mxu0
  %v3202 = vadd.f32 %v364, %v3201
  %v3203 = vpop.f32.mrb[0].mxu0
  %v3204 = vadd.f32 %v364, %v3203
  %3205 = vmatprep.mubr.f32.mxu0 0.0
  %3206 = vmatmul.mubr.f32.gmra.mrb[0].mxu0 %v394
  %v3207 = vpop.f32.mrb[0].mxu0
  %v3208 = vadd.f32 %v369, %v3207
  %v3209 = vpop.f32.mrb[0].mxu0
  %v3210 = vadd.f32 %v369, %v3209
  %3211 = vdwg.mxu0
  %3212 = vmatprep.subr.mxu0 %v82
  %3213 = vmatpush1.msra.mxu0 %v81
  %3214 = vmatprep.subr.mxu0 %v154
  %3215 = vmatpush1.msra.mxu0 %v153
  %3216 = vmatprep.subr.mxu0 %v226
  %3217 = vmatpush1.msra.mxu0 %v225
  %3218 = vmatprep.subr.mxu0 %v539
  %3219 = vmatpush1.msra.mxu0 %v536
  %3220 = vmatprep.subr.mxu0 0.0
  %3221 = vmatpush1.msra.mxu0 0.0
  %3222 = vmatprep.subr.mxu0 0.0
  %3223 = vmatpush1.msra.mxu0 0.0
  %3224 = vmatprep.subr.mxu0 0.0
  %3225 = vmatpush1.msra.mxu0 0.0
  %3226 = vmatprep.subr.mxu0 0.0
  %3227 = vmatpush1.msra.mxu0 0.0
  %3228 = vmatprep.subr.mxu0 0.0
  %3229 = vmatpush1.msra.mxu0 0.0
  %3230 = vmatprep.subr.mxu0 0.0
  %3231 = vmatpush1.msra.mxu0 0.0
  %3232 = vmatprep.subr.mxu0 0.0
  %3233 = vmatpush1.msra.mxu0 0.0
  %3234 = vmatprep.subr.mxu0 0.0
  %3235 = vmatpush1.msra.mxu0 0.0
  %3236 = vmatprep.subr.mxu0 0.0
  %3237 = vmatpush1.msra.mxu0 0.0
  %3238 = vmatprep.subr.mxu0 0.0
  %3239 = vmatpush1.msra.mxu0 0.0
  %3240 = vmatprep.subr.mxu0 0.0
  %3241 = vmatpush1.msra.mxu0 0.0
  %3242 = vmatprep.subr.mxu0 0.0
  %3243 = vmatpush1.msra.mxu0 0.0
  %3244 = vmatprep.subr.mxu0 0.0
  %3245 = vmatpush1.msra.mxu0 0.0
  %3246 = vmatprep.subr.mxu0 0.0
  %3247 = vmatpush1.msra.mxu0 0.0
  %3248 = vmatprep.subr.mxu0 0.0
  %3249 = vmatpush1.msra.mxu0 0.0
  %3250 = vmatprep.subr.mxu0 0.0
  %3251 = vmatpush1.msra.mxu0 0.0
  %3252 = vmatprep.subr.mxu0 0.0
  %3253 = vmatpush1.msra.mxu0 0.0
  %3254 = vmatprep.subr.mxu0 0.0
  %3255 = vmatpush1.msra.mxu0 0.0
  %3256 = vmatprep.subr.mxu0 0.0
  %3257 = vmatpush1.msra.mxu0 0.0
  %3258 = vmatprep.subr.mxu0 0.0
  %3259 = vmatpush1.msra.mxu0 0.0
  %3260 = vmatprep.subr.mxu0 0.0
  %3261 = vmatpush1.msra.mxu0 0.0
  %3262 = vmatprep.subr.mxu0 0.0
  %3263 = vmatpush1.msra.mxu0 0.0
  %3264 = vmatprep.subr.mxu0 0.0
  %3265 = vmatpush1.msra.mxu0 0.0
  %3266 = vmatprep.subr.mxu0 0.0
  %3267 = vmatpush1.msra.mxu0 0.0
  %3268 = vmatprep.subr.mxu0 0.0
  %3269 = vmatpush1.msra.mxu0 0.0
  %3270 = vmatprep.subr.mxu0 0.0
  %3271 = vmatpush1.msra.mxu0 0.0
  %3272 = vmatprep.subr.mxu0 0.0
  %3273 = vmatpush1.msra.mxu0 0.0
  %3274 = vmatprep.subr.mxu0 0.0
  %3275 = vmatpush1.msra.mxu0 0.0
  %3276 = vmatprep.mubr.f32.mxu0 0.0
  %3277 = vmatmul.mubr.f32.gmra.mrb[0].mxu0 %v373
  %v3278 = vpop.f32.mrb[0].mxu0
  %v3279 = vadd.f32 %v334, %v3278
  %v3280 = vpop.f32.mrb[0].mxu0
  %v3281 = vadd.f32 %v334, %v3280
  %3282 = vmatprep.mubr.f32.mxu0 0.0
  %3283 = vmatmul.mubr.f32.gmra.mrb[0].mxu0 %v376
  %v3284 = vpop.f32.mrb[0].mxu0
  %v3285 = vadd.f32 %v339, %v3284
  %v3286 = vpop.f32.mrb[0].mxu0
  %v3287 = vadd.f32 %v339, %v3286
  %3288 = vmatprep.mubr.f32.mxu0 0.0
  %3289 = vmatmul.mubr.f32.gmra.mrb[0].mxu0 %v379
  %v3290 = vpop.f32.mrb[0].mxu0
  %v3291 = vadd.f32 %v344, %v3290
  %v3292 = vpop.f32.mrb[0].mxu0
  %v3293 = vadd.f32 %v344, %v3292
  %3294 = vmatprep.mubr.f32.mxu0 0.0
  %3295 = vmatmul.mubr.f32.gmra.mrb[0].mxu0 %v382
  %v3296 = vpop.f32.mrb[0].mxu0
  %v3297 = vadd.f32 %v349, %v3296
  %v3298 = vpop.f32.mrb[0].mxu0
  %v3299 = vadd.f32 %v349, %v3298
  %3300 = vmatprep.mubr.f32.mxu0 0.0
  %3301 = vmatmul.mubr.f32.gmra.mrb[0].mxu0 %v385
  %v3302 = vpop.f32.mrb[0].mxu0
  %v3303 = vadd.f32 %v354, %v3302
  %v3304 = vpop.f32.mrb[0].mxu0
  %v3305 = vadd.f32 %v354, %v3304
  %3306 = vmatprep.mubr.f32.mxu0 0.0
  %3307 = vmatmul.mubr.f32.gmra.mrb[0].mxu0 %v388
  %v3308 = vpop.f32.mrb[0].mxu0
  %v3309 = vadd.f32 %v359, %v3308
  %v3310 = vpop.f32.mrb[0].mxu0
  %v3311 = vadd.f32 %v359, %v3310
  %3312 = vmatprep.mubr.f32.mxu0 0.0
  %3313 = vmatmul.mubr.f32.gmra.mrb[0].mxu0 %v391
  %v3314 = vpop.f32.mrb[0].mxu0
  %v3315 = vadd.f32 %v364, %v3314
  %v3316 = vpop.f32.mrb[0].mxu0
  %v3317 = vadd.f32 %v364, %v3316
  %3318 = vmatprep.mubr.f32.mxu0 0.0
  %3319 = vmatmul.mubr.f32.gmra.mrb[0].mxu0 %v394
  %v3320 = vpop.f32.mrb[0].mxu0
  %v3321 = vadd.f32 %v369, %v3320
  %v3322 = vpop.f32.mrb[0].mxu0
  %v3323 = vadd.f32 %v369, %v3322
  %3324 = vdwg.mxu0
  %3325 = vmatprep.subr.mxu0 %v84
  %3326 = vmatpush1.msra.mxu0 %v83
  %3327 = vmatprep.subr.mxu0 %v156
  %3328 = vmatpush1.msra.mxu0 %v155
  %3329 = vmatprep.subr.mxu0 %v228
  %3330 = vmatpush1.msra.mxu0 %v227
  %3331 = vmatprep.subr.mxu0 %v545
  %3332 = vmatpush1.msra.mxu0 %v542
  %3333 = vmatprep.subr.mxu0 0.0
  %3334 = vmatpush1.msra.mxu0 0.0
  %3335 = vmatprep.subr.mxu0 0.0
  %3336 = vmatpush1.msra.mxu0 0.0
  %3337 = vmatprep.subr.mxu0 0.0
  %3338 = vmatpush1.msra.mxu0 0.0
  %3339 = vmatprep.subr.mxu0 0.0
  %3340 = vmatpush1.msra.mxu0 0.0
  %3341 = vmatprep.subr.mxu0 0.0
  %3342 = vmatpush1.msra.mxu0 0.0
  %3343 = vmatprep.subr.mxu0 0.0
  %3344 = vmatpush1.msra.mxu0 0.0
  %3345 = vmatprep.subr.mxu0 0.0
  %3346 = vmatpush1.msra.mxu0 0.0
  %3347 = vmatprep.subr.mxu0 0.0
  %3348 = vmatpush1.msra.mxu0 0.0
  %3349 = vmatprep.subr.mxu0 0.0
  %3350 = vmatpush1.msra.mxu0 0.0
  %3351 = vmatprep.subr.mxu0 0.0
  %3352 = vmatpush1.msra.mxu0 0.0
  %3353 = vmatprep.subr.mxu0 0.0
  %3354 = vmatpush1.msra.mxu0 0.0
  %3355 = vmatprep.subr.mxu0 0.0
  %3356 = vmatpush1.msra.mxu0 0.0
  %3357 = vmatprep.subr.mxu0 0.0
  %3358 = vmatpush1.msra.mxu0 0.0
  %3359 = vmatprep.subr.mxu0 0.0
  %3360 = vmatpush1.msra.mxu0 0.0
  %3361 = vmatprep.subr.mxu0 0.0
  %3362 = vmatpush1.msra.mxu0 0.0
  %3363 = vmatprep.subr.mxu0 0.0
  %3364 = vmatpush1.msra.mxu0 0.0
  %3365 = vmatprep.subr.mxu0 0.0
  %3366 = vmatpush1.msra.mxu0 0.0
  %3367 = vmatprep.subr.mxu0 0.0
  %3368 = vmatpush1.msra.mxu0 0.0
  %3369 = vmatprep.subr.mxu0 0.0
  %3370 = vmatpush1.msra.mxu0 0.0
  %3371 = vmatprep.subr.mxu0 0.0
  %3372 = vmatpush1.msra.mxu0 0.0
  %3373 = vmatprep.subr.mxu0 0.0
  %3374 = vmatpush1.msra.mxu0 0.0
  %3375 = vmatprep.subr.mxu0 0.0
  %3376 = vmatpush1.msra.mxu0 0.0
  %3377 = vmatprep.subr.mxu0 0.0
  %3378 = vmatpush1.msra.mxu0 0.0
  %3379 = vmatprep.subr.mxu0 0.0
  %3380 = vmatpush1.msra.mxu0 0.0
  %3381 = vmatprep.subr.mxu0 0.0
  %3382 = vmatpush1.msra.mxu0 0.0
  %3383 = vmatprep.subr.mxu0 0.0
  %3384 = vmatpush1.msra.mxu0 0.0
  %3385 = vmatprep.subr.mxu0 0.0
  %3386 = vmatpush1.msra.mxu0 0.0
  %3387 = vmatprep.subr.mxu0 0.0
  %3388 = vmatpush1.msra.mxu0 0.0
  %3389 = vmatprep.mubr.f32.mxu0 0.0
  %3390 = vmatmul.mubr.f32.gmra.mrb[0].mxu0 %v373
  %v3391 = vpop.f32.mrb[0].mxu0
  %v3392 = vadd.f32 %v334, %v3391
  %v3393 = vpop.f32.mrb[0].mxu0
  %v3394 = vadd.f32 %v334, %v3393
  %3395 = vmatprep.mubr.f32.mxu0 0.0
  %3396 = vmatmul.mubr.f32.gmra.mrb[0].mxu0 %v376
  %v3397 = vpop.f32.mrb[0].mxu0
  %v3398 = vadd.f32 %v339, %v3397
  %v3399 = vpop.f32.mrb[0].mxu0
  %v3400 = vadd.f32 %v339, %v3399
  %3401 = vmatprep.mubr.f32.mxu0 0.0
  %3402 = vmatmul.mubr.f32.gmra.mrb[0].mxu0 %v379
  %v3403 = vpop.f32.mrb[0].mxu0
  %v3404 = vadd.f32 %v344, %v3403
  %v3405 = vpop.f32.mrb[0].mxu0
  %v3406 = vadd.f32 %v344, %v3405
  %3407 = vmatprep.mubr.f32.mxu0 0.0
  %3408 = vmatmul.mubr.f32.gmra.mrb[0].mxu0 %v382
  %v3409 = vpop.f32.mrb[0].mxu0
  %v3410 = vadd.f32 %v349, %v3409
  %v3411 = vpop.f32.mrb[0].mxu0
  %v3412 = vadd.f32 %v349, %v3411
  %3413 = vmatprep.mubr.f32.mxu0 0.0
  %3414 = vmatmul.mubr.f32.gmra.mrb[0].mxu0 %v385
  %v3415 = vpop.f32.mrb[0].mxu0
  %v3416 = vadd.f32 %v354, %v3415
  %v3417 = vpop.f32.mrb[0].mxu0
  %v3418 = vadd.f32 %v354, %v3417
  %3419 = vmatprep.mubr.f32.mxu0 0.0
  %3420 = vmatmul.mubr.f32.gmra.mrb[0].mxu0 %v388
  %v3421 = vpop.f32.mrb[0].mxu0
  %v3422 = vadd.f32 %v359, %v3421
  %v3423 = vpop.f32.mrb[0].mxu0
  %v3424 = vadd.f32 %v359, %v3423
  %3425 = vmatprep.mubr.f32.mxu0 0.0
  %3426 = vmatmul.mubr.f32.gmra.mrb[0].mxu0 %v391
  %v3427 = vpop.f32.mrb[0].mxu0
  %v3428 = vadd.f32 %v364, %v3427
  %v3429 = vpop.f32.mrb[0].mxu0
  %v3430 = vadd.f32 %v364, %v3429
  %3431 = vmatprep.mubr.f32.mxu0 0.0
  %3432 = vmatmul.mubr.f32.gmra.mrb[0].mxu0 %v394
  %v3433 = vpop.f32.mrb[0].mxu0
  %v3434 = vadd.f32 %v369, %v3433
  %v3435 = vpop.f32.mrb[0].mxu0
  %v3436 = vadd.f32 %v369, %v3435
  %3437 = vdwg.mxu0
  %3438 = vmatprep.subr.mxu0 %v86
  %3439 = vmatpush1.msra.mxu0 %v85
  %3440 = vmatprep.subr.mxu0 %v158
  %3441 = vmatpush1.msra.mxu0 %v157
  %3442 = vmatprep.subr.mxu0 %v230
  %3443 = vmatpush1.msra.mxu0 %v229
  %3444 = vmatprep.subr.mxu0 %v551
  %3445 = vmatpush1.msra.mxu0 %v548
  %3446 = vmatprep.subr.mxu0 0.0
  %3447 = vmatpush1.msra.mxu0 0.0
  %3448 = vmatprep.subr.mxu0 0.0
  %3449 = vmatpush1.msra.mxu0 0.0
  %3450 = vmatprep.subr.mxu0 0.0
  %3451 = vmatpush1.msra.mxu0 0.0
  %3452 = vmatprep.subr.mxu0 0.0
  %3453 = vmatpush1.msra.mxu0 0.0
  %3454 = vmatprep.subr.mxu0 0.0
  %3455 = vmatpush1.msra.mxu0 0.0
  %3456 = vmatprep.subr.mxu0 0.0
  %3457 = vmatpush1.msra.mxu0 0.0
  %3458 = vmatprep.subr.mxu0 0.0
  %3459 = vmatpush1.msra.mxu0 0.0
  %3460 = vmatprep.subr.mxu0 0.0
  %3461 = vmatpush1.msra.mxu0 0.0
  %3462 = vmatprep.subr.mxu0 0.0
  %3463 = vmatpush1.msra.mxu0 0.0
  %3464 = vmatprep.subr.mxu0 0.0
  %3465 = vmatpush1.msra.mxu0 0.0
  %3466 = vmatprep.subr.mxu0 0.0
  %3467 = vmatpush1.msra.mxu0 0.0
  %3468 = vmatprep.subr.mxu0 0.0
  %3469 = vmatpush1.msra.mxu0 0.0
  %3470 = vmatprep.subr.mxu0 0.0
  %3471 = vmatpush1.msra.mxu0 0.0
  %3472 = vmatprep.subr.mxu0 0.0
  %3473 = vmatpush1.msra.mxu0 0.0
  %3474 = vmatprep.subr.mxu0 0.0
  %3475 = vmatpush1.msra.mxu0 0.0
  %3476 = vmatprep.subr.mxu0 0.0
  %3477 = vmatpush1.msra.mxu0 0.0
  %3478 = vmatprep.subr.mxu0 0.0
  %3479 = vmatpush1.msra.mxu0 0.0
  %3480 = vmatprep.subr.mxu0 0.0
  %3481 = vmatpush1.msra.mxu0 0.0
  %3482 = vmatprep.subr.mxu0 0.0
  %3483 = vmatpush1.msra.mxu0 0.0
  %3484 = vmatprep.subr.mxu0 0.0
  %3485 = vmatpush1.msra.mxu0 0.0
  %3486 = vmatprep.subr.mxu0 0.0
  %3487 = vmatpush1.msra.mxu0 0.0
  %3488 = vmatprep.subr.mxu0 0.0
  %3489 = vmatpush1.msra.mxu0 0.0
  %3490 = vmatprep.subr.mxu0 0.0
  %3491 = vmatpush1.msra.mxu0 0.0
  %3492 = vmatprep.subr.mxu0 0.0
  %3493 = vmatpush1.msra.mxu0 0.0
  %3494 = vmatprep.subr.mxu0 0.0
  %3495 = vmatpush1.msra.mxu0 0.0
  %3496 = vmatprep.subr.mxu0 0.0
  %3497 = vmatpush1.msra.mxu0 0.0
  %3498 = vmatprep.subr.mxu0 0.0
  %3499 = vmatpush1.msra.mxu0 0.0
  %3500 = vmatprep.subr.mxu0 0.0
  %3501 = vmatpush1.msra.mxu0 0.0
  %3502 = vmatprep.mubr.f32.mxu0 0.0
  %3503 = vmatmul.mubr.f32.gmra.mrb[0].mxu0 %v373
  %v3504 = vpop.f32.mrb[0].mxu0
  %v3505 = vadd.f32 %v334, %v3504
  %v3506 = vpop.f32.mrb[0].mxu0
  %v3507 = vadd.f32 %v334, %v3506
  %3508 = vmatprep.mubr.f32.mxu0 0.0
  %3509 = vmatmul.mubr.f32.gmra.mrb[0].mxu0 %v376
  %v3510 = vpop.f32.mrb[0].mxu0
  %v3511 = vadd.f32 %v339, %v3510
  %v3512 = vpop.f32.mrb[0].mxu0
  %v3513 = vadd.f32 %v339, %v3512
  %3514 = vmatprep.mubr.f32.mxu0 0.0
  %3515 = vmatmul.mubr.f32.gmra.mrb[0].mxu0 %v379
  %v3516 = vpop.f32.mrb[0].mxu0
  %v3517 = vadd.f32 %v344, %v3516
  %v3518 = vpop.f32.mrb[0].mxu0
  %v3519 = vadd.f32 %v344, %v3518
  %3520 = vmatprep.mubr.f32.mxu0 0.0
  %3521 = vmatmul.mubr.f32.gmra.mrb[0].mxu0 %v382
  %v3522 = vpop.f32.mrb[0].mxu0
  %v3523 = vadd.f32 %v349, %v3522
  %v3524 = vpop.f32.mrb[0].mxu0
  %v3525 = vadd.f32 %v349, %v3524
  %3526 = vmatprep.mubr.f32.mxu0 0.0
  %3527 = vmatmul.mubr.f32.gmra.mrb[0].mxu0 %v385
  %v3528 = vpop.f32.mrb[0].mxu0
  %v3529 = vadd.f32 %v354, %v3528
  %v3530 = vpop.f32.mrb[0].mxu0
  %v3531 = vadd.f32 %v354, %v3530
  %3532 = vmatprep.mubr.f32.mxu0 0.0
  %3533 = vmatmul.mubr.f32.gmra.mrb[0].mxu0 %v388
  %v3534 = vpop.f32.mrb[0].mxu0
  %v3535 = vadd.f32 %v359, %v3534
  %v3536 = vpop.f32.mrb[0].mxu0
  %v3537 = vadd.f32 %v359, %v3536
  %3538 = vmatprep.mubr.f32.mxu0 0.0
  %3539 = vmatmul.mubr.f32.gmra.mrb[0].mxu0 %v391
  %v3540 = vpop.f32.mrb[0].mxu0
  %v3541 = vadd.f32 %v364, %v3540
  %v3542 = vpop.f32.mrb[0].mxu0
  %v3543 = vadd.f32 %v364, %v3542
  %3544 = vmatprep.mubr.f32.mxu0 0.0
  %3545 = vmatmul.mubr.f32.gmra.mrb[0].mxu0 %v394
  %v3546 = vpop.f32.mrb[0].mxu0
  %v3547 = vadd.f32 %v369, %v3546
  %v3548 = vpop.f32.mrb[0].mxu0
  %v3549 = vadd.f32 %v369, %v3548
  %3550 = vdwg.mxu0
  %3551 = vmatprep.subr.mxu0 %v88
  %3552 = vmatpush1.msra.mxu0 %v87
  %3553 = vmatprep.subr.mxu0 %v160
  %3554 = vmatpush1.msra.mxu0 %v159
  %3555 = vmatprep.subr.mxu0 %v232
  %3556 = vmatpush1.msra.mxu0 %v231
  %3557 = vmatprep.subr.mxu0 %v557
  %3558 = vmatpush1.msra.mxu0 %v554
  %3559 = vmatprep.subr.mxu0 0.0
  %3560 = vmatpush1.msra.mxu0 0.0
  %3561 = vmatprep.subr.mxu0 0.0
  %3562 = vmatpush1.msra.mxu0 0.0
  %3563 = vmatprep.subr.mxu0 0.0
  %3564 = vmatpush1.msra.mxu0 0.0
  %3565 = vmatprep.subr.mxu0 0.0
  %3566 = vmatpush1.msra.mxu0 0.0
  %3567 = vmatprep.subr.mxu0 0.0
  %3568 = vmatpush1.msra.mxu0 0.0
  %3569 = vmatprep.subr.mxu0 0.0
  %3570 = vmatpush1.msra.mxu0 0.0
  %3571 = vmatprep.subr.mxu0 0.0
  %3572 = vmatpush1.msra.mxu0 0.0
  %3573 = vmatprep.subr.mxu0 0.0
  %3574 = vmatpush1.msra.mxu0 0.0
  %3575 = vmatprep.subr.mxu0 0.0
  %3576 = vmatpush1.msra.mxu0 0.0
  %3577 = vmatprep.subr.mxu0 0.0
  %3578 = vmatpush1.msra.mxu0 0.0
  %3579 = vmatprep.subr.mxu0 0.0
  %3580 = vmatpush1.msra.mxu0 0.0
  %3581 = vmatprep.subr.mxu0 0.0
  %3582 = vmatpush1.msra.mxu0 0.0
  %3583 = vmatprep.subr.mxu0 0.0
  %3584 = vmatpush1.msra.mxu0 0.0
  %3585 = vmatprep.subr.mxu0 0.0
  %3586 = vmatpush1.msra.mxu0 0.0
  %3587 = vmatprep.subr.mxu0 0.0
  %3588 = vmatpush1.msra.mxu0 0.0
  %3589 = vmatprep.subr.mxu0 0.0
  %3590 = vmatpush1.msra.mxu0 0.0
  %3591 = vmatprep.subr.mxu0 0.0
  %3592 = vmatpush1.msra.mxu0 0.0
  %3593 = vmatprep.subr.mxu0 0.0
  %3594 = vmatpush1.msra.mxu0 0.0
  %3595 = vmatprep.subr.mxu0 0.0
  %3596 = vmatpush1.msra.mxu0 0.0
  %3597 = vmatprep.subr.mxu0 0.0
  %3598 = vmatpush1.msra.mxu0 0.0
  %3599 = vmatprep.subr.mxu0 0.0
  %3600 = vmatpush1.msra.mxu0 0.0
  %3601 = vmatprep.subr.mxu0 0.0
  %3602 = vmatpush1.msra.mxu0 0.0
  %3603 = vmatprep.subr.mxu0 0.0
  %3604 = vmatpush1.msra.mxu0 0.0
  %3605 = vmatprep.subr.mxu0 0.0
  %3606 = vmatpush1.msra.mxu0 0.0
  %3607 = vmatprep.subr.mxu0 0.0
  %3608 = vmatpush1.msra.mxu0 0.0
  %3609 = vmatprep.subr.mxu0 0.0
  %3610 = vmatpush1.msra.mxu0 0.0
  %3611 = vmatprep.subr.mxu0 0.0
  %3612 = vmatpush1.msra.mxu0 0.0
  %3613 = vmatprep.subr.mxu0 0.0
  %3614 = vmatpush1.msra.mxu0 0.0
  %3615 = vmatprep.mubr.f32.mxu0 0.0
  %3616 = vmatmul.mubr.f32.gmra.mrb[0].mxu0 %v373
  %v3617 = vpop.f32.mrb[0].mxu0
  %v3618 = vadd.f32 %v334, %v3617
  %v3619 = vpop.f32.mrb[0].mxu0
  %v3620 = vadd.f32 %v334, %v3619
  %3621 = vmatprep.mubr.f32.mxu0 0.0
  %3622 = vmatmul.mubr.f32.gmra.mrb[0].mxu0 %v376
  %v3623 = vpop.f32.mrb[0].mxu0
  %v3624 = vadd.f32 %v339, %v3623
  %v3625 = vpop.f32.mrb[0].mxu0
  %v3626 = vadd.f32 %v339, %v3625
  %3627 = vmatprep.mubr.f32.mxu0 0.0
  %3628 = vmatmul.mubr.f32.gmra.mrb[0].mxu0 %v379
  %v3629 = vpop.f32.mrb[0].mxu0
  %v3630 = vadd.f32 %v344, %v3629
  %v3631 = vpop.f32.mrb[0].mxu0
  %v3632 = vadd.f32 %v344, %v3631
  %3633 = vmatprep.mubr.f32.mxu0 0.0
  %3634 = vmatmul.mubr.f32.gmra.mrb[0].mxu0 %v382
  %v3635 = vpop.f32.mrb[0].mxu0
  %v3636 = vadd.f32 %v349, %v3635
  %v3637 = vpop.f32.mrb[0].mxu0
  %v3638 = vadd.f32 %v349, %v3637
  %3639 = vmatprep.mubr.f32.mxu0 0.0
  %3640 = vmatmul.mubr.f32.gmra.mrb[0].mxu0 %v385
  %v3641 = vpop.f32.mrb[0].mxu0
  %v3642 = vadd.f32 %v354, %v3641
  %v3643 = vpop.f32.mrb[0].mxu0
  %v3644 = vadd.f32 %v354, %v3643
  %3645 = vmatprep.mubr.f32.mxu0 0.0
  %3646 = vmatmul.mubr.f32.gmra.mrb[0].mxu0 %v388
  %v3647 = vpop.f32.mrb[0].mxu0
  %v3648 = vadd.f32 %v359, %v3647
  %v3649 = vpop.f32.mrb[0].mxu0
  %v3650 = vadd.f32 %v359, %v3649
  %3651 = vmatprep.mubr.f32.mxu0 0.0
  %3652 = vmatmul.mubr.f32.gmra.mrb[0].mxu0 %v391
  %v3653 = vpop.f32.mrb[0].mxu0
  %v3654 = vadd.f32 %v364, %v3653
  %v3655 = vpop.f32.mrb[0].mxu0
  %v3656 = vadd.f32 %v364, %v3655
  %3657 = vmatprep.mubr.f32.mxu0 0.0
  %3658 = vmatmul.mubr.f32.gmra.mrb[0].mxu0 %v394
  %v3659 = vpop.f32.mrb[0].mxu0
  %v3660 = vadd.f32 %v369, %v3659
  %v3661 = vpop.f32.mrb[0].mxu0
  %v3662 = vadd.f32 %v369, %v3661
  %3663 = vdwg.mxu0
  %3664 = vmatprep.subr.mxu0 %v90
  %3665 = vmatpush1.msra.mxu0 %v89
  %3666 = vmatprep.subr.mxu0 %v162
  %3667 = vmatpush1.msra.mxu0 %v161
  %3668 = vmatprep.subr.mxu0 %v234
  %3669 = vmatpush1.msra.mxu0 %v233
  %3670 = vmatprep.subr.mxu0 %v563
  %3671 = vmatpush1.msra.mxu0 %v560
  %3672 = vmatprep.subr.mxu0 0.0
  %3673 = vmatpush1.msra.mxu0 0.0
  %3674 = vmatprep.subr.mxu0 0.0
  %3675 = vmatpush1.msra.mxu0 0.0
  %3676 = vmatprep.subr.mxu0 0.0
  %3677 = vmatpush1.msra.mxu0 0.0
  %3678 = vmatprep.subr.mxu0 0.0
  %3679 = vmatpush1.msra.mxu0 0.0
  %3680 = vmatprep.subr.mxu0 0.0
  %3681 = vmatpush1.msra.mxu0 0.0
  %3682 = vmatprep.subr.mxu0 0.0
  %3683 = vmatpush1.msra.mxu0 0.0
  %3684 = vmatprep.subr.mxu0 0.0
  %3685 = vmatpush1.msra.mxu0 0.0
  %3686 = vmatprep.subr.mxu0 0.0
  %3687 = vmatpush1.msra.mxu0 0.0
  %3688 = vmatprep.subr.mxu0 0.0
  %3689 = vmatpush1.msra.mxu0 0.0
  %3690 = vmatprep.subr.mxu0 0.0
  %3691 = vmatpush1.msra.mxu0 0.0
  %3692 = vmatprep.subr.mxu0 0.0
  %3693 = vmatpush1.msra.mxu0 0.0
  %3694 = vmatprep.subr.mxu0 0.0
  %3695 = vmatpush1.msra.mxu0 0.0
  %3696 = vmatprep.subr.mxu0 0.0
  %3697 = vmatpush1.msra.mxu0 0.0
  %3698 = vmatprep.subr.mxu0 0.0
  %3699 = vmatpush1.msra.mxu0 0.0
  %3700 = vmatprep.subr.mxu0 0.0
  %3701 = vmatpush1.msra.mxu0 0.0
  %3702 = vmatprep.subr.mxu0 0.0
  %3703 = vmatpush1.msra.mxu0 0.0
  %3704 = vmatprep.subr.mxu0 0.0
  %3705 = vmatpush1.msra.mxu0 0.0
  %3706 = vmatprep.subr.mxu0 0.0
  %3707 = vmatpush1.msra.mxu0 0.0
  %3708 = vmatprep.subr.mxu0 0.0
  %3709 = vmatpush1.msra.mxu0 0.0
  %3710 = vmatprep.subr.mxu0 0.0
  %3711 = vmatpush1.msra.mxu0 0.0
  %3712 = vmatprep.subr.mxu0 0.0
  %3713 = vmatpush1.msra.mxu0 0.0
  %3714 = vmatprep.subr.mxu0 0.0
  %3715 = vmatpush1.msra.mxu0 0.0
  %3716 = vmatprep.subr.mxu0 0.0
  %3717 = vmatpush1.msra.mxu0 0.0
  %3718 = vmatprep.subr.mxu0 0.0
  %3719 = vmatpush1.msra.mxu0 0.0
  %3720 = vmatprep.subr.mxu0 0.0
  %3721 = vmatpush1.msra.mxu0 0.0
  %3722 = vmatprep.subr.mxu0 0.0
  %3723 = vmatpush1.msra.mxu0 0.0
  %3724 = vmatprep.subr.mxu0 0.0
  %3725 = vmatpush1.msra.mxu0 0.0
  %3726 = vmatprep.subr.mxu0 0.0
  %3727 = vmatpush1.msra.mxu0 0.0
  %3728 = vmatprep.mubr.f32.mxu0 0.0
  %3729 = vmatmul.mubr.f32.gmra.mrb[0].mxu0 %v373
  %v3730 = vpop.f32.mrb[0].mxu0
  %v3731 = vadd.f32 %v334, %v3730
  %v3732 = vpop.f32.mrb[0].mxu0
  %v3733 = vadd.f32 %v334, %v3732
  %3734 = vmatprep.mubr.f32.mxu0 0.0
  %3735 = vmatmul.mubr.f32.gmra.mrb[0].mxu0 %v376
  %v3736 = vpop.f32.mrb[0].mxu0
  %v3737 = vadd.f32 %v339, %v3736
  %v3738 = vpop.f32.mrb[0].mxu0
  %v3739 = vadd.f32 %v339, %v3738
  %3740 = vmatprep.mubr.f32.mxu0 0.0
  %3741 = vmatmul.mubr.f32.gmra.mrb[0].mxu0 %v379
  %v3742 = vpop.f32.mrb[0].mxu0
  %v3743 = vadd.f32 %v344, %v3742
  %v3744 = vpop.f32.mrb[0].mxu0
  %v3745 = vadd.f32 %v344, %v3744
  %3746 = vmatprep.mubr.f32.mxu0 0.0
  %3747 = vmatmul.mubr.f32.gmra.mrb[0].mxu0 %v382
  %v3748 = vpop.f32.mrb[0].mxu0
  %v3749 = vadd.f32 %v349, %v3748
  %v3750 = vpop.f32.mrb[0].mxu0
  %v3751 = vadd.f32 %v349, %v3750
  %3752 = vmatprep.mubr.f32.mxu0 0.0
  %3753 = vmatmul.mubr.f32.gmra.mrb[0].mxu0 %v385
  %v3754 = vpop.f32.mrb[0].mxu0
  %v3755 = vadd.f32 %v354, %v3754
  %v3756 = vpop.f32.mrb[0].mxu0
  %v3757 = vadd.f32 %v354, %v3756
  %3758 = vmatprep.mubr.f32.mxu0 0.0
  %3759 = vmatmul.mubr.f32.gmra.mrb[0].mxu0 %v388
  %v3760 = vpop.f32.mrb[0].mxu0
  %v3761 = vadd.f32 %v359, %v3760
  %v3762 = vpop.f32.mrb[0].mxu0
  %v3763 = vadd.f32 %v359, %v3762
  %3764 = vmatprep.mubr.f32.mxu0 0.0
  %3765 = vmatmul.mubr.f32.gmra.mrb[0].mxu0 %v391
  %v3766 = vpop.f32.mrb[0].mxu0
  %v3767 = vadd.f32 %v364, %v3766
  %v3768 = vpop.f32.mrb[0].mxu0
  %v3769 = vadd.f32 %v364, %v3768
  %3770 = vmatprep.mubr.f32.mxu0 0.0
  %3771 = vmatmul.mubr.f32.gmra.mrb[0].mxu0 %v394
  %v3772 = vpop.f32.mrb[0].mxu0
  %v3773 = vadd.f32 %v369, %v3772
  %v3774 = vpop.f32.mrb[0].mxu0
  %v3775 = vadd.f32 %v369, %v3774
  %3776 = vdwg.mxu0
  %3777 = vmatprep.subr.mxu0 %v92
  %3778 = vmatpush1.msra.mxu0 %v91
  %3779 = vmatprep.subr.mxu0 %v164
  %3780 = vmatpush1.msra.mxu0 %v163
  %3781 = vmatprep.subr.mxu0 %v236
  %3782 = vmatpush1.msra.mxu0 %v235
  %3783 = vmatprep.subr.mxu0 %v569
  %3784 = vmatpush1.msra.mxu0 %v566
  %3785 = vmatprep.subr.mxu0 0.0
  %3786 = vmatpush1.msra.mxu0 0.0
  %3787 = vmatprep.subr.mxu0 0.0
  %3788 = vmatpush1.msra.mxu0 0.0
  %3789 = vmatprep.subr.mxu0 0.0
  %3790 = vmatpush1.msra.mxu0 0.0
  %3791 = vmatprep.subr.mxu0 0.0
  %3792 = vmatpush1.msra.mxu0 0.0
  %3793 = vmatprep.subr.mxu0 0.0
  %3794 = vmatpush1.msra.mxu0 0.0
  %3795 = vmatprep.subr.mxu0 0.0
  %3796 = vmatpush1.msra.mxu0 0.0
  %3797 = vmatprep.subr.mxu0 0.0
  %3798 = vmatpush1.msra.mxu0 0.0
  %3799 = vmatprep.subr.mxu0 0.0
  %3800 = vmatpush1.msra.mxu0 0.0
  %3801 = vmatprep.subr.mxu0 0.0
  %3802 = vmatpush1.msra.mxu0 0.0
  %3803 = vmatprep.subr.mxu0 0.0
  %3804 = vmatpush1.msra.mxu0 0.0
  %3805 = vmatprep.subr.mxu0 0.0
  %3806 = vmatpush1.msra.mxu0 0.0
  %3807 = vmatprep.subr.mxu0 0.0
  %3808 = vmatpush1.msra.mxu0 0.0
  %3809 = vmatprep.subr.mxu0 0.0
  %3810 = vmatpush1.msra.mxu0 0.0
  %3811 = vmatprep.subr.mxu0 0.0
  %3812 = vmatpush1.msra.mxu0 0.0
  %3813 = vmatprep.subr.mxu0 0.0
  %3814 = vmatpush1.msra.mxu0 0.0
  %3815 = vmatprep.subr.mxu0 0.0
  %3816 = vmatpush1.msra.mxu0 0.0
  %3817 = vmatprep.subr.mxu0 0.0
  %3818 = vmatpush1.msra.mxu0 0.0
  %3819 = vmatprep.subr.mxu0 0.0
  %3820 = vmatpush1.msra.mxu0 0.0
  %3821 = vmatprep.subr.mxu0 0.0
  %3822 = vmatpush1.msra.mxu0 0.0
  %3823 = vmatprep.subr.mxu0 0.0
  %3824 = vmatpush1.msra.mxu0 0.0
  %3825 = vmatprep.subr.mxu0 0.0
  %3826 = vmatpush1.msra.mxu0 0.0
  %3827 = vmatprep.subr.mxu0 0.0
  %3828 = vmatpush1.msra.mxu0 0.0
  %3829 = vmatprep.subr.mxu0 0.0
  %3830 = vmatpush1.msra.mxu0 0.0
  %3831 = vmatprep.subr.mxu0 0.0
  %3832 = vmatpush1.msra.mxu0 0.0
  %3833 = vmatprep.subr.mxu0 0.0
  %3834 = vmatpush1.msra.mxu0 0.0
  %3835 = vmatprep.subr.mxu0 0.0
  %3836 = vmatpush1.msra.mxu0 0.0
  %3837 = vmatprep.subr.mxu0 0.0
  %3838 = vmatpush1.msra.mxu0 0.0
  %3839 = vmatprep.subr.mxu0 0.0
  %3840 = vmatpush1.msra.mxu0 0.0
  %3841 = vmatprep.mubr.f32.mxu0 0.0
  %3842 = vmatmul.mubr.f32.gmra.mrb[0].mxu0 %v373
  %v3843 = vpop.f32.mrb[0].mxu0
  %v3844 = vadd.f32 %v334, %v3843
  %v3845 = vpop.f32.mrb[0].mxu0
  %v3846 = vadd.f32 %v334, %v3845
  %3847 = vmatprep.mubr.f32.mxu0 0.0
  %3848 = vmatmul.mubr.f32.gmra.mrb[0].mxu0 %v376
  %v3849 = vpop.f32.mrb[0].mxu0
  %v3850 = vadd.f32 %v339, %v3849
  %v3851 = vpop.f32.mrb[0].mxu0
  %v3852 = vadd.f32 %v339, %v3851
  %3853 = vmatprep.mubr.f32.mxu0 0.0
  %3854 = vmatmul.mubr.f32.gmra.mrb[0].mxu0 %v379
  %v3855 = vpop.f32.mrb[0].mxu0
  %v3856 = vadd.f32 %v344, %v3855
  %v3857 = vpop.f32.mrb[0].mxu0
  %v3858 = vadd.f32 %v344, %v3857
  %3859 = vmatprep.mubr.f32.mxu0 0.0
  %3860 = vmatmul.mubr.f32.gmra.mrb[0].mxu0 %v382
  %v3861 = vpop.f32.mrb[0].mxu0
  %v3862 = vadd.f32 %v349, %v3861
  %v3863 = vpop.f32.mrb[0].mxu0
  %v3864 = vadd.f32 %v349, %v3863
  %3865 = vmatprep.mubr.f32.mxu0 0.0
  %3866 = vmatmul.mubr.f32.gmra.mrb[0].mxu0 %v385
  %v3867 = vpop.f32.mrb[0].mxu0
  %v3868 = vadd.f32 %v354, %v3867
  %v3869 = vpop.f32.mrb[0].mxu0
  %v3870 = vadd.f32 %v354, %v3869
  %3871 = vmatprep.mubr.f32.mxu0 0.0
  %3872 = vmatmul.mubr.f32.gmra.mrb[0].mxu0 %v388
  %v3873 = vpop.f32.mrb[0].mxu0
  %v3874 = vadd.f32 %v359, %v3873
  %v3875 = vpop.f32.mrb[0].mxu0
  %v3876 = vadd.f32 %v359, %v3875
  %3877 = vmatprep.mubr.f32.mxu0 0.0
  %3878 = vmatmul.mubr.f32.gmra.mrb[0].mxu0 %v391
  %v3879 = vpop.f32.mrb[0].mxu0
  %v3880 = vadd.f32 %v364, %v3879
  %v3881 = vpop.f32.mrb[0].mxu0
  %v3882 = vadd.f32 %v364, %v3881
  %3883 = vmatprep.mubr.f32.mxu0 0.0
  %3884 = vmatmul.mubr.f32.gmra.mrb[0].mxu0 %v394
  %v3885 = vpop.f32.mrb[0].mxu0
  %v3886 = vadd.f32 %v369, %v3885
  %v3887 = vpop.f32.mrb[0].mxu0
  %v3888 = vadd.f32 %v369, %v3887
  %3889 = vdwg.mxu0
  %3890 = vmatprep.subr.mxu0 %v94
  %3891 = vmatpush1.msra.mxu0 %v93
  %3892 = vmatprep.subr.mxu0 %v166
  %3893 = vmatpush1.msra.mxu0 %v165
  %3894 = vmatprep.subr.mxu0 %v238
  %3895 = vmatpush1.msra.mxu0 %v237
  %3896 = vmatprep.subr.mxu0 %v575
  %3897 = vmatpush1.msra.mxu0 %v572
  %3898 = vmatprep.subr.mxu0 0.0
  %3899 = vmatpush1.msra.mxu0 0.0
  %3900 = vmatprep.subr.mxu0 0.0
  %3901 = vmatpush1.msra.mxu0 0.0
  %3902 = vmatprep.subr.mxu0 0.0
  %3903 = vmatpush1.msra.mxu0 0.0
  %3904 = vmatprep.subr.mxu0 0.0
  %3905 = vmatpush1.msra.mxu0 0.0
  %3906 = vmatprep.subr.mxu0 0.0
  %3907 = vmatpush1.msra.mxu0 0.0
  %3908 = vmatprep.subr.mxu0 0.0
  %3909 = vmatpush1.msra.mxu0 0.0
  %3910 = vmatprep.subr.mxu0 0.0
  %3911 = vmatpush1.msra.mxu0 0.0
  %3912 = vmatprep.subr.mxu0 0.0
  %3913 = vmatpush1.msra.mxu0 0.0
  %3914 = vmatprep.subr.mxu0 0.0
  %3915 = vmatpush1.msra.mxu0 0.0
  %3916 = vmatprep.subr.mxu0 0.0
  %3917 = vmatpush1.msra.mxu0 0.0
  %3918 = vmatprep.subr.mxu0 0.0
  %3919 = vmatpush1.msra.mxu0 0.0
  %3920 = vmatprep.subr.mxu0 0.0
  %3921 = vmatpush1.msra.mxu0 0.0
  %3922 = vmatprep.subr.mxu0 0.0
  %3923 = vmatpush1.msra.mxu0 0.0
  %3924 = vmatprep.subr.mxu0 0.0
  %3925 = vmatpush1.msra.mxu0 0.0
  %3926 = vmatprep.subr.mxu0 0.0
  %3927 = vmatpush1.msra.mxu0 0.0
  %3928 = vmatprep.subr.mxu0 0.0
  %3929 = vmatpush1.msra.mxu0 0.0
  %3930 = vmatprep.subr.mxu0 0.0
  %3931 = vmatpush1.msra.mxu0 0.0
  %3932 = vmatprep.subr.mxu0 0.0
  %3933 = vmatpush1.msra.mxu0 0.0
  %3934 = vmatprep.subr.mxu0 0.0
  %3935 = vmatpush1.msra.mxu0 0.0
  %3936 = vmatprep.subr.mxu0 0.0
  %3937 = vmatpush1.msra.mxu0 0.0
  %3938 = vmatprep.subr.mxu0 0.0
  %3939 = vmatpush1.msra.mxu0 0.0
  %3940 = vmatprep.subr.mxu0 0.0
  %3941 = vmatpush1.msra.mxu0 0.0
  %3942 = vmatprep.subr.mxu0 0.0
  %3943 = vmatpush1.msra.mxu0 0.0
  %3944 = vmatprep.subr.mxu0 0.0
  %3945 = vmatpush1.msra.mxu0 0.0
  %3946 = vmatprep.subr.mxu0 0.0
  %3947 = vmatpush1.msra.mxu0 0.0
  %3948 = vmatprep.subr.mxu0 0.0
  %3949 = vmatpush1.msra.mxu0 0.0
  %3950 = vmatprep.subr.mxu0 0.0
  %3951 = vmatpush1.msra.mxu0 0.0
  %3952 = vmatprep.subr.mxu0 0.0
  %3953 = vmatpush1.msra.mxu0 0.0
  %3954 = vmatprep.mubr.f32.mxu0 0.0
  %3955 = vmatmul.mubr.f32.gmra.mrb[0].mxu0 %v373
  %v3956 = vpop.f32.mrb[0].mxu0
  %v3957 = vadd.f32 %v334, %v3956
  %v3958 = vpop.f32.mrb[0].mxu0
  %v3959 = vadd.f32 %v334, %v3958
  %3960 = vmatprep.mubr.f32.mxu0 0.0
  %3961 = vmatmul.mubr.f32.gmra.mrb[0].mxu0 %v376
  %v3962 = vpop.f32.mrb[0].mxu0
  %v3963 = vadd.f32 %v339, %v3962
  %v3964 = vpop.f32.mrb[0].mxu0
  %v3965 = vadd.f32 %v339, %v3964
  %3966 = vmatprep.mubr.f32.mxu0 0.0
  %3967 = vmatmul.mubr.f32.gmra.mrb[0].mxu0 %v379
  %v3968 = vpop.f32.mrb[0].mxu0
  %v3969 = vadd.f32 %v344, %v3968
  %v3970 = vpop.f32.mrb[0].mxu0
  %v3971 = vadd.f32 %v344, %v3970
  %3972 = vmatprep.mubr.f32.mxu0 0.0
  %3973 = vmatmul.mubr.f32.gmra.mrb[0].mxu0 %v382
  %v3974 = vpop.f32.mrb[0].mxu0
  %v3975 = vadd.f32 %v349, %v3974
  %v3976 = vpop.f32.mrb[0].mxu0
  %v3977 = vadd.f32 %v349, %v3976
  %3978 = vmatprep.mubr.f32.mxu0 0.0
  %3979 = vmatmul.mubr.f32.gmra.mrb[0].mxu0 %v385
  %v3980 = vpop.f32.mrb[0].mxu0
  %v3981 = vadd.f32 %v354, %v3980
  %v3982 = vpop.f32.mrb[0].mxu0
  %v3983 = vadd.f32 %v354, %v3982
  %3984 = vmatprep.mubr.f32.mxu0 0.0
  %3985 = vmatmul.mubr.f32.gmra.mrb[0].mxu0 %v388
  %v3986 = vpop.f32.mrb[0].mxu0
  %v3987 = vadd.f32 %v359, %v3986
  %v3988 = vpop.f32.mrb[0].mxu0
  %v3989 = vadd.f32 %v359, %v3988
  %3990 = vmatprep.mubr.f32.mxu0 0.0
  %3991 = vmatmul.mubr.f32.gmra.mrb[0].mxu0 %v391
  %v3992 = vpop.f32.mrb[0].mxu0
  %v3993 = vadd.f32 %v364, %v3992
  %v3994 = vpop.f32.mrb[0].mxu0
  %v3995 = vadd.f32 %v364, %v3994
  %3996 = vmatprep.mubr.f32.mxu0 0.0
  %3997 = vmatmul.mubr.f32.gmra.mrb[0].mxu0 %v394
  %v3998 = vpop.f32.mrb[0].mxu0
  %v3999 = vadd.f32 %v369, %v3998
  %v4000 = vpop.f32.mrb[0].mxu0
  %v4001 = vadd.f32 %v369, %v4000
  %4002 = vdwg.mxu0
  %4003 = vmatprep.subr.mxu0 %v96
  %4004 = vmatpush1.msra.mxu0 %v95
  %4005 = vmatprep.subr.mxu0 %v168
  %4006 = vmatpush1.msra.mxu0 %v167
  %4007 = vmatprep.subr.mxu0 %v240
  %4008 = vmatpush1.msra.mxu0 %v239
  %4009 = vmatprep.subr.mxu0 %v581
  %4010 = vmatpush1.msra.mxu0 %v578
  %4011 = vmatprep.subr.mxu0 0.0
  %4012 = vmatpush1.msra.mxu0 0.0
  %4013 = vmatprep.subr.mxu0 0.0
  %4014 = vmatpush1.msra.mxu0 0.0
  %4015 = vmatprep.subr.mxu0 0.0
  %4016 = vmatpush1.msra.mxu0 0.0
  %4017 = vmatprep.subr.mxu0 0.0
  %4018 = vmatpush1.msra.mxu0 0.0
  %4019 = vmatprep.subr.mxu0 0.0
  %4020 = vmatpush1.msra.mxu0 0.0
  %4021 = vmatprep.subr.mxu0 0.0
  %4022 = vmatpush1.msra.mxu0 0.0
  %4023 = vmatprep.subr.mxu0 0.0
  %4024 = vmatpush1.msra.mxu0 0.0
  %4025 = vmatprep.subr.mxu0 0.0
  %4026 = vmatpush1.msra.mxu0 0.0
  %4027 = vmatprep.subr.mxu0 0.0
  %4028 = vmatpush1.msra.mxu0 0.0
  %4029 = vmatprep.subr.mxu0 0.0
  %4030 = vmatpush1.msra.mxu0 0.0
  %4031 = vmatprep.subr.mxu0 0.0
  %4032 = vmatpush1.msra.mxu0 0.0
  %4033 = vmatprep.subr.mxu0 0.0
  %4034 = vmatpush1.msra.mxu0 0.0
  %4035 = vmatprep.subr.mxu0 0.0
  %4036 = vmatpush1.msra.mxu0 0.0
  %4037 = vmatprep.subr.mxu0 0.0
  %4038 = vmatpush1.msra.mxu0 0.0
  %4039 = vmatprep.subr.mxu0 0.0
  %4040 = vmatpush1.msra.mxu0 0.0
  %4041 = vmatprep.subr.mxu0 0.0
  %4042 = vmatpush1.msra.mxu0 0.0
  %4043 = vmatprep.subr.mxu0 0.0
  %4044 = vmatpush1.msra.mxu0 0.0
  %4045 = vmatprep.subr.mxu0 0.0
  %4046 = vmatpush1.msra.mxu0 0.0
  %4047 = vmatprep.subr.mxu0 0.0
  %4048 = vmatpush1.msra.mxu0 0.0
  %4049 = vmatprep.subr.mxu0 0.0
  %4050 = vmatpush1.msra.mxu0 0.0
  %4051 = vmatprep.subr.mxu0 0.0
  %4052 = vmatpush1.msra.mxu0 0.0
  %4053 = vmatprep.subr.mxu0 0.0
  %4054 = vmatpush1.msra.mxu0 0.0
  %4055 = vmatprep.subr.mxu0 0.0
  %4056 = vmatpush1.msra.mxu0 0.0
  %4057 = vmatprep.subr.mxu0 0.0
  %4058 = vmatpush1.msra.mxu0 0.0
  %4059 = vmatprep.subr.mxu0 0.0
  %4060 = vmatpush1.msra.mxu0 0.0
  %4061 = vmatprep.subr.mxu0 0.0
  %4062 = vmatpush1.msra.mxu0 0.0
  %4063 = vmatprep.subr.mxu0 0.0
  %4064 = vmatpush1.msra.mxu0 0.0
  %4065 = vmatprep.subr.mxu0 0.0
  %4066 = vmatpush1.msra.mxu0 0.0
  %4067 = vmatprep.mubr.f32.mxu0 0.0
  %4068 = vmatmul.mubr.f32.gmra.mrb[0].mxu0 %v373
  %v4069 = vpop.f32.mrb[0].mxu0
  %v4070 = vadd.f32 %v334, %v4069
  %v4071 = vpop.f32.mrb[0].mxu0
  %v4072 = vadd.f32 %v334, %v4071
  %4073 = vmatprep.mubr.f32.mxu0 0.0
  %4074 = vmatmul.mubr.f32.gmra.mrb[0].mxu0 %v376
  %v4075 = vpop.f32.mrb[0].mxu0
  %v4076 = vadd.f32 %v339, %v4075
  %v4077 = vpop.f32.mrb[0].mxu0
  %v4078 = vadd.f32 %v339, %v4077
  %4079 = vmatprep.mubr.f32.mxu0 0.0
  %4080 = vmatmul.mubr.f32.gmra.mrb[0].mxu0 %v379
  %v4081 = vpop.f32.mrb[0].mxu0
  %v4082 = vadd.f32 %v344, %v4081
  %v4083 = vpop.f32.mrb[0].mxu0
  %v4084 = vadd.f32 %v344, %v4083
  %4085 = vmatprep.mubr.f32.mxu0 0.0
  %4086 = vmatmul.mubr.f32.gmra.mrb[0].mxu0 %v382
  %v4087 = vpop.f32.mrb[0].mxu0
  %v4088 = vadd.f32 %v349, %v4087
  %v4089 = vpop.f32.mrb[0].mxu0
  %v4090 = vadd.f32 %v349, %v4089
  %4091 = vmatprep.mubr.f32.mxu0 0.0
  %4092 = vmatmul.mubr.f32.gmra.mrb[0].mxu0 %v385
  %v4093 = vpop.f32.mrb[0].mxu0
  %v4094 = vadd.f32 %v354, %v4093
  %v4095 = vpop.f32.mrb[0].mxu0
  %v4096 = vadd.f32 %v354, %v4095
  %4097 = vmatprep.mubr.f32.mxu0 0.0
  %4098 = vmatmul.mubr.f32.gmra.mrb[0].mxu0 %v388
  %v4099 = vpop.f32.mrb[0].mxu0
  %v4100 = vadd.f32 %v359, %v4099
  %v4101 = vpop.f32.mrb[0].mxu0
  %v4102 = vadd.f32 %v359, %v4101
  %4103 = vmatprep.mubr.f32.mxu0 0.0
  %4104 = vmatmul.mubr.f32.gmra.mrb[0].mxu0 %v391
  %v4105 = vpop.f32.mrb[0].mxu0
  %v4106 = vadd.f32 %v364, %v4105
  %v4107 = vpop.f32.mrb[0].mxu0
  %v4108 = vadd.f32 %v364, %v4107
  %4109 = vmatprep.mubr.f32.mxu0 0.0
  %4110 = vmatmul.mubr.f32.gmra.mrb[0].mxu0 %v394
  %v4111 = vpop.f32.mrb[0].mxu0
  %v4112 = vadd.f32 %v369, %v4111
  %v4113 = vpop.f32.mrb[0].mxu0
  %v4114 = vadd.f32 %v369, %v4113
  %4115 = vdwg.mxu0
  %4116 = vmatprep.subr.mxu0 %v98
  %4117 = vmatpush1.msra.mxu0 %v97
  %4118 = vmatprep.subr.mxu0 %v170
  %4119 = vmatpush1.msra.mxu0 %v169
  %4120 = vmatprep.subr.mxu0 %v242
  %4121 = vmatpush1.msra.mxu0 %v241
  %4122 = vmatprep.subr.mxu0 %v587
  %4123 = vmatpush1.msra.mxu0 %v584
  %4124 = vmatprep.subr.mxu0 0.0
  %4125 = vmatpush1.msra.mxu0 0.0
  %4126 = vmatprep.subr.mxu0 0.0
  %4127 = vmatpush1.msra.mxu0 0.0
  %4128 = vmatprep.subr.mxu0 0.0
  %4129 = vmatpush1.msra.mxu0 0.0
  %4130 = vmatprep.subr.mxu0 0.0
  %4131 = vmatpush1.msra.mxu0 0.0
  %4132 = vmatprep.subr.mxu0 0.0
  %4133 = vmatpush1.msra.mxu0 0.0
  %4134 = vmatprep.subr.mxu0 0.0
  %4135 = vmatpush1.msra.mxu0 0.0
  %4136 = vmatprep.subr.mxu0 0.0
  %4137 = vmatpush1.msra.mxu0 0.0
  %4138 = vmatprep.subr.mxu0 0.0
  %4139 = vmatpush1.msra.mxu0 0.0
  %4140 = vmatprep.subr.mxu0 0.0
  %4141 = vmatpush1.msra.mxu0 0.0
  %4142 = vmatprep.subr.mxu0 0.0
  %4143 = vmatpush1.msra.mxu0 0.0
  %4144 = vmatprep.subr.mxu0 0.0
  %4145 = vmatpush1.msra.mxu0 0.0
  %4146 = vmatprep.subr.mxu0 0.0
  %4147 = vmatpush1.msra.mxu0 0.0
  %4148 = vmatprep.subr.mxu0 0.0
  %4149 = vmatpush1.msra.mxu0 0.0
  %4150 = vmatprep.subr.mxu0 0.0
  %4151 = vmatpush1.msra.mxu0 0.0
  %4152 = vmatprep.subr.mxu0 0.0
  %4153 = vmatpush1.msra.mxu0 0.0
  %4154 = vmatprep.subr.mxu0 0.0
  %4155 = vmatpush1.msra.mxu0 0.0
  %4156 = vmatprep.subr.mxu0 0.0
  %4157 = vmatpush1.msra.mxu0 0.0
  %4158 = vmatprep.subr.mxu0 0.0
  %4159 = vmatpush1.msra.mxu0 0.0
  %4160 = vmatprep.subr.mxu0 0.0
  %4161 = vmatpush1.msra.mxu0 0.0
  %4162 = vmatprep.subr.mxu0 0.0
  %4163 = vmatpush1.msra.mxu0 0.0
  %4164 = vmatprep.subr.mxu0 0.0
  %4165 = vmatpush1.msra.mxu0 0.0
  %4166 = vmatprep.subr.mxu0 0.0
  %4167 = vmatpush1.msra.mxu0 0.0
  %4168 = vmatprep.subr.mxu0 0.0
  %4169 = vmatpush1.msra.mxu0 0.0
  %4170 = vmatprep.subr.mxu0 0.0
  %4171 = vmatpush1.msra.mxu0 0.0
  %4172 = vmatprep.subr.mxu0 0.0
  %4173 = vmatpush1.msra.mxu0 0.0
  %4174 = vmatprep.subr.mxu0 0.0
  %4175 = vmatpush1.msra.mxu0 0.0
  %4176 = vmatprep.subr.mxu0 0.0
  %4177 = vmatpush1.msra.mxu0 0.0
  %4178 = vmatprep.subr.mxu0 0.0
  %4179 = vmatpush1.msra.mxu0 0.0
  %4180 = vmatprep.mubr.f32.mxu0 0.0
  %4181 = vmatmul.mubr.f32.gmra.mrb[0].mxu0 %v373
  %v4182 = vpop.f32.mrb[0].mxu0
  %v4183 = vadd.f32 %v334, %v4182
  %v4184 = vpop.f32.mrb[0].mxu0
  %v4185 = vadd.f32 %v334, %v4184
  %4186 = vmatprep.mubr.f32.mxu0 0.0
  %4187 = vmatmul.mubr.f32.gmra.mrb[0].mxu0 %v376
  %v4188 = vpop.f32.mrb[0].mxu0
  %v4189 = vadd.f32 %v339, %v4188
  %v4190 = vpop.f32.mrb[0].mxu0
  %v4191 = vadd.f32 %v339, %v4190
  %4192 = vmatprep.mubr.f32.mxu0 0.0
  %4193 = vmatmul.mubr.f32.gmra.mrb[0].mxu0 %v379
  %v4194 = vpop.f32.mrb[0].mxu0
  %v4195 = vadd.f32 %v344, %v4194
  %v4196 = vpop.f32.mrb[0].mxu0
  %v4197 = vadd.f32 %v344, %v4196
  %4198 = vmatprep.mubr.f32.mxu0 0.0
  %4199 = vmatmul.mubr.f32.gmra.mrb[0].mxu0 %v382
  %v4200 = vpop.f32.mrb[0].mxu0
  %v4201 = vadd.f32 %v349, %v4200
  %v4202 = vpop.f32.mrb[0].mxu0
  %v4203 = vadd.f32 %v349, %v4202
  %4204 = vmatprep.mubr.f32.mxu0 0.0
  %4205 = vmatmul.mubr.f32.gmra.mrb[0].mxu0 %v385
  %v4206 = vpop.f32.mrb[0].mxu0
  %v4207 = vadd.f32 %v354, %v4206
  %v4208 = vpop.f32.mrb[0].mxu0
  %v4209 = vadd.f32 %v354, %v4208
  %4210 = vmatprep.mubr.f32.mxu0 0.0
  %4211 = vmatmul.mubr.f32.gmra.mrb[0].mxu0 %v388
  %v4212 = vpop.f32.mrb[0].mxu0
  %v4213 = vadd.f32 %v359, %v4212
  %v4214 = vpop.f32.mrb[0].mxu0
  %v4215 = vadd.f32 %v359, %v4214
  %4216 = vmatprep.mubr.f32.mxu0 0.0
  %4217 = vmatmul.mubr.f32.gmra.mrb[0].mxu0 %v391
  %v4218 = vpop.f32.mrb[0].mxu0
  %v4219 = vadd.f32 %v364, %v4218
  %v4220 = vpop.f32.mrb[0].mxu0
  %v4221 = vadd.f32 %v364, %v4220
  %4222 = vmatprep.mubr.f32.mxu0 0.0
  %4223 = vmatmul.mubr.f32.gmra.mrb[0].mxu0 %v394
  %v4224 = vpop.f32.mrb[0].mxu0
  %v4225 = vadd.f32 %v369, %v4224
  %v4226 = vpop.f32.mrb[0].mxu0
  %v4227 = vadd.f32 %v369, %v4226
  %4228 = vdwg.mxu0
  %4229 = vmatprep.subr.mxu0 %v100
  %4230 = vmatpush1.msra.mxu0 %v99
  %4231 = vmatprep.subr.mxu0 %v172
  %4232 = vmatpush1.msra.mxu0 %v171
  %4233 = vmatprep.subr.mxu0 %v244
  %4234 = vmatpush1.msra.mxu0 %v243
  %4235 = vmatprep.subr.mxu0 %v593
  %4236 = vmatpush1.msra.mxu0 %v590
  %4237 = vmatprep.subr.mxu0 0.0
  %4238 = vmatpush1.msra.mxu0 0.0
  %4239 = vmatprep.subr.mxu0 0.0
  %4240 = vmatpush1.msra.mxu0 0.0
  %4241 = vmatprep.subr.mxu0 0.0
  %4242 = vmatpush1.msra.mxu0 0.0
  %4243 = vmatprep.subr.mxu0 0.0
  %4244 = vmatpush1.msra.mxu0 0.0
  %4245 = vmatprep.subr.mxu0 0.0
  %4246 = vmatpush1.msra.mxu0 0.0
  %4247 = vmatprep.subr.mxu0 0.0
  %4248 = vmatpush1.msra.mxu0 0.0
  %4249 = vmatprep.subr.mxu0 0.0
  %4250 = vmatpush1.msra.mxu0 0.0
  %4251 = vmatprep.subr.mxu0 0.0
  %4252 = vmatpush1.msra.mxu0 0.0
  %4253 = vmatprep.subr.mxu0 0.0
  %4254 = vmatpush1.msra.mxu0 0.0
  %4255 = vmatprep.subr.mxu0 0.0
  %4256 = vmatpush1.msra.mxu0 0.0
  %4257 = vmatprep.subr.mxu0 0.0
  %4258 = vmatpush1.msra.mxu0 0.0
  %4259 = vmatprep.subr.mxu0 0.0
  %4260 = vmatpush1.msra.mxu0 0.0
  %4261 = vmatprep.subr.mxu0 0.0
  %4262 = vmatpush1.msra.mxu0 0.0
  %4263 = vmatprep.subr.mxu0 0.0
  %4264 = vmatpush1.msra.mxu0 0.0
  %4265 = vmatprep.subr.mxu0 0.0
  %4266 = vmatpush1.msra.mxu0 0.0
  %4267 = vmatprep.subr.mxu0 0.0
  %4268 = vmatpush1.msra.mxu0 0.0
  %4269 = vmatprep.subr.mxu0 0.0
  %4270 = vmatpush1.msra.mxu0 0.0
  %4271 = vmatprep.subr.mxu0 0.0
  %4272 = vmatpush1.msra.mxu0 0.0
  %4273 = vmatprep.subr.mxu0 0.0
  %4274 = vmatpush1.msra.mxu0 0.0
  %4275 = vmatprep.subr.mxu0 0.0
  %4276 = vmatpush1.msra.mxu0 0.0
  %4277 = vmatprep.subr.mxu0 0.0
  %4278 = vmatpush1.msra.mxu0 0.0
  %4279 = vmatprep.subr.mxu0 0.0
  %4280 = vmatpush1.msra.mxu0 0.0
  %4281 = vmatprep.subr.mxu0 0.0
  %4282 = vmatpush1.msra.mxu0 0.0
  %4283 = vmatprep.subr.mxu0 0.0
  %4284 = vmatpush1.msra.mxu0 0.0
  %4285 = vmatprep.subr.mxu0 0.0
  %4286 = vmatpush1.msra.mxu0 0.0
  %4287 = vmatprep.subr.mxu0 0.0
  %4288 = vmatpush1.msra.mxu0 0.0
  %4289 = vmatprep.subr.mxu0 0.0
  %4290 = vmatpush1.msra.mxu0 0.0
  %4291 = vmatprep.subr.mxu0 0.0
  %4292 = vmatpush1.msra.mxu0 0.0
  %4293 = vmatprep.mubr.f32.mxu0 0.0
  %4294 = vmatmul.mubr.f32.gmra.mrb[0].mxu0 %v373
  %v4295 = vpop.f32.mrb[0].mxu0
  %v4296 = vadd.f32 %v334, %v4295
  %v4297 = vpop.f32.mrb[0].mxu0
  %v4298 = vadd.f32 %v334, %v4297
  %4299 = vmatprep.mubr.f32.mxu0 0.0
  %4300 = vmatmul.mubr.f32.gmra.mrb[0].mxu0 %v376
  %v4301 = vpop.f32.mrb[0].mxu0
  %v4302 = vadd.f32 %v339, %v4301
  %v4303 = vpop.f32.mrb[0].mxu0
  %v4304 = vadd.f32 %v339, %v4303
  %4305 = vmatprep.mubr.f32.mxu0 0.0
  %4306 = vmatmul.mubr.f32.gmra.mrb[0].mxu0 %v379
  %v4307 = vpop.f32.mrb[0].mxu0
  %v4308 = vadd.f32 %v344, %v4307
  %v4309 = vpop.f32.mrb[0].mxu0
  %v4310 = vadd.f32 %v344, %v4309
  %4311 = vmatprep.mubr.f32.mxu0 0.0
  %4312 = vmatmul.mubr.f32.gmra.mrb[0].mxu0 %v382
  %v4313 = vpop.f32.mrb[0].mxu0
  %v4314 = vadd.f32 %v349, %v4313
  %v4315 = vpop.f32.mrb[0].mxu0
  %v4316 = vadd.f32 %v349, %v4315
  %4317 = vmatprep.mubr.f32.mxu0 0.0
  %4318 = vmatmul.mubr.f32.gmra.mrb[0].mxu0 %v385
  %v4319 = vpop.f32.mrb[0].mxu0
  %v4320 = vadd.f32 %v354, %v4319
  %v4321 = vpop.f32.mrb[0].mxu0
  %v4322 = vadd.f32 %v354, %v4321
  %4323 = vmatprep.mubr.f32.mxu0 0.0
  %4324 = vmatmul.mubr.f32.gmra.mrb[0].mxu0 %v388
  %v4325 = vpop.f32.mrb[0].mxu0
  %v4326 = vadd.f32 %v359, %v4325
  %v4327 = vpop.f32.mrb[0].mxu0
  %v4328 = vadd.f32 %v359, %v4327
  %4329 = vmatprep.mubr.f32.mxu0 0.0
  %4330 = vmatmul.mubr.f32.gmra.mrb[0].mxu0 %v391
  %v4331 = vpop.f32.mrb[0].mxu0
  %v4332 = vadd.f32 %v364, %v4331
  %v4333 = vpop.f32.mrb[0].mxu0
  %v4334 = vadd.f32 %v364, %v4333
  %4335 = vmatprep.mubr.f32.mxu0 0.0
  %4336 = vmatmul.mubr.f32.gmra.mrb[0].mxu0 %v394
  %v4337 = vpop.f32.mrb[0].mxu0
  %v4338 = vadd.f32 %v369, %v4337
  %v4339 = vpop.f32.mrb[0].mxu0
  %v4340 = vadd.f32 %v369, %v4339
  %4341 = vdwg.mxu0
  %4342 = vmatprep.subr.mxu0 %v102
  %4343 = vmatpush1.msra.mxu0 %v101
  %4344 = vmatprep.subr.mxu0 %v174
  %4345 = vmatpush1.msra.mxu0 %v173
  %4346 = vmatprep.subr.mxu0 %v246
  %4347 = vmatpush1.msra.mxu0 %v245
  %4348 = vmatprep.subr.mxu0 %v599
  %4349 = vmatpush1.msra.mxu0 %v596
  %4350 = vmatprep.subr.mxu0 0.0
  %4351 = vmatpush1.msra.mxu0 0.0
  %4352 = vmatprep.subr.mxu0 0.0
  %4353 = vmatpush1.msra.mxu0 0.0
  %4354 = vmatprep.subr.mxu0 0.0
  %4355 = vmatpush1.msra.mxu0 0.0
  %4356 = vmatprep.subr.mxu0 0.0
  %4357 = vmatpush1.msra.mxu0 0.0
  %4358 = vmatprep.subr.mxu0 0.0
  %4359 = vmatpush1.msra.mxu0 0.0
  %4360 = vmatprep.subr.mxu0 0.0
  %4361 = vmatpush1.msra.mxu0 0.0
  %4362 = vmatprep.subr.mxu0 0.0
  %4363 = vmatpush1.msra.mxu0 0.0
  %4364 = vmatprep.subr.mxu0 0.0
  %4365 = vmatpush1.msra.mxu0 0.0
  %4366 = vmatprep.subr.mxu0 0.0
  %4367 = vmatpush1.msra.mxu0 0.0
  %4368 = vmatprep.subr.mxu0 0.0
  %4369 = vmatpush1.msra.mxu0 0.0
  %4370 = vmatprep.subr.mxu0 0.0
  %4371 = vmatpush1.msra.mxu0 0.0
  %4372 = vmatprep.subr.mxu0 0.0
  %4373 = vmatpush1.msra.mxu0 0.0
  %4374 = vmatprep.subr.mxu0 0.0
  %4375 = vmatpush1.msra.mxu0 0.0
  %4376 = vmatprep.subr.mxu0 0.0
  %4377 = vmatpush1.msra.mxu0 0.0
  %4378 = vmatprep.subr.mxu0 0.0
  %4379 = vmatpush1.msra.mxu0 0.0
  %4380 = vmatprep.subr.mxu0 0.0
  %4381 = vmatpush1.msra.mxu0 0.0
  %4382 = vmatprep.subr.mxu0 0.0
  %4383 = vmatpush1.msra.mxu0 0.0
  %4384 = vmatprep.subr.mxu0 0.0
  %4385 = vmatpush1.msra.mxu0 0.0
  %4386 = vmatprep.subr.mxu0 0.0
  %4387 = vmatpush1.msra.mxu0 0.0
  %4388 = vmatprep.subr.mxu0 0.0
  %4389 = vmatpush1.msra.mxu0 0.0
  %4390 = vmatprep.subr.mxu0 0.0
  %4391 = vmatpush1.msra.mxu0 0.0
  %4392 = vmatprep.subr.mxu0 0.0
  %4393 = vmatpush1.msra.mxu0 0.0
  %4394 = vmatprep.subr.mxu0 0.0
  %4395 = vmatpush1.msra.mxu0 0.0
  %4396 = vmatprep.subr.mxu0 0.0
  %4397 = vmatpush1.msra.mxu0 0.0
  %4398 = vmatprep.subr.mxu0 0.0
  %4399 = vmatpush1.msra.mxu0 0.0
  %4400 = vmatprep.subr.mxu0 0.0
  %4401 = vmatpush1.msra.mxu0 0.0
  %4402 = vmatprep.subr.mxu0 0.0
  %4403 = vmatpush1.msra.mxu0 0.0
  %4404 = vmatprep.subr.mxu0 0.0
  %4405 = vmatpush1.msra.mxu0 0.0
  %4406 = vmatprep.mubr.f32.mxu0 0.0
  %4407 = vmatmul.mubr.f32.gmra.mrb[0].mxu0 %v373
  %v4408 = vpop.f32.mrb[0].mxu0
  %v4409 = vadd.f32 %v334, %v4408
  %v4410 = vpop.f32.mrb[0].mxu0
  %v4411 = vadd.f32 %v334, %v4410
  %4412 = vmatprep.mubr.f32.mxu0 0.0
  %4413 = vmatmul.mubr.f32.gmra.mrb[0].mxu0 %v376
  %v4414 = vpop.f32.mrb[0].mxu0
  %v4415 = vadd.f32 %v339, %v4414
  %v4416 = vpop.f32.mrb[0].mxu0
  %v4417 = vadd.f32 %v339, %v4416
  %4418 = vmatprep.mubr.f32.mxu0 0.0
  %4419 = vmatmul.mubr.f32.gmra.mrb[0].mxu0 %v379
  %v4420 = vpop.f32.mrb[0].mxu0
  %v4421 = vadd.f32 %v344, %v4420
  %v4422 = vpop.f32.mrb[0].mxu0
  %v4423 = vadd.f32 %v344, %v4422
  %4424 = vmatprep.mubr.f32.mxu0 0.0
  %4425 = vmatmul.mubr.f32.gmra.mrb[0].mxu0 %v382
  %v4426 = vpop.f32.mrb[0].mxu0
  %v4427 = vadd.f32 %v349, %v4426
  %v4428 = vpop.f32.mrb[0].mxu0
  %v4429 = vadd.f32 %v349, %v4428
  %4430 = vmatprep.mubr.f32.mxu0 0.0
  %4431 = vmatmul.mubr.f32.gmra.mrb[0].mxu0 %v385
  %v4432 = vpop.f32.mrb[0].mxu0
  %v4433 = vadd.f32 %v354, %v4432
  %v4434 = vpop.f32.mrb[0].mxu0
  %v4435 = vadd.f32 %v354, %v4434
  %4436 = vmatprep.mubr.f32.mxu0 0.0
  %4437 = vmatmul.mubr.f32.gmra.mrb[0].mxu0 %v388
  %v4438 = vpop.f32.mrb[0].mxu0
  %v4439 = vadd.f32 %v359, %v4438
  %v4440 = vpop.f32.mrb[0].mxu0
  %v4441 = vadd.f32 %v359, %v4440
  %4442 = vmatprep.mubr.f32.mxu0 0.0
  %4443 = vmatmul.mubr.f32.gmra.mrb[0].mxu0 %v391
  %v4444 = vpop.f32.mrb[0].mxu0
  %v4445 = vadd.f32 %v364, %v4444
  %v4446 = vpop.f32.mrb[0].mxu0
  %v4447 = vadd.f32 %v364, %v4446
  %4448 = vmatprep.mubr.f32.mxu0 0.0
  %4449 = vmatmul.mubr.f32.gmra.mrb[0].mxu0 %v394
  %v4450 = vpop.f32.mrb[0].mxu0
  %v4451 = vadd.f32 %v369, %v4450
  %v4452 = vpop.f32.mrb[0].mxu0
  %v4453 = vadd.f32 %v369, %v4452
  %4454 = vdwg.mxu0
  %4455 = vmatprep.subr.mxu0 %v104
  %4456 = vmatpush1.msra.mxu0 %v103
  %4457 = vmatprep.subr.mxu0 %v176
  %4458 = vmatpush1.msra.mxu0 %v175
  %4459 = vmatprep.subr.mxu0 %v248
  %4460 = vmatpush1.msra.mxu0 %v247
  %4461 = vmatprep.subr.mxu0 %v605
  %4462 = vmatpush1.msra.mxu0 %v602
  %4463 = vmatprep.subr.mxu0 0.0
  %4464 = vmatpush1.msra.mxu0 0.0
  %4465 = vmatprep.subr.mxu0 0.0
  %4466 = vmatpush1.msra.mxu0 0.0
  %4467 = vmatprep.subr.mxu0 0.0
  %4468 = vmatpush1.msra.mxu0 0.0
  %4469 = vmatprep.subr.mxu0 0.0
  %4470 = vmatpush1.msra.mxu0 0.0
  %4471 = vmatprep.subr.mxu0 0.0
  %4472 = vmatpush1.msra.mxu0 0.0
  %4473 = vmatprep.subr.mxu0 0.0
  %4474 = vmatpush1.msra.mxu0 0.0
  %4475 = vmatprep.subr.mxu0 0.0
  %4476 = vmatpush1.msra.mxu0 0.0
  %4477 = vmatprep.subr.mxu0 0.0
  %4478 = vmatpush1.msra.mxu0 0.0
  %4479 = vmatprep.subr.mxu0 0.0
  %4480 = vmatpush1.msra.mxu0 0.0
  %4481 = vmatprep.subr.mxu0 0.0
  %4482 = vmatpush1.msra.mxu0 0.0
  %4483 = vmatprep.subr.mxu0 0.0
  %4484 = vmatpush1.msra.mxu0 0.0
  %4485 = vmatprep.subr.mxu0 0.0
  %4486 = vmatpush1.msra.mxu0 0.0
  %4487 = vmatprep.subr.mxu0 0.0
  %4488 = vmatpush1.msra.mxu0 0.0
  %4489 = vmatprep.subr.mxu0 0.0
  %4490 = vmatpush1.msra.mxu0 0.0
  %4491 = vmatprep.subr.mxu0 0.0
  %4492 = vmatpush1.msra.mxu0 0.0
  %4493 = vmatprep.subr.mxu0 0.0
  %4494 = vmatpush1.msra.mxu0 0.0
  %4495 = vmatprep.subr.mxu0 0.0
  %4496 = vmatpush1.msra.mxu0 0.0
  %4497 = vmatprep.subr.mxu0 0.0
  %4498 = vmatpush1.msra.mxu0 0.0
  %4499 = vmatprep.subr.mxu0 0.0
  %4500 = vmatpush1.msra.mxu0 0.0
  %4501 = vmatprep.subr.mxu0 0.0
  %4502 = vmatpush1.msra.mxu0 0.0
  %4503 = vmatprep.subr.mxu0 0.0
  %4504 = vmatpush1.msra.mxu0 0.0
  %4505 = vmatprep.subr.mxu0 0.0
  %4506 = vmatpush1.msra.mxu0 0.0
  %4507 = vmatprep.subr.mxu0 0.0
  %4508 = vmatpush1.msra.mxu0 0.0
  %4509 = vmatprep.subr.mxu0 0.0
  %4510 = vmatpush1.msra.mxu0 0.0
  %4511 = vmatprep.subr.mxu0 0.0
  %4512 = vmatpush1.msra.mxu0 0.0
  %4513 = vmatprep.subr.mxu0 0.0
  %4514 = vmatpush1.msra.mxu0 0.0
  %4515 = vmatprep.subr.mxu0 0.0
  %4516 = vmatpush1.msra.mxu0 0.0
  %4517 = vmatprep.subr.mxu0 0.0
  %4518 = vmatpush1.msra.mxu0 0.0
  %4519 = vmatprep.mubr.f32.mxu0 0.0
  %4520 = vmatmul.mubr.f32.gmra.mrb[0].mxu0 %v373
  %v4521 = vpop.f32.mrb[0].mxu0
  %v4522 = vadd.f32 %v334, %v4521
  %v4523 = vpop.f32.mrb[0].mxu0
  %v4524 = vadd.f32 %v334, %v4523
  %4525 = vmatprep.mubr.f32.mxu0 0.0
  %4526 = vmatmul.mubr.f32.gmra.mrb[0].mxu0 %v376
  %v4527 = vpop.f32.mrb[0].mxu0
  %v4528 = vadd.f32 %v339, %v4527
  %v4529 = vpop.f32.mrb[0].mxu0
  %v4530 = vadd.f32 %v339, %v4529
  %4531 = vmatprep.mubr.f32.mxu0 0.0
  %4532 = vmatmul.mubr.f32.gmra.mrb[0].mxu0 %v379
  %v4533 = vpop.f32.mrb[0].mxu0
  %v4534 = vadd.f32 %v344, %v4533
  %v4535 = vpop.f32.mrb[0].mxu0
  %v4536 = vadd.f32 %v344, %v4535
  %4537 = vmatprep.mubr.f32.mxu0 0.0
  %4538 = vmatmul.mubr.f32.gmra.mrb[0].mxu0 %v382
  %v4539 = vpop.f32.mrb[0].mxu0
  %v4540 = vadd.f32 %v349, %v4539
  %v4541 = vpop.f32.mrb[0].mxu0
  %v4542 = vadd.f32 %v349, %v4541
  %4543 = vmatprep.mubr.f32.mxu0 0.0
  %4544 = vmatmul.mubr.f32.gmra.mrb[0].mxu0 %v385
  %v4545 = vpop.f32.mrb[0].mxu0
  %v4546 = vadd.f32 %v354, %v4545
  %v4547 = vpop.f32.mrb[0].mxu0
  %v4548 = vadd.f32 %v354, %v4547
  %4549 = vmatprep.mubr.f32.mxu0 0.0
  %4550 = vmatmul.mubr.f32.gmra.mrb[0].mxu0 %v388
  %v4551 = vpop.f32.mrb[0].mxu0
  %v4552 = vadd.f32 %v359, %v4551
  %v4553 = vpop.f32.mrb[0].mxu0
  %v4554 = vadd.f32 %v359, %v4553
  %4555 = vmatprep.mubr.f32.mxu0 0.0
  %4556 = vmatmul.mubr.f32.gmra.mrb[0].mxu0 %v391
  %v4557 = vpop.f32.mrb[0].mxu0
  %v4558 = vadd.f32 %v364, %v4557
  %v4559 = vpop.f32.mrb[0].mxu0
  %v4560 = vadd.f32 %v364, %v4559
  %4561 = vmatprep.mubr.f32.mxu0 0.0
  %4562 = vmatmul.mubr.f32.gmra.mrb[0].mxu0 %v394
  %v4563 = vpop.f32.mrb[0].mxu0
  %v4564 = vadd.f32 %v369, %v4563
  %v4565 = vpop.f32.mrb[0].mxu0
  %v4566 = vadd.f32 %v369, %v4565
  %4567 = vdwg.mxu0
  %4568 = vmatprep.subr.mxu0 %v106
  %4569 = vmatpush1.msra.mxu0 %v105
  %4570 = vmatprep.subr.mxu0 %v178
  %4571 = vmatpush1.msra.mxu0 %v177
  %4572 = vmatprep.subr.mxu0 %v250
  %4573 = vmatpush1.msra.mxu0 %v249
  %4574 = vmatprep.subr.mxu0 %v611
  %4575 = vmatpush1.msra.mxu0 %v608
  %4576 = vmatprep.subr.mxu0 0.0
  %4577 = vmatpush1.msra.mxu0 0.0
  %4578 = vmatprep.subr.mxu0 0.0
  %4579 = vmatpush1.msra.mxu0 0.0
  %4580 = vmatprep.subr.mxu0 0.0
  %4581 = vmatpush1.msra.mxu0 0.0
  %4582 = vmatprep.subr.mxu0 0.0
  %4583 = vmatpush1.msra.mxu0 0.0
  %4584 = vmatprep.subr.mxu0 0.0
  %4585 = vmatpush1.msra.mxu0 0.0
  %4586 = vmatprep.subr.mxu0 0.0
  %4587 = vmatpush1.msra.mxu0 0.0
  %4588 = vmatprep.subr.mxu0 0.0
  %4589 = vmatpush1.msra.mxu0 0.0
  %4590 = vmatprep.subr.mxu0 0.0
  %4591 = vmatpush1.msra.mxu0 0.0
  %4592 = vmatprep.subr.mxu0 0.0
  %4593 = vmatpush1.msra.mxu0 0.0
  %4594 = vmatprep.subr.mxu0 0.0
  %4595 = vmatpush1.msra.mxu0 0.0
  %4596 = vmatprep.subr.mxu0 0.0
  %4597 = vmatpush1.msra.mxu0 0.0
  %4598 = vmatprep.subr.mxu0 0.0
  %4599 = vmatpush1.msra.mxu0 0.0
  %4600 = vmatprep.subr.mxu0 0.0
  %4601 = vmatpush1.msra.mxu0 0.0
  %4602 = vmatprep.subr.mxu0 0.0
  %4603 = vmatpush1.msra.mxu0 0.0
  %4604 = vmatprep.subr.mxu0 0.0
  %4605 = vmatpush1.msra.mxu0 0.0
  %4606 = vmatprep.subr.mxu0 0.0
  %4607 = vmatpush1.msra.mxu0 0.0
  %4608 = vmatprep.subr.mxu0 0.0
  %4609 = vmatpush1.msra.mxu0 0.0
  %4610 = vmatprep.subr.mxu0 0.0
  %4611 = vmatpush1.msra.mxu0 0.0
  %4612 = vmatprep.subr.mxu0 0.0
  %4613 = vmatpush1.msra.mxu0 0.0
  %4614 = vmatprep.subr.mxu0 0.0
  %4615 = vmatpush1.msra.mxu0 0.0
  %4616 = vmatprep.subr.mxu0 0.0
  %4617 = vmatpush1.msra.mxu0 0.0
  %4618 = vmatprep.subr.mxu0 0.0
  %4619 = vmatpush1.msra.mxu0 0.0
  %4620 = vmatprep.subr.mxu0 0.0
  %4621 = vmatpush1.msra.mxu0 0.0
  %4622 = vmatprep.subr.mxu0 0.0
  %4623 = vmatpush1.msra.mxu0 0.0
  %4624 = vmatprep.subr.mxu0 0.0
  %4625 = vmatpush1.msra.mxu0 0.0
  %4626 = vmatprep.subr.mxu0 0.0
  %4627 = vmatpush1.msra.mxu0 0.0
  %4628 = vmatprep.subr.mxu0 0.0
  %4629 = vmatpush1.msra.mxu0 0.0
  %4630 = vmatprep.subr.mxu0 0.0
  %4631 = vmatpush1.msra.mxu0 0.0
  %4632 = vmatprep.mubr.f32.mxu0 0.0
  %4633 = vmatmul.mubr.f32.gmra.mrb[0].mxu0 %v373
  %v4634 = vpop.f32.mrb[0].mxu0
  %v4635 = vadd.f32 %v334, %v4634
  %v4636 = vpop.f32.mrb[0].mxu0
  %v4637 = vadd.f32 %v334, %v4636
  %4638 = vmatprep.mubr.f32.mxu0 0.0
  %4639 = vmatmul.mubr.f32.gmra.mrb[0].mxu0 %v376
  %v4640 = vpop.f32.mrb[0].mxu0
  %v4641 = vadd.f32 %v339, %v4640
  %v4642 = vpop.f32.mrb[0].mxu0
  %v4643 = vadd.f32 %v339, %v4642
  %4644 = vmatprep.mubr.f32.mxu0 0.0
  %4645 = vmatmul.mubr.f32.gmra.mrb[0].mxu0 %v379
  %v4646 = vpop.f32.mrb[0].mxu0
  %v4647 = vadd.f32 %v344, %v4646
  %v4648 = vpop.f32.mrb[0].mxu0
  %v4649 = vadd.f32 %v344, %v4648
  %4650 = vmatprep.mubr.f32.mxu0 0.0
  %4651 = vmatmul.mubr.f32.gmra.mrb[0].mxu0 %v382
  %v4652 = vpop.f32.mrb[0].mxu0
  %v4653 = vadd.f32 %v349, %v4652
  %v4654 = vpop.f32.mrb[0].mxu0
  %v4655 = vadd.f32 %v349, %v4654
  %4656 = vmatprep.mubr.f32.mxu0 0.0
  %4657 = vmatmul.mubr.f32.gmra.mrb[0].mxu0 %v385
  %v4658 = vpop.f32.mrb[0].mxu0
  %v4659 = vadd.f32 %v354, %v4658
  %v4660 = vpop.f32.mrb[0].mxu0
  %v4661 = vadd.f32 %v354, %v4660
  %4662 = vmatprep.mubr.f32.mxu0 0.0
  %4663 = vmatmul.mubr.f32.gmra.mrb[0].mxu0 %v388
  %v4664 = vpop.f32.mrb[0].mxu0
  %v4665 = vadd.f32 %v359, %v4664
  %v4666 = vpop.f32.mrb[0].mxu0
  %v4667 = vadd.f32 %v359, %v4666
  %4668 = vmatprep.mubr.f32.mxu0 0.0
  %4669 = vmatmul.mubr.f32.gmra.mrb[0].mxu0 %v391
  %v4670 = vpop.f32.mrb[0].mxu0
  %v4671 = vadd.f32 %v364, %v4670
  %v4672 = vpop.f32.mrb[0].mxu0
  %v4673 = vadd.f32 %v364, %v4672
  %4674 = vmatprep.mubr.f32.mxu0 0.0
  %4675 = vmatmul.mubr.f32.gmra.mrb[0].mxu0 %v394
  %v4676 = vpop.f32.mrb[0].mxu0
  %v4677 = vadd.f32 %v369, %v4676
  %v4678 = vpop.f32.mrb[0].mxu0
  %v4679 = vadd.f32 %v369, %v4678
  %4680 = vdwg.mxu0
  %v4681 = vmax.f32 %v680, 0.0
  %v4682 = vmax.f32 %v682, 0.0
  %v4683 = vmax.f32 %v793, 0.0
  %v4684 = vmax.f32 %v795, 0.0
  %v4685 = vmax.f32 %v906, 0.0
  %v4686 = vmax.f32 %v908, 0.0
  %v4687 = vmax.f32 %v1019, 0.0
  %v4688 = vmax.f32 %v1021, 0.0
  %v4689 = vmax.f32 %v1132, 0.0
  %v4690 = vmax.f32 %v1134, 0.0
  %v4691 = vmax.f32 %v1245, 0.0
  %v4692 = vmax.f32 %v1247, 0.0
  %v4693 = vmax.f32 %v1358, 0.0
  %v4694 = vmax.f32 %v1360, 0.0
  %v4695 = vmax.f32 %v1471, 0.0
  %v4696 = vmax.f32 %v1473, 0.0
  %v4697 = vmax.f32 %v1584, 0.0
  %v4698 = vmax.f32 %v1586, 0.0
  %v4699 = vmax.f32 %v1697, 0.0
  %v4700 = vmax.f32 %v1699, 0.0
  %v4701 = vmax.f32 %v1810, 0.0
  %v4702 = vmax.f32 %v1812, 0.0
  %v4703 = vmax.f32 %v1923, 0.0
  %v4704 = vmax.f32 %v1925, 0.0
  %v4705 = vmax.f32 %v2036, 0.0
  %v4706 = vmax.f32 %v2038, 0.0
  %v4707 = vmax.f32 %v2149, 0.0
  %v4708 = vmax.f32 %v2151, 0.0
  %v4709 = vmax.f32 %v2262, 0.0
  %v4710 = vmax.f32 %v2264, 0.0
  %v4711 = vmax.f32 %v2375, 0.0
  %v4712 = vmax.f32 %v2377, 0.0
  %v4713 = vmax.f32 %v2488, 0.0
  %v4714 = vmax.f32 %v2490, 0.0
  %v4715 = vmax.f32 %v2601, 0.0
  %v4716 = vmax.f32 %v2603, 0.0
  %v4717 = vmax.f32 %v2714, 0.0
  %v4718 = vmax.f32 %v2716, 0.0
  %v4719 = vmax.f32 %v2827, 0.0
  %v4720 = vmax.f32 %v2829, 0.0
  %v4721 = vmax.f32 %v2940, 0.0
  %v4722 = vmax.f32 %v2942, 0.0
  %v4723 = vmax.f32 %v3053, 0.0
  %v4724 = vmax.f32 %v3055, 0.0
  %v4725 = vmax.f32 %v3166, 0.0
  %v4726 = vmax.f32 %v3168, 0.0
  %v4727 = vmax.f32 %v3279, 0.0
  %v4728 = vmax.f32 %v3281, 0.0
  %v4729 = vmax.f32 %v3392, 0.0
  %v4730 = vmax.f32 %v3394, 0.0
  %v4731 = vmax.f32 %v3505, 0.0
  %v4732 = vmax.f32 %v3507, 0.0
  %v4733 = vmax.f32 %v3618, 0.0
  %v4734 = vmax.f32 %v3620, 0.0
  %v4735 = vmax.f32 %v3731, 0.0
  %v4736 = vmax.f32 %v3733, 0.0
  %v4737 = vmax.f32 %v3844, 0.0
  %v4738 = vmax.f32 %v3846, 0.0
  %v4739 = vmax.f32 %v3957, 0.0
  %v4740 = vmax.f32 %v3959, 0.0
  %v4741 = vmax.f32 %v4070, 0.0
  %v4742 = vmax.f32 %v4072, 0.0
  %v4743 = vmax.f32 %v4183, 0.0
  %v4744 = vmax.f32 %v4185, 0.0
  %v4745 = vmax.f32 %v4296, 0.0
  %v4746 = vmax.f32 %v4298, 0.0
  %v4747 = vmax.f32 %v4409, 0.0
  %v4748 = vmax.f32 %v4411, 0.0
  %v4749 = vmax.f32 %v4522, 0.0
  %v4750 = vmax.f32 %v4524, 0.0
  %v4751 = vmax.f32 %v4635, 0.0
  %v4752 = vmax.f32 %v4637, 0.0
  %v4753 = vmax.f32 %v686, 0.0
  %v4754 = vmax.f32 %v688, 0.0
  %v4755 = vmax.f32 %v799, 0.0
  %v4756 = vmax.f32 %v801, 0.0
  %v4757 = vmax.f32 %v912, 0.0
  %v4758 = vmax.f32 %v914, 0.0
  %v4759 = vmax.f32 %v1025, 0.0
  %v4760 = vmax.f32 %v1027, 0.0
  %v4761 = vmax.f32 %v1138, 0.0
  %v4762 = vmax.f32 %v1140, 0.0
  %v4763 = vmax.f32 %v1251, 0.0
  %v4764 = vmax.f32 %v1253, 0.0
  %v4765 = vmax.f32 %v1364, 0.0
  %v4766 = vmax.f32 %v1366, 0.0
  %v4767 = vmax.f32 %v1477, 0.0
  %v4768 = vmax.f32 %v1479, 0.0
  %v4769 = vmax.f32 %v1590, 0.0
  %v4770 = vmax.f32 %v1592, 0.0
  %v4771 = vmax.f32 %v1703, 0.0
  %v4772 = vmax.f32 %v1705, 0.0
  %v4773 = vmax.f32 %v1816, 0.0
  %v4774 = vmax.f32 %v1818, 0.0
  %v4775 = vmax.f32 %v1929, 0.0
  %v4776 = vmax.f32 %v1931, 0.0
  %v4777 = vmax.f32 %v2042, 0.0
  %v4778 = vmax.f32 %v2044, 0.0
  %v4779 = vmax.f32 %v2155, 0.0
  %v4780 = vmax.f32 %v2157, 0.0
  %v4781 = vmax.f32 %v2268, 0.0
  %v4782 = vmax.f32 %v2270, 0.0
  %v4783 = vmax.f32 %v2381, 0.0
  %v4784 = vmax.f32 %v2383, 0.0
  %v4785 = vmax.f32 %v2494, 0.0
  %v4786 = vmax.f32 %v2496, 0.0
  %v4787 = vmax.f32 %v2607, 0.0
  %v4788 = vmax.f32 %v2609, 0.0
  %v4789 = vmax.f32 %v2720, 0.0
  %v4790 = vmax.f32 %v2722, 0.0
  %v4791 = vmax.f32 %v2833, 0.0
  %v4792 = vmax.f32 %v2835, 0.0
  %v4793 = vmax.f32 %v2946, 0.0
  %v4794 = vmax.f32 %v2948, 0.0
  %v4795 = vmax.f32 %v3059, 0.0
  %v4796 = vmax.f32 %v3061, 0.0
  %v4797 = vmax.f32 %v3172, 0.0
  %v4798 = vmax.f32 %v3174, 0.0
  %v4799 = vmax.f32 %v3285, 0.0
  %v4800 = vmax.f32 %v3287, 0.0
  %v4801 = vmax.f32 %v3398, 0.0
  %v4802 = vmax.f32 %v3400, 0.0
  %v4803 = vmax.f32 %v3511, 0.0
  %v4804 = vmax.f32 %v3513, 0.0
  %v4805 = vmax.f32 %v3624, 0.0
  %v4806 = vmax.f32 %v3626, 0.0
  %v4807 = vmax.f32 %v3737, 0.0
  %v4808 = vmax.f32 %v3739, 0.0
  %v4809 = vmax.f32 %v3850, 0.0
  %v4810 = vmax.f32 %v3852, 0.0
  %v4811 = vmax.f32 %v3963, 0.0
  %v4812 = vmax.f32 %v3965, 0.0
  %v4813 = vmax.f32 %v4076, 0.0
  %v4814 = vmax.f32 %v4078, 0.0
  %v4815 = vmax.f32 %v4189, 0.0
  %v4816 = vmax.f32 %v4191, 0.0
  %v4817 = vmax.f32 %v4302, 0.0
  %v4818 = vmax.f32 %v4304, 0.0
  %v4819 = vmax.f32 %v4415, 0.0
  %v4820 = vmax.f32 %v4417, 0.0
  %v4821 = vmax.f32 %v4528, 0.0
  %v4822 = vmax.f32 %v4530, 0.0
  %v4823 = vmax.f32 %v4641, 0.0
  %v4824 = vmax.f32 %v4643, 0.0
  %v4825 = vmax.f32 %v692, 0.0
  %v4826 = vmax.f32 %v694, 0.0
  %v4827 = vmax.f32 %v805, 0.0
  %v4828 = vmax.f32 %v807, 0.0
  %v4829 = vmax.f32 %v918, 0.0
  %v4830 = vmax.f32 %v920, 0.0
  %v4831 = vmax.f32 %v1031, 0.0
  %v4832 = vmax.f32 %v1033, 0.0
  %v4833 = vmax.f32 %v1144, 0.0
  %v4834 = vmax.f32 %v1146, 0.0
  %v4835 = vmax.f32 %v1257, 0.0
  %v4836 = vmax.f32 %v1259, 0.0
  %v4837 = vmax.f32 %v1370, 0.0
  %v4838 = vmax.f32 %v1372, 0.0
  %v4839 = vmax.f32 %v1483, 0.0
  %v4840 = vmax.f32 %v1485, 0.0
  %v4841 = vmax.f32 %v1596, 0.0
  %v4842 = vmax.f32 %v1598, 0.0
  %v4843 = vmax.f32 %v1709, 0.0
  %v4844 = vmax.f32 %v1711, 0.0
  %v4845 = vmax.f32 %v1822, 0.0
  %v4846 = vmax.f32 %v1824, 0.0
  %v4847 = vmax.f32 %v1935, 0.0
  %v4848 = vmax.f32 %v1937, 0.0
  %v4849 = vmax.f32 %v2048, 0.0
  %v4850 = vmax.f32 %v2050, 0.0
  %v4851 = vmax.f32 %v2161, 0.0
  %v4852 = vmax.f32 %v2163, 0.0
  %v4853 = vmax.f32 %v2274, 0.0
  %v4854 = vmax.f32 %v2276, 0.0
  %v4855 = vmax.f32 %v2387, 0.0
  %v4856 = vmax.f32 %v2389, 0.0
  %v4857 = vmax.f32 %v2500, 0.0
  %v4858 = vmax.f32 %v2502, 0.0
  %v4859 = vmax.f32 %v2613, 0.0
  %v4860 = vmax.f32 %v2615, 0.0
  %v4861 = vmax.f32 %v2726, 0.0
  %v4862 = vmax.f32 %v2728, 0.0
  %v4863 = vmax.f32 %v2839, 0.0
  %v4864 = vmax.f32 %v2841, 0.0
  %v4865 = vmax.f32 %v2952, 0.0
  %v4866 = vmax.f32 %v2954, 0.0
  %v4867 = vmax.f32 %v3065, 0.0
  %v4868 = vmax.f32 %v3067, 0.0
  %v4869 = vmax.f32 %v3178, 0.0
  %v4870 = vmax.f32 %v3180, 0.0
  %v4871 = vmax.f32 %v3291, 0.0
  %v4872 = vmax.f32 %v3293, 0.0
  %v4873 = vmax.f32 %v3404, 0.0
  %v4874 = vmax.f32 %v3406, 0.0
  %v4875 = vmax.f32 %v3517, 0.0
  %v4876 = vmax.f32 %v3519, 0.0
  %v4877 = vmax.f32 %v3630, 0.0
  %v4878 = vmax.f32 %v3632, 0.0
  %v4879 = vmax.f32 %v3743, 0.0
  %v4880 = vmax.f32 %v3745, 0.0
  %v4881 = vmax.f32 %v3856, 0.0
  %v4882 = vmax.f32 %v3858, 0.0
  %v4883 = vmax.f32 %v3969, 0.0
  %v4884 = vmax.f32 %v3971, 0.0
  %v4885 = vmax.f32 %v4082, 0.0
  %v4886 = vmax.f32 %v4084, 0.0
  %v4887 = vmax.f32 %v4195, 0.0
  %v4888 = vmax.f32 %v4197, 0.0
  %v4889 = vmax.f32 %v4308, 0.0
  %v4890 = vmax.f32 %v4310, 0.0
  %v4891 = vmax.f32 %v4421, 0.0
  %v4892 = vmax.f32 %v4423, 0.0
  %v4893 = vmax.f32 %v4534, 0.0
  %v4894 = vmax.f32 %v4536, 0.0
  %v4895 = vmax.f32 %v4647, 0.0
  %v4896 = vmax.f32 %v4649, 0.0
  %v4897 = vmax.f32 %v698, 0.0
  %v4898 = vmax.f32 %v700, 0.0
  %v4899 = vmax.f32 %v811, 0.0
  %v4900 = vmax.f32 %v813, 0.0
  %v4901 = vmax.f32 %v924, 0.0
  %v4902 = vmax.f32 %v926, 0.0
  %v4903 = vmax.f32 %v1037, 0.0
  %v4904 = vmax.f32 %v1039, 0.0
  %v4905 = vmax.f32 %v1150, 0.0
  %v4906 = vmax.f32 %v1152, 0.0
  %v4907 = vmax.f32 %v1263, 0.0
  %v4908 = vmax.f32 %v1265, 0.0
  %v4909 = vmax.f32 %v1376, 0.0
  %v4910 = vmax.f32 %v1378, 0.0
  %v4911 = vmax.f32 %v1489, 0.0
  %v4912 = vmax.f32 %v1491, 0.0
  %v4913 = vmax.f32 %v1602, 0.0
  %v4914 = vmax.f32 %v1604, 0.0
  %v4915 = vmax.f32 %v1715, 0.0
  %v4916 = vmax.f32 %v1717, 0.0
  %v4917 = vmax.f32 %v1828, 0.0
  %v4918 = vmax.f32 %v1830, 0.0
  %v4919 = vmax.f32 %v1941, 0.0
  %v4920 = vmax.f32 %v1943, 0.0
  %v4921 = vmax.f32 %v2054, 0.0
  %v4922 = vmax.f32 %v2056, 0.0
  %v4923 = vmax.f32 %v2167, 0.0
  %v4924 = vmax.f32 %v2169, 0.0
  %v4925 = vmax.f32 %v2280, 0.0
  %v4926 = vmax.f32 %v2282, 0.0
  %v4927 = vmax.f32 %v2393, 0.0
  %v4928 = vmax.f32 %v2395, 0.0
  %v4929 = vmax.f32 %v2506, 0.0
  %v4930 = vmax.f32 %v2508, 0.0
  %v4931 = vmax.f32 %v2619, 0.0
  %v4932 = vmax.f32 %v2621, 0.0
  %v4933 = vmax.f32 %v2732, 0.0
  %v4934 = vmax.f32 %v2734, 0.0
  %v4935 = vmax.f32 %v2845, 0.0
  %v4936 = vmax.f32 %v2847, 0.0
  %v4937 = vmax.f32 %v2958, 0.0
  %v4938 = vmax.f32 %v2960, 0.0
  %v4939 = vmax.f32 %v3071, 0.0
  %v4940 = vmax.f32 %v3073, 0.0
  %v4941 = vmax.f32 %v3184, 0.0
  %v4942 = vmax.f32 %v3186, 0.0
  %v4943 = vmax.f32 %v3297, 0.0
  %v4944 = vmax.f32 %v3299, 0.0
  %v4945 = vmax.f32 %v3410, 0.0
  %v4946 = vmax.f32 %v3412, 0.0
  %v4947 = vmax.f32 %v3523, 0.0
  %v4948 = vmax.f32 %v3525, 0.0
  %v4949 = vmax.f32 %v3636, 0.0
  %v4950 = vmax.f32 %v3638, 0.0
  %v4951 = vmax.f32 %v3749, 0.0
  %v4952 = vmax.f32 %v3751, 0.0
  %v4953 = vmax.f32 %v3862, 0.0
  %v4954 = vmax.f32 %v3864, 0.0
  %v4955 = vmax.f32 %v3975, 0.0
  %v4956 = vmax.f32 %v3977, 0.0
  %v4957 = vmax.f32 %v4088, 0.0
  %v4958 = vmax.f32 %v4090, 0.0
  %v4959 = vmax.f32 %v4201, 0.0
  %v4960 = vmax.f32 %v4203, 0.0
  %v4961 = vmax.f32 %v4314, 0.0
  %v4962 = vmax.f32 %v4316, 0.0
  %v4963 = vmax.f32 %v4427, 0.0
  %v4964 = vmax.f32 %v4429, 0.0
  %v4965 = vmax.f32 %v4540, 0.0
  %v4966 = vmax.f32 %v4542, 0.0
  %v4967 = vmax.f32 %v4653, 0.0
  %v4968 = vmax.f32 %v4655, 0.0
  %v4969 = vmax.f32 %v704, 0.0
  %v4970 = vmax.f32 %v706, 0.0
  %v4971 = vmax.f32 %v817, 0.0
  %v4972 = vmax.f32 %v819, 0.0
  %v4973 = vmax.f32 %v930, 0.0
  %v4974 = vmax.f32 %v932, 0.0
  %v4975 = vmax.f32 %v1043, 0.0
  %v4976 = vmax.f32 %v1045, 0.0
  %v4977 = vmax.f32 %v1156, 0.0
  %v4978 = vmax.f32 %v1158, 0.0
  %v4979 = vmax.f32 %v1269, 0.0
  %v4980 = vmax.f32 %v1271, 0.0
  %v4981 = vmax.f32 %v1382, 0.0
  %v4982 = vmax.f32 %v1384, 0.0
  %v4983 = vmax.f32 %v1495, 0.0
  %v4984 = vmax.f32 %v1497, 0.0
  %v4985 = vmax.f32 %v1608, 0.0
  %v4986 = vmax.f32 %v1610, 0.0
  %v4987 = vmax.f32 %v1721, 0.0
  %v4988 = vmax.f32 %v1723, 0.0
  %v4989 = vmax.f32 %v1834, 0.0
  %v4990 = vmax.f32 %v1836, 0.0
  %v4991 = vmax.f32 %v1947, 0.0
  %v4992 = vmax.f32 %v1949, 0.0
  %v4993 = vmax.f32 %v2060, 0.0
  %v4994 = vmax.f32 %v2062, 0.0
  %v4995 = vmax.f32 %v2173, 0.0
  %v4996 = vmax.f32 %v2175, 0.0
  %v4997 = vmax.f32 %v2286, 0.0
  %v4998 = vmax.f32 %v2288, 0.0
  %v4999 = vmax.f32 %v2399, 0.0
  %v5000 = vmax.f32 %v2401, 0.0
  %v5001 = vmax.f32 %v2512, 0.0
  %v5002 = vmax.f32 %v2514, 0.0
  %v5003 = vmax.f32 %v2625, 0.0
  %v5004 = vmax.f32 %v2627, 0.0
  %v5005 = vmax.f32 %v2738, 0.0
  %v5006 = vmax.f32 %v2740, 0.0
  %v5007 = vmax.f32 %v2851, 0.0
  %v5008 = vmax.f32 %v2853, 0.0
  %v5009 = vmax.f32 %v2964, 0.0
  %v5010 = vmax.f32 %v2966, 0.0
  %v5011 = vmax.f32 %v3077, 0.0
  %v5012 = vmax.f32 %v3079, 0.0
  %v5013 = vmax.f32 %v3190, 0.0
  %v5014 = vmax.f32 %v3192, 0.0
  %v5015 = vmax.f32 %v3303, 0.0
  %v5016 = vmax.f32 %v3305, 0.0
  %v5017 = vmax.f32 %v3416, 0.0
  %v5018 = vmax.f32 %v3418, 0.0
  %v5019 = vmax.f32 %v3529, 0.0
  %v5020 = vmax.f32 %v3531, 0.0
  %v5021 = vmax.f32 %v3642, 0.0
  %v5022 = vmax.f32 %v3644, 0.0
  %v5023 = vmax.f32 %v3755, 0.0
  %v5024 = vmax.f32 %v3757, 0.0
  %v5025 = vmax.f32 %v3868, 0.0
  %v5026 = vmax.f32 %v3870, 0.0
  %v5027 = vmax.f32 %v3981, 0.0
  %v5028 = vmax.f32 %v3983, 0.0
  %v5029 = vmax.f32 %v4094, 0.0
  %v5030 = vmax.f32 %v4096, 0.0
  %v5031 = vmax.f32 %v4207, 0.0
  %v5032 = vmax.f32 %v4209, 0.0
  %v5033 = vmax.f32 %v4320, 0.0
  %v5034 = vmax.f32 %v4322, 0.0
  %v5035 = vmax.f32 %v4433, 0.0
  %v5036 = vmax.f32 %v4435, 0.0
  %v5037 = vmax.f32 %v4546, 0.0
  %v5038 = vmax.f32 %v4548, 0.0
  %v5039 = vmax.f32 %v4659, 0.0
  %v5040 = vmax.f32 %v4661, 0.0
  %v5041 = vmax.f32 %v710, 0.0
  %v5042 = vmax.f32 %v712, 0.0
  %v5043 = vmax.f32 %v823, 0.0
  %v5044 = vmax.f32 %v825, 0.0
  %v5045 = vmax.f32 %v936, 0.0
  %v5046 = vmax.f32 %v938, 0.0
  %v5047 = vmax.f32 %v1049, 0.0
  %v5048 = vmax.f32 %v1051, 0.0
  %v5049 = vmax.f32 %v1162, 0.0
  %v5050 = vmax.f32 %v1164, 0.0
  %v5051 = vmax.f32 %v1275, 0.0
  %v5052 = vmax.f32 %v1277, 0.0
  %v5053 = vmax.f32 %v1388, 0.0
  %v5054 = vmax.f32 %v1390, 0.0
  %v5055 = vmax.f32 %v1501, 0.0
  %v5056 = vmax.f32 %v1503, 0.0
  %v5057 = vmax.f32 %v1614, 0.0
  %v5058 = vmax.f32 %v1616, 0.0
  %v5059 = vmax.f32 %v1727, 0.0
  %v5060 = vmax.f32 %v1729, 0.0
  %v5061 = vmax.f32 %v1840, 0.0
  %v5062 = vmax.f32 %v1842, 0.0
  %v5063 = vmax.f32 %v1953, 0.0
  %v5064 = vmax.f32 %v1955, 0.0
  %v5065 = vmax.f32 %v2066, 0.0
  %v5066 = vmax.f32 %v2068, 0.0
  %v5067 = vmax.f32 %v2179, 0.0
  %v5068 = vmax.f32 %v2181, 0.0
  %v5069 = vmax.f32 %v2292, 0.0
  %v5070 = vmax.f32 %v2294, 0.0
  %v5071 = vmax.f32 %v2405, 0.0
  %v5072 = vmax.f32 %v2407, 0.0
  %v5073 = vmax.f32 %v2518, 0.0
  %v5074 = vmax.f32 %v2520, 0.0
  %v5075 = vmax.f32 %v2631, 0.0
  %v5076 = vmax.f32 %v2633, 0.0
  %v5077 = vmax.f32 %v2744, 0.0
  %v5078 = vmax.f32 %v2746, 0.0
  %v5079 = vmax.f32 %v2857, 0.0
  %v5080 = vmax.f32 %v2859, 0.0
  %v5081 = vmax.f32 %v2970, 0.0
  %v5082 = vmax.f32 %v2972, 0.0
  %v5083 = vmax.f32 %v3083, 0.0
  %v5084 = vmax.f32 %v3085, 0.0
  %v5085 = vmax.f32 %v3196, 0.0
  %v5086 = vmax.f32 %v3198, 0.0
  %v5087 = vmax.f32 %v3309, 0.0
  %v5088 = vmax.f32 %v3311, 0.0
  %v5089 = vmax.f32 %v3422, 0.0
  %v5090 = vmax.f32 %v3424, 0.0
  %v5091 = vmax.f32 %v3535, 0.0
  %v5092 = vmax.f32 %v3537, 0.0
  %v5093 = vmax.f32 %v3648, 0.0
  %v5094 = vmax.f32 %v3650, 0.0
  %v5095 = vmax.f32 %v3761, 0.0
  %v5096 = vmax.f32 %v3763, 0.0
  %v5097 = vmax.f32 %v3874, 0.0
  %v5098 = vmax.f32 %v3876, 0.0
  %v5099 = vmax.f32 %v3987, 0.0
  %v5100 = vmax.f32 %v3989, 0.0
  %v5101 = vmax.f32 %v4100, 0.0
  %v5102 = vmax.f32 %v4102, 0.0
  %v5103 = vmax.f32 %v4213, 0.0
  %v5104 = vmax.f32 %v4215, 0.0
  %v5105 = vmax.f32 %v4326, 0.0
  %v5106 = vmax.f32 %v4328, 0.0
  %v5107 = vmax.f32 %v4439, 0.0
  %v5108 = vmax.f32 %v4441, 0.0
  %v5109 = vmax.f32 %v4552, 0.0
  %v5110 = vmax.f32 %v4554, 0.0
  %v5111 = vmax.f32 %v4665, 0.0
  %v5112 = vmax.f32 %v4667, 0.0
  %v5113 = vmax.f32 %v716, 0.0
  %v5114 = vmax.f32 %v718, 0.0
  %v5115 = vmax.f32 %v829, 0.0
  %v5116 = vmax.f32 %v831, 0.0
  %v5117 = vmax.f32 %v942, 0.0
  %v5118 = vmax.f32 %v944, 0.0
  %v5119 = vmax.f32 %v1055, 0.0
  %v5120 = vmax.f32 %v1057, 0.0
  %v5121 = vmax.f32 %v1168, 0.0
  %v5122 = vmax.f32 %v1170, 0.0
  %v5123 = vmax.f32 %v1281, 0.0
  %v5124 = vmax.f32 %v1283, 0.0
  %v5125 = vmax.f32 %v1394, 0.0
  %v5126 = vmax.f32 %v1396, 0.0
  %v5127 = vmax.f32 %v1507, 0.0
  %v5128 = vmax.f32 %v1509, 0.0
  %v5129 = vmax.f32 %v1620, 0.0
  %v5130 = vmax.f32 %v1622, 0.0
  %v5131 = vmax.f32 %v1733, 0.0
  %v5132 = vmax.f32 %v1735, 0.0
  %v5133 = vmax.f32 %v1846, 0.0
  %v5134 = vmax.f32 %v1848, 0.0
  %v5135 = vmax.f32 %v1959, 0.0
  %v5136 = vmax.f32 %v1961, 0.0
  %v5137 = vmax.f32 %v2072, 0.0
  %v5138 = vmax.f32 %v2074, 0.0
  %v5139 = vmax.f32 %v2185, 0.0
  %v5140 = vmax.f32 %v2187, 0.0
  %v5141 = vmax.f32 %v2298, 0.0
  %v5142 = vmax.f32 %v2300, 0.0
  %v5143 = vmax.f32 %v2411, 0.0
  %v5144 = vmax.f32 %v2413, 0.0
  %v5145 = vmax.f32 %v2524, 0.0
  %v5146 = vmax.f32 %v2526, 0.0
  %v5147 = vmax.f32 %v2637, 0.0
  %v5148 = vmax.f32 %v2639, 0.0
  %v5149 = vmax.f32 %v2750, 0.0
  %v5150 = vmax.f32 %v2752, 0.0
  %v5151 = vmax.f32 %v2863, 0.0
  %v5152 = vmax.f32 %v2865, 0.0
  %v5153 = vmax.f32 %v2976, 0.0
  %v5154 = vmax.f32 %v2978, 0.0
  %v5155 = vmax.f32 %v3089, 0.0
  %v5156 = vmax.f32 %v3091, 0.0
  %v5157 = vmax.f32 %v3202, 0.0
  %v5158 = vmax.f32 %v3204, 0.0
  %v5159 = vmax.f32 %v3315, 0.0
  %v5160 = vmax.f32 %v3317, 0.0
  %v5161 = vmax.f32 %v3428, 0.0
  %v5162 = vmax.f32 %v3430, 0.0
  %v5163 = vmax.f32 %v3541, 0.0
  %v5164 = vmax.f32 %v3543, 0.0
  %v5165 = vmax.f32 %v3654, 0.0
  %v5166 = vmax.f32 %v3656, 0.0
  %v5167 = vmax.f32 %v3767, 0.0
  %v5168 = vmax.f32 %v3769, 0.0
  %v5169 = vmax.f32 %v3880, 0.0
  %v5170 = vmax.f32 %v3882, 0.0
  %v5171 = vmax.f32 %v3993, 0.0
  %v5172 = vmax.f32 %v3995, 0.0
  %v5173 = vmax.f32 %v4106, 0.0
  %v5174 = vmax.f32 %v4108, 0.0
  %v5175 = vmax.f32 %v4219, 0.0
  %v5176 = vmax.f32 %v4221, 0.0
  %v5177 = vmax.f32 %v4332, 0.0
  %v5178 = vmax.f32 %v4334, 0.0
  %v5179 = vmax.f32 %v4445, 0.0
  %v5180 = vmax.f32 %v4447, 0.0
  %v5181 = vmax.f32 %v4558, 0.0
  %v5182 = vmax.f32 %v4560, 0.0
  %v5183 = vmax.f32 %v4671, 0.0
  %v5184 = vmax.f32 %v4673, 0.0
  %v5185 = vmax.f32 %v722, 0.0
  %v5186 = vmax.f32 %v724, 0.0
  %v5187 = vmax.f32 %v835, 0.0
  %v5188 = vmax.f32 %v837, 0.0
  %v5189 = vmax.f32 %v948, 0.0
  %v5190 = vmax.f32 %v950, 0.0
  %v5191 = vmax.f32 %v1061, 0.0
  %v5192 = vmax.f32 %v1063, 0.0
  %v5193 = vmax.f32 %v1174, 0.0
  %v5194 = vmax.f32 %v1176, 0.0
  %v5195 = vmax.f32 %v1287, 0.0
  %v5196 = vmax.f32 %v1289, 0.0
  %v5197 = vmax.f32 %v1400, 0.0
  %v5198 = vmax.f32 %v1402, 0.0
  %v5199 = vmax.f32 %v1513, 0.0
  %v5200 = vmax.f32 %v1515, 0.0
  %v5201 = vmax.f32 %v1626, 0.0
  %v5202 = vmax.f32 %v1628, 0.0
  %v5203 = vmax.f32 %v1739, 0.0
  %v5204 = vmax.f32 %v1741, 0.0
  %v5205 = vmax.f32 %v1852, 0.0
  %v5206 = vmax.f32 %v1854, 0.0
  %v5207 = vmax.f32 %v1965, 0.0
  %v5208 = vmax.f32 %v1967, 0.0
  %v5209 = vmax.f32 %v2078, 0.0
  %v5210 = vmax.f32 %v2080, 0.0
  %v5211 = vmax.f32 %v2191, 0.0
  %v5212 = vmax.f32 %v2193, 0.0
  %v5213 = vmax.f32 %v2304, 0.0
  %v5214 = vmax.f32 %v2306, 0.0
  %v5215 = vmax.f32 %v2417, 0.0
  %v5216 = vmax.f32 %v2419, 0.0
  %v5217 = vmax.f32 %v2530, 0.0
  %v5218 = vmax.f32 %v2532, 0.0
  %v5219 = vmax.f32 %v2643, 0.0
  %v5220 = vmax.f32 %v2645, 0.0
  %v5221 = vmax.f32 %v2756, 0.0
  %v5222 = vmax.f32 %v2758, 0.0
  %v5223 = vmax.f32 %v2869, 0.0
  %v5224 = vmax.f32 %v2871, 0.0
  %v5225 = vmax.f32 %v2982, 0.0
  %v5226 = vmax.f32 %v2984, 0.0
  %v5227 = vmax.f32 %v3095, 0.0
  %v5228 = vmax.f32 %v3097, 0.0
  %v5229 = vmax.f32 %v3208, 0.0
  %v5230 = vmax.f32 %v3210, 0.0
  %v5231 = vmax.f32 %v3321, 0.0
  %v5232 = vmax.f32 %v3323, 0.0
  %v5233 = vmax.f32 %v3434, 0.0
  %v5234 = vmax.f32 %v3436, 0.0
  %v5235 = vmax.f32 %v3547, 0.0
  %v5236 = vmax.f32 %v3549, 0.0
  %v5237 = vmax.f32 %v3660, 0.0
  %v5238 = vmax.f32 %v3662, 0.0
  %v5239 = vmax.f32 %v3773, 0.0
  %v5240 = vmax.f32 %v3775, 0.0
  %v5241 = vmax.f32 %v3886, 0.0
  %v5242 = vmax.f32 %v3888, 0.0
  %v5243 = vmax.f32 %v3999, 0.0
  %v5244 = vmax.f32 %v4001, 0.0
  %v5245 = vmax.f32 %v4112, 0.0
  %v5246 = vmax.f32 %v4114, 0.0
  %v5247 = vmax.f32 %v4225, 0.0
  %v5248 = vmax.f32 %v4227, 0.0
  %v5249 = vmax.f32 %v4338, 0.0
  %v5250 = vmax.f32 %v4340, 0.0
  %v5251 = vmax.f32 %v4451, 0.0
  %v5252 = vmax.f32 %v4453, 0.0
  %v5253 = vmax.f32 %v4564, 0.0
  %v5254 = vmax.f32 %v4566, 0.0
  %v5255 = vmax.f32 %v4677, 0.0
  %v5256 = vmax.f32 %v4679, 0.0
  %v5257 = vlaneseq
  %v5258 = vshrl.u32 %v5257, 7
  %v5259 = vadd.s32 %v5258, 8
  %v5260 = vadd.s32 %v5258, 16
  %v5261 = vadd.s32 %v5258, 24
  %v5262 = vadd.s32 %v5258, 32
  %v5263 = vld [vmem:[%s4] sm:$0xff]
  %v5264 = vld [vmem:[%s4 + $0x8] sm:$0xff]
  %v5265 = vld [vmem:[%s4 + $0x10] sm:$0xff]
  %v5266 = vld [vmem:[%s4 + $0x18] sm:$0xff]
  %v5267 = vld [vmem:[%s4 + $0x20] sm:$0xff]
  %v5268 = vld [vmem:[%s4 + $0x28] sm:$0xff]
  %v5269 = vld [vmem:[%s4 + $0x30] sm:$0xff]
  %v5270 = vld [vmem:[%s4 + $0x38] sm:$0xff]
  %v5271 = vld [vmem:[%s4 + $0x40] sm:$0xff]
  %v5272 = vlaneseq
  %v5273 = vshrl.u32 %v5272, 7
  %v5274 = vsub.s32 0, %v5273
  %v5275 = vrot.slane %v5263, %v5274
  %v5276 = vlaneseq
  %v5277 = vshrl.u32 %v5276, 7
  %v5278 = vsub.s32 1, %v5277
  %v5279 = vrot.slane %v5263, %v5278
  %v5280 = vlaneseq
  %v5281 = vshrl.u32 %v5280, 7
  %v5282 = vsub.s32 2, %v5281
  %v5283 = vrot.slane %v5263, %v5282
  %v5284 = vlaneseq
  %v5285 = vshrl.u32 %v5284, 7
  %v5286 = vsub.s32 3, %v5285
  %v5287 = vrot.slane %v5263, %v5286
  %v5288 = vlaneseq
  %v5289 = vshrl.u32 %v5288, 7
  %v5290 = vsub.s32 4, %v5289
  %v5291 = vrot.slane %v5263, %v5290
  %v5292 = vlaneseq
  %v5293 = vshrl.u32 %v5292, 7
  %v5294 = vsub.s32 5, %v5293
  %v5295 = vrot.slane %v5263, %v5294
  %v5296 = vlaneseq
  %v5297 = vshrl.u32 %v5296, 7
  %v5298 = vsub.s32 6, %v5297
  %v5299 = vrot.slane %v5263, %v5298
  %v5300 = vlaneseq
  %v5301 = vshrl.u32 %v5300, 7
  %v5302 = vsub.s32 7, %v5301
  %v5303 = vrot.slane %v5263, %v5302
  %v5304 = vlaneseq
  %v5305 = vshrl.u32 %v5304, 7
  %v5306 = vsub.s32 0, %v5305
  %v5307 = vrot.slane %v5264, %v5306
  %v5308 = vlaneseq
  %v5309 = vshrl.u32 %v5308, 7
  %v5310 = vsub.s32 1, %v5309
  %v5311 = vrot.slane %v5264, %v5310
  %v5312 = vlaneseq
  %v5313 = vshrl.u32 %v5312, 7
  %v5314 = vsub.s32 2, %v5313
  %v5315 = vrot.slane %v5264, %v5314
  %v5316 = vlaneseq
  %v5317 = vshrl.u32 %v5316, 7
  %v5318 = vsub.s32 3, %v5317
  %v5319 = vrot.slane %v5264, %v5318
  %v5320 = vlaneseq
  %v5321 = vshrl.u32 %v5320, 7
  %v5322 = vsub.s32 4, %v5321
  %v5323 = vrot.slane %v5264, %v5322
  %v5324 = vlaneseq
  %v5325 = vshrl.u32 %v5324, 7
  %v5326 = vsub.s32 5, %v5325
  %v5327 = vrot.slane %v5264, %v5326
  %v5328 = vlaneseq
  %v5329 = vshrl.u32 %v5328, 7
  %v5330 = vsub.s32 6, %v5329
  %v5331 = vrot.slane %v5264, %v5330
  %v5332 = vlaneseq
  %v5333 = vshrl.u32 %v5332, 7
  %v5334 = vsub.s32 7, %v5333
  %v5335 = vrot.slane %v5264, %v5334
  %v5336 = vlaneseq
  %v5337 = vshrl.u32 %v5336, 7
  %v5338 = vsub.s32 0, %v5337
  %v5339 = vrot.slane %v5265, %v5338
  %v5340 = vlaneseq
  %v5341 = vshrl.u32 %v5340, 7
  %v5342 = vsub.s32 1, %v5341
  %v5343 = vrot.slane %v5265, %v5342
  %v5344 = vlaneseq
  %v5345 = vshrl.u32 %v5344, 7
  %v5346 = vsub.s32 2, %v5345
  %v5347 = vrot.slane %v5265, %v5346
  %v5348 = vlaneseq
  %v5349 = vshrl.u32 %v5348, 7
  %v5350 = vsub.s32 3, %v5349
  %v5351 = vrot.slane %v5265, %v5350
  %v5352 = vlaneseq
  %v5353 = vshrl.u32 %v5352, 7
  %v5354 = vsub.s32 4, %v5353
  %v5355 = vrot.slane %v5265, %v5354
  %v5356 = vlaneseq
  %v5357 = vshrl.u32 %v5356, 7
  %v5358 = vsub.s32 5, %v5357
  %v5359 = vrot.slane %v5265, %v5358
  %v5360 = vlaneseq
  %v5361 = vshrl.u32 %v5360, 7
  %v5362 = vsub.s32 6, %v5361
  %v5363 = vrot.slane %v5265, %v5362
  %v5364 = vlaneseq
  %v5365 = vshrl.u32 %v5364, 7
  %v5366 = vsub.s32 7, %v5365
  %v5367 = vrot.slane %v5265, %v5366
  %v5368 = vlaneseq
  %v5369 = vshrl.u32 %v5368, 7
  %v5370 = vsub.s32 0, %v5369
  %v5371 = vrot.slane %v5266, %v5370
  %v5372 = vlaneseq
  %v5373 = vshrl.u32 %v5372, 7
  %v5374 = vsub.s32 1, %v5373
  %v5375 = vrot.slane %v5266, %v5374
  %v5376 = vlaneseq
  %v5377 = vshrl.u32 %v5376, 7
  %v5378 = vsub.s32 2, %v5377
  %v5379 = vrot.slane %v5266, %v5378
  %v5380 = vlaneseq
  %v5381 = vshrl.u32 %v5380, 7
  %v5382 = vsub.s32 3, %v5381
  %v5383 = vrot.slane %v5266, %v5382
  %v5384 = vlaneseq
  %v5385 = vshrl.u32 %v5384, 7
  %v5386 = vsub.s32 4, %v5385
  %v5387 = vrot.slane %v5266, %v5386
  %v5388 = vlaneseq
  %v5389 = vshrl.u32 %v5388, 7
  %v5390 = vsub.s32 5, %v5389
  %v5391 = vrot.slane %v5266, %v5390
  %v5392 = vlaneseq
  %v5393 = vshrl.u32 %v5392, 7
  %v5394 = vsub.s32 6, %v5393
  %v5395 = vrot.slane %v5266, %v5394
  %v5396 = vlaneseq
  %v5397 = vshrl.u32 %v5396, 7
  %v5398 = vsub.s32 7, %v5397
  %v5399 = vrot.slane %v5266, %v5398
  %v5400 = vlaneseq
  %v5401 = vshrl.u32 %v5400, 7
  %v5402 = vsub.s32 0, %v5401
  %v5403 = vrot.slane %v5267, %v5402
  %v5404 = vlaneseq
  %v5405 = vshrl.u32 %v5404, 7
  %v5406 = vsub.s32 1, %v5405
  %v5407 = vrot.slane %v5267, %v5406
  %v5408 = vlaneseq
  %v5409 = vshrl.u32 %v5408, 7
  %v5410 = vsub.s32 2, %v5409
  %v5411 = vrot.slane %v5267, %v5410
  %v5412 = vlaneseq
  %v5413 = vshrl.u32 %v5412, 7
  %v5414 = vsub.s32 3, %v5413
  %v5415 = vrot.slane %v5267, %v5414
  %v5416 = vlaneseq
  %v5417 = vshrl.u32 %v5416, 7
  %v5418 = vsub.s32 4, %v5417
  %v5419 = vrot.slane %v5267, %v5418
  %v5420 = vlaneseq
  %v5421 = vshrl.u32 %v5420, 7
  %v5422 = vsub.s32 5, %v5421
  %v5423 = vrot.slane %v5267, %v5422
  %v5424 = vlaneseq
  %v5425 = vshrl.u32 %v5424, 7
  %v5426 = vsub.s32 6, %v5425
  %v5427 = vrot.slane %v5267, %v5426
  %v5428 = vlaneseq
  %v5429 = vshrl.u32 %v5428, 7
  %v5430 = vsub.s32 7, %v5429
  %v5431 = vrot.slane %v5267, %v5430
  %v5432 = vlaneseq
  %v5433 = vshrl.u32 %v5432, 7
  %v5434 = vsub.s32 0, %v5433
  %v5435 = vrot.slane %v5268, %v5434
  %v5436 = vlaneseq
  %v5437 = vshrl.u32 %v5436, 7
  %v5438 = vsub.s32 1, %v5437
  %v5439 = vrot.slane %v5268, %v5438
  %v5440 = vlaneseq
  %v5441 = vshrl.u32 %v5440, 7
  %v5442 = vsub.s32 2, %v5441
  %v5443 = vrot.slane %v5268, %v5442
  %v5444 = vlaneseq
  %v5445 = vshrl.u32 %v5444, 7
  %v5446 = vsub.s32 3, %v5445
  %v5447 = vrot.slane %v5268, %v5446
  %v5448 = vlaneseq
  %v5449 = vshrl.u32 %v5448, 7
  %v5450 = vsub.s32 4, %v5449
  %v5451 = vrot.slane %v5268, %v5450
  %v5452 = vlaneseq
  %v5453 = vshrl.u32 %v5452, 7
  %v5454 = vsub.s32 5, %v5453
  %v5455 = vrot.slane %v5268, %v5454
  %v5456 = vlaneseq
  %v5457 = vshrl.u32 %v5456, 7
  %v5458 = vsub.s32 6, %v5457
  %v5459 = vrot.slane %v5268, %v5458
  %v5460 = vlaneseq
  %v5461 = vshrl.u32 %v5460, 7
  %v5462 = vsub.s32 7, %v5461
  %v5463 = vrot.slane %v5268, %v5462
  %v5464 = vlaneseq
  %v5465 = vshrl.u32 %v5464, 7
  %v5466 = vsub.s32 0, %v5465
  %v5467 = vrot.slane %v5269, %v5466
  %v5468 = vlaneseq
  %v5469 = vshrl.u32 %v5468, 7
  %v5470 = vsub.s32 1, %v5469
  %v5471 = vrot.slane %v5269, %v5470
  %v5472 = vlaneseq
  %v5473 = vshrl.u32 %v5472, 7
  %v5474 = vsub.s32 2, %v5473
  %v5475 = vrot.slane %v5269, %v5474
  %v5476 = vlaneseq
  %v5477 = vshrl.u32 %v5476, 7
  %v5478 = vsub.s32 3, %v5477
  %v5479 = vrot.slane %v5269, %v5478
  %v5480 = vlaneseq
  %v5481 = vshrl.u32 %v5480, 7
  %v5482 = vsub.s32 4, %v5481
  %v5483 = vrot.slane %v5269, %v5482
  %v5484 = vlaneseq
  %v5485 = vshrl.u32 %v5484, 7
  %v5486 = vsub.s32 5, %v5485
  %v5487 = vrot.slane %v5269, %v5486
  %v5488 = vlaneseq
  %v5489 = vshrl.u32 %v5488, 7
  %v5490 = vsub.s32 6, %v5489
  %v5491 = vrot.slane %v5269, %v5490
  %v5492 = vlaneseq
  %v5493 = vshrl.u32 %v5492, 7
  %v5494 = vsub.s32 7, %v5493
  %v5495 = vrot.slane %v5269, %v5494
  %v5496 = vlaneseq
  %v5497 = vshrl.u32 %v5496, 7
  %v5498 = vsub.s32 0, %v5497
  %v5499 = vrot.slane %v5270, %v5498
  %v5500 = vlaneseq
  %v5501 = vshrl.u32 %v5500, 7
  %v5502 = vsub.s32 1, %v5501
  %v5503 = vrot.slane %v5270, %v5502
  %v5504 = vlaneseq
  %v5505 = vshrl.u32 %v5504, 7
  %v5506 = vsub.s32 2, %v5505
  %v5507 = vrot.slane %v5270, %v5506
  %v5508 = vlaneseq
  %v5509 = vshrl.u32 %v5508, 7
  %v5510 = vsub.s32 3, %v5509
  %v5511 = vrot.slane %v5270, %v5510
  %v5512 = vlaneseq
  %v5513 = vshrl.u32 %v5512, 7
  %v5514 = vsub.s32 4, %v5513
  %v5515 = vrot.slane %v5270, %v5514
  %v5516 = vlaneseq
  %v5517 = vshrl.u32 %v5516, 7
  %v5518 = vsub.s32 5, %v5517
  %v5519 = vrot.slane %v5270, %v5518
  %v5520 = vlaneseq
  %v5521 = vshrl.u32 %v5520, 7
  %v5522 = vsub.s32 6, %v5521
  %v5523 = vrot.slane %v5270, %v5522
  %v5524 = vlaneseq
  %v5525 = vshrl.u32 %v5524, 7
  %v5526 = vsub.s32 7, %v5525
  %v5527 = vrot.slane %v5270, %v5526
  %v5528 = vlaneseq
  %v5529 = vshrl.u32 %v5528, 7
  %v5530 = vsub.s32 0, %v5529
  %v5531 = vrot.slane %v5271, %v5530
  %v5532 = vlaneseq
  %v5533 = vshrl.u32 %v5532, 7
  %v5534 = vsub.s32 1, %v5533
  %v5535 = vrot.slane %v5271, %v5534
  %v5536 = vlaneseq
  %v5537 = vshrl.u32 %v5536, 7
  %v5538 = vsub.s32 2, %v5537
  %v5539 = vrot.slane %v5271, %v5538
  %v5540 = vlaneseq
  %v5541 = vshrl.u32 %v5540, 7
  %v5542 = vsub.s32 3, %v5541
  %v5543 = vrot.slane %v5271, %v5542
  %v5544 = vlaneseq
  %v5545 = vshrl.u32 %v5544, 7
  %v5546 = vsub.s32 4, %v5545
  %v5547 = vrot.slane %v5271, %v5546
  %v5548 = vlaneseq
  %v5549 = vshrl.u32 %v5548, 7
  %v5550 = vsub.s32 5, %v5549
  %v5551 = vrot.slane %v5271, %v5550
  %v5552 = vlaneseq
  %v5553 = vshrl.u32 %v5552, 7
  %v5554 = vsub.s32 6, %v5553
  %v5555 = vrot.slane %v5271, %v5554
  %v5556 = vlaneseq
  %v5557 = vshrl.u32 %v5556, 7
  %v5558 = vsub.s32 7, %v5557
  %v5559 = vrot.slane %v5271, %v5558
  %vm5560 = vcmp.eq.s32.totalorder %v5258, %v5275
  %vm5561 = vcmp.eq.s32.totalorder %v5258, %v5279
  %vm5562 = vcmp.eq.s32.totalorder %v5258, %v5283
  %vm5563 = vcmp.eq.s32.totalorder %v5258, %v5287
  %vm5564 = vcmp.eq.s32.totalorder %v5258, %v5291
  %vm5565 = vcmp.eq.s32.totalorder %v5258, %v5295
  %vm5566 = vcmp.eq.s32.totalorder %v5258, %v5299
  %vm5567 = vcmp.eq.s32.totalorder %v5258, %v5303
  %vm5568 = vcmp.eq.s32.totalorder %v5258, %v5307
  %vm5569 = vcmp.eq.s32.totalorder %v5258, %v5311
  %vm5570 = vcmp.eq.s32.totalorder %v5258, %v5315
  %vm5571 = vcmp.eq.s32.totalorder %v5258, %v5319
  %vm5572 = vcmp.eq.s32.totalorder %v5258, %v5323
  %vm5573 = vcmp.eq.s32.totalorder %v5258, %v5327
  %vm5574 = vcmp.eq.s32.totalorder %v5258, %v5331
  %vm5575 = vcmp.eq.s32.totalorder %v5258, %v5335
  %vm5576 = vcmp.eq.s32.totalorder %v5258, %v5339
  %vm5577 = vcmp.eq.s32.totalorder %v5258, %v5343
  %vm5578 = vcmp.eq.s32.totalorder %v5258, %v5347
  %vm5579 = vcmp.eq.s32.totalorder %v5258, %v5351
  %vm5580 = vcmp.eq.s32.totalorder %v5258, %v5355
  %vm5581 = vcmp.eq.s32.totalorder %v5258, %v5359
  %vm5582 = vcmp.eq.s32.totalorder %v5258, %v5363
  %vm5583 = vcmp.eq.s32.totalorder %v5258, %v5367
  %vm5584 = vcmp.eq.s32.totalorder %v5258, %v5371
  %vm5585 = vcmp.eq.s32.totalorder %v5258, %v5375
  %vm5586 = vcmp.eq.s32.totalorder %v5258, %v5379
  %vm5587 = vcmp.eq.s32.totalorder %v5258, %v5383
  %vm5588 = vcmp.eq.s32.totalorder %v5258, %v5387
  %vm5589 = vcmp.eq.s32.totalorder %v5258, %v5391
  %vm5590 = vcmp.eq.s32.totalorder %v5258, %v5395
  %vm5591 = vcmp.eq.s32.totalorder %v5258, %v5399
  %vm5592 = vcmp.eq.s32.totalorder %v5258, %v5403
  %vm5593 = vcmp.eq.s32.totalorder %v5258, %v5407
  %vm5594 = vcmp.eq.s32.totalorder %v5258, %v5411
  %vm5595 = vcmp.eq.s32.totalorder %v5258, %v5415
  %vm5596 = vcmp.eq.s32.totalorder %v5258, %v5419
  %vm5597 = vcmp.eq.s32.totalorder %v5258, %v5423
  %vm5598 = vcmp.eq.s32.totalorder %v5258, %v5427
  %vm5599 = vcmp.eq.s32.totalorder %v5258, %v5431
  %vm5600 = vcmp.eq.s32.totalorder %v5258, %v5435
  %vm5601 = vcmp.eq.s32.totalorder %v5258, %v5439
  %vm5602 = vcmp.eq.s32.totalorder %v5258, %v5443
  %vm5603 = vcmp.eq.s32.totalorder %v5258, %v5447
  %vm5604 = vcmp.eq.s32.totalorder %v5258, %v5451
  %vm5605 = vcmp.eq.s32.totalorder %v5258, %v5455
  %vm5606 = vcmp.eq.s32.totalorder %v5258, %v5459
  %vm5607 = vcmp.eq.s32.totalorder %v5258, %v5463
  %vm5608 = vcmp.eq.s32.totalorder %v5258, %v5467
  %vm5609 = vcmp.eq.s32.totalorder %v5258, %v5471
  %vm5610 = vcmp.eq.s32.totalorder %v5258, %v5475
  %vm5611 = vcmp.eq.s32.totalorder %v5258, %v5479
  %vm5612 = vcmp.eq.s32.totalorder %v5258, %v5483
  %vm5613 = vcmp.eq.s32.totalorder %v5258, %v5487
  %vm5614 = vcmp.eq.s32.totalorder %v5258, %v5491
  %vm5615 = vcmp.eq.s32.totalorder %v5258, %v5495
  %vm5616 = vcmp.eq.s32.totalorder %v5258, %v5499
  %vm5617 = vcmp.eq.s32.totalorder %v5258, %v5503
  %vm5618 = vcmp.eq.s32.totalorder %v5258, %v5507
  %vm5619 = vcmp.eq.s32.totalorder %v5258, %v5511
  %vm5620 = vcmp.eq.s32.totalorder %v5258, %v5515
  %vm5621 = vcmp.eq.s32.totalorder %v5258, %v5519
  %vm5622 = vcmp.eq.s32.totalorder %v5258, %v5523
  %vm5623 = vcmp.eq.s32.totalorder %v5258, %v5527
  %vm5624 = vcmp.eq.s32.totalorder %v5258, %v5531
  %vm5625 = vcmp.eq.s32.totalorder %v5258, %v5535
  %vm5626 = vcmp.eq.s32.totalorder %v5258, %v5539
  %vm5627 = vcmp.eq.s32.totalorder %v5258, %v5543
  %vm5628 = vcmp.eq.s32.totalorder %v5258, %v5547
  %vm5629 = vcmp.eq.s32.totalorder %v5258, %v5551
  %vm5630 = vcmp.eq.s32.totalorder %v5258, %v5555
  %vm5631 = vcmp.eq.s32.totalorder %v5258, %v5559
  %vm5632 = vcmp.eq.s32.totalorder %v5259, %v5275
  %vm5633 = vcmp.eq.s32.totalorder %v5259, %v5279
  %vm5634 = vcmp.eq.s32.totalorder %v5259, %v5283
  %vm5635 = vcmp.eq.s32.totalorder %v5259, %v5287
  %vm5636 = vcmp.eq.s32.totalorder %v5259, %v5291
  %vm5637 = vcmp.eq.s32.totalorder %v5259, %v5295
  %vm5638 = vcmp.eq.s32.totalorder %v5259, %v5299
  %vm5639 = vcmp.eq.s32.totalorder %v5259, %v5303
  %vm5640 = vcmp.eq.s32.totalorder %v5259, %v5307
  %vm5641 = vcmp.eq.s32.totalorder %v5259, %v5311
  %vm5642 = vcmp.eq.s32.totalorder %v5259, %v5315
  %vm5643 = vcmp.eq.s32.totalorder %v5259, %v5319
  %vm5644 = vcmp.eq.s32.totalorder %v5259, %v5323
  %vm5645 = vcmp.eq.s32.totalorder %v5259, %v5327
  %vm5646 = vcmp.eq.s32.totalorder %v5259, %v5331
  %vm5647 = vcmp.eq.s32.totalorder %v5259, %v5335
  %vm5648 = vcmp.eq.s32.totalorder %v5259, %v5339
  %vm5649 = vcmp.eq.s32.totalorder %v5259, %v5343
  %vm5650 = vcmp.eq.s32.totalorder %v5259, %v5347
  %vm5651 = vcmp.eq.s32.totalorder %v5259, %v5351
  %vm5652 = vcmp.eq.s32.totalorder %v5259, %v5355
  %vm5653 = vcmp.eq.s32.totalorder %v5259, %v5359
  %vm5654 = vcmp.eq.s32.totalorder %v5259, %v5363
  %vm5655 = vcmp.eq.s32.totalorder %v5259, %v5367
  %vm5656 = vcmp.eq.s32.totalorder %v5259, %v5371
  %vm5657 = vcmp.eq.s32.totalorder %v5259, %v5375
  %vm5658 = vcmp.eq.s32.totalorder %v5259, %v5379
  %vm5659 = vcmp.eq.s32.totalorder %v5259, %v5383
  %vm5660 = vcmp.eq.s32.totalorder %v5259, %v5387
  %vm5661 = vcmp.eq.s32.totalorder %v5259, %v5391
  %vm5662 = vcmp.eq.s32.totalorder %v5259, %v5395
  %vm5663 = vcmp.eq.s32.totalorder %v5259, %v5399
  %vm5664 = vcmp.eq.s32.totalorder %v5259, %v5403
  %vm5665 = vcmp.eq.s32.totalorder %v5259, %v5407
  %vm5666 = vcmp.eq.s32.totalorder %v5259, %v5411
  %vm5667 = vcmp.eq.s32.totalorder %v5259, %v5415
  %vm5668 = vcmp.eq.s32.totalorder %v5259, %v5419
  %vm5669 = vcmp.eq.s32.totalorder %v5259, %v5423
  %vm5670 = vcmp.eq.s32.totalorder %v5259, %v5427
  %vm5671 = vcmp.eq.s32.totalorder %v5259, %v5431
  %vm5672 = vcmp.eq.s32.totalorder %v5259, %v5435
  %vm5673 = vcmp.eq.s32.totalorder %v5259, %v5439
  %vm5674 = vcmp.eq.s32.totalorder %v5259, %v5443
  %vm5675 = vcmp.eq.s32.totalorder %v5259, %v5447
  %vm5676 = vcmp.eq.s32.totalorder %v5259, %v5451
  %vm5677 = vcmp.eq.s32.totalorder %v5259, %v5455
  %vm5678 = vcmp.eq.s32.totalorder %v5259, %v5459
  %vm5679 = vcmp.eq.s32.totalorder %v5259, %v5463
  %vm5680 = vcmp.eq.s32.totalorder %v5259, %v5467
  %vm5681 = vcmp.eq.s32.totalorder %v5259, %v5471
  %vm5682 = vcmp.eq.s32.totalorder %v5259, %v5475
  %vm5683 = vcmp.eq.s32.totalorder %v5259, %v5479
  %vm5684 = vcmp.eq.s32.totalorder %v5259, %v5483
  %vm5685 = vcmp.eq.s32.totalorder %v5259, %v5487
  %vm5686 = vcmp.eq.s32.totalorder %v5259, %v5491
  %vm5687 = vcmp.eq.s32.totalorder %v5259, %v5495
  %vm5688 = vcmp.eq.s32.totalorder %v5259, %v5499
  %vm5689 = vcmp.eq.s32.totalorder %v5259, %v5503
  %vm5690 = vcmp.eq.s32.totalorder %v5259, %v5507
  %vm5691 = vcmp.eq.s32.totalorder %v5259, %v5511
  %vm5692 = vcmp.eq.s32.totalorder %v5259, %v5515
  %vm5693 = vcmp.eq.s32.totalorder %v5259, %v5519
  %vm5694 = vcmp.eq.s32.totalorder %v5259, %v5523
  %vm5695 = vcmp.eq.s32.totalorder %v5259, %v5527
  %vm5696 = vcmp.eq.s32.totalorder %v5259, %v5531
  %vm5697 = vcmp.eq.s32.totalorder %v5259, %v5535
  %vm5698 = vcmp.eq.s32.totalorder %v5259, %v5539
  %vm5699 = vcmp.eq.s32.totalorder %v5259, %v5543
  %vm5700 = vcmp.eq.s32.totalorder %v5259, %v5547
  %vm5701 = vcmp.eq.s32.totalorder %v5259, %v5551
  %vm5702 = vcmp.eq.s32.totalorder %v5259, %v5555
  %vm5703 = vcmp.eq.s32.totalorder %v5259, %v5559
  %vm5704 = vcmp.eq.s32.totalorder %v5260, %v5275
  %vm5705 = vcmp.eq.s32.totalorder %v5260, %v5279
  %vm5706 = vcmp.eq.s32.totalorder %v5260, %v5283
  %vm5707 = vcmp.eq.s32.totalorder %v5260, %v5287
  %vm5708 = vcmp.eq.s32.totalorder %v5260, %v5291
  %vm5709 = vcmp.eq.s32.totalorder %v5260, %v5295
  %vm5710 = vcmp.eq.s32.totalorder %v5260, %v5299
  %vm5711 = vcmp.eq.s32.totalorder %v5260, %v5303
  %vm5712 = vcmp.eq.s32.totalorder %v5260, %v5307
  %vm5713 = vcmp.eq.s32.totalorder %v5260, %v5311
  %vm5714 = vcmp.eq.s32.totalorder %v5260, %v5315
  %vm5715 = vcmp.eq.s32.totalorder %v5260, %v5319
  %vm5716 = vcmp.eq.s32.totalorder %v5260, %v5323
  %vm5717 = vcmp.eq.s32.totalorder %v5260, %v5327
  %vm5718 = vcmp.eq.s32.totalorder %v5260, %v5331
  %vm5719 = vcmp.eq.s32.totalorder %v5260, %v5335
  %vm5720 = vcmp.eq.s32.totalorder %v5260, %v5339
  %vm5721 = vcmp.eq.s32.totalorder %v5260, %v5343
  %vm5722 = vcmp.eq.s32.totalorder %v5260, %v5347
  %vm5723 = vcmp.eq.s32.totalorder %v5260, %v5351
  %vm5724 = vcmp.eq.s32.totalorder %v5260, %v5355
  %vm5725 = vcmp.eq.s32.totalorder %v5260, %v5359
  %vm5726 = vcmp.eq.s32.totalorder %v5260, %v5363
  %vm5727 = vcmp.eq.s32.totalorder %v5260, %v5367
  %vm5728 = vcmp.eq.s32.totalorder %v5260, %v5371
  %vm5729 = vcmp.eq.s32.totalorder %v5260, %v5375
  %vm5730 = vcmp.eq.s32.totalorder %v5260, %v5379
  %vm5731 = vcmp.eq.s32.totalorder %v5260, %v5383
  %vm5732 = vcmp.eq.s32.totalorder %v5260, %v5387
  %vm5733 = vcmp.eq.s32.totalorder %v5260, %v5391
  %vm5734 = vcmp.eq.s32.totalorder %v5260, %v5395
  %vm5735 = vcmp.eq.s32.totalorder %v5260, %v5399
  %vm5736 = vcmp.eq.s32.totalorder %v5260, %v5403
  %vm5737 = vcmp.eq.s32.totalorder %v5260, %v5407
  %vm5738 = vcmp.eq.s32.totalorder %v5260, %v5411
  %vm5739 = vcmp.eq.s32.totalorder %v5260, %v5415
  %vm5740 = vcmp.eq.s32.totalorder %v5260, %v5419
  %vm5741 = vcmp.eq.s32.totalorder %v5260, %v5423
  %vm5742 = vcmp.eq.s32.totalorder %v5260, %v5427
  %vm5743 = vcmp.eq.s32.totalorder %v5260, %v5431
  %vm5744 = vcmp.eq.s32.totalorder %v5260, %v5435
  %vm5745 = vcmp.eq.s32.totalorder %v5260, %v5439
  %vm5746 = vcmp.eq.s32.totalorder %v5260, %v5443
  %vm5747 = vcmp.eq.s32.totalorder %v5260, %v5447
  %vm5748 = vcmp.eq.s32.totalorder %v5260, %v5451
  %vm5749 = vcmp.eq.s32.totalorder %v5260, %v5455
  %vm5750 = vcmp.eq.s32.totalorder %v5260, %v5459
  %vm5751 = vcmp.eq.s32.totalorder %v5260, %v5463
  %vm5752 = vcmp.eq.s32.totalorder %v5260, %v5467
  %vm5753 = vcmp.eq.s32.totalorder %v5260, %v5471
  %vm5754 = vcmp.eq.s32.totalorder %v5260, %v5475
  %vm5755 = vcmp.eq.s32.totalorder %v5260, %v5479
  %vm5756 = vcmp.eq.s32.totalorder %v5260, %v5483
  %vm5757 = vcmp.eq.s32.totalorder %v5260, %v5487
  %vm5758 = vcmp.eq.s32.totalorder %v5260, %v5491
  %vm5759 = vcmp.eq.s32.totalorder %v5260, %v5495
  %vm5760 = vcmp.eq.s32.totalorder %v5260, %v5499
  %vm5761 = vcmp.eq.s32.totalorder %v5260, %v5503
  %vm5762 = vcmp.eq.s32.totalorder %v5260, %v5507
  %vm5763 = vcmp.eq.s32.totalorder %v5260, %v5511
  %vm5764 = vcmp.eq.s32.totalorder %v5260, %v5515
  %vm5765 = vcmp.eq.s32.totalorder %v5260, %v5519
  %vm5766 = vcmp.eq.s32.totalorder %v5260, %v5523
  %vm5767 = vcmp.eq.s32.totalorder %v5260, %v5527
  %vm5768 = vcmp.eq.s32.totalorder %v5260, %v5531
  %vm5769 = vcmp.eq.s32.totalorder %v5260, %v5535
  %vm5770 = vcmp.eq.s32.totalorder %v5260, %v5539
  %vm5771 = vcmp.eq.s32.totalorder %v5260, %v5543
  %vm5772 = vcmp.eq.s32.totalorder %v5260, %v5547
  %vm5773 = vcmp.eq.s32.totalorder %v5260, %v5551
  %vm5774 = vcmp.eq.s32.totalorder %v5260, %v5555
  %vm5775 = vcmp.eq.s32.totalorder %v5260, %v5559
  %vm5776 = vcmp.eq.s32.totalorder %v5261, %v5275
  %vm5777 = vcmp.eq.s32.totalorder %v5261, %v5279
  %vm5778 = vcmp.eq.s32.totalorder %v5261, %v5283
  %vm5779 = vcmp.eq.s32.totalorder %v5261, %v5287
  %vm5780 = vcmp.eq.s32.totalorder %v5261, %v5291
  %vm5781 = vcmp.eq.s32.totalorder %v5261, %v5295
  %vm5782 = vcmp.eq.s32.totalorder %v5261, %v5299
  %vm5783 = vcmp.eq.s32.totalorder %v5261, %v5303
  %vm5784 = vcmp.eq.s32.totalorder %v5261, %v5307
  %vm5785 = vcmp.eq.s32.totalorder %v5261, %v5311
  %vm5786 = vcmp.eq.s32.totalorder %v5261, %v5315
  %vm5787 = vcmp.eq.s32.totalorder %v5261, %v5319
  %vm5788 = vcmp.eq.s32.totalorder %v5261, %v5323
  %vm5789 = vcmp.eq.s32.totalorder %v5261, %v5327
  %vm5790 = vcmp.eq.s32.totalorder %v5261, %v5331
  %vm5791 = vcmp.eq.s32.totalorder %v5261, %v5335
  %vm5792 = vcmp.eq.s32.totalorder %v5261, %v5339
  %vm5793 = vcmp.eq.s32.totalorder %v5261, %v5343
  %vm5794 = vcmp.eq.s32.totalorder %v5261, %v5347
  %vm5795 = vcmp.eq.s32.totalorder %v5261, %v5351
  %vm5796 = vcmp.eq.s32.totalorder %v5261, %v5355
  %vm5797 = vcmp.eq.s32.totalorder %v5261, %v5359
  %vm5798 = vcmp.eq.s32.totalorder %v5261, %v5363
  %vm5799 = vcmp.eq.s32.totalorder %v5261, %v5367
  %vm5800 = vcmp.eq.s32.totalorder %v5261, %v5371
  %vm5801 = vcmp.eq.s32.totalorder %v5261, %v5375
  %vm5802 = vcmp.eq.s32.totalorder %v5261, %v5379
  %vm5803 = vcmp.eq.s32.totalorder %v5261, %v5383
  %vm5804 = vcmp.eq.s32.totalorder %v5261, %v5387
  %vm5805 = vcmp.eq.s32.totalorder %v5261, %v5391
  %vm5806 = vcmp.eq.s32.totalorder %v5261, %v5395
  %vm5807 = vcmp.eq.s32.totalorder %v5261, %v5399
  %vm5808 = vcmp.eq.s32.totalorder %v5261, %v5403
  %vm5809 = vcmp.eq.s32.totalorder %v5261, %v5407
  %vm5810 = vcmp.eq.s32.totalorder %v5261, %v5411
  %vm5811 = vcmp.eq.s32.totalorder %v5261, %v5415
  %vm5812 = vcmp.eq.s32.totalorder %v5261, %v5419
  %vm5813 = vcmp.eq.s32.totalorder %v5261, %v5423
  %vm5814 = vcmp.eq.s32.totalorder %v5261, %v5427
  %vm5815 = vcmp.eq.s32.totalorder %v5261, %v5431
  %vm5816 = vcmp.eq.s32.totalorder %v5261, %v5435
  %vm5817 = vcmp.eq.s32.totalorder %v5261, %v5439
  %vm5818 = vcmp.eq.s32.totalorder %v5261, %v5443
  %vm5819 = vcmp.eq.s32.totalorder %v5261, %v5447
  %vm5820 = vcmp.eq.s32.totalorder %v5261, %v5451
  %vm5821 = vcmp.eq.s32.totalorder %v5261, %v5455
  %vm5822 = vcmp.eq.s32.totalorder %v5261, %v5459
  %vm5823 = vcmp.eq.s32.totalorder %v5261, %v5463
  %vm5824 = vcmp.eq.s32.totalorder %v5261, %v5467
  %vm5825 = vcmp.eq.s32.totalorder %v5261, %v5471
  %vm5826 = vcmp.eq.s32.totalorder %v5261, %v5475
  %vm5827 = vcmp.eq.s32.totalorder %v5261, %v5479
  %vm5828 = vcmp.eq.s32.totalorder %v5261, %v5483
  %vm5829 = vcmp.eq.s32.totalorder %v5261, %v5487
  %vm5830 = vcmp.eq.s32.totalorder %v5261, %v5491
  %vm5831 = vcmp.eq.s32.totalorder %v5261, %v5495
  %vm5832 = vcmp.eq.s32.totalorder %v5261, %v5499
  %vm5833 = vcmp.eq.s32.totalorder %v5261, %v5503
  %vm5834 = vcmp.eq.s32.totalorder %v5261, %v5507
  %vm5835 = vcmp.eq.s32.totalorder %v5261, %v5511
  %vm5836 = vcmp.eq.s32.totalorder %v5261, %v5515
  %vm5837 = vcmp.eq.s32.totalorder %v5261, %v5519
  %vm5838 = vcmp.eq.s32.totalorder %v5261, %v5523
  %vm5839 = vcmp.eq.s32.totalorder %v5261, %v5527
  %vm5840 = vcmp.eq.s32.totalorder %v5261, %v5531
  %vm5841 = vcmp.eq.s32.totalorder %v5261, %v5535
  %vm5842 = vcmp.eq.s32.totalorder %v5261, %v5539
  %vm5843 = vcmp.eq.s32.totalorder %v5261, %v5543
  %vm5844 = vcmp.eq.s32.totalorder %v5261, %v5547
  %vm5845 = vcmp.eq.s32.totalorder %v5261, %v5551
  %vm5846 = vcmp.eq.s32.totalorder %v5261, %v5555
  %vm5847 = vcmp.eq.s32.totalorder %v5261, %v5559
  %vm5848 = vcmp.eq.s32.totalorder %v5262, %v5275
  %vm5849 = vcmp.eq.s32.totalorder %v5262, %v5279
  %vm5850 = vcmp.eq.s32.totalorder %v5262, %v5283
  %vm5851 = vcmp.eq.s32.totalorder %v5262, %v5287
  %vm5852 = vcmp.eq.s32.totalorder %v5262, %v5291
  %vm5853 = vcmp.eq.s32.totalorder %v5262, %v5295
  %vm5854 = vcmp.eq.s32.totalorder %v5262, %v5299
  %vm5855 = vcmp.eq.s32.totalorder %v5262, %v5303
  %vm5856 = vcmp.eq.s32.totalorder %v5262, %v5307
  %vm5857 = vcmp.eq.s32.totalorder %v5262, %v5311
  %vm5858 = vcmp.eq.s32.totalorder %v5262, %v5315
  %vm5859 = vcmp.eq.s32.totalorder %v5262, %v5319
  %vm5860 = vcmp.eq.s32.totalorder %v5262, %v5323
  %vm5861 = vcmp.eq.s32.totalorder %v5262, %v5327
  %vm5862 = vcmp.eq.s32.totalorder %v5262, %v5331
  %vm5863 = vcmp.eq.s32.totalorder %v5262, %v5335
  %vm5864 = vcmp.eq.s32.totalorder %v5262, %v5339
  %vm5865 = vcmp.eq.s32.totalorder %v5262, %v5343
  %vm5866 = vcmp.eq.s32.totalorder %v5262, %v5347
  %vm5867 = vcmp.eq.s32.totalorder %v5262, %v5351
  %vm5868 = vcmp.eq.s32.totalorder %v5262, %v5355
  %vm5869 = vcmp.eq.s32.totalorder %v5262, %v5359
  %vm5870 = vcmp.eq.s32.totalorder %v5262, %v5363
  %vm5871 = vcmp.eq.s32.totalorder %v5262, %v5367
  %vm5872 = vcmp.eq.s32.totalorder %v5262, %v5371
  %vm5873 = vcmp.eq.s32.totalorder %v5262, %v5375
  %vm5874 = vcmp.eq.s32.totalorder %v5262, %v5379
  %vm5875 = vcmp.eq.s32.totalorder %v5262, %v5383
  %vm5876 = vcmp.eq.s32.totalorder %v5262, %v5387
  %vm5877 = vcmp.eq.s32.totalorder %v5262, %v5391
  %vm5878 = vcmp.eq.s32.totalorder %v5262, %v5395
  %vm5879 = vcmp.eq.s32.totalorder %v5262, %v5399
  %vm5880 = vcmp.eq.s32.totalorder %v5262, %v5403
  %vm5881 = vcmp.eq.s32.totalorder %v5262, %v5407
  %vm5882 = vcmp.eq.s32.totalorder %v5262, %v5411
  %vm5883 = vcmp.eq.s32.totalorder %v5262, %v5415
  %vm5884 = vcmp.eq.s32.totalorder %v5262, %v5419
  %vm5885 = vcmp.eq.s32.totalorder %v5262, %v5423
  %vm5886 = vcmp.eq.s32.totalorder %v5262, %v5427
  %vm5887 = vcmp.eq.s32.totalorder %v5262, %v5431
  %vm5888 = vcmp.eq.s32.totalorder %v5262, %v5435
  %vm5889 = vcmp.eq.s32.totalorder %v5262, %v5439
  %vm5890 = vcmp.eq.s32.totalorder %v5262, %v5443
  %vm5891 = vcmp.eq.s32.totalorder %v5262, %v5447
  %vm5892 = vcmp.eq.s32.totalorder %v5262, %v5451
  %vm5893 = vcmp.eq.s32.totalorder %v5262, %v5455
  %vm5894 = vcmp.eq.s32.totalorder %v5262, %v5459
  %vm5895 = vcmp.eq.s32.totalorder %v5262, %v5463
  %vm5896 = vcmp.eq.s32.totalorder %v5262, %v5467
  %vm5897 = vcmp.eq.s32.totalorder %v5262, %v5471
  %vm5898 = vcmp.eq.s32.totalorder %v5262, %v5475
  %vm5899 = vcmp.eq.s32.totalorder %v5262, %v5479
  %vm5900 = vcmp.eq.s32.totalorder %v5262, %v5483
  %vm5901 = vcmp.eq.s32.totalorder %v5262, %v5487
  %vm5902 = vcmp.eq.s32.totalorder %v5262, %v5491
  %vm5903 = vcmp.eq.s32.totalorder %v5262, %v5495
  %vm5904 = vcmp.eq.s32.totalorder %v5262, %v5499
  %vm5905 = vcmp.eq.s32.totalorder %v5262, %v5503
  %vm5906 = vcmp.eq.s32.totalorder %v5262, %v5507
  %vm5907 = vcmp.eq.s32.totalorder %v5262, %v5511
  %vm5908 = vcmp.eq.s32.totalorder %v5262, %v5515
  %vm5909 = vcmp.eq.s32.totalorder %v5262, %v5519
  %vm5910 = vcmp.eq.s32.totalorder %v5262, %v5523
  %vm5911 = vcmp.eq.s32.totalorder %v5262, %v5527
  %vm5912 = vcmp.eq.s32.totalorder %v5262, %v5531
  %vm5913 = vcmp.eq.s32.totalorder %v5262, %v5535
  %vm5914 = vcmp.eq.s32.totalorder %v5262, %v5539
  %vm5915 = vcmp.eq.s32.totalorder %v5262, %v5543
  %vm5916 = vcmp.eq.s32.totalorder %v5262, %v5547
  %vm5917 = vcmp.eq.s32.totalorder %v5262, %v5551
  %vm5918 = vcmp.eq.s32.totalorder %v5262, %v5555
  %vm5919 = vcmp.eq.s32.totalorder %v5262, %v5559
  %v5920 = vsel %vm5560, 0.00390625, 0.0
  %v5921 = vsel %vm5561, 0.00390625, 0.0
  %v5922 = vsel %vm5562, 0.00390625, 0.0
  %v5923 = vsel %vm5563, 0.00390625, 0.0
  %v5924 = vsel %vm5564, 0.00390625, 0.0
  %v5925 = vsel %vm5565, 0.00390625, 0.0
  %v5926 = vsel %vm5566, 0.00390625, 0.0
  %v5927 = vsel %vm5567, 0.00390625, 0.0
  %v5928 = vsel %vm5568, 0.00390625, 0.0
  %v5929 = vsel %vm5569, 0.00390625, 0.0
  %v5930 = vsel %vm5570, 0.00390625, 0.0
  %v5931 = vsel %vm5571, 0.00390625, 0.0
  %v5932 = vsel %vm5572, 0.00390625, 0.0
  %v5933 = vsel %vm5573, 0.00390625, 0.0
  %v5934 = vsel %vm5574, 0.00390625, 0.0
  %v5935 = vsel %vm5575, 0.00390625, 0.0
  %v5936 = vsel %vm5576, 0.00390625, 0.0
  %v5937 = vsel %vm5577, 0.00390625, 0.0
  %v5938 = vsel %vm5578, 0.00390625, 0.0
  %v5939 = vsel %vm5579, 0.00390625, 0.0
  %v5940 = vsel %vm5580, 0.00390625, 0.0
  %v5941 = vsel %vm5581, 0.00390625, 0.0
  %v5942 = vsel %vm5582, 0.00390625, 0.0
  %v5943 = vsel %vm5583, 0.00390625, 0.0
  %v5944 = vsel %vm5584, 0.00390625, 0.0
  %v5945 = vsel %vm5585, 0.00390625, 0.0
  %v5946 = vsel %vm5586, 0.00390625, 0.0
  %v5947 = vsel %vm5587, 0.00390625, 0.0
  %v5948 = vsel %vm5588, 0.00390625, 0.0
  %v5949 = vsel %vm5589, 0.00390625, 0.0
  %v5950 = vsel %vm5590, 0.00390625, 0.0
  %v5951 = vsel %vm5591, 0.00390625, 0.0
  %v5952 = vsel %vm5592, 0.00390625, 0.0
  %v5953 = vsel %vm5593, 0.00390625, 0.0
  %v5954 = vsel %vm5594, 0.00390625, 0.0
  %v5955 = vsel %vm5595, 0.00390625, 0.0
  %v5956 = vsel %vm5596, 0.00390625, 0.0
  %v5957 = vsel %vm5597, 0.00390625, 0.0
  %v5958 = vsel %vm5598, 0.00390625, 0.0
  %v5959 = vsel %vm5599, 0.00390625, 0.0
  %v5960 = vsel %vm5600, 0.00390625, 0.0
  %v5961 = vsel %vm5601, 0.00390625, 0.0
  %v5962 = vsel %vm5602, 0.00390625, 0.0
  %v5963 = vsel %vm5603, 0.00390625, 0.0
  %v5964 = vsel %vm5604, 0.00390625, 0.0
  %v5965 = vsel %vm5605, 0.00390625, 0.0
  %v5966 = vsel %vm5606, 0.00390625, 0.0
  %v5967 = vsel %vm5607, 0.00390625, 0.0
  %v5968 = vsel %vm5608, 0.00390625, 0.0
  %v5969 = vsel %vm5609, 0.00390625, 0.0
  %v5970 = vsel %vm5610, 0.00390625, 0.0
  %v5971 = vsel %vm5611, 0.00390625, 0.0
  %v5972 = vsel %vm5612, 0.00390625, 0.0
  %v5973 = vsel %vm5613, 0.00390625, 0.0
  %v5974 = vsel %vm5614, 0.00390625, 0.0
  %v5975 = vsel %vm5615, 0.00390625, 0.0
  %v5976 = vsel %vm5616, 0.00390625, 0.0
  %v5977 = vsel %vm5617, 0.00390625, 0.0
  %v5978 = vsel %vm5618, 0.00390625, 0.0
  %v5979 = vsel %vm5619, 0.00390625, 0.0
  %v5980 = vsel %vm5620, 0.00390625, 0.0
  %v5981 = vsel %vm5621, 0.00390625, 0.0
  %v5982 = vsel %vm5622, 0.00390625, 0.0
  %v5983 = vsel %vm5623, 0.00390625, 0.0
  %v5984 = vsel %vm5624, 0.00390625, 0.0
  %v5985 = vsel %vm5625, 0.00390625, 0.0
  %v5986 = vsel %vm5626, 0.00390625, 0.0
  %v5987 = vsel %vm5627, 0.00390625, 0.0
  %v5988 = vsel %vm5628, 0.00390625, 0.0
  %v5989 = vsel %vm5629, 0.00390625, 0.0
  %v5990 = vsel %vm5630, 0.00390625, 0.0
  %v5991 = vsel %vm5631, 0.00390625, 0.0
  %v5992 = vsel %vm5632, 0.00390625, 0.0
  %v5993 = vsel %vm5633, 0.00390625, 0.0
  %v5994 = vsel %vm5634, 0.00390625, 0.0
  %v5995 = vsel %vm5635, 0.00390625, 0.0
  %v5996 = vsel %vm5636, 0.00390625, 0.0
  %v5997 = vsel %vm5637, 0.00390625, 0.0
  %v5998 = vsel %vm5638, 0.00390625, 0.0
  %v5999 = vsel %vm5639, 0.00390625, 0.0
  %v6000 = vsel %vm5640, 0.00390625, 0.0
  %v6001 = vsel %vm5641, 0.00390625, 0.0
  %v6002 = vsel %vm5642, 0.00390625, 0.0
  %v6003 = vsel %vm5643, 0.00390625, 0.0
  %v6004 = vsel %vm5644, 0.00390625, 0.0
  %v6005 = vsel %vm5645, 0.00390625, 0.0
  %v6006 = vsel %vm5646, 0.00390625, 0.0
  %v6007 = vsel %vm5647, 0.00390625, 0.0
  %v6008 = vsel %vm5648, 0.00390625, 0.0
  %v6009 = vsel %vm5649, 0.00390625, 0.0
  %v6010 = vsel %vm5650, 0.00390625, 0.0
  %v6011 = vsel %vm5651, 0.00390625, 0.0
  %v6012 = vsel %vm5652, 0.00390625, 0.0
  %v6013 = vsel %vm5653, 0.00390625, 0.0
  %v6014 = vsel %vm5654, 0.00390625, 0.0
  %v6015 = vsel %vm5655, 0.00390625, 0.0
  %v6016 = vsel %vm5656, 0.00390625, 0.0
  %v6017 = vsel %vm5657, 0.00390625, 0.0
  %v6018 = vsel %vm5658, 0.00390625, 0.0
  %v6019 = vsel %vm5659, 0.00390625, 0.0
  %v6020 = vsel %vm5660, 0.00390625, 0.0
  %v6021 = vsel %vm5661, 0.00390625, 0.0
  %v6022 = vsel %vm5662, 0.00390625, 0.0
  %v6023 = vsel %vm5663, 0.00390625, 0.0
  %v6024 = vsel %vm5664, 0.00390625, 0.0
  %v6025 = vsel %vm5665, 0.00390625, 0.0
  %v6026 = vsel %vm5666, 0.00390625, 0.0
  %v6027 = vsel %vm5667, 0.00390625, 0.0
  %v6028 = vsel %vm5668, 0.00390625, 0.0
  %v6029 = vsel %vm5669, 0.00390625, 0.0
  %v6030 = vsel %vm5670, 0.00390625, 0.0
  %v6031 = vsel %vm5671, 0.00390625, 0.0
  %v6032 = vsel %vm5672, 0.00390625, 0.0
  %v6033 = vsel %vm5673, 0.00390625, 0.0
  %v6034 = vsel %vm5674, 0.00390625, 0.0
  %v6035 = vsel %vm5675, 0.00390625, 0.0
  %v6036 = vsel %vm5676, 0.00390625, 0.0
  %v6037 = vsel %vm5677, 0.00390625, 0.0
  %v6038 = vsel %vm5678, 0.00390625, 0.0
  %v6039 = vsel %vm5679, 0.00390625, 0.0
  %v6040 = vsel %vm5680, 0.00390625, 0.0
  %v6041 = vsel %vm5681, 0.00390625, 0.0
  %v6042 = vsel %vm5682, 0.00390625, 0.0
  %v6043 = vsel %vm5683, 0.00390625, 0.0
  %v6044 = vsel %vm5684, 0.00390625, 0.0
  %v6045 = vsel %vm5685, 0.00390625, 0.0
  %v6046 = vsel %vm5686, 0.00390625, 0.0
  %v6047 = vsel %vm5687, 0.00390625, 0.0
  %v6048 = vsel %vm5688, 0.00390625, 0.0
  %v6049 = vsel %vm5689, 0.00390625, 0.0
  %v6050 = vsel %vm5690, 0.00390625, 0.0
  %v6051 = vsel %vm5691, 0.00390625, 0.0
  %v6052 = vsel %vm5692, 0.00390625, 0.0
  %v6053 = vsel %vm5693, 0.00390625, 0.0
  %v6054 = vsel %vm5694, 0.00390625, 0.0
  %v6055 = vsel %vm5695, 0.00390625, 0.0
  %v6056 = vsel %vm5696, 0.00390625, 0.0
  %v6057 = vsel %vm5697, 0.00390625, 0.0
  %v6058 = vsel %vm5698, 0.00390625, 0.0
  %v6059 = vsel %vm5699, 0.00390625, 0.0
  %v6060 = vsel %vm5700, 0.00390625, 0.0
  %v6061 = vsel %vm5701, 0.00390625, 0.0
  %v6062 = vsel %vm5702, 0.00390625, 0.0
  %v6063 = vsel %vm5703, 0.00390625, 0.0
  %v6064 = vsel %vm5704, 0.00390625, 0.0
  %v6065 = vsel %vm5705, 0.00390625, 0.0
  %v6066 = vsel %vm5706, 0.00390625, 0.0
  %v6067 = vsel %vm5707, 0.00390625, 0.0
  %v6068 = vsel %vm5708, 0.00390625, 0.0
  %v6069 = vsel %vm5709, 0.00390625, 0.0
  %v6070 = vsel %vm5710, 0.00390625, 0.0
  %v6071 = vsel %vm5711, 0.00390625, 0.0
  %v6072 = vsel %vm5712, 0.00390625, 0.0
  %v6073 = vsel %vm5713, 0.00390625, 0.0
  %v6074 = vsel %vm5714, 0.00390625, 0.0
  %v6075 = vsel %vm5715, 0.00390625, 0.0
  %v6076 = vsel %vm5716, 0.00390625, 0.0
  %v6077 = vsel %vm5717, 0.00390625, 0.0
  %v6078 = vsel %vm5718, 0.00390625, 0.0
  %v6079 = vsel %vm5719, 0.00390625, 0.0
  %v6080 = vsel %vm5720, 0.00390625, 0.0
  %v6081 = vsel %vm5721, 0.00390625, 0.0
  %v6082 = vsel %vm5722, 0.00390625, 0.0
  %v6083 = vsel %vm5723, 0.00390625, 0.0
  %v6084 = vsel %vm5724, 0.00390625, 0.0
  %v6085 = vsel %vm5725, 0.00390625, 0.0
  %v6086 = vsel %vm5726, 0.00390625, 0.0
  %v6087 = vsel %vm5727, 0.00390625, 0.0
  %v6088 = vsel %vm5728, 0.00390625, 0.0
  %v6089 = vsel %vm5729, 0.00390625, 0.0
  %v6090 = vsel %vm5730, 0.00390625, 0.0
  %v6091 = vsel %vm5731, 0.00390625, 0.0
  %v6092 = vsel %vm5732, 0.00390625, 0.0
  %v6093 = vsel %vm5733, 0.00390625, 0.0
  %v6094 = vsel %vm5734, 0.00390625, 0.0
  %v6095 = vsel %vm5735, 0.00390625, 0.0
  %v6096 = vsel %vm5736, 0.00390625, 0.0
  %v6097 = vsel %vm5737, 0.00390625, 0.0
  %v6098 = vsel %vm5738, 0.00390625, 0.0
  %v6099 = vsel %vm5739, 0.00390625, 0.0
  %v6100 = vsel %vm5740, 0.00390625, 0.0
  %v6101 = vsel %vm5741, 0.00390625, 0.0
  %v6102 = vsel %vm5742, 0.00390625, 0.0
  %v6103 = vsel %vm5743, 0.00390625, 0.0
  %v6104 = vsel %vm5744, 0.00390625, 0.0
  %v6105 = vsel %vm5745, 0.00390625, 0.0
  %v6106 = vsel %vm5746, 0.00390625, 0.0
  %v6107 = vsel %vm5747, 0.00390625, 0.0
  %v6108 = vsel %vm5748, 0.00390625, 0.0
  %v6109 = vsel %vm5749, 0.00390625, 0.0
  %v6110 = vsel %vm5750, 0.00390625, 0.0
  %v6111 = vsel %vm5751, 0.00390625, 0.0
  %v6112 = vsel %vm5752, 0.00390625, 0.0
  %v6113 = vsel %vm5753, 0.00390625, 0.0
  %v6114 = vsel %vm5754, 0.00390625, 0.0
  %v6115 = vsel %vm5755, 0.00390625, 0.0
  %v6116 = vsel %vm5756, 0.00390625, 0.0
  %v6117 = vsel %vm5757, 0.00390625, 0.0
  %v6118 = vsel %vm5758, 0.00390625, 0.0
  %v6119 = vsel %vm5759, 0.00390625, 0.0
  %v6120 = vsel %vm5760, 0.00390625, 0.0
  %v6121 = vsel %vm5761, 0.00390625, 0.0
  %v6122 = vsel %vm5762, 0.00390625, 0.0
  %v6123 = vsel %vm5763, 0.00390625, 0.0
  %v6124 = vsel %vm5764, 0.00390625, 0.0
  %v6125 = vsel %vm5765, 0.00390625, 0.0
  %v6126 = vsel %vm5766, 0.00390625, 0.0
  %v6127 = vsel %vm5767, 0.00390625, 0.0
  %v6128 = vsel %vm5768, 0.00390625, 0.0
  %v6129 = vsel %vm5769, 0.00390625, 0.0
  %v6130 = vsel %vm5770, 0.00390625, 0.0
  %v6131 = vsel %vm5771, 0.00390625, 0.0
  %v6132 = vsel %vm5772, 0.00390625, 0.0
  %v6133 = vsel %vm5773, 0.00390625, 0.0
  %v6134 = vsel %vm5774, 0.00390625, 0.0
  %v6135 = vsel %vm5775, 0.00390625, 0.0
  %v6136 = vsel %vm5776, 0.00390625, 0.0
  %v6137 = vsel %vm5777, 0.00390625, 0.0
  %v6138 = vsel %vm5778, 0.00390625, 0.0
  %v6139 = vsel %vm5779, 0.00390625, 0.0
  %v6140 = vsel %vm5780, 0.00390625, 0.0
  %v6141 = vsel %vm5781, 0.00390625, 0.0
  %v6142 = vsel %vm5782, 0.00390625, 0.0
  %v6143 = vsel %vm5783, 0.00390625, 0.0
  %v6144 = vsel %vm5784, 0.00390625, 0.0
  %v6145 = vsel %vm5785, 0.00390625, 0.0
  %v6146 = vsel %vm5786, 0.00390625, 0.0
  %v6147 = vsel %vm5787, 0.00390625, 0.0
  %v6148 = vsel %vm5788, 0.00390625, 0.0
  %v6149 = vsel %vm5789, 0.00390625, 0.0
  %v6150 = vsel %vm5790, 0.00390625, 0.0
  %v6151 = vsel %vm5791, 0.00390625, 0.0
  %v6152 = vsel %vm5792, 0.00390625, 0.0
  %v6153 = vsel %vm5793, 0.00390625, 0.0
  %v6154 = vsel %vm5794, 0.00390625, 0.0
  %v6155 = vsel %vm5795, 0.00390625, 0.0
  %v6156 = vsel %vm5796, 0.00390625, 0.0
  %v6157 = vsel %vm5797, 0.00390625, 0.0
  %v6158 = vsel %vm5798, 0.00390625, 0.0
  %v6159 = vsel %vm5799, 0.00390625, 0.0
  %v6160 = vsel %vm5800, 0.00390625, 0.0
  %v6161 = vsel %vm5801, 0.00390625, 0.0
  %v6162 = vsel %vm5802, 0.00390625, 0.0
  %v6163 = vsel %vm5803, 0.00390625, 0.0
  %v6164 = vsel %vm5804, 0.00390625, 0.0
  %v6165 = vsel %vm5805, 0.00390625, 0.0
  %v6166 = vsel %vm5806, 0.00390625, 0.0
  %v6167 = vsel %vm5807, 0.00390625, 0.0
  %v6168 = vsel %vm5808, 0.00390625, 0.0
  %v6169 = vsel %vm5809, 0.00390625, 0.0
  %v6170 = vsel %vm5810, 0.00390625, 0.0
  %v6171 = vsel %vm5811, 0.00390625, 0.0
  %v6172 = vsel %vm5812, 0.00390625, 0.0
  %v6173 = vsel %vm5813, 0.00390625, 0.0
  %v6174 = vsel %vm5814, 0.00390625, 0.0
  %v6175 = vsel %vm5815, 0.00390625, 0.0
  %v6176 = vsel %vm5816, 0.00390625, 0.0
  %v6177 = vsel %vm5817, 0.00390625, 0.0
  %v6178 = vsel %vm5818, 0.00390625, 0.0
  %v6179 = vsel %vm5819, 0.00390625, 0.0
  %v6180 = vsel %vm5820, 0.00390625, 0.0
  %v6181 = vsel %vm5821, 0.00390625, 0.0
  %v6182 = vsel %vm5822, 0.00390625, 0.0
  %v6183 = vsel %vm5823, 0.00390625, 0.0
  %v6184 = vsel %vm5824, 0.00390625, 0.0
  %v6185 = vsel %vm5825, 0.00390625, 0.0
  %v6186 = vsel %vm5826, 0.00390625, 0.0
  %v6187 = vsel %vm5827, 0.00390625, 0.0
  %v6188 = vsel %vm5828, 0.00390625, 0.0
  %v6189 = vsel %vm5829, 0.00390625, 0.0
  %v6190 = vsel %vm5830, 0.00390625, 0.0
  %v6191 = vsel %vm5831, 0.00390625, 0.0
  %v6192 = vsel %vm5832, 0.00390625, 0.0
  %v6193 = vsel %vm5833, 0.00390625, 0.0
  %v6194 = vsel %vm5834, 0.00390625, 0.0
  %v6195 = vsel %vm5835, 0.00390625, 0.0
  %v6196 = vsel %vm5836, 0.00390625, 0.0
  %v6197 = vsel %vm5837, 0.00390625, 0.0
  %v6198 = vsel %vm5838, 0.00390625, 0.0
  %v6199 = vsel %vm5839, 0.00390625, 0.0
  %v6200 = vsel %vm5840, 0.00390625, 0.0
  %v6201 = vsel %vm5841, 0.00390625, 0.0
  %v6202 = vsel %vm5842, 0.00390625, 0.0
  %v6203 = vsel %vm5843, 0.00390625, 0.0
  %v6204 = vsel %vm5844, 0.00390625, 0.0
  %v6205 = vsel %vm5845, 0.00390625, 0.0
  %v6206 = vsel %vm5846, 0.00390625, 0.0
  %v6207 = vsel %vm5847, 0.00390625, 0.0
  %v6208 = vsel %vm5848, 0.00390625, 0.0
  %v6209 = vsel %vm5849, 0.00390625, 0.0
  %v6210 = vsel %vm5850, 0.00390625, 0.0
  %v6211 = vsel %vm5851, 0.00390625, 0.0
  %v6212 = vsel %vm5852, 0.00390625, 0.0
  %v6213 = vsel %vm5853, 0.00390625, 0.0
  %v6214 = vsel %vm5854, 0.00390625, 0.0
  %v6215 = vsel %vm5855, 0.00390625, 0.0
  %v6216 = vsel %vm5856, 0.00390625, 0.0
  %v6217 = vsel %vm5857, 0.00390625, 0.0
  %v6218 = vsel %vm5858, 0.00390625, 0.0
  %v6219 = vsel %vm5859, 0.00390625, 0.0
  %v6220 = vsel %vm5860, 0.00390625, 0.0
  %v6221 = vsel %vm5861, 0.00390625, 0.0
  %v6222 = vsel %vm5862, 0.00390625, 0.0
  %v6223 = vsel %vm5863, 0.00390625, 0.0
  %v6224 = vsel %vm5864, 0.00390625, 0.0
  %v6225 = vsel %vm5865, 0.00390625, 0.0
  %v6226 = vsel %vm5866, 0.00390625, 0.0
  %v6227 = vsel %vm5867, 0.00390625, 0.0
  %v6228 = vsel %vm5868, 0.00390625, 0.0
  %v6229 = vsel %vm5869, 0.00390625, 0.0
  %v6230 = vsel %vm5870, 0.00390625, 0.0
  %v6231 = vsel %vm5871, 0.00390625, 0.0
  %v6232 = vsel %vm5872, 0.00390625, 0.0
  %v6233 = vsel %vm5873, 0.00390625, 0.0
  %v6234 = vsel %vm5874, 0.00390625, 0.0
  %v6235 = vsel %vm5875, 0.00390625, 0.0
  %v6236 = vsel %vm5876, 0.00390625, 0.0
  %v6237 = vsel %vm5877, 0.00390625, 0.0
  %v6238 = vsel %vm5878, 0.00390625, 0.0
  %v6239 = vsel %vm5879, 0.00390625, 0.0
  %v6240 = vsel %vm5880, 0.00390625, 0.0
  %v6241 = vsel %vm5881, 0.00390625, 0.0
  %v6242 = vsel %vm5882, 0.00390625, 0.0
  %v6243 = vsel %vm5883, 0.00390625, 0.0
  %v6244 = vsel %vm5884, 0.00390625, 0.0
  %v6245 = vsel %vm5885, 0.00390625, 0.0
  %v6246 = vsel %vm5886, 0.00390625, 0.0
  %v6247 = vsel %vm5887, 0.00390625, 0.0
  %v6248 = vsel %vm5888, 0.00390625, 0.0
  %v6249 = vsel %vm5889, 0.00390625, 0.0
  %v6250 = vsel %vm5890, 0.00390625, 0.0
  %v6251 = vsel %vm5891, 0.00390625, 0.0
  %v6252 = vsel %vm5892, 0.00390625, 0.0
  %v6253 = vsel %vm5893, 0.00390625, 0.0
  %v6254 = vsel %vm5894, 0.00390625, 0.0
  %v6255 = vsel %vm5895, 0.00390625, 0.0
  %v6256 = vsel %vm5896, 0.00390625, 0.0
  %v6257 = vsel %vm5897, 0.00390625, 0.0
  %v6258 = vsel %vm5898, 0.00390625, 0.0
  %v6259 = vsel %vm5899, 0.00390625, 0.0
  %v6260 = vsel %vm5900, 0.00390625, 0.0
  %v6261 = vsel %vm5901, 0.00390625, 0.0
  %v6262 = vsel %vm5902, 0.00390625, 0.0
  %v6263 = vsel %vm5903, 0.00390625, 0.0
  %v6264 = vsel %vm5904, 0.00390625, 0.0
  %v6265 = vsel %vm5905, 0.00390625, 0.0
  %v6266 = vsel %vm5906, 0.00390625, 0.0
  %v6267 = vsel %vm5907, 0.00390625, 0.0
  %v6268 = vsel %vm5908, 0.00390625, 0.0
  %v6269 = vsel %vm5909, 0.00390625, 0.0
  %v6270 = vsel %vm5910, 0.00390625, 0.0
  %v6271 = vsel %vm5911, 0.00390625, 0.0
  %v6272 = vsel %vm5912, 0.00390625, 0.0
  %v6273 = vsel %vm5913, 0.00390625, 0.0
  %v6274 = vsel %vm5914, 0.00390625, 0.0
  %v6275 = vsel %vm5915, 0.00390625, 0.0
  %v6276 = vsel %vm5916, 0.00390625, 0.0
  %v6277 = vsel %vm5917, 0.00390625, 0.0
  %v6278 = vsel %vm5918, 0.00390625, 0.0
  %v6279 = vsel %vm5919, 0.00390625, 0.0
  %6280 = vmatprep.subr.mxu0 %v4682
  %6281 = vmatpush1.xpose.msra.mxu0 %v4681
  %6282 = vmatprep.subr.mxu0 %v4754
  %6283 = vmatpush1.xpose.msra.mxu0 %v4753
  %6284 = vmatprep.subr.mxu0 %v4826
  %6285 = vmatpush1.xpose.msra.mxu0 %v4825
  %6286 = vmatprep.subr.mxu0 %v4898
  %6287 = vmatpush1.xpose.msra.mxu0 %v4897
  %6288 = vmatprep.subr.mxu0 %v4970
  %6289 = vmatpush1.xpose.msra.mxu0 %v4969
  %6290 = vmatprep.subr.mxu0 %v5042
  %6291 = vmatpush1.xpose.msra.mxu0 %v5041
  %6292 = vmatprep.subr.mxu0 %v5114
  %6293 = vmatpush1.xpose.msra.mxu0 %v5113
  %6294 = vmatprep.subr.mxu0 %v5186
  %6295 = vmatpush1.xpose.msra.mxu0 %v5185
  %6296 = vmatprep.subr.mxu0 0.0
  %6297 = vmatpush1.xpose.msra.mxu0 0.0
  %6298 = vmatprep.subr.mxu0 0.0
  %6299 = vmatpush1.xpose.msra.mxu0 0.0
  %6300 = vmatprep.subr.mxu0 0.0
  %6301 = vmatpush1.xpose.msra.mxu0 0.0
  %6302 = vmatprep.subr.mxu0 0.0
  %6303 = vmatpush1.xpose.msra.mxu0 0.0
  %6304 = vmatprep.subr.mxu0 0.0
  %6305 = vmatpush1.xpose.msra.mxu0 0.0
  %6306 = vmatprep.subr.mxu0 0.0
  %6307 = vmatpush1.xpose.msra.mxu0 0.0
  %6308 = vmatprep.subr.mxu0 0.0
  %6309 = vmatpush1.xpose.msra.mxu0 0.0
  %6310 = vmatprep.subr.mxu0 0.0
  %6311 = vmatpush1.xpose.msra.mxu0 0.0
  %6312 = vmatprep.subr.mxu0 0.0
  %6313 = vmatpush1.xpose.msra.mxu0 0.0
  %6314 = vmatprep.subr.mxu0 0.0
  %6315 = vmatpush1.xpose.msra.mxu0 0.0
  %6316 = vmatprep.subr.mxu0 0.0
  %6317 = vmatpush1.xpose.msra.mxu0 0.0
  %6318 = vmatprep.subr.mxu0 0.0
  %6319 = vmatpush1.xpose.msra.mxu0 0.0
  %6320 = vmatprep.subr.mxu0 0.0
  %6321 = vmatpush1.xpose.msra.mxu0 0.0
  %6322 = vmatprep.subr.mxu0 0.0
  %6323 = vmatpush1.xpose.msra.mxu0 0.0
  %6324 = vmatprep.subr.mxu0 0.0
  %6325 = vmatpush1.xpose.msra.mxu0 0.0
  %6326 = vmatprep.subr.mxu0 0.0
  %6327 = vmatpush1.xpose.msra.mxu0 0.0
  %6328 = vmatprep.subr.mxu0 0.0
  %6329 = vmatpush1.xpose.msra.mxu0 0.0
  %6330 = vmatprep.subr.mxu0 0.0
  %6331 = vmatpush1.xpose.msra.mxu0 0.0
  %6332 = vmatprep.subr.mxu0 0.0
  %6333 = vmatpush1.xpose.msra.mxu0 0.0
  %6334 = vmatprep.subr.mxu0 0.0
  %6335 = vmatpush1.xpose.msra.mxu0 0.0
  %6336 = vmatprep.subr.mxu0 0.0
  %6337 = vmatpush1.xpose.msra.mxu0 0.0
  %6338 = vmatprep.subr.mxu0 0.0
  %6339 = vmatpush1.xpose.msra.mxu0 0.0
  %6340 = vmatprep.subr.mxu0 0.0
  %6341 = vmatpush1.xpose.msra.mxu0 0.0
  %6342 = vmatprep.subr.mxu0 0.0
  %6343 = vmatpush1.xpose.msra.mxu0 0.0
  %6344 = vmatprep.mubr.f32.mxu0 %v5921
  %6345 = vmatmul.mubr.f32.gmra.mrb[0].mxu0 %v5920
  %v6346 = vpop.f32.mrb[0].mxu0
  %v6347 = vadd.f32 0.5, %v6346
  %v6348 = vpop.f32.mrb[0].mxu0
  %6349 = vmatprep.mubr.f32.mxu0 %v5993
  %6350 = vmatmul.mubr.f32.gmra.mrb[0].mxu0 %v5992
  %v6351 = vpop.f32.mrb[0].mxu0
  %v6352 = vadd.f32 0.5, %v6351
  %v6353 = vpop.f32.mrb[0].mxu0
  %6354 = vmatprep.mubr.f32.mxu0 %v6065
  %6355 = vmatmul.mubr.f32.gmra.mrb[0].mxu0 %v6064
  %v6356 = vpop.f32.mrb[0].mxu0
  %v6357 = vadd.f32 0.5, %v6356
  %v6358 = vpop.f32.mrb[0].mxu0
  %6359 = vmatprep.mubr.f32.mxu0 %v6137
  %6360 = vmatmul.mubr.f32.gmra.mrb[0].mxu0 %v6136
  %v6361 = vpop.f32.mrb[0].mxu0
  %v6362 = vadd.f32 0.5, %v6361
  %v6363 = vpop.f32.mrb[0].mxu0
  %6364 = vmatprep.mubr.f32.mxu0 %v6209
  %6365 = vmatmul.mubr.f32.gmra.mrb[0].mxu0 %v6208
  %v6366 = vpop.f32.mrb[0].mxu0
  %v6367 = vadd.f32 0.5, %v6366
  %v6368 = vpop.f32.mrb[0].mxu0
  %6369 = vdwg.mxu0
  %6370 = vmatprep.subr.mxu0 %v4684
  %6371 = vmatpush1.xpose.msra.mxu0 %v4683
  %6372 = vmatprep.subr.mxu0 %v4756
  %6373 = vmatpush1.xpose.msra.mxu0 %v4755
  %6374 = vmatprep.subr.mxu0 %v4828
  %6375 = vmatpush1.xpose.msra.mxu0 %v4827
  %6376 = vmatprep.subr.mxu0 %v4900
  %6377 = vmatpush1.xpose.msra.mxu0 %v4899
  %6378 = vmatprep.subr.mxu0 %v4972
  %6379 = vmatpush1.xpose.msra.mxu0 %v4971
  %6380 = vmatprep.subr.mxu0 %v5044
  %6381 = vmatpush1.xpose.msra.mxu0 %v5043
  %6382 = vmatprep.subr.mxu0 %v5116
  %6383 = vmatpush1.xpose.msra.mxu0 %v5115
  %6384 = vmatprep.subr.mxu0 %v5188
  %6385 = vmatpush1.xpose.msra.mxu0 %v5187
  %6386 = vmatprep.subr.mxu0 0.0
  %6387 = vmatpush1.xpose.msra.mxu0 0.0
  %6388 = vmatprep.subr.mxu0 0.0
  %6389 = vmatpush1.xpose.msra.mxu0 0.0
  %6390 = vmatprep.subr.mxu0 0.0
  %6391 = vmatpush1.xpose.msra.mxu0 0.0
  %6392 = vmatprep.subr.mxu0 0.0
  %6393 = vmatpush1.xpose.msra.mxu0 0.0
  %6394 = vmatprep.subr.mxu0 0.0
  %6395 = vmatpush1.xpose.msra.mxu0 0.0
  %6396 = vmatprep.subr.mxu0 0.0
  %6397 = vmatpush1.xpose.msra.mxu0 0.0
  %6398 = vmatprep.subr.mxu0 0.0
  %6399 = vmatpush1.xpose.msra.mxu0 0.0
  %6400 = vmatprep.subr.mxu0 0.0
  %6401 = vmatpush1.xpose.msra.mxu0 0.0
  %6402 = vmatprep.subr.mxu0 0.0
  %6403 = vmatpush1.xpose.msra.mxu0 0.0
  %6404 = vmatprep.subr.mxu0 0.0
  %6405 = vmatpush1.xpose.msra.mxu0 0.0
  %6406 = vmatprep.subr.mxu0 0.0
  %6407 = vmatpush1.xpose.msra.mxu0 0.0
  %6408 = vmatprep.subr.mxu0 0.0
  %6409 = vmatpush1.xpose.msra.mxu0 0.0
  %6410 = vmatprep.subr.mxu0 0.0
  %6411 = vmatpush1.xpose.msra.mxu0 0.0
  %6412 = vmatprep.subr.mxu0 0.0
  %6413 = vmatpush1.xpose.msra.mxu0 0.0
  %6414 = vmatprep.subr.mxu0 0.0
  %6415 = vmatpush1.xpose.msra.mxu0 0.0
  %6416 = vmatprep.subr.mxu0 0.0
  %6417 = vmatpush1.xpose.msra.mxu0 0.0
  %6418 = vmatprep.subr.mxu0 0.0
  %6419 = vmatpush1.xpose.msra.mxu0 0.0
  %6420 = vmatprep.subr.mxu0 0.0
  %6421 = vmatpush1.xpose.msra.mxu0 0.0
  %6422 = vmatprep.subr.mxu0 0.0
  %6423 = vmatpush1.xpose.msra.mxu0 0.0
  %6424 = vmatprep.subr.mxu0 0.0
  %6425 = vmatpush1.xpose.msra.mxu0 0.0
  %6426 = vmatprep.subr.mxu0 0.0
  %6427 = vmatpush1.xpose.msra.mxu0 0.0
  %6428 = vmatprep.subr.mxu0 0.0
  %6429 = vmatpush1.xpose.msra.mxu0 0.0
  %6430 = vmatprep.subr.mxu0 0.0
  %6431 = vmatpush1.xpose.msra.mxu0 0.0
  %6432 = vmatprep.subr.mxu0 0.0
  %6433 = vmatpush1.xpose.msra.mxu0 0.0
  %6434 = vmatprep.mubr.f32.mxu0 %v5923
  %6435 = vmatmul.mubr.f32.gmra.mrb[0].mxu0 %v5922
  %v6436 = vpop.f32.mrb[0].mxu0
  %v6437 = vadd.f32 %v6347, %v6436
  %v6438 = vpop.f32.mrb[0].mxu0
  %6439 = vmatprep.mubr.f32.mxu0 %v5995
  %6440 = vmatmul.mubr.f32.gmra.mrb[0].mxu0 %v5994
  %v6441 = vpop.f32.mrb[0].mxu0
  %v6442 = vadd.f32 %v6352, %v6441
  %v6443 = vpop.f32.mrb[0].mxu0
  %6444 = vmatprep.mubr.f32.mxu0 %v6067
  %6445 = vmatmul.mubr.f32.gmra.mrb[0].mxu0 %v6066
  %v6446 = vpop.f32.mrb[0].mxu0
  %v6447 = vadd.f32 %v6357, %v6446
  %v6448 = vpop.f32.mrb[0].mxu0
  %6449 = vmatprep.mubr.f32.mxu0 %v6139
  %6450 = vmatmul.mubr.f32.gmra.mrb[0].mxu0 %v6138
  %v6451 = vpop.f32.mrb[0].mxu0
  %v6452 = vadd.f32 %v6362, %v6451
  %v6453 = vpop.f32.mrb[0].mxu0
  %6454 = vmatprep.mubr.f32.mxu0 %v6211
  %6455 = vmatmul.mubr.f32.gmra.mrb[0].mxu0 %v6210
  %v6456 = vpop.f32.mrb[0].mxu0
  %v6457 = vadd.f32 %v6367, %v6456
  %v6458 = vpop.f32.mrb[0].mxu0
  %6459 = vdwg.mxu0
  %6460 = vmatprep.subr.mxu0 %v4686
  %6461 = vmatpush1.xpose.msra.mxu0 %v4685
  %6462 = vmatprep.subr.mxu0 %v4758
  %6463 = vmatpush1.xpose.msra.mxu0 %v4757
  %6464 = vmatprep.subr.mxu0 %v4830
  %6465 = vmatpush1.xpose.msra.mxu0 %v4829
  %6466 = vmatprep.subr.mxu0 %v4902
  %6467 = vmatpush1.xpose.msra.mxu0 %v4901
  %6468 = vmatprep.subr.mxu0 %v4974
  %6469 = vmatpush1.xpose.msra.mxu0 %v4973
  %6470 = vmatprep.subr.mxu0 %v5046
  %6471 = vmatpush1.xpose.msra.mxu0 %v5045
  %6472 = vmatprep.subr.mxu0 %v5118
  %6473 = vmatpush1.xpose.msra.mxu0 %v5117
  %6474 = vmatprep.subr.mxu0 %v5190
  %6475 = vmatpush1.xpose.msra.mxu0 %v5189
  %6476 = vmatprep.subr.mxu0 0.0
  %6477 = vmatpush1.xpose.msra.mxu0 0.0
  %6478 = vmatprep.subr.mxu0 0.0
  %6479 = vmatpush1.xpose.msra.mxu0 0.0
  %6480 = vmatprep.subr.mxu0 0.0
  %6481 = vmatpush1.xpose.msra.mxu0 0.0
  %6482 = vmatprep.subr.mxu0 0.0
  %6483 = vmatpush1.xpose.msra.mxu0 0.0
  %6484 = vmatprep.subr.mxu0 0.0
  %6485 = vmatpush1.xpose.msra.mxu0 0.0
  %6486 = vmatprep.subr.mxu0 0.0
  %6487 = vmatpush1.xpose.msra.mxu0 0.0
  %6488 = vmatprep.subr.mxu0 0.0
  %6489 = vmatpush1.xpose.msra.mxu0 0.0
  %6490 = vmatprep.subr.mxu0 0.0
  %6491 = vmatpush1.xpose.msra.mxu0 0.0
  %6492 = vmatprep.subr.mxu0 0.0
  %6493 = vmatpush1.xpose.msra.mxu0 0.0
  %6494 = vmatprep.subr.mxu0 0.0
  %6495 = vmatpush1.xpose.msra.mxu0 0.0
  %6496 = vmatprep.subr.mxu0 0.0
  %6497 = vmatpush1.xpose.msra.mxu0 0.0
  %6498 = vmatprep.subr.mxu0 0.0
  %6499 = vmatpush1.xpose.msra.mxu0 0.0
  %6500 = vmatprep.subr.mxu0 0.0
  %6501 = vmatpush1.xpose.msra.mxu0 0.0
  %6502 = vmatprep.subr.mxu0 0.0
  %6503 = vmatpush1.xpose.msra.mxu0 0.0
  %6504 = vmatprep.subr.mxu0 0.0
  %6505 = vmatpush1.xpose.msra.mxu0 0.0
  %6506 = vmatprep.subr.mxu0 0.0
  %6507 = vmatpush1.xpose.msra.mxu0 0.0
  %6508 = vmatprep.subr.mxu0 0.0
  %6509 = vmatpush1.xpose.msra.mxu0 0.0
  %6510 = vmatprep.subr.mxu0 0.0
  %6511 = vmatpush1.xpose.msra.mxu0 0.0
  %6512 = vmatprep.subr.mxu0 0.0
  %6513 = vmatpush1.xpose.msra.mxu0 0.0
  %6514 = vmatprep.subr.mxu0 0.0
  %6515 = vmatpush1.xpose.msra.mxu0 0.0
  %6516 = vmatprep.subr.mxu0 0.0
  %6517 = vmatpush1.xpose.msra.mxu0 0.0
  %6518 = vmatprep.subr.mxu0 0.0
  %6519 = vmatpush1.xpose.msra.mxu0 0.0
  %6520 = vmatprep.subr.mxu0 0.0
  %6521 = vmatpush1.xpose.msra.mxu0 0.0
  %6522 = vmatprep.subr.mxu0 0.0
  %6523 = vmatpush1.xpose.msra.mxu0 0.0
  %6524 = vmatprep.mubr.f32.mxu0 %v5925
  %6525 = vmatmul.mubr.f32.gmra.mrb[0].mxu0 %v5924
  %v6526 = vpop.f32.mrb[0].mxu0
  %v6527 = vadd.f32 %v6437, %v6526
  %v6528 = vpop.f32.mrb[0].mxu0
  %6529 = vmatprep.mubr.f32.mxu0 %v5997
  %6530 = vmatmul.mubr.f32.gmra.mrb[0].mxu0 %v5996
  %v6531 = vpop.f32.mrb[0].mxu0
  %v6532 = vadd.f32 %v6442, %v6531
  %v6533 = vpop.f32.mrb[0].mxu0
  %6534 = vmatprep.mubr.f32.mxu0 %v6069
  %6535 = vmatmul.mubr.f32.gmra.mrb[0].mxu0 %v6068
  %v6536 = vpop.f32.mrb[0].mxu0
  %v6537 = vadd.f32 %v6447, %v6536
  %v6538 = vpop.f32.mrb[0].mxu0
  %6539 = vmatprep.mubr.f32.mxu0 %v6141
  %6540 = vmatmul.mubr.f32.gmra.mrb[0].mxu0 %v6140
  %v6541 = vpop.f32.mrb[0].mxu0
  %v6542 = vadd.f32 %v6452, %v6541
  %v6543 = vpop.f32.mrb[0].mxu0
  %6544 = vmatprep.mubr.f32.mxu0 %v6213
  %6545 = vmatmul.mubr.f32.gmra.mrb[0].mxu0 %v6212
  %v6546 = vpop.f32.mrb[0].mxu0
  %v6547 = vadd.f32 %v6457, %v6546
  %v6548 = vpop.f32.mrb[0].mxu0
  %6549 = vdwg.mxu0
  %6550 = vmatprep.subr.mxu0 %v4688
  %6551 = vmatpush1.xpose.msra.mxu0 %v4687
  %6552 = vmatprep.subr.mxu0 %v4760
  %6553 = vmatpush1.xpose.msra.mxu0 %v4759
  %6554 = vmatprep.subr.mxu0 %v4832
  %6555 = vmatpush1.xpose.msra.mxu0 %v4831
  %6556 = vmatprep.subr.mxu0 %v4904
  %6557 = vmatpush1.xpose.msra.mxu0 %v4903
  %6558 = vmatprep.subr.mxu0 %v4976
  %6559 = vmatpush1.xpose.msra.mxu0 %v4975
  %6560 = vmatprep.subr.mxu0 %v5048
  %6561 = vmatpush1.xpose.msra.mxu0 %v5047
  %6562 = vmatprep.subr.mxu0 %v5120
  %6563 = vmatpush1.xpose.msra.mxu0 %v5119
  %6564 = vmatprep.subr.mxu0 %v5192
  %6565 = vmatpush1.xpose.msra.mxu0 %v5191
  %6566 = vmatprep.subr.mxu0 0.0
  %6567 = vmatpush1.xpose.msra.mxu0 0.0
  %6568 = vmatprep.subr.mxu0 0.0
  %6569 = vmatpush1.xpose.msra.mxu0 0.0
  %6570 = vmatprep.subr.mxu0 0.0
  %6571 = vmatpush1.xpose.msra.mxu0 0.0
  %6572 = vmatprep.subr.mxu0 0.0
  %6573 = vmatpush1.xpose.msra.mxu0 0.0
  %6574 = vmatprep.subr.mxu0 0.0
  %6575 = vmatpush1.xpose.msra.mxu0 0.0
  %6576 = vmatprep.subr.mxu0 0.0
  %6577 = vmatpush1.xpose.msra.mxu0 0.0
  %6578 = vmatprep.subr.mxu0 0.0
  %6579 = vmatpush1.xpose.msra.mxu0 0.0
  %6580 = vmatprep.subr.mxu0 0.0
  %6581 = vmatpush1.xpose.msra.mxu0 0.0
  %6582 = vmatprep.subr.mxu0 0.0
  %6583 = vmatpush1.xpose.msra.mxu0 0.0
  %6584 = vmatprep.subr.mxu0 0.0
  %6585 = vmatpush1.xpose.msra.mxu0 0.0
  %6586 = vmatprep.subr.mxu0 0.0
  %6587 = vmatpush1.xpose.msra.mxu0 0.0
  %6588 = vmatprep.subr.mxu0 0.0
  %6589 = vmatpush1.xpose.msra.mxu0 0.0
  %6590 = vmatprep.subr.mxu0 0.0
  %6591 = vmatpush1.xpose.msra.mxu0 0.0
  %6592 = vmatprep.subr.mxu0 0.0
  %6593 = vmatpush1.xpose.msra.mxu0 0.0
  %6594 = vmatprep.subr.mxu0 0.0
  %6595 = vmatpush1.xpose.msra.mxu0 0.0
  %6596 = vmatprep.subr.mxu0 0.0
  %6597 = vmatpush1.xpose.msra.mxu0 0.0
  %6598 = vmatprep.subr.mxu0 0.0
  %6599 = vmatpush1.xpose.msra.mxu0 0.0
  %6600 = vmatprep.subr.mxu0 0.0
  %6601 = vmatpush1.xpose.msra.mxu0 0.0
  %6602 = vmatprep.subr.mxu0 0.0
  %6603 = vmatpush1.xpose.msra.mxu0 0.0
  %6604 = vmatprep.subr.mxu0 0.0
  %6605 = vmatpush1.xpose.msra.mxu0 0.0
  %6606 = vmatprep.subr.mxu0 0.0
  %6607 = vmatpush1.xpose.msra.mxu0 0.0
  %6608 = vmatprep.subr.mxu0 0.0
  %6609 = vmatpush1.xpose.msra.mxu0 0.0
  %6610 = vmatprep.subr.mxu0 0.0
  %6611 = vmatpush1.xpose.msra.mxu0 0.0
  %6612 = vmatprep.subr.mxu0 0.0
  %6613 = vmatpush1.xpose.msra.mxu0 0.0
  %6614 = vmatprep.mubr.f32.mxu0 %v5927
  %6615 = vmatmul.mubr.f32.gmra.mrb[0].mxu0 %v5926
  %v6616 = vpop.f32.mrb[0].mxu0
  %v6617 = vadd.f32 %v6527, %v6616
  %v6618 = vpop.f32.mrb[0].mxu0
  %6619 = vmatprep.mubr.f32.mxu0 %v5999
  %6620 = vmatmul.mubr.f32.gmra.mrb[0].mxu0 %v5998
  %v6621 = vpop.f32.mrb[0].mxu0
  %v6622 = vadd.f32 %v6532, %v6621
  %v6623 = vpop.f32.mrb[0].mxu0
  %6624 = vmatprep.mubr.f32.mxu0 %v6071
  %6625 = vmatmul.mubr.f32.gmra.mrb[0].mxu0 %v6070
  %v6626 = vpop.f32.mrb[0].mxu0
  %v6627 = vadd.f32 %v6537, %v6626
  %v6628 = vpop.f32.mrb[0].mxu0
  %6629 = vmatprep.mubr.f32.mxu0 %v6143
  %6630 = vmatmul.mubr.f32.gmra.mrb[0].mxu0 %v6142
  %v6631 = vpop.f32.mrb[0].mxu0
  %v6632 = vadd.f32 %v6542, %v6631
  %v6633 = vpop.f32.mrb[0].mxu0
  %6634 = vmatprep.mubr.f32.mxu0 %v6215
  %6635 = vmatmul.mubr.f32.gmra.mrb[0].mxu0 %v6214
  %v6636 = vpop.f32.mrb[0].mxu0
  %v6637 = vadd.f32 %v6547, %v6636
  %v6638 = vpop.f32.mrb[0].mxu0
  %6639 = vdwg.mxu0
  %6640 = vmatprep.subr.mxu0 %v4690
  %6641 = vmatpush1.xpose.msra.mxu0 %v4689
  %6642 = vmatprep.subr.mxu0 %v4762
  %6643 = vmatpush1.xpose.msra.mxu0 %v4761
  %6644 = vmatprep.subr.mxu0 %v4834
  %6645 = vmatpush1.xpose.msra.mxu0 %v4833
  %6646 = vmatprep.subr.mxu0 %v4906
  %6647 = vmatpush1.xpose.msra.mxu0 %v4905
  %6648 = vmatprep.subr.mxu0 %v4978
  %6649 = vmatpush1.xpose.msra.mxu0 %v4977
  %6650 = vmatprep.subr.mxu0 %v5050
  %6651 = vmatpush1.xpose.msra.mxu0 %v5049
  %6652 = vmatprep.subr.mxu0 %v5122
  %6653 = vmatpush1.xpose.msra.mxu0 %v5121
  %6654 = vmatprep.subr.mxu0 %v5194
  %6655 = vmatpush1.xpose.msra.mxu0 %v5193
  %6656 = vmatprep.subr.mxu0 0.0
  %6657 = vmatpush1.xpose.msra.mxu0 0.0
  %6658 = vmatprep.subr.mxu0 0.0
  %6659 = vmatpush1.xpose.msra.mxu0 0.0
  %6660 = vmatprep.subr.mxu0 0.0
  %6661 = vmatpush1.xpose.msra.mxu0 0.0
  %6662 = vmatprep.subr.mxu0 0.0
  %6663 = vmatpush1.xpose.msra.mxu0 0.0
  %6664 = vmatprep.subr.mxu0 0.0
  %6665 = vmatpush1.xpose.msra.mxu0 0.0
  %6666 = vmatprep.subr.mxu0 0.0
  %6667 = vmatpush1.xpose.msra.mxu0 0.0
  %6668 = vmatprep.subr.mxu0 0.0
  %6669 = vmatpush1.xpose.msra.mxu0 0.0
  %6670 = vmatprep.subr.mxu0 0.0
  %6671 = vmatpush1.xpose.msra.mxu0 0.0
  %6672 = vmatprep.subr.mxu0 0.0
  %6673 = vmatpush1.xpose.msra.mxu0 0.0
  %6674 = vmatprep.subr.mxu0 0.0
  %6675 = vmatpush1.xpose.msra.mxu0 0.0
  %6676 = vmatprep.subr.mxu0 0.0
  %6677 = vmatpush1.xpose.msra.mxu0 0.0
  %6678 = vmatprep.subr.mxu0 0.0
  %6679 = vmatpush1.xpose.msra.mxu0 0.0
  %6680 = vmatprep.subr.mxu0 0.0
  %6681 = vmatpush1.xpose.msra.mxu0 0.0
  %6682 = vmatprep.subr.mxu0 0.0
  %6683 = vmatpush1.xpose.msra.mxu0 0.0
  %6684 = vmatprep.subr.mxu0 0.0
  %6685 = vmatpush1.xpose.msra.mxu0 0.0
  %6686 = vmatprep.subr.mxu0 0.0
  %6687 = vmatpush1.xpose.msra.mxu0 0.0
  %6688 = vmatprep.subr.mxu0 0.0
  %6689 = vmatpush1.xpose.msra.mxu0 0.0
  %6690 = vmatprep.subr.mxu0 0.0
  %6691 = vmatpush1.xpose.msra.mxu0 0.0
  %6692 = vmatprep.subr.mxu0 0.0
  %6693 = vmatpush1.xpose.msra.mxu0 0.0
  %6694 = vmatprep.subr.mxu0 0.0
  %6695 = vmatpush1.xpose.msra.mxu0 0.0
  %6696 = vmatprep.subr.mxu0 0.0
  %6697 = vmatpush1.xpose.msra.mxu0 0.0
  %6698 = vmatprep.subr.mxu0 0.0
  %6699 = vmatpush1.xpose.msra.mxu0 0.0
  %6700 = vmatprep.subr.mxu0 0.0
  %6701 = vmatpush1.xpose.msra.mxu0 0.0
  %6702 = vmatprep.subr.mxu0 0.0
  %6703 = vmatpush1.xpose.msra.mxu0 0.0
  %6704 = vmatprep.mubr.f32.mxu0 %v5929
  %6705 = vmatmul.mubr.f32.gmra.mrb[0].mxu0 %v5928
  %v6706 = vpop.f32.mrb[0].mxu0
  %v6707 = vadd.f32 %v6617, %v6706
  %v6708 = vpop.f32.mrb[0].mxu0
  %6709 = vmatprep.mubr.f32.mxu0 %v6001
  %6710 = vmatmul.mubr.f32.gmra.mrb[0].mxu0 %v6000
  %v6711 = vpop.f32.mrb[0].mxu0
  %v6712 = vadd.f32 %v6622, %v6711
  %v6713 = vpop.f32.mrb[0].mxu0
  %6714 = vmatprep.mubr.f32.mxu0 %v6073
  %6715 = vmatmul.mubr.f32.gmra.mrb[0].mxu0 %v6072
  %v6716 = vpop.f32.mrb[0].mxu0
  %v6717 = vadd.f32 %v6627, %v6716
  %v6718 = vpop.f32.mrb[0].mxu0
  %6719 = vmatprep.mubr.f32.mxu0 %v6145
  %6720 = vmatmul.mubr.f32.gmra.mrb[0].mxu0 %v6144
  %v6721 = vpop.f32.mrb[0].mxu0
  %v6722 = vadd.f32 %v6632, %v6721
  %v6723 = vpop.f32.mrb[0].mxu0
  %6724 = vmatprep.mubr.f32.mxu0 %v6217
  %6725 = vmatmul.mubr.f32.gmra.mrb[0].mxu0 %v6216
  %v6726 = vpop.f32.mrb[0].mxu0
  %v6727 = vadd.f32 %v6637, %v6726
  %v6728 = vpop.f32.mrb[0].mxu0
  %6729 = vdwg.mxu0
  %6730 = vmatprep.subr.mxu0 %v4692
  %6731 = vmatpush1.xpose.msra.mxu0 %v4691
  %6732 = vmatprep.subr.mxu0 %v4764
  %6733 = vmatpush1.xpose.msra.mxu0 %v4763
  %6734 = vmatprep.subr.mxu0 %v4836
  %6735 = vmatpush1.xpose.msra.mxu0 %v4835
  %6736 = vmatprep.subr.mxu0 %v4908
  %6737 = vmatpush1.xpose.msra.mxu0 %v4907
  %6738 = vmatprep.subr.mxu0 %v4980
  %6739 = vmatpush1.xpose.msra.mxu0 %v4979
  %6740 = vmatprep.subr.mxu0 %v5052
  %6741 = vmatpush1.xpose.msra.mxu0 %v5051
  %6742 = vmatprep.subr.mxu0 %v5124
  %6743 = vmatpush1.xpose.msra.mxu0 %v5123
  %6744 = vmatprep.subr.mxu0 %v5196
  %6745 = vmatpush1.xpose.msra.mxu0 %v5195
  %6746 = vmatprep.subr.mxu0 0.0
  %6747 = vmatpush1.xpose.msra.mxu0 0.0
  %6748 = vmatprep.subr.mxu0 0.0
  %6749 = vmatpush1.xpose.msra.mxu0 0.0
  %6750 = vmatprep.subr.mxu0 0.0
  %6751 = vmatpush1.xpose.msra.mxu0 0.0
  %6752 = vmatprep.subr.mxu0 0.0
  %6753 = vmatpush1.xpose.msra.mxu0 0.0
  %6754 = vmatprep.subr.mxu0 0.0
  %6755 = vmatpush1.xpose.msra.mxu0 0.0
  %6756 = vmatprep.subr.mxu0 0.0
  %6757 = vmatpush1.xpose.msra.mxu0 0.0
  %6758 = vmatprep.subr.mxu0 0.0
  %6759 = vmatpush1.xpose.msra.mxu0 0.0
  %6760 = vmatprep.subr.mxu0 0.0
  %6761 = vmatpush1.xpose.msra.mxu0 0.0
  %6762 = vmatprep.subr.mxu0 0.0
  %6763 = vmatpush1.xpose.msra.mxu0 0.0
  %6764 = vmatprep.subr.mxu0 0.0
  %6765 = vmatpush1.xpose.msra.mxu0 0.0
  %6766 = vmatprep.subr.mxu0 0.0
  %6767 = vmatpush1.xpose.msra.mxu0 0.0
  %6768 = vmatprep.subr.mxu0 0.0
  %6769 = vmatpush1.xpose.msra.mxu0 0.0
  %6770 = vmatprep.subr.mxu0 0.0
  %6771 = vmatpush1.xpose.msra.mxu0 0.0
  %6772 = vmatprep.subr.mxu0 0.0
  %6773 = vmatpush1.xpose.msra.mxu0 0.0
  %6774 = vmatprep.subr.mxu0 0.0
  %6775 = vmatpush1.xpose.msra.mxu0 0.0
  %6776 = vmatprep.subr.mxu0 0.0
  %6777 = vmatpush1.xpose.msra.mxu0 0.0
  %6778 = vmatprep.subr.mxu0 0.0
  %6779 = vmatpush1.xpose.msra.mxu0 0.0
  %6780 = vmatprep.subr.mxu0 0.0
  %6781 = vmatpush1.xpose.msra.mxu0 0.0
  %6782 = vmatprep.subr.mxu0 0.0
  %6783 = vmatpush1.xpose.msra.mxu0 0.0
  %6784 = vmatprep.subr.mxu0 0.0
  %6785 = vmatpush1.xpose.msra.mxu0 0.0
  %6786 = vmatprep.subr.mxu0 0.0
  %6787 = vmatpush1.xpose.msra.mxu0 0.0
  %6788 = vmatprep.subr.mxu0 0.0
  %6789 = vmatpush1.xpose.msra.mxu0 0.0
  %6790 = vmatprep.subr.mxu0 0.0
  %6791 = vmatpush1.xpose.msra.mxu0 0.0
  %6792 = vmatprep.subr.mxu0 0.0
  %6793 = vmatpush1.xpose.msra.mxu0 0.0
  %6794 = vmatprep.mubr.f32.mxu0 %v5931
  %6795 = vmatmul.mubr.f32.gmra.mrb[0].mxu0 %v5930
  %v6796 = vpop.f32.mrb[0].mxu0
  %v6797 = vadd.f32 %v6707, %v6796
  %v6798 = vpop.f32.mrb[0].mxu0
  %6799 = vmatprep.mubr.f32.mxu0 %v6003
  %6800 = vmatmul.mubr.f32.gmra.mrb[0].mxu0 %v6002
  %v6801 = vpop.f32.mrb[0].mxu0
  %v6802 = vadd.f32 %v6712, %v6801
  %v6803 = vpop.f32.mrb[0].mxu0
  %6804 = vmatprep.mubr.f32.mxu0 %v6075
  %6805 = vmatmul.mubr.f32.gmra.mrb[0].mxu0 %v6074
  %v6806 = vpop.f32.mrb[0].mxu0
  %v6807 = vadd.f32 %v6717, %v6806
  %v6808 = vpop.f32.mrb[0].mxu0
  %6809 = vmatprep.mubr.f32.mxu0 %v6147
  %6810 = vmatmul.mubr.f32.gmra.mrb[0].mxu0 %v6146
  %v6811 = vpop.f32.mrb[0].mxu0
  %v6812 = vadd.f32 %v6722, %v6811
  %v6813 = vpop.f32.mrb[0].mxu0
  %6814 = vmatprep.mubr.f32.mxu0 %v6219
  %6815 = vmatmul.mubr.f32.gmra.mrb[0].mxu0 %v6218
  %v6816 = vpop.f32.mrb[0].mxu0
  %v6817 = vadd.f32 %v6727, %v6816
  %v6818 = vpop.f32.mrb[0].mxu0
  %6819 = vdwg.mxu0
  %6820 = vmatprep.subr.mxu0 %v4694
  %6821 = vmatpush1.xpose.msra.mxu0 %v4693
  %6822 = vmatprep.subr.mxu0 %v4766
  %6823 = vmatpush1.xpose.msra.mxu0 %v4765
  %6824 = vmatprep.subr.mxu0 %v4838
  %6825 = vmatpush1.xpose.msra.mxu0 %v4837
  %6826 = vmatprep.subr.mxu0 %v4910
  %6827 = vmatpush1.xpose.msra.mxu0 %v4909
  %6828 = vmatprep.subr.mxu0 %v4982
  %6829 = vmatpush1.xpose.msra.mxu0 %v4981
  %6830 = vmatprep.subr.mxu0 %v5054
  %6831 = vmatpush1.xpose.msra.mxu0 %v5053
  %6832 = vmatprep.subr.mxu0 %v5126
  %6833 = vmatpush1.xpose.msra.mxu0 %v5125
  %6834 = vmatprep.subr.mxu0 %v5198
  %6835 = vmatpush1.xpose.msra.mxu0 %v5197
  %6836 = vmatprep.subr.mxu0 0.0
  %6837 = vmatpush1.xpose.msra.mxu0 0.0
  %6838 = vmatprep.subr.mxu0 0.0
  %6839 = vmatpush1.xpose.msra.mxu0 0.0
  %6840 = vmatprep.subr.mxu0 0.0
  %6841 = vmatpush1.xpose.msra.mxu0 0.0
  %6842 = vmatprep.subr.mxu0 0.0
  %6843 = vmatpush1.xpose.msra.mxu0 0.0
  %6844 = vmatprep.subr.mxu0 0.0
  %6845 = vmatpush1.xpose.msra.mxu0 0.0
  %6846 = vmatprep.subr.mxu0 0.0
  %6847 = vmatpush1.xpose.msra.mxu0 0.0
  %6848 = vmatprep.subr.mxu0 0.0
  %6849 = vmatpush1.xpose.msra.mxu0 0.0
  %6850 = vmatprep.subr.mxu0 0.0
  %6851 = vmatpush1.xpose.msra.mxu0 0.0
  %6852 = vmatprep.subr.mxu0 0.0
  %6853 = vmatpush1.xpose.msra.mxu0 0.0
  %6854 = vmatprep.subr.mxu0 0.0
  %6855 = vmatpush1.xpose.msra.mxu0 0.0
  %6856 = vmatprep.subr.mxu0 0.0
  %6857 = vmatpush1.xpose.msra.mxu0 0.0
  %6858 = vmatprep.subr.mxu0 0.0
  %6859 = vmatpush1.xpose.msra.mxu0 0.0
  %6860 = vmatprep.subr.mxu0 0.0
  %6861 = vmatpush1.xpose.msra.mxu0 0.0
  %6862 = vmatprep.subr.mxu0 0.0
  %6863 = vmatpush1.xpose.msra.mxu0 0.0
  %6864 = vmatprep.subr.mxu0 0.0
  %6865 = vmatpush1.xpose.msra.mxu0 0.0
  %6866 = vmatprep.subr.mxu0 0.0
  %6867 = vmatpush1.xpose.msra.mxu0 0.0
  %6868 = vmatprep.subr.mxu0 0.0
  %6869 = vmatpush1.xpose.msra.mxu0 0.0
  %6870 = vmatprep.subr.mxu0 0.0
  %6871 = vmatpush1.xpose.msra.mxu0 0.0
  %6872 = vmatprep.subr.mxu0 0.0
  %6873 = vmatpush1.xpose.msra.mxu0 0.0
  %6874 = vmatprep.subr.mxu0 0.0
  %6875 = vmatpush1.xpose.msra.mxu0 0.0
  %6876 = vmatprep.subr.mxu0 0.0
  %6877 = vmatpush1.xpose.msra.mxu0 0.0
  %6878 = vmatprep.subr.mxu0 0.0
  %6879 = vmatpush1.xpose.msra.mxu0 0.0
  %6880 = vmatprep.subr.mxu0 0.0
  %6881 = vmatpush1.xpose.msra.mxu0 0.0
  %6882 = vmatprep.subr.mxu0 0.0
  %6883 = vmatpush1.xpose.msra.mxu0 0.0
  %6884 = vmatprep.mubr.f32.mxu0 %v5933
  %6885 = vmatmul.mubr.f32.gmra.mrb[0].mxu0 %v5932
  %v6886 = vpop.f32.mrb[0].mxu0
  %v6887 = vadd.f32 %v6797, %v6886
  %v6888 = vpop.f32.mrb[0].mxu0
  %6889 = vmatprep.mubr.f32.mxu0 %v6005
  %6890 = vmatmul.mubr.f32.gmra.mrb[0].mxu0 %v6004
  %v6891 = vpop.f32.mrb[0].mxu0
  %v6892 = vadd.f32 %v6802, %v6891
  %v6893 = vpop.f32.mrb[0].mxu0
  %6894 = vmatprep.mubr.f32.mxu0 %v6077
  %6895 = vmatmul.mubr.f32.gmra.mrb[0].mxu0 %v6076
  %v6896 = vpop.f32.mrb[0].mxu0
  %v6897 = vadd.f32 %v6807, %v6896
  %v6898 = vpop.f32.mrb[0].mxu0
  %6899 = vmatprep.mubr.f32.mxu0 %v6149
  %6900 = vmatmul.mubr.f32.gmra.mrb[0].mxu0 %v6148
  %v6901 = vpop.f32.mrb[0].mxu0
  %v6902 = vadd.f32 %v6812, %v6901
  %v6903 = vpop.f32.mrb[0].mxu0
  %6904 = vmatprep.mubr.f32.mxu0 %v6221
  %6905 = vmatmul.mubr.f32.gmra.mrb[0].mxu0 %v6220
  %v6906 = vpop.f32.mrb[0].mxu0
  %v6907 = vadd.f32 %v6817, %v6906
  %v6908 = vpop.f32.mrb[0].mxu0
  %6909 = vdwg.mxu0
  %6910 = vmatprep.subr.mxu0 %v4696
  %6911 = vmatpush1.xpose.msra.mxu0 %v4695
  %6912 = vmatprep.subr.mxu0 %v4768
  %6913 = vmatpush1.xpose.msra.mxu0 %v4767
  %6914 = vmatprep.subr.mxu0 %v4840
  %6915 = vmatpush1.xpose.msra.mxu0 %v4839
  %6916 = vmatprep.subr.mxu0 %v4912
  %6917 = vmatpush1.xpose.msra.mxu0 %v4911
  %6918 = vmatprep.subr.mxu0 %v4984
  %6919 = vmatpush1.xpose.msra.mxu0 %v4983
  %6920 = vmatprep.subr.mxu0 %v5056
  %6921 = vmatpush1.xpose.msra.mxu0 %v5055
  %6922 = vmatprep.subr.mxu0 %v5128
  %6923 = vmatpush1.xpose.msra.mxu0 %v5127
  %6924 = vmatprep.subr.mxu0 %v5200
  %6925 = vmatpush1.xpose.msra.mxu0 %v5199
  %6926 = vmatprep.subr.mxu0 0.0
  %6927 = vmatpush1.xpose.msra.mxu0 0.0
  %6928 = vmatprep.subr.mxu0 0.0
  %6929 = vmatpush1.xpose.msra.mxu0 0.0
  %6930 = vmatprep.subr.mxu0 0.0
  %6931 = vmatpush1.xpose.msra.mxu0 0.0
  %6932 = vmatprep.subr.mxu0 0.0
  %6933 = vmatpush1.xpose.msra.mxu0 0.0
  %6934 = vmatprep.subr.mxu0 0.0
  %6935 = vmatpush1.xpose.msra.mxu0 0.0
  %6936 = vmatprep.subr.mxu0 0.0
  %6937 = vmatpush1.xpose.msra.mxu0 0.0
  %6938 = vmatprep.subr.mxu0 0.0
  %6939 = vmatpush1.xpose.msra.mxu0 0.0
  %6940 = vmatprep.subr.mxu0 0.0
  %6941 = vmatpush1.xpose.msra.mxu0 0.0
  %6942 = vmatprep.subr.mxu0 0.0
  %6943 = vmatpush1.xpose.msra.mxu0 0.0
  %6944 = vmatprep.subr.mxu0 0.0
  %6945 = vmatpush1.xpose.msra.mxu0 0.0
  %6946 = vmatprep.subr.mxu0 0.0
  %6947 = vmatpush1.xpose.msra.mxu0 0.0
  %6948 = vmatprep.subr.mxu0 0.0
  %6949 = vmatpush1.xpose.msra.mxu0 0.0
  %6950 = vmatprep.subr.mxu0 0.0
  %6951 = vmatpush1.xpose.msra.mxu0 0.0
  %6952 = vmatprep.subr.mxu0 0.0
  %6953 = vmatpush1.xpose.msra.mxu0 0.0
  %6954 = vmatprep.subr.mxu0 0.0
  %6955 = vmatpush1.xpose.msra.mxu0 0.0
  %6956 = vmatprep.subr.mxu0 0.0
  %6957 = vmatpush1.xpose.msra.mxu0 0.0
  %6958 = vmatprep.subr.mxu0 0.0
  %6959 = vmatpush1.xpose.msra.mxu0 0.0
  %6960 = vmatprep.subr.mxu0 0.0
  %6961 = vmatpush1.xpose.msra.mxu0 0.0
  %6962 = vmatprep.subr.mxu0 0.0
  %6963 = vmatpush1.xpose.msra.mxu0 0.0
  %6964 = vmatprep.subr.mxu0 0.0
  %6965 = vmatpush1.xpose.msra.mxu0 0.0
  %6966 = vmatprep.subr.mxu0 0.0
  %6967 = vmatpush1.xpose.msra.mxu0 0.0
  %6968 = vmatprep.subr.mxu0 0.0
  %6969 = vmatpush1.xpose.msra.mxu0 0.0
  %6970 = vmatprep.subr.mxu0 0.0
  %6971 = vmatpush1.xpose.msra.mxu0 0.0
  %6972 = vmatprep.subr.mxu0 0.0
  %6973 = vmatpush1.xpose.msra.mxu0 0.0
  %6974 = vmatprep.mubr.f32.mxu0 %v5935
  %6975 = vmatmul.mubr.f32.gmra.mrb[0].mxu0 %v5934
  %v6976 = vpop.f32.mrb[0].mxu0
  %v6977 = vadd.f32 %v6887, %v6976
  %v6978 = vpop.f32.mrb[0].mxu0
  %6979 = vmatprep.mubr.f32.mxu0 %v6007
  %6980 = vmatmul.mubr.f32.gmra.mrb[0].mxu0 %v6006
  %v6981 = vpop.f32.mrb[0].mxu0
  %v6982 = vadd.f32 %v6892, %v6981
  %v6983 = vpop.f32.mrb[0].mxu0
  %6984 = vmatprep.mubr.f32.mxu0 %v6079
  %6985 = vmatmul.mubr.f32.gmra.mrb[0].mxu0 %v6078
  %v6986 = vpop.f32.mrb[0].mxu0
  %v6987 = vadd.f32 %v6897, %v6986
  %v6988 = vpop.f32.mrb[0].mxu0
  %6989 = vmatprep.mubr.f32.mxu0 %v6151
  %6990 = vmatmul.mubr.f32.gmra.mrb[0].mxu0 %v6150
  %v6991 = vpop.f32.mrb[0].mxu0
  %v6992 = vadd.f32 %v6902, %v6991
  %v6993 = vpop.f32.mrb[0].mxu0
  %6994 = vmatprep.mubr.f32.mxu0 %v6223
  %6995 = vmatmul.mubr.f32.gmra.mrb[0].mxu0 %v6222
  %v6996 = vpop.f32.mrb[0].mxu0
  %v6997 = vadd.f32 %v6907, %v6996
  %v6998 = vpop.f32.mrb[0].mxu0
  %6999 = vdwg.mxu0
  %7000 = vmatprep.subr.mxu0 %v4698
  %7001 = vmatpush1.xpose.msra.mxu0 %v4697
  %7002 = vmatprep.subr.mxu0 %v4770
  %7003 = vmatpush1.xpose.msra.mxu0 %v4769
  %7004 = vmatprep.subr.mxu0 %v4842
  %7005 = vmatpush1.xpose.msra.mxu0 %v4841
  %7006 = vmatprep.subr.mxu0 %v4914
  %7007 = vmatpush1.xpose.msra.mxu0 %v4913
  %7008 = vmatprep.subr.mxu0 %v4986
  %7009 = vmatpush1.xpose.msra.mxu0 %v4985
  %7010 = vmatprep.subr.mxu0 %v5058
  %7011 = vmatpush1.xpose.msra.mxu0 %v5057
  %7012 = vmatprep.subr.mxu0 %v5130
  %7013 = vmatpush1.xpose.msra.mxu0 %v5129
  %7014 = vmatprep.subr.mxu0 %v5202
  %7015 = vmatpush1.xpose.msra.mxu0 %v5201
  %7016 = vmatprep.subr.mxu0 0.0
  %7017 = vmatpush1.xpose.msra.mxu0 0.0
  %7018 = vmatprep.subr.mxu0 0.0
  %7019 = vmatpush1.xpose.msra.mxu0 0.0
  %7020 = vmatprep.subr.mxu0 0.0
  %7021 = vmatpush1.xpose.msra.mxu0 0.0
  %7022 = vmatprep.subr.mxu0 0.0
  %7023 = vmatpush1.xpose.msra.mxu0 0.0
  %7024 = vmatprep.subr.mxu0 0.0
  %7025 = vmatpush1.xpose.msra.mxu0 0.0
  %7026 = vmatprep.subr.mxu0 0.0
  %7027 = vmatpush1.xpose.msra.mxu0 0.0
  %7028 = vmatprep.subr.mxu0 0.0
  %7029 = vmatpush1.xpose.msra.mxu0 0.0
  %7030 = vmatprep.subr.mxu0 0.0
  %7031 = vmatpush1.xpose.msra.mxu0 0.0
  %7032 = vmatprep.subr.mxu0 0.0
  %7033 = vmatpush1.xpose.msra.mxu0 0.0
  %7034 = vmatprep.subr.mxu0 0.0
  %7035 = vmatpush1.xpose.msra.mxu0 0.0
  %7036 = vmatprep.subr.mxu0 0.0
  %7037 = vmatpush1.xpose.msra.mxu0 0.0
  %7038 = vmatprep.subr.mxu0 0.0
  %7039 = vmatpush1.xpose.msra.mxu0 0.0
  %7040 = vmatprep.subr.mxu0 0.0
  %7041 = vmatpush1.xpose.msra.mxu0 0.0
  %7042 = vmatprep.subr.mxu0 0.0
  %7043 = vmatpush1.xpose.msra.mxu0 0.0
  %7044 = vmatprep.subr.mxu0 0.0
  %7045 = vmatpush1.xpose.msra.mxu0 0.0
  %7046 = vmatprep.subr.mxu0 0.0
  %7047 = vmatpush1.xpose.msra.mxu0 0.0
  %7048 = vmatprep.subr.mxu0 0.0
  %7049 = vmatpush1.xpose.msra.mxu0 0.0
  %7050 = vmatprep.subr.mxu0 0.0
  %7051 = vmatpush1.xpose.msra.mxu0 0.0
  %7052 = vmatprep.subr.mxu0 0.0
  %7053 = vmatpush1.xpose.msra.mxu0 0.0
  %7054 = vmatprep.subr.mxu0 0.0
  %7055 = vmatpush1.xpose.msra.mxu0 0.0
  %7056 = vmatprep.subr.mxu0 0.0
  %7057 = vmatpush1.xpose.msra.mxu0 0.0
  %7058 = vmatprep.subr.mxu0 0.0
  %7059 = vmatpush1.xpose.msra.mxu0 0.0
  %7060 = vmatprep.subr.mxu0 0.0
  %7061 = vmatpush1.xpose.msra.mxu0 0.0
  %7062 = vmatprep.subr.mxu0 0.0
  %7063 = vmatpush1.xpose.msra.mxu0 0.0
  %7064 = vmatprep.mubr.f32.mxu0 %v5937
  %7065 = vmatmul.mubr.f32.gmra.mrb[0].mxu0 %v5936
  %v7066 = vpop.f32.mrb[0].mxu0
  %v7067 = vadd.f32 %v6977, %v7066
  %v7068 = vpop.f32.mrb[0].mxu0
  %7069 = vmatprep.mubr.f32.mxu0 %v6009
  %7070 = vmatmul.mubr.f32.gmra.mrb[0].mxu0 %v6008
  %v7071 = vpop.f32.mrb[0].mxu0
  %v7072 = vadd.f32 %v6982, %v7071
  %v7073 = vpop.f32.mrb[0].mxu0
  %7074 = vmatprep.mubr.f32.mxu0 %v6081
  %7075 = vmatmul.mubr.f32.gmra.mrb[0].mxu0 %v6080
  %v7076 = vpop.f32.mrb[0].mxu0
  %v7077 = vadd.f32 %v6987, %v7076
  %v7078 = vpop.f32.mrb[0].mxu0
  %7079 = vmatprep.mubr.f32.mxu0 %v6153
  %7080 = vmatmul.mubr.f32.gmra.mrb[0].mxu0 %v6152
  %v7081 = vpop.f32.mrb[0].mxu0
  %v7082 = vadd.f32 %v6992, %v7081
  %v7083 = vpop.f32.mrb[0].mxu0
  %7084 = vmatprep.mubr.f32.mxu0 %v6225
  %7085 = vmatmul.mubr.f32.gmra.mrb[0].mxu0 %v6224
  %v7086 = vpop.f32.mrb[0].mxu0
  %v7087 = vadd.f32 %v6997, %v7086
  %v7088 = vpop.f32.mrb[0].mxu0
  %7089 = vdwg.mxu0
  %7090 = vmatprep.subr.mxu0 %v4700
  %7091 = vmatpush1.xpose.msra.mxu0 %v4699
  %7092 = vmatprep.subr.mxu0 %v4772
  %7093 = vmatpush1.xpose.msra.mxu0 %v4771
  %7094 = vmatprep.subr.mxu0 %v4844
  %7095 = vmatpush1.xpose.msra.mxu0 %v4843
  %7096 = vmatprep.subr.mxu0 %v4916
  %7097 = vmatpush1.xpose.msra.mxu0 %v4915
  %7098 = vmatprep.subr.mxu0 %v4988
  %7099 = vmatpush1.xpose.msra.mxu0 %v4987
  %7100 = vmatprep.subr.mxu0 %v5060
  %7101 = vmatpush1.xpose.msra.mxu0 %v5059
  %7102 = vmatprep.subr.mxu0 %v5132
  %7103 = vmatpush1.xpose.msra.mxu0 %v5131
  %7104 = vmatprep.subr.mxu0 %v5204
  %7105 = vmatpush1.xpose.msra.mxu0 %v5203
  %7106 = vmatprep.subr.mxu0 0.0
  %7107 = vmatpush1.xpose.msra.mxu0 0.0
  %7108 = vmatprep.subr.mxu0 0.0
  %7109 = vmatpush1.xpose.msra.mxu0 0.0
  %7110 = vmatprep.subr.mxu0 0.0
  %7111 = vmatpush1.xpose.msra.mxu0 0.0
  %7112 = vmatprep.subr.mxu0 0.0
  %7113 = vmatpush1.xpose.msra.mxu0 0.0
  %7114 = vmatprep.subr.mxu0 0.0
  %7115 = vmatpush1.xpose.msra.mxu0 0.0
  %7116 = vmatprep.subr.mxu0 0.0
  %7117 = vmatpush1.xpose.msra.mxu0 0.0
  %7118 = vmatprep.subr.mxu0 0.0
  %7119 = vmatpush1.xpose.msra.mxu0 0.0
  %7120 = vmatprep.subr.mxu0 0.0
  %7121 = vmatpush1.xpose.msra.mxu0 0.0
  %7122 = vmatprep.subr.mxu0 0.0
  %7123 = vmatpush1.xpose.msra.mxu0 0.0
  %7124 = vmatprep.subr.mxu0 0.0
  %7125 = vmatpush1.xpose.msra.mxu0 0.0
  %7126 = vmatprep.subr.mxu0 0.0
  %7127 = vmatpush1.xpose.msra.mxu0 0.0
  %7128 = vmatprep.subr.mxu0 0.0
  %7129 = vmatpush1.xpose.msra.mxu0 0.0
  %7130 = vmatprep.subr.mxu0 0.0
  %7131 = vmatpush1.xpose.msra.mxu0 0.0
  %7132 = vmatprep.subr.mxu0 0.0
  %7133 = vmatpush1.xpose.msra.mxu0 0.0
  %7134 = vmatprep.subr.mxu0 0.0
  %7135 = vmatpush1.xpose.msra.mxu0 0.0
  %7136 = vmatprep.subr.mxu0 0.0
  %7137 = vmatpush1.xpose.msra.mxu0 0.0
  %7138 = vmatprep.subr.mxu0 0.0
  %7139 = vmatpush1.xpose.msra.mxu0 0.0
  %7140 = vmatprep.subr.mxu0 0.0
  %7141 = vmatpush1.xpose.msra.mxu0 0.0
  %7142 = vmatprep.subr.mxu0 0.0
  %7143 = vmatpush1.xpose.msra.mxu0 0.0
  %7144 = vmatprep.subr.mxu0 0.0
  %7145 = vmatpush1.xpose.msra.mxu0 0.0
  %7146 = vmatprep.subr.mxu0 0.0
  %7147 = vmatpush1.xpose.msra.mxu0 0.0
  %7148 = vmatprep.subr.mxu0 0.0
  %7149 = vmatpush1.xpose.msra.mxu0 0.0
  %7150 = vmatprep.subr.mxu0 0.0
  %7151 = vmatpush1.xpose.msra.mxu0 0.0
  %7152 = vmatprep.subr.mxu0 0.0
  %7153 = vmatpush1.xpose.msra.mxu0 0.0
  %7154 = vmatprep.mubr.f32.mxu0 %v5939
  %7155 = vmatmul.mubr.f32.gmra.mrb[0].mxu0 %v5938
  %v7156 = vpop.f32.mrb[0].mxu0
  %v7157 = vadd.f32 %v7067, %v7156
  %v7158 = vpop.f32.mrb[0].mxu0
  %7159 = vmatprep.mubr.f32.mxu0 %v6011
  %7160 = vmatmul.mubr.f32.gmra.mrb[0].mxu0 %v6010
  %v7161 = vpop.f32.mrb[0].mxu0
  %v7162 = vadd.f32 %v7072, %v7161
  %v7163 = vpop.f32.mrb[0].mxu0
  %7164 = vmatprep.mubr.f32.mxu0 %v6083
  %7165 = vmatmul.mubr.f32.gmra.mrb[0].mxu0 %v6082
  %v7166 = vpop.f32.mrb[0].mxu0
  %v7167 = vadd.f32 %v7077, %v7166
  %v7168 = vpop.f32.mrb[0].mxu0
  %7169 = vmatprep.mubr.f32.mxu0 %v6155
  %7170 = vmatmul.mubr.f32.gmra.mrb[0].mxu0 %v6154
  %v7171 = vpop.f32.mrb[0].mxu0
  %v7172 = vadd.f32 %v7082, %v7171
  %v7173 = vpop.f32.mrb[0].mxu0
  %7174 = vmatprep.mubr.f32.mxu0 %v6227
  %7175 = vmatmul.mubr.f32.gmra.mrb[0].mxu0 %v6226
  %v7176 = vpop.f32.mrb[0].mxu0
  %v7177 = vadd.f32 %v7087, %v7176
  %v7178 = vpop.f32.mrb[0].mxu0
  %7179 = vdwg.mxu0
  %7180 = vmatprep.subr.mxu0 %v4702
  %7181 = vmatpush1.xpose.msra.mxu0 %v4701
  %7182 = vmatprep.subr.mxu0 %v4774
  %7183 = vmatpush1.xpose.msra.mxu0 %v4773
  %7184 = vmatprep.subr.mxu0 %v4846
  %7185 = vmatpush1.xpose.msra.mxu0 %v4845
  %7186 = vmatprep.subr.mxu0 %v4918
  %7187 = vmatpush1.xpose.msra.mxu0 %v4917
  %7188 = vmatprep.subr.mxu0 %v4990
  %7189 = vmatpush1.xpose.msra.mxu0 %v4989
  %7190 = vmatprep.subr.mxu0 %v5062
  %7191 = vmatpush1.xpose.msra.mxu0 %v5061
  %7192 = vmatprep.subr.mxu0 %v5134
  %7193 = vmatpush1.xpose.msra.mxu0 %v5133
  %7194 = vmatprep.subr.mxu0 %v5206
  %7195 = vmatpush1.xpose.msra.mxu0 %v5205
  %7196 = vmatprep.subr.mxu0 0.0
  %7197 = vmatpush1.xpose.msra.mxu0 0.0
  %7198 = vmatprep.subr.mxu0 0.0
  %7199 = vmatpush1.xpose.msra.mxu0 0.0
  %7200 = vmatprep.subr.mxu0 0.0
  %7201 = vmatpush1.xpose.msra.mxu0 0.0
  %7202 = vmatprep.subr.mxu0 0.0
  %7203 = vmatpush1.xpose.msra.mxu0 0.0
  %7204 = vmatprep.subr.mxu0 0.0
  %7205 = vmatpush1.xpose.msra.mxu0 0.0
  %7206 = vmatprep.subr.mxu0 0.0
  %7207 = vmatpush1.xpose.msra.mxu0 0.0
  %7208 = vmatprep.subr.mxu0 0.0
  %7209 = vmatpush1.xpose.msra.mxu0 0.0
  %7210 = vmatprep.subr.mxu0 0.0
  %7211 = vmatpush1.xpose.msra.mxu0 0.0
  %7212 = vmatprep.subr.mxu0 0.0
  %7213 = vmatpush1.xpose.msra.mxu0 0.0
  %7214 = vmatprep.subr.mxu0 0.0
  %7215 = vmatpush1.xpose.msra.mxu0 0.0
  %7216 = vmatprep.subr.mxu0 0.0
  %7217 = vmatpush1.xpose.msra.mxu0 0.0
  %7218 = vmatprep.subr.mxu0 0.0
  %7219 = vmatpush1.xpose.msra.mxu0 0.0
  %7220 = vmatprep.subr.mxu0 0.0
  %7221 = vmatpush1.xpose.msra.mxu0 0.0
  %7222 = vmatprep.subr.mxu0 0.0
  %7223 = vmatpush1.xpose.msra.mxu0 0.0
  %7224 = vmatprep.subr.mxu0 0.0
  %7225 = vmatpush1.xpose.msra.mxu0 0.0
  %7226 = vmatprep.subr.mxu0 0.0
  %7227 = vmatpush1.xpose.msra.mxu0 0.0
  %7228 = vmatprep.subr.mxu0 0.0
  %7229 = vmatpush1.xpose.msra.mxu0 0.0
  %7230 = vmatprep.subr.mxu0 0.0
  %7231 = vmatpush1.xpose.msra.mxu0 0.0
  %7232 = vmatprep.subr.mxu0 0.0
  %7233 = vmatpush1.xpose.msra.mxu0 0.0
  %7234 = vmatprep.subr.mxu0 0.0
  %7235 = vmatpush1.xpose.msra.mxu0 0.0
  %7236 = vmatprep.subr.mxu0 0.0
  %7237 = vmatpush1.xpose.msra.mxu0 0.0
  %7238 = vmatprep.subr.mxu0 0.0
  %7239 = vmatpush1.xpose.msra.mxu0 0.0
  %7240 = vmatprep.subr.mxu0 0.0
  %7241 = vmatpush1.xpose.msra.mxu0 0.0
  %7242 = vmatprep.subr.mxu0 0.0
  %7243 = vmatpush1.xpose.msra.mxu0 0.0
  %7244 = vmatprep.mubr.f32.mxu0 %v5941
  %7245 = vmatmul.mubr.f32.gmra.mrb[0].mxu0 %v5940
  %v7246 = vpop.f32.mrb[0].mxu0
  %v7247 = vadd.f32 %v7157, %v7246
  %v7248 = vpop.f32.mrb[0].mxu0
  %7249 = vmatprep.mubr.f32.mxu0 %v6013
  %7250 = vmatmul.mubr.f32.gmra.mrb[0].mxu0 %v6012
  %v7251 = vpop.f32.mrb[0].mxu0
  %v7252 = vadd.f32 %v7162, %v7251
  %v7253 = vpop.f32.mrb[0].mxu0
  %7254 = vmatprep.mubr.f32.mxu0 %v6085
  %7255 = vmatmul.mubr.f32.gmra.mrb[0].mxu0 %v6084
  %v7256 = vpop.f32.mrb[0].mxu0
  %v7257 = vadd.f32 %v7167, %v7256
  %v7258 = vpop.f32.mrb[0].mxu0
  %7259 = vmatprep.mubr.f32.mxu0 %v6157
  %7260 = vmatmul.mubr.f32.gmra.mrb[0].mxu0 %v6156
  %v7261 = vpop.f32.mrb[0].mxu0
  %v7262 = vadd.f32 %v7172, %v7261
  %v7263 = vpop.f32.mrb[0].mxu0
  %7264 = vmatprep.mubr.f32.mxu0 %v6229
  %7265 = vmatmul.mubr.f32.gmra.mrb[0].mxu0 %v6228
  %v7266 = vpop.f32.mrb[0].mxu0
  %v7267 = vadd.f32 %v7177, %v7266
  %v7268 = vpop.f32.mrb[0].mxu0
  %7269 = vdwg.mxu0
  %7270 = vmatprep.subr.mxu0 %v4704
  %7271 = vmatpush1.xpose.msra.mxu0 %v4703
  %7272 = vmatprep.subr.mxu0 %v4776
  %7273 = vmatpush1.xpose.msra.mxu0 %v4775
  %7274 = vmatprep.subr.mxu0 %v4848
  %7275 = vmatpush1.xpose.msra.mxu0 %v4847
  %7276 = vmatprep.subr.mxu0 %v4920
  %7277 = vmatpush1.xpose.msra.mxu0 %v4919
  %7278 = vmatprep.subr.mxu0 %v4992
  %7279 = vmatpush1.xpose.msra.mxu0 %v4991
  %7280 = vmatprep.subr.mxu0 %v5064
  %7281 = vmatpush1.xpose.msra.mxu0 %v5063
  %7282 = vmatprep.subr.mxu0 %v5136
  %7283 = vmatpush1.xpose.msra.mxu0 %v5135
  %7284 = vmatprep.subr.mxu0 %v5208
  %7285 = vmatpush1.xpose.msra.mxu0 %v5207
  %7286 = vmatprep.subr.mxu0 0.0
  %7287 = vmatpush1.xpose.msra.mxu0 0.0
  %7288 = vmatprep.subr.mxu0 0.0
  %7289 = vmatpush1.xpose.msra.mxu0 0.0
  %7290 = vmatprep.subr.mxu0 0.0
  %7291 = vmatpush1.xpose.msra.mxu0 0.0
  %7292 = vmatprep.subr.mxu0 0.0
  %7293 = vmatpush1.xpose.msra.mxu0 0.0
  %7294 = vmatprep.subr.mxu0 0.0
  %7295 = vmatpush1.xpose.msra.mxu0 0.0
  %7296 = vmatprep.subr.mxu0 0.0
  %7297 = vmatpush1.xpose.msra.mxu0 0.0
  %7298 = vmatprep.subr.mxu0 0.0
  %7299 = vmatpush1.xpose.msra.mxu0 0.0
  %7300 = vmatprep.subr.mxu0 0.0
  %7301 = vmatpush1.xpose.msra.mxu0 0.0
  %7302 = vmatprep.subr.mxu0 0.0
  %7303 = vmatpush1.xpose.msra.mxu0 0.0
  %7304 = vmatprep.subr.mxu0 0.0
  %7305 = vmatpush1.xpose.msra.mxu0 0.0
  %7306 = vmatprep.subr.mxu0 0.0
  %7307 = vmatpush1.xpose.msra.mxu0 0.0
  %7308 = vmatprep.subr.mxu0 0.0
  %7309 = vmatpush1.xpose.msra.mxu0 0.0
  %7310 = vmatprep.subr.mxu0 0.0
  %7311 = vmatpush1.xpose.msra.mxu0 0.0
  %7312 = vmatprep.subr.mxu0 0.0
  %7313 = vmatpush1.xpose.msra.mxu0 0.0
  %7314 = vmatprep.subr.mxu0 0.0
  %7315 = vmatpush1.xpose.msra.mxu0 0.0
  %7316 = vmatprep.subr.mxu0 0.0
  %7317 = vmatpush1.xpose.msra.mxu0 0.0
  %7318 = vmatprep.subr.mxu0 0.0
  %7319 = vmatpush1.xpose.msra.mxu0 0.0
  %7320 = vmatprep.subr.mxu0 0.0
  %7321 = vmatpush1.xpose.msra.mxu0 0.0
  %7322 = vmatprep.subr.mxu0 0.0
  %7323 = vmatpush1.xpose.msra.mxu0 0.0
  %7324 = vmatprep.subr.mxu0 0.0
  %7325 = vmatpush1.xpose.msra.mxu0 0.0
  %7326 = vmatprep.subr.mxu0 0.0
  %7327 = vmatpush1.xpose.msra.mxu0 0.0
  %7328 = vmatprep.subr.mxu0 0.0
  %7329 = vmatpush1.xpose.msra.mxu0 0.0
  %7330 = vmatprep.subr.mxu0 0.0
  %7331 = vmatpush1.xpose.msra.mxu0 0.0
  %7332 = vmatprep.subr.mxu0 0.0
  %7333 = vmatpush1.xpose.msra.mxu0 0.0
  %7334 = vmatprep.mubr.f32.mxu0 %v5943
  %7335 = vmatmul.mubr.f32.gmra.mrb[0].mxu0 %v5942
  %v7336 = vpop.f32.mrb[0].mxu0
  %v7337 = vadd.f32 %v7247, %v7336
  %v7338 = vpop.f32.mrb[0].mxu0
  %7339 = vmatprep.mubr.f32.mxu0 %v6015
  %7340 = vmatmul.mubr.f32.gmra.mrb[0].mxu0 %v6014
  %v7341 = vpop.f32.mrb[0].mxu0
  %v7342 = vadd.f32 %v7252, %v7341
  %v7343 = vpop.f32.mrb[0].mxu0
  %7344 = vmatprep.mubr.f32.mxu0 %v6087
  %7345 = vmatmul.mubr.f32.gmra.mrb[0].mxu0 %v6086
  %v7346 = vpop.f32.mrb[0].mxu0
  %v7347 = vadd.f32 %v7257, %v7346
  %v7348 = vpop.f32.mrb[0].mxu0
  %7349 = vmatprep.mubr.f32.mxu0 %v6159
  %7350 = vmatmul.mubr.f32.gmra.mrb[0].mxu0 %v6158
  %v7351 = vpop.f32.mrb[0].mxu0
  %v7352 = vadd.f32 %v7262, %v7351
  %v7353 = vpop.f32.mrb[0].mxu0
  %7354 = vmatprep.mubr.f32.mxu0 %v6231
  %7355 = vmatmul.mubr.f32.gmra.mrb[0].mxu0 %v6230
  %v7356 = vpop.f32.mrb[0].mxu0
  %v7357 = vadd.f32 %v7267, %v7356
  %v7358 = vpop.f32.mrb[0].mxu0
  %7359 = vdwg.mxu0
  %7360 = vmatprep.subr.mxu0 %v4706
  %7361 = vmatpush1.xpose.msra.mxu0 %v4705
  %7362 = vmatprep.subr.mxu0 %v4778
  %7363 = vmatpush1.xpose.msra.mxu0 %v4777
  %7364 = vmatprep.subr.mxu0 %v4850
  %7365 = vmatpush1.xpose.msra.mxu0 %v4849
  %7366 = vmatprep.subr.mxu0 %v4922
  %7367 = vmatpush1.xpose.msra.mxu0 %v4921
  %7368 = vmatprep.subr.mxu0 %v4994
  %7369 = vmatpush1.xpose.msra.mxu0 %v4993
  %7370 = vmatprep.subr.mxu0 %v5066
  %7371 = vmatpush1.xpose.msra.mxu0 %v5065
  %7372 = vmatprep.subr.mxu0 %v5138
  %7373 = vmatpush1.xpose.msra.mxu0 %v5137
  %7374 = vmatprep.subr.mxu0 %v5210
  %7375 = vmatpush1.xpose.msra.mxu0 %v5209
  %7376 = vmatprep.subr.mxu0 0.0
  %7377 = vmatpush1.xpose.msra.mxu0 0.0
  %7378 = vmatprep.subr.mxu0 0.0
  %7379 = vmatpush1.xpose.msra.mxu0 0.0
  %7380 = vmatprep.subr.mxu0 0.0
  %7381 = vmatpush1.xpose.msra.mxu0 0.0
  %7382 = vmatprep.subr.mxu0 0.0
  %7383 = vmatpush1.xpose.msra.mxu0 0.0
  %7384 = vmatprep.subr.mxu0 0.0
  %7385 = vmatpush1.xpose.msra.mxu0 0.0
  %7386 = vmatprep.subr.mxu0 0.0
  %7387 = vmatpush1.xpose.msra.mxu0 0.0
  %7388 = vmatprep.subr.mxu0 0.0
  %7389 = vmatpush1.xpose.msra.mxu0 0.0
  %7390 = vmatprep.subr.mxu0 0.0
  %7391 = vmatpush1.xpose.msra.mxu0 0.0
  %7392 = vmatprep.subr.mxu0 0.0
  %7393 = vmatpush1.xpose.msra.mxu0 0.0
  %7394 = vmatprep.subr.mxu0 0.0
  %7395 = vmatpush1.xpose.msra.mxu0 0.0
  %7396 = vmatprep.subr.mxu0 0.0
  %7397 = vmatpush1.xpose.msra.mxu0 0.0
  %7398 = vmatprep.subr.mxu0 0.0
  %7399 = vmatpush1.xpose.msra.mxu0 0.0
  %7400 = vmatprep.subr.mxu0 0.0
  %7401 = vmatpush1.xpose.msra.mxu0 0.0
  %7402 = vmatprep.subr.mxu0 0.0
  %7403 = vmatpush1.xpose.msra.mxu0 0.0
  %7404 = vmatprep.subr.mxu0 0.0
  %7405 = vmatpush1.xpose.msra.mxu0 0.0
  %7406 = vmatprep.subr.mxu0 0.0
  %7407 = vmatpush1.xpose.msra.mxu0 0.0
  %7408 = vmatprep.subr.mxu0 0.0
  %7409 = vmatpush1.xpose.msra.mxu0 0.0
  %7410 = vmatprep.subr.mxu0 0.0
  %7411 = vmatpush1.xpose.msra.mxu0 0.0
  %7412 = vmatprep.subr.mxu0 0.0
  %7413 = vmatpush1.xpose.msra.mxu0 0.0
  %7414 = vmatprep.subr.mxu0 0.0
  %7415 = vmatpush1.xpose.msra.mxu0 0.0
  %7416 = vmatprep.subr.mxu0 0.0
  %7417 = vmatpush1.xpose.msra.mxu0 0.0
  %7418 = vmatprep.subr.mxu0 0.0
  %7419 = vmatpush1.xpose.msra.mxu0 0.0
  %7420 = vmatprep.subr.mxu0 0.0
  %7421 = vmatpush1.xpose.msra.mxu0 0.0
  %7422 = vmatprep.subr.mxu0 0.0
  %7423 = vmatpush1.xpose.msra.mxu0 0.0
  %7424 = vmatprep.mubr.f32.mxu0 %v5945
  %7425 = vmatmul.mubr.f32.gmra.mrb[0].mxu0 %v5944
  %v7426 = vpop.f32.mrb[0].mxu0
  %v7427 = vadd.f32 %v7337, %v7426
  %v7428 = vpop.f32.mrb[0].mxu0
  %7429 = vmatprep.mubr.f32.mxu0 %v6017
  %7430 = vmatmul.mubr.f32.gmra.mrb[0].mxu0 %v6016
  %v7431 = vpop.f32.mrb[0].mxu0
  %v7432 = vadd.f32 %v7342, %v7431
  %v7433 = vpop.f32.mrb[0].mxu0
  %7434 = vmatprep.mubr.f32.mxu0 %v6089
  %7435 = vmatmul.mubr.f32.gmra.mrb[0].mxu0 %v6088
  %v7436 = vpop.f32.mrb[0].mxu0
  %v7437 = vadd.f32 %v7347, %v7436
  %v7438 = vpop.f32.mrb[0].mxu0
  %7439 = vmatprep.mubr.f32.mxu0 %v6161
  %7440 = vmatmul.mubr.f32.gmra.mrb[0].mxu0 %v6160
  %v7441 = vpop.f32.mrb[0].mxu0
  %v7442 = vadd.f32 %v7352, %v7441
  %v7443 = vpop.f32.mrb[0].mxu0
  %7444 = vmatprep.mubr.f32.mxu0 %v6233
  %7445 = vmatmul.mubr.f32.gmra.mrb[0].mxu0 %v6232
  %v7446 = vpop.f32.mrb[0].mxu0
  %v7447 = vadd.f32 %v7357, %v7446
  %v7448 = vpop.f32.mrb[0].mxu0
  %7449 = vdwg.mxu0
  %7450 = vmatprep.subr.mxu0 %v4708
  %7451 = vmatpush1.xpose.msra.mxu0 %v4707
  %7452 = vmatprep.subr.mxu0 %v4780
  %7453 = vmatpush1.xpose.msra.mxu0 %v4779
  %7454 = vmatprep.subr.mxu0 %v4852
  %7455 = vmatpush1.xpose.msra.mxu0 %v4851
  %7456 = vmatprep.subr.mxu0 %v4924
  %7457 = vmatpush1.xpose.msra.mxu0 %v4923
  %7458 = vmatprep.subr.mxu0 %v4996
  %7459 = vmatpush1.xpose.msra.mxu0 %v4995
  %7460 = vmatprep.subr.mxu0 %v5068
  %7461 = vmatpush1.xpose.msra.mxu0 %v5067
  %7462 = vmatprep.subr.mxu0 %v5140
  %7463 = vmatpush1.xpose.msra.mxu0 %v5139
  %7464 = vmatprep.subr.mxu0 %v5212
  %7465 = vmatpush1.xpose.msra.mxu0 %v5211
  %7466 = vmatprep.subr.mxu0 0.0
  %7467 = vmatpush1.xpose.msra.mxu0 0.0
  %7468 = vmatprep.subr.mxu0 0.0
  %7469 = vmatpush1.xpose.msra.mxu0 0.0
  %7470 = vmatprep.subr.mxu0 0.0
  %7471 = vmatpush1.xpose.msra.mxu0 0.0
  %7472 = vmatprep.subr.mxu0 0.0
  %7473 = vmatpush1.xpose.msra.mxu0 0.0
  %7474 = vmatprep.subr.mxu0 0.0
  %7475 = vmatpush1.xpose.msra.mxu0 0.0
  %7476 = vmatprep.subr.mxu0 0.0
  %7477 = vmatpush1.xpose.msra.mxu0 0.0
  %7478 = vmatprep.subr.mxu0 0.0
  %7479 = vmatpush1.xpose.msra.mxu0 0.0
  %7480 = vmatprep.subr.mxu0 0.0
  %7481 = vmatpush1.xpose.msra.mxu0 0.0
  %7482 = vmatprep.subr.mxu0 0.0
  %7483 = vmatpush1.xpose.msra.mxu0 0.0
  %7484 = vmatprep.subr.mxu0 0.0
  %7485 = vmatpush1.xpose.msra.mxu0 0.0
  %7486 = vmatprep.subr.mxu0 0.0
  %7487 = vmatpush1.xpose.msra.mxu0 0.0
  %7488 = vmatprep.subr.mxu0 0.0
  %7489 = vmatpush1.xpose.msra.mxu0 0.0
  %7490 = vmatprep.subr.mxu0 0.0
  %7491 = vmatpush1.xpose.msra.mxu0 0.0
  %7492 = vmatprep.subr.mxu0 0.0
  %7493 = vmatpush1.xpose.msra.mxu0 0.0
  %7494 = vmatprep.subr.mxu0 0.0
  %7495 = vmatpush1.xpose.msra.mxu0 0.0
  %7496 = vmatprep.subr.mxu0 0.0
  %7497 = vmatpush1.xpose.msra.mxu0 0.0
  %7498 = vmatprep.subr.mxu0 0.0
  %7499 = vmatpush1.xpose.msra.mxu0 0.0
  %7500 = vmatprep.subr.mxu0 0.0
  %7501 = vmatpush1.xpose.msra.mxu0 0.0
  %7502 = vmatprep.subr.mxu0 0.0
  %7503 = vmatpush1.xpose.msra.mxu0 0.0
  %7504 = vmatprep.subr.mxu0 0.0
  %7505 = vmatpush1.xpose.msra.mxu0 0.0
  %7506 = vmatprep.subr.mxu0 0.0
  %7507 = vmatpush1.xpose.msra.mxu0 0.0
  %7508 = vmatprep.subr.mxu0 0.0
  %7509 = vmatpush1.xpose.msra.mxu0 0.0
  %7510 = vmatprep.subr.mxu0 0.0
  %7511 = vmatpush1.xpose.msra.mxu0 0.0
  %7512 = vmatprep.subr.mxu0 0.0
  %7513 = vmatpush1.xpose.msra.mxu0 0.0
  %7514 = vmatprep.mubr.f32.mxu0 %v5947
  %7515 = vmatmul.mubr.f32.gmra.mrb[0].mxu0 %v5946
  %v7516 = vpop.f32.mrb[0].mxu0
  %v7517 = vadd.f32 %v7427, %v7516
  %v7518 = vpop.f32.mrb[0].mxu0
  %7519 = vmatprep.mubr.f32.mxu0 %v6019
  %7520 = vmatmul.mubr.f32.gmra.mrb[0].mxu0 %v6018
  %v7521 = vpop.f32.mrb[0].mxu0
  %v7522 = vadd.f32 %v7432, %v7521
  %v7523 = vpop.f32.mrb[0].mxu0
  %7524 = vmatprep.mubr.f32.mxu0 %v6091
  %7525 = vmatmul.mubr.f32.gmra.mrb[0].mxu0 %v6090
  %v7526 = vpop.f32.mrb[0].mxu0
  %v7527 = vadd.f32 %v7437, %v7526
  %v7528 = vpop.f32.mrb[0].mxu0
  %7529 = vmatprep.mubr.f32.mxu0 %v6163
  %7530 = vmatmul.mubr.f32.gmra.mrb[0].mxu0 %v6162
  %v7531 = vpop.f32.mrb[0].mxu0
  %v7532 = vadd.f32 %v7442, %v7531
  %v7533 = vpop.f32.mrb[0].mxu0
  %7534 = vmatprep.mubr.f32.mxu0 %v6235
  %7535 = vmatmul.mubr.f32.gmra.mrb[0].mxu0 %v6234
  %v7536 = vpop.f32.mrb[0].mxu0
  %v7537 = vadd.f32 %v7447, %v7536
  %v7538 = vpop.f32.mrb[0].mxu0
  %7539 = vdwg.mxu0
  %7540 = vmatprep.subr.mxu0 %v4710
  %7541 = vmatpush1.xpose.msra.mxu0 %v4709
  %7542 = vmatprep.subr.mxu0 %v4782
  %7543 = vmatpush1.xpose.msra.mxu0 %v4781
  %7544 = vmatprep.subr.mxu0 %v4854
  %7545 = vmatpush1.xpose.msra.mxu0 %v4853
  %7546 = vmatprep.subr.mxu0 %v4926
  %7547 = vmatpush1.xpose.msra.mxu0 %v4925
  %7548 = vmatprep.subr.mxu0 %v4998
  %7549 = vmatpush1.xpose.msra.mxu0 %v4997
  %7550 = vmatprep.subr.mxu0 %v5070
  %7551 = vmatpush1.xpose.msra.mxu0 %v5069
  %7552 = vmatprep.subr.mxu0 %v5142
  %7553 = vmatpush1.xpose.msra.mxu0 %v5141
  %7554 = vmatprep.subr.mxu0 %v5214
  %7555 = vmatpush1.xpose.msra.mxu0 %v5213
  %7556 = vmatprep.subr.mxu0 0.0
  %7557 = vmatpush1.xpose.msra.mxu0 0.0
  %7558 = vmatprep.subr.mxu0 0.0
  %7559 = vmatpush1.xpose.msra.mxu0 0.0
  %7560 = vmatprep.subr.mxu0 0.0
  %7561 = vmatpush1.xpose.msra.mxu0 0.0
  %7562 = vmatprep.subr.mxu0 0.0
  %7563 = vmatpush1.xpose.msra.mxu0 0.0
  %7564 = vmatprep.subr.mxu0 0.0
  %7565 = vmatpush1.xpose.msra.mxu0 0.0
  %7566 = vmatprep.subr.mxu0 0.0
  %7567 = vmatpush1.xpose.msra.mxu0 0.0
  %7568 = vmatprep.subr.mxu0 0.0
  %7569 = vmatpush1.xpose.msra.mxu0 0.0
  %7570 = vmatprep.subr.mxu0 0.0
  %7571 = vmatpush1.xpose.msra.mxu0 0.0
  %7572 = vmatprep.subr.mxu0 0.0
  %7573 = vmatpush1.xpose.msra.mxu0 0.0
  %7574 = vmatprep.subr.mxu0 0.0
  %7575 = vmatpush1.xpose.msra.mxu0 0.0
  %7576 = vmatprep.subr.mxu0 0.0
  %7577 = vmatpush1.xpose.msra.mxu0 0.0
  %7578 = vmatprep.subr.mxu0 0.0
  %7579 = vmatpush1.xpose.msra.mxu0 0.0
  %7580 = vmatprep.subr.mxu0 0.0
  %7581 = vmatpush1.xpose.msra.mxu0 0.0
  %7582 = vmatprep.subr.mxu0 0.0
  %7583 = vmatpush1.xpose.msra.mxu0 0.0
  %7584 = vmatprep.subr.mxu0 0.0
  %7585 = vmatpush1.xpose.msra.mxu0 0.0
  %7586 = vmatprep.subr.mxu0 0.0
  %7587 = vmatpush1.xpose.msra.mxu0 0.0
  %7588 = vmatprep.subr.mxu0 0.0
  %7589 = vmatpush1.xpose.msra.mxu0 0.0
  %7590 = vmatprep.subr.mxu0 0.0
  %7591 = vmatpush1.xpose.msra.mxu0 0.0
  %7592 = vmatprep.subr.mxu0 0.0
  %7593 = vmatpush1.xpose.msra.mxu0 0.0
  %7594 = vmatprep.subr.mxu0 0.0
  %7595 = vmatpush1.xpose.msra.mxu0 0.0
  %7596 = vmatprep.subr.mxu0 0.0
  %7597 = vmatpush1.xpose.msra.mxu0 0.0
  %7598 = vmatprep.subr.mxu0 0.0
  %7599 = vmatpush1.xpose.msra.mxu0 0.0
  %7600 = vmatprep.subr.mxu0 0.0
  %7601 = vmatpush1.xpose.msra.mxu0 0.0
  %7602 = vmatprep.subr.mxu0 0.0
  %7603 = vmatpush1.xpose.msra.mxu0 0.0
  %7604 = vmatprep.mubr.f32.mxu0 %v5949
  %7605 = vmatmul.mubr.f32.gmra.mrb[0].mxu0 %v5948
  %v7606 = vpop.f32.mrb[0].mxu0
  %v7607 = vadd.f32 %v7517, %v7606
  %v7608 = vpop.f32.mrb[0].mxu0
  %7609 = vmatprep.mubr.f32.mxu0 %v6021
  %7610 = vmatmul.mubr.f32.gmra.mrb[0].mxu0 %v6020
  %v7611 = vpop.f32.mrb[0].mxu0
  %v7612 = vadd.f32 %v7522, %v7611
  %v7613 = vpop.f32.mrb[0].mxu0
  %7614 = vmatprep.mubr.f32.mxu0 %v6093
  %7615 = vmatmul.mubr.f32.gmra.mrb[0].mxu0 %v6092
  %v7616 = vpop.f32.mrb[0].mxu0
  %v7617 = vadd.f32 %v7527, %v7616
  %v7618 = vpop.f32.mrb[0].mxu0
  %7619 = vmatprep.mubr.f32.mxu0 %v6165
  %7620 = vmatmul.mubr.f32.gmra.mrb[0].mxu0 %v6164
  %v7621 = vpop.f32.mrb[0].mxu0
  %v7622 = vadd.f32 %v7532, %v7621
  %v7623 = vpop.f32.mrb[0].mxu0
  %7624 = vmatprep.mubr.f32.mxu0 %v6237
  %7625 = vmatmul.mubr.f32.gmra.mrb[0].mxu0 %v6236
  %v7626 = vpop.f32.mrb[0].mxu0
  %v7627 = vadd.f32 %v7537, %v7626
  %v7628 = vpop.f32.mrb[0].mxu0
  %7629 = vdwg.mxu0
  %7630 = vmatprep.subr.mxu0 %v4712
  %7631 = vmatpush1.xpose.msra.mxu0 %v4711
  %7632 = vmatprep.subr.mxu0 %v4784
  %7633 = vmatpush1.xpose.msra.mxu0 %v4783
  %7634 = vmatprep.subr.mxu0 %v4856
  %7635 = vmatpush1.xpose.msra.mxu0 %v4855
  %7636 = vmatprep.subr.mxu0 %v4928
  %7637 = vmatpush1.xpose.msra.mxu0 %v4927
  %7638 = vmatprep.subr.mxu0 %v5000
  %7639 = vmatpush1.xpose.msra.mxu0 %v4999
  %7640 = vmatprep.subr.mxu0 %v5072
  %7641 = vmatpush1.xpose.msra.mxu0 %v5071
  %7642 = vmatprep.subr.mxu0 %v5144
  %7643 = vmatpush1.xpose.msra.mxu0 %v5143
  %7644 = vmatprep.subr.mxu0 %v5216
  %7645 = vmatpush1.xpose.msra.mxu0 %v5215
  %7646 = vmatprep.subr.mxu0 0.0
  %7647 = vmatpush1.xpose.msra.mxu0 0.0
  %7648 = vmatprep.subr.mxu0 0.0
  %7649 = vmatpush1.xpose.msra.mxu0 0.0
  %7650 = vmatprep.subr.mxu0 0.0
  %7651 = vmatpush1.xpose.msra.mxu0 0.0
  %7652 = vmatprep.subr.mxu0 0.0
  %7653 = vmatpush1.xpose.msra.mxu0 0.0
  %7654 = vmatprep.subr.mxu0 0.0
  %7655 = vmatpush1.xpose.msra.mxu0 0.0
  %7656 = vmatprep.subr.mxu0 0.0
  %7657 = vmatpush1.xpose.msra.mxu0 0.0
  %7658 = vmatprep.subr.mxu0 0.0
  %7659 = vmatpush1.xpose.msra.mxu0 0.0
  %7660 = vmatprep.subr.mxu0 0.0
  %7661 = vmatpush1.xpose.msra.mxu0 0.0
  %7662 = vmatprep.subr.mxu0 0.0
  %7663 = vmatpush1.xpose.msra.mxu0 0.0
  %7664 = vmatprep.subr.mxu0 0.0
  %7665 = vmatpush1.xpose.msra.mxu0 0.0
  %7666 = vmatprep.subr.mxu0 0.0
  %7667 = vmatpush1.xpose.msra.mxu0 0.0
  %7668 = vmatprep.subr.mxu0 0.0
  %7669 = vmatpush1.xpose.msra.mxu0 0.0
  %7670 = vmatprep.subr.mxu0 0.0
  %7671 = vmatpush1.xpose.msra.mxu0 0.0
  %7672 = vmatprep.subr.mxu0 0.0
  %7673 = vmatpush1.xpose.msra.mxu0 0.0
  %7674 = vmatprep.subr.mxu0 0.0
  %7675 = vmatpush1.xpose.msra.mxu0 0.0
  %7676 = vmatprep.subr.mxu0 0.0
  %7677 = vmatpush1.xpose.msra.mxu0 0.0
  %7678 = vmatprep.subr.mxu0 0.0
  %7679 = vmatpush1.xpose.msra.mxu0 0.0
  %7680 = vmatprep.subr.mxu0 0.0
  %7681 = vmatpush1.xpose.msra.mxu0 0.0
  %7682 = vmatprep.subr.mxu0 0.0
  %7683 = vmatpush1.xpose.msra.mxu0 0.0
  %7684 = vmatprep.subr.mxu0 0.0
  %7685 = vmatpush1.xpose.msra.mxu0 0.0
  %7686 = vmatprep.subr.mxu0 0.0
  %7687 = vmatpush1.xpose.msra.mxu0 0.0
  %7688 = vmatprep.subr.mxu0 0.0
  %7689 = vmatpush1.xpose.msra.mxu0 0.0
  %7690 = vmatprep.subr.mxu0 0.0
  %7691 = vmatpush1.xpose.msra.mxu0 0.0
  %7692 = vmatprep.subr.mxu0 0.0
  %7693 = vmatpush1.xpose.msra.mxu0 0.0
  %7694 = vmatprep.mubr.f32.mxu0 %v5951
  %7695 = vmatmul.mubr.f32.gmra.mrb[0].mxu0 %v5950
  %v7696 = vpop.f32.mrb[0].mxu0
  %v7697 = vadd.f32 %v7607, %v7696
  %v7698 = vpop.f32.mrb[0].mxu0
  %7699 = vmatprep.mubr.f32.mxu0 %v6023
  %7700 = vmatmul.mubr.f32.gmra.mrb[0].mxu0 %v6022
  %v7701 = vpop.f32.mrb[0].mxu0
  %v7702 = vadd.f32 %v7612, %v7701
  %v7703 = vpop.f32.mrb[0].mxu0
  %7704 = vmatprep.mubr.f32.mxu0 %v6095
  %7705 = vmatmul.mubr.f32.gmra.mrb[0].mxu0 %v6094
  %v7706 = vpop.f32.mrb[0].mxu0
  %v7707 = vadd.f32 %v7617, %v7706
  %v7708 = vpop.f32.mrb[0].mxu0
  %7709 = vmatprep.mubr.f32.mxu0 %v6167
  %7710 = vmatmul.mubr.f32.gmra.mrb[0].mxu0 %v6166
  %v7711 = vpop.f32.mrb[0].mxu0
  %v7712 = vadd.f32 %v7622, %v7711
  %v7713 = vpop.f32.mrb[0].mxu0
  %7714 = vmatprep.mubr.f32.mxu0 %v6239
  %7715 = vmatmul.mubr.f32.gmra.mrb[0].mxu0 %v6238
  %v7716 = vpop.f32.mrb[0].mxu0
  %v7717 = vadd.f32 %v7627, %v7716
  %v7718 = vpop.f32.mrb[0].mxu0
  %7719 = vdwg.mxu0
  %7720 = vmatprep.subr.mxu0 %v4714
  %7721 = vmatpush1.xpose.msra.mxu0 %v4713
  %7722 = vmatprep.subr.mxu0 %v4786
  %7723 = vmatpush1.xpose.msra.mxu0 %v4785
  %7724 = vmatprep.subr.mxu0 %v4858
  %7725 = vmatpush1.xpose.msra.mxu0 %v4857
  %7726 = vmatprep.subr.mxu0 %v4930
  %7727 = vmatpush1.xpose.msra.mxu0 %v4929
  %7728 = vmatprep.subr.mxu0 %v5002
  %7729 = vmatpush1.xpose.msra.mxu0 %v5001
  %7730 = vmatprep.subr.mxu0 %v5074
  %7731 = vmatpush1.xpose.msra.mxu0 %v5073
  %7732 = vmatprep.subr.mxu0 %v5146
  %7733 = vmatpush1.xpose.msra.mxu0 %v5145
  %7734 = vmatprep.subr.mxu0 %v5218
  %7735 = vmatpush1.xpose.msra.mxu0 %v5217
  %7736 = vmatprep.subr.mxu0 0.0
  %7737 = vmatpush1.xpose.msra.mxu0 0.0
  %7738 = vmatprep.subr.mxu0 0.0
  %7739 = vmatpush1.xpose.msra.mxu0 0.0
  %7740 = vmatprep.subr.mxu0 0.0
  %7741 = vmatpush1.xpose.msra.mxu0 0.0
  %7742 = vmatprep.subr.mxu0 0.0
  %7743 = vmatpush1.xpose.msra.mxu0 0.0
  %7744 = vmatprep.subr.mxu0 0.0
  %7745 = vmatpush1.xpose.msra.mxu0 0.0
  %7746 = vmatprep.subr.mxu0 0.0
  %7747 = vmatpush1.xpose.msra.mxu0 0.0
  %7748 = vmatprep.subr.mxu0 0.0
  %7749 = vmatpush1.xpose.msra.mxu0 0.0
  %7750 = vmatprep.subr.mxu0 0.0
  %7751 = vmatpush1.xpose.msra.mxu0 0.0
  %7752 = vmatprep.subr.mxu0 0.0
  %7753 = vmatpush1.xpose.msra.mxu0 0.0
  %7754 = vmatprep.subr.mxu0 0.0
  %7755 = vmatpush1.xpose.msra.mxu0 0.0
  %7756 = vmatprep.subr.mxu0 0.0
  %7757 = vmatpush1.xpose.msra.mxu0 0.0
  %7758 = vmatprep.subr.mxu0 0.0
  %7759 = vmatpush1.xpose.msra.mxu0 0.0
  %7760 = vmatprep.subr.mxu0 0.0
  %7761 = vmatpush1.xpose.msra.mxu0 0.0
  %7762 = vmatprep.subr.mxu0 0.0
  %7763 = vmatpush1.xpose.msra.mxu0 0.0
  %7764 = vmatprep.subr.mxu0 0.0
  %7765 = vmatpush1.xpose.msra.mxu0 0.0
  %7766 = vmatprep.subr.mxu0 0.0
  %7767 = vmatpush1.xpose.msra.mxu0 0.0
  %7768 = vmatprep.subr.mxu0 0.0
  %7769 = vmatpush1.xpose.msra.mxu0 0.0
  %7770 = vmatprep.subr.mxu0 0.0
  %7771 = vmatpush1.xpose.msra.mxu0 0.0
  %7772 = vmatprep.subr.mxu0 0.0
  %7773 = vmatpush1.xpose.msra.mxu0 0.0
  %7774 = vmatprep.subr.mxu0 0.0
  %7775 = vmatpush1.xpose.msra.mxu0 0.0
  %7776 = vmatprep.subr.mxu0 0.0
  %7777 = vmatpush1.xpose.msra.mxu0 0.0
  %7778 = vmatprep.subr.mxu0 0.0
  %7779 = vmatpush1.xpose.msra.mxu0 0.0
  %7780 = vmatprep.subr.mxu0 0.0
  %7781 = vmatpush1.xpose.msra.mxu0 0.0
  %7782 = vmatprep.subr.mxu0 0.0
  %7783 = vmatpush1.xpose.msra.mxu0 0.0
  %7784 = vmatprep.mubr.f32.mxu0 %v5953
  %7785 = vmatmul.mubr.f32.gmra.mrb[0].mxu0 %v5952
  %v7786 = vpop.f32.mrb[0].mxu0
  %v7787 = vadd.f32 %v7697, %v7786
  %v7788 = vpop.f32.mrb[0].mxu0
  %7789 = vmatprep.mubr.f32.mxu0 %v6025
  %7790 = vmatmul.mubr.f32.gmra.mrb[0].mxu0 %v6024
  %v7791 = vpop.f32.mrb[0].mxu0
  %v7792 = vadd.f32 %v7702, %v7791
  %v7793 = vpop.f32.mrb[0].mxu0
  %7794 = vmatprep.mubr.f32.mxu0 %v6097
  %7795 = vmatmul.mubr.f32.gmra.mrb[0].mxu0 %v6096
  %v7796 = vpop.f32.mrb[0].mxu0
  %v7797 = vadd.f32 %v7707, %v7796
  %v7798 = vpop.f32.mrb[0].mxu0
  %7799 = vmatprep.mubr.f32.mxu0 %v6169
  %7800 = vmatmul.mubr.f32.gmra.mrb[0].mxu0 %v6168
  %v7801 = vpop.f32.mrb[0].mxu0
  %v7802 = vadd.f32 %v7712, %v7801
  %v7803 = vpop.f32.mrb[0].mxu0
  %7804 = vmatprep.mubr.f32.mxu0 %v6241
  %7805 = vmatmul.mubr.f32.gmra.mrb[0].mxu0 %v6240
  %v7806 = vpop.f32.mrb[0].mxu0
  %v7807 = vadd.f32 %v7717, %v7806
  %v7808 = vpop.f32.mrb[0].mxu0
  %7809 = vdwg.mxu0
  %7810 = vmatprep.subr.mxu0 %v4716
  %7811 = vmatpush1.xpose.msra.mxu0 %v4715
  %7812 = vmatprep.subr.mxu0 %v4788
  %7813 = vmatpush1.xpose.msra.mxu0 %v4787
  %7814 = vmatprep.subr.mxu0 %v4860
  %7815 = vmatpush1.xpose.msra.mxu0 %v4859
  %7816 = vmatprep.subr.mxu0 %v4932
  %7817 = vmatpush1.xpose.msra.mxu0 %v4931
  %7818 = vmatprep.subr.mxu0 %v5004
  %7819 = vmatpush1.xpose.msra.mxu0 %v5003
  %7820 = vmatprep.subr.mxu0 %v5076
  %7821 = vmatpush1.xpose.msra.mxu0 %v5075
  %7822 = vmatprep.subr.mxu0 %v5148
  %7823 = vmatpush1.xpose.msra.mxu0 %v5147
  %7824 = vmatprep.subr.mxu0 %v5220
  %7825 = vmatpush1.xpose.msra.mxu0 %v5219
  %7826 = vmatprep.subr.mxu0 0.0
  %7827 = vmatpush1.xpose.msra.mxu0 0.0
  %7828 = vmatprep.subr.mxu0 0.0
  %7829 = vmatpush1.xpose.msra.mxu0 0.0
  %7830 = vmatprep.subr.mxu0 0.0
  %7831 = vmatpush1.xpose.msra.mxu0 0.0
  %7832 = vmatprep.subr.mxu0 0.0
  %7833 = vmatpush1.xpose.msra.mxu0 0.0
  %7834 = vmatprep.subr.mxu0 0.0
  %7835 = vmatpush1.xpose.msra.mxu0 0.0
  %7836 = vmatprep.subr.mxu0 0.0
  %7837 = vmatpush1.xpose.msra.mxu0 0.0
  %7838 = vmatprep.subr.mxu0 0.0
  %7839 = vmatpush1.xpose.msra.mxu0 0.0
  %7840 = vmatprep.subr.mxu0 0.0
  %7841 = vmatpush1.xpose.msra.mxu0 0.0
  %7842 = vmatprep.subr.mxu0 0.0
  %7843 = vmatpush1.xpose.msra.mxu0 0.0
  %7844 = vmatprep.subr.mxu0 0.0
  %7845 = vmatpush1.xpose.msra.mxu0 0.0
  %7846 = vmatprep.subr.mxu0 0.0
  %7847 = vmatpush1.xpose.msra.mxu0 0.0
  %7848 = vmatprep.subr.mxu0 0.0
  %7849 = vmatpush1.xpose.msra.mxu0 0.0
  %7850 = vmatprep.subr.mxu0 0.0
  %7851 = vmatpush1.xpose.msra.mxu0 0.0
  %7852 = vmatprep.subr.mxu0 0.0
  %7853 = vmatpush1.xpose.msra.mxu0 0.0
  %7854 = vmatprep.subr.mxu0 0.0
  %7855 = vmatpush1.xpose.msra.mxu0 0.0
  %7856 = vmatprep.subr.mxu0 0.0
  %7857 = vmatpush1.xpose.msra.mxu0 0.0
  %7858 = vmatprep.subr.mxu0 0.0
  %7859 = vmatpush1.xpose.msra.mxu0 0.0
  %7860 = vmatprep.subr.mxu0 0.0
  %7861 = vmatpush1.xpose.msra.mxu0 0.0
  %7862 = vmatprep.subr.mxu0 0.0
  %7863 = vmatpush1.xpose.msra.mxu0 0.0
  %7864 = vmatprep.subr.mxu0 0.0
  %7865 = vmatpush1.xpose.msra.mxu0 0.0
  %7866 = vmatprep.subr.mxu0 0.0
  %7867 = vmatpush1.xpose.msra.mxu0 0.0
  %7868 = vmatprep.subr.mxu0 0.0
  %7869 = vmatpush1.xpose.msra.mxu0 0.0
  %7870 = vmatprep.subr.mxu0 0.0
  %7871 = vmatpush1.xpose.msra.mxu0 0.0
  %7872 = vmatprep.subr.mxu0 0.0
  %7873 = vmatpush1.xpose.msra.mxu0 0.0
  %7874 = vmatprep.mubr.f32.mxu0 %v5955
  %7875 = vmatmul.mubr.f32.gmra.mrb[0].mxu0 %v5954
  %v7876 = vpop.f32.mrb[0].mxu0
  %v7877 = vadd.f32 %v7787, %v7876
  %v7878 = vpop.f32.mrb[0].mxu0
  %7879 = vmatprep.mubr.f32.mxu0 %v6027
  %7880 = vmatmul.mubr.f32.gmra.mrb[0].mxu0 %v6026
  %v7881 = vpop.f32.mrb[0].mxu0
  %v7882 = vadd.f32 %v7792, %v7881
  %v7883 = vpop.f32.mrb[0].mxu0
  %7884 = vmatprep.mubr.f32.mxu0 %v6099
  %7885 = vmatmul.mubr.f32.gmra.mrb[0].mxu0 %v6098
  %v7886 = vpop.f32.mrb[0].mxu0
  %v7887 = vadd.f32 %v7797, %v7886
  %v7888 = vpop.f32.mrb[0].mxu0
  %7889 = vmatprep.mubr.f32.mxu0 %v6171
  %7890 = vmatmul.mubr.f32.gmra.mrb[0].mxu0 %v6170
  %v7891 = vpop.f32.mrb[0].mxu0
  %v7892 = vadd.f32 %v7802, %v7891
  %v7893 = vpop.f32.mrb[0].mxu0
  %7894 = vmatprep.mubr.f32.mxu0 %v6243
  %7895 = vmatmul.mubr.f32.gmra.mrb[0].mxu0 %v6242
  %v7896 = vpop.f32.mrb[0].mxu0
  %v7897 = vadd.f32 %v7807, %v7896
  %v7898 = vpop.f32.mrb[0].mxu0
  %7899 = vdwg.mxu0
  %7900 = vmatprep.subr.mxu0 %v4718
  %7901 = vmatpush1.xpose.msra.mxu0 %v4717
  %7902 = vmatprep.subr.mxu0 %v4790
  %7903 = vmatpush1.xpose.msra.mxu0 %v4789
  %7904 = vmatprep.subr.mxu0 %v4862
  %7905 = vmatpush1.xpose.msra.mxu0 %v4861
  %7906 = vmatprep.subr.mxu0 %v4934
  %7907 = vmatpush1.xpose.msra.mxu0 %v4933
  %7908 = vmatprep.subr.mxu0 %v5006
  %7909 = vmatpush1.xpose.msra.mxu0 %v5005
  %7910 = vmatprep.subr.mxu0 %v5078
  %7911 = vmatpush1.xpose.msra.mxu0 %v5077
  %7912 = vmatprep.subr.mxu0 %v5150
  %7913 = vmatpush1.xpose.msra.mxu0 %v5149
  %7914 = vmatprep.subr.mxu0 %v5222
  %7915 = vmatpush1.xpose.msra.mxu0 %v5221
  %7916 = vmatprep.subr.mxu0 0.0
  %7917 = vmatpush1.xpose.msra.mxu0 0.0
  %7918 = vmatprep.subr.mxu0 0.0
  %7919 = vmatpush1.xpose.msra.mxu0 0.0
  %7920 = vmatprep.subr.mxu0 0.0
  %7921 = vmatpush1.xpose.msra.mxu0 0.0
  %7922 = vmatprep.subr.mxu0 0.0
  %7923 = vmatpush1.xpose.msra.mxu0 0.0
  %7924 = vmatprep.subr.mxu0 0.0
  %7925 = vmatpush1.xpose.msra.mxu0 0.0
  %7926 = vmatprep.subr.mxu0 0.0
  %7927 = vmatpush1.xpose.msra.mxu0 0.0
  %7928 = vmatprep.subr.mxu0 0.0
  %7929 = vmatpush1.xpose.msra.mxu0 0.0
  %7930 = vmatprep.subr.mxu0 0.0
  %7931 = vmatpush1.xpose.msra.mxu0 0.0
  %7932 = vmatprep.subr.mxu0 0.0
  %7933 = vmatpush1.xpose.msra.mxu0 0.0
  %7934 = vmatprep.subr.mxu0 0.0
  %7935 = vmatpush1.xpose.msra.mxu0 0.0
  %7936 = vmatprep.subr.mxu0 0.0
  %7937 = vmatpush1.xpose.msra.mxu0 0.0
  %7938 = vmatprep.subr.mxu0 0.0
  %7939 = vmatpush1.xpose.msra.mxu0 0.0
  %7940 = vmatprep.subr.mxu0 0.0
  %7941 = vmatpush1.xpose.msra.mxu0 0.0
  %7942 = vmatprep.subr.mxu0 0.0
  %7943 = vmatpush1.xpose.msra.mxu0 0.0
  %7944 = vmatprep.subr.mxu0 0.0
  %7945 = vmatpush1.xpose.msra.mxu0 0.0
  %7946 = vmatprep.subr.mxu0 0.0
  %7947 = vmatpush1.xpose.msra.mxu0 0.0
  %7948 = vmatprep.subr.mxu0 0.0
  %7949 = vmatpush1.xpose.msra.mxu0 0.0
  %7950 = vmatprep.subr.mxu0 0.0
  %7951 = vmatpush1.xpose.msra.mxu0 0.0
  %7952 = vmatprep.subr.mxu0 0.0
  %7953 = vmatpush1.xpose.msra.mxu0 0.0
  %7954 = vmatprep.subr.mxu0 0.0
  %7955 = vmatpush1.xpose.msra.mxu0 0.0
  %7956 = vmatprep.subr.mxu0 0.0
  %7957 = vmatpush1.xpose.msra.mxu0 0.0
  %7958 = vmatprep.subr.mxu0 0.0
  %7959 = vmatpush1.xpose.msra.mxu0 0.0
  %7960 = vmatprep.subr.mxu0 0.0
  %7961 = vmatpush1.xpose.msra.mxu0 0.0
  %7962 = vmatprep.subr.mxu0 0.0
  %7963 = vmatpush1.xpose.msra.mxu0 0.0
  %7964 = vmatprep.mubr.f32.mxu0 %v5957
  %7965 = vmatmul.mubr.f32.gmra.mrb[0].mxu0 %v5956
  %v7966 = vpop.f32.mrb[0].mxu0
  %v7967 = vadd.f32 %v7877, %v7966
  %v7968 = vpop.f32.mrb[0].mxu0
  %7969 = vmatprep.mubr.f32.mxu0 %v6029
  %7970 = vmatmul.mubr.f32.gmra.mrb[0].mxu0 %v6028
  %v7971 = vpop.f32.mrb[0].mxu0
  %v7972 = vadd.f32 %v7882, %v7971
  %v7973 = vpop.f32.mrb[0].mxu0
  %7974 = vmatprep.mubr.f32.mxu0 %v6101
  %7975 = vmatmul.mubr.f32.gmra.mrb[0].mxu0 %v6100
  %v7976 = vpop.f32.mrb[0].mxu0
  %v7977 = vadd.f32 %v7887, %v7976
  %v7978 = vpop.f32.mrb[0].mxu0
  %7979 = vmatprep.mubr.f32.mxu0 %v6173
  %7980 = vmatmul.mubr.f32.gmra.mrb[0].mxu0 %v6172
  %v7981 = vpop.f32.mrb[0].mxu0
  %v7982 = vadd.f32 %v7892, %v7981
  %v7983 = vpop.f32.mrb[0].mxu0
  %7984 = vmatprep.mubr.f32.mxu0 %v6245
  %7985 = vmatmul.mubr.f32.gmra.mrb[0].mxu0 %v6244
  %v7986 = vpop.f32.mrb[0].mxu0
  %v7987 = vadd.f32 %v7897, %v7986
  %v7988 = vpop.f32.mrb[0].mxu0
  %7989 = vdwg.mxu0
  %7990 = vmatprep.subr.mxu0 %v4720
  %7991 = vmatpush1.xpose.msra.mxu0 %v4719
  %7992 = vmatprep.subr.mxu0 %v4792
  %7993 = vmatpush1.xpose.msra.mxu0 %v4791
  %7994 = vmatprep.subr.mxu0 %v4864
  %7995 = vmatpush1.xpose.msra.mxu0 %v4863
  %7996 = vmatprep.subr.mxu0 %v4936
  %7997 = vmatpush1.xpose.msra.mxu0 %v4935
  %7998 = vmatprep.subr.mxu0 %v5008
  %7999 = vmatpush1.xpose.msra.mxu0 %v5007
  %8000 = vmatprep.subr.mxu0 %v5080
  %8001 = vmatpush1.xpose.msra.mxu0 %v5079
  %8002 = vmatprep.subr.mxu0 %v5152
  %8003 = vmatpush1.xpose.msra.mxu0 %v5151
  %8004 = vmatprep.subr.mxu0 %v5224
  %8005 = vmatpush1.xpose.msra.mxu0 %v5223
  %8006 = vmatprep.subr.mxu0 0.0
  %8007 = vmatpush1.xpose.msra.mxu0 0.0
  %8008 = vmatprep.subr.mxu0 0.0
  %8009 = vmatpush1.xpose.msra.mxu0 0.0
  %8010 = vmatprep.subr.mxu0 0.0
  %8011 = vmatpush1.xpose.msra.mxu0 0.0
  %8012 = vmatprep.subr.mxu0 0.0
  %8013 = vmatpush1.xpose.msra.mxu0 0.0
  %8014 = vmatprep.subr.mxu0 0.0
  %8015 = vmatpush1.xpose.msra.mxu0 0.0
  %8016 = vmatprep.subr.mxu0 0.0
  %8017 = vmatpush1.xpose.msra.mxu0 0.0
  %8018 = vmatprep.subr.mxu0 0.0
  %8019 = vmatpush1.xpose.msra.mxu0 0.0
  %8020 = vmatprep.subr.mxu0 0.0
  %8021 = vmatpush1.xpose.msra.mxu0 0.0
  %8022 = vmatprep.subr.mxu0 0.0
  %8023 = vmatpush1.xpose.msra.mxu0 0.0
  %8024 = vmatprep.subr.mxu0 0.0
  %8025 = vmatpush1.xpose.msra.mxu0 0.0
  %8026 = vmatprep.subr.mxu0 0.0
  %8027 = vmatpush1.xpose.msra.mxu0 0.0
  %8028 = vmatprep.subr.mxu0 0.0
  %8029 = vmatpush1.xpose.msra.mxu0 0.0
  %8030 = vmatprep.subr.mxu0 0.0
  %8031 = vmatpush1.xpose.msra.mxu0 0.0
  %8032 = vmatprep.subr.mxu0 0.0
  %8033 = vmatpush1.xpose.msra.mxu0 0.0
  %8034 = vmatprep.subr.mxu0 0.0
  %8035 = vmatpush1.xpose.msra.mxu0 0.0
  %8036 = vmatprep.subr.mxu0 0.0
  %8037 = vmatpush1.xpose.msra.mxu0 0.0
  %8038 = vmatprep.subr.mxu0 0.0
  %8039 = vmatpush1.xpose.msra.mxu0 0.0
  %8040 = vmatprep.subr.mxu0 0.0
  %8041 = vmatpush1.xpose.msra.mxu0 0.0
  %8042 = vmatprep.subr.mxu0 0.0
  %8043 = vmatpush1.xpose.msra.mxu0 0.0
  %8044 = vmatprep.subr.mxu0 0.0
  %8045 = vmatpush1.xpose.msra.mxu0 0.0
  %8046 = vmatprep.subr.mxu0 0.0
  %8047 = vmatpush1.xpose.msra.mxu0 0.0
  %8048 = vmatprep.subr.mxu0 0.0
  %8049 = vmatpush1.xpose.msra.mxu0 0.0
  %8050 = vmatprep.subr.mxu0 0.0
  %8051 = vmatpush1.xpose.msra.mxu0 0.0
  %8052 = vmatprep.subr.mxu0 0.0
  %8053 = vmatpush1.xpose.msra.mxu0 0.0
  %8054 = vmatprep.mubr.f32.mxu0 %v5959
  %8055 = vmatmul.mubr.f32.gmra.mrb[0].mxu0 %v5958
  %v8056 = vpop.f32.mrb[0].mxu0
  %v8057 = vadd.f32 %v7967, %v8056
  %v8058 = vpop.f32.mrb[0].mxu0
  %8059 = vmatprep.mubr.f32.mxu0 %v6031
  %8060 = vmatmul.mubr.f32.gmra.mrb[0].mxu0 %v6030
  %v8061 = vpop.f32.mrb[0].mxu0
  %v8062 = vadd.f32 %v7972, %v8061
  %v8063 = vpop.f32.mrb[0].mxu0
  %8064 = vmatprep.mubr.f32.mxu0 %v6103
  %8065 = vmatmul.mubr.f32.gmra.mrb[0].mxu0 %v6102
  %v8066 = vpop.f32.mrb[0].mxu0
  %v8067 = vadd.f32 %v7977, %v8066
  %v8068 = vpop.f32.mrb[0].mxu0
  %8069 = vmatprep.mubr.f32.mxu0 %v6175
  %8070 = vmatmul.mubr.f32.gmra.mrb[0].mxu0 %v6174
  %v8071 = vpop.f32.mrb[0].mxu0
  %v8072 = vadd.f32 %v7982, %v8071
  %v8073 = vpop.f32.mrb[0].mxu0
  %8074 = vmatprep.mubr.f32.mxu0 %v6247
  %8075 = vmatmul.mubr.f32.gmra.mrb[0].mxu0 %v6246
  %v8076 = vpop.f32.mrb[0].mxu0
  %v8077 = vadd.f32 %v7987, %v8076
  %v8078 = vpop.f32.mrb[0].mxu0
  %8079 = vdwg.mxu0
  %8080 = vmatprep.subr.mxu0 %v4722
  %8081 = vmatpush1.xpose.msra.mxu0 %v4721
  %8082 = vmatprep.subr.mxu0 %v4794
  %8083 = vmatpush1.xpose.msra.mxu0 %v4793
  %8084 = vmatprep.subr.mxu0 %v4866
  %8085 = vmatpush1.xpose.msra.mxu0 %v4865
  %8086 = vmatprep.subr.mxu0 %v4938
  %8087 = vmatpush1.xpose.msra.mxu0 %v4937
  %8088 = vmatprep.subr.mxu0 %v5010
  %8089 = vmatpush1.xpose.msra.mxu0 %v5009
  %8090 = vmatprep.subr.mxu0 %v5082
  %8091 = vmatpush1.xpose.msra.mxu0 %v5081
  %8092 = vmatprep.subr.mxu0 %v5154
  %8093 = vmatpush1.xpose.msra.mxu0 %v5153
  %8094 = vmatprep.subr.mxu0 %v5226
  %8095 = vmatpush1.xpose.msra.mxu0 %v5225
  %8096 = vmatprep.subr.mxu0 0.0
  %8097 = vmatpush1.xpose.msra.mxu0 0.0
  %8098 = vmatprep.subr.mxu0 0.0
  %8099 = vmatpush1.xpose.msra.mxu0 0.0
  %8100 = vmatprep.subr.mxu0 0.0
  %8101 = vmatpush1.xpose.msra.mxu0 0.0
  %8102 = vmatprep.subr.mxu0 0.0
  %8103 = vmatpush1.xpose.msra.mxu0 0.0
  %8104 = vmatprep.subr.mxu0 0.0
  %8105 = vmatpush1.xpose.msra.mxu0 0.0
  %8106 = vmatprep.subr.mxu0 0.0
  %8107 = vmatpush1.xpose.msra.mxu0 0.0
  %8108 = vmatprep.subr.mxu0 0.0
  %8109 = vmatpush1.xpose.msra.mxu0 0.0
  %8110 = vmatprep.subr.mxu0 0.0
  %8111 = vmatpush1.xpose.msra.mxu0 0.0
  %8112 = vmatprep.subr.mxu0 0.0
  %8113 = vmatpush1.xpose.msra.mxu0 0.0
  %8114 = vmatprep.subr.mxu0 0.0
  %8115 = vmatpush1.xpose.msra.mxu0 0.0
  %8116 = vmatprep.subr.mxu0 0.0
  %8117 = vmatpush1.xpose.msra.mxu0 0.0
  %8118 = vmatprep.subr.mxu0 0.0
  %8119 = vmatpush1.xpose.msra.mxu0 0.0
  %8120 = vmatprep.subr.mxu0 0.0
  %8121 = vmatpush1.xpose.msra.mxu0 0.0
  %8122 = vmatprep.subr.mxu0 0.0
  %8123 = vmatpush1.xpose.msra.mxu0 0.0
  %8124 = vmatprep.subr.mxu0 0.0
  %8125 = vmatpush1.xpose.msra.mxu0 0.0
  %8126 = vmatprep.subr.mxu0 0.0
  %8127 = vmatpush1.xpose.msra.mxu0 0.0
  %8128 = vmatprep.subr.mxu0 0.0
  %8129 = vmatpush1.xpose.msra.mxu0 0.0
  %8130 = vmatprep.subr.mxu0 0.0
  %8131 = vmatpush1.xpose.msra.mxu0 0.0
  %8132 = vmatprep.subr.mxu0 0.0
  %8133 = vmatpush1.xpose.msra.mxu0 0.0
  %8134 = vmatprep.subr.mxu0 0.0
  %8135 = vmatpush1.xpose.msra.mxu0 0.0
  %8136 = vmatprep.subr.mxu0 0.0
  %8137 = vmatpush1.xpose.msra.mxu0 0.0
  %8138 = vmatprep.subr.mxu0 0.0
  %8139 = vmatpush1.xpose.msra.mxu0 0.0
  %8140 = vmatprep.subr.mxu0 0.0
  %8141 = vmatpush1.xpose.msra.mxu0 0.0
  %8142 = vmatprep.subr.mxu0 0.0
  %8143 = vmatpush1.xpose.msra.mxu0 0.0
  %8144 = vmatprep.mubr.f32.mxu0 %v5961
  %8145 = vmatmul.mubr.f32.gmra.mrb[0].mxu0 %v5960
  %v8146 = vpop.f32.mrb[0].mxu0
  %v8147 = vadd.f32 %v8057, %v8146
  %v8148 = vpop.f32.mrb[0].mxu0
  %8149 = vmatprep.mubr.f32.mxu0 %v6033
  %8150 = vmatmul.mubr.f32.gmra.mrb[0].mxu0 %v6032
  %v8151 = vpop.f32.mrb[0].mxu0
  %v8152 = vadd.f32 %v8062, %v8151
  %v8153 = vpop.f32.mrb[0].mxu0
  %8154 = vmatprep.mubr.f32.mxu0 %v6105
  %8155 = vmatmul.mubr.f32.gmra.mrb[0].mxu0 %v6104
  %v8156 = vpop.f32.mrb[0].mxu0
  %v8157 = vadd.f32 %v8067, %v8156
  %v8158 = vpop.f32.mrb[0].mxu0
  %8159 = vmatprep.mubr.f32.mxu0 %v6177
  %8160 = vmatmul.mubr.f32.gmra.mrb[0].mxu0 %v6176
  %v8161 = vpop.f32.mrb[0].mxu0
  %v8162 = vadd.f32 %v8072, %v8161
  %v8163 = vpop.f32.mrb[0].mxu0
  %8164 = vmatprep.mubr.f32.mxu0 %v6249
  %8165 = vmatmul.mubr.f32.gmra.mrb[0].mxu0 %v6248
  %v8166 = vpop.f32.mrb[0].mxu0
  %v8167 = vadd.f32 %v8077, %v8166
  %v8168 = vpop.f32.mrb[0].mxu0
  %8169 = vdwg.mxu0
  %8170 = vmatprep.subr.mxu0 %v4724
  %8171 = vmatpush1.xpose.msra.mxu0 %v4723
  %8172 = vmatprep.subr.mxu0 %v4796
  %8173 = vmatpush1.xpose.msra.mxu0 %v4795
  %8174 = vmatprep.subr.mxu0 %v4868
  %8175 = vmatpush1.xpose.msra.mxu0 %v4867
  %8176 = vmatprep.subr.mxu0 %v4940
  %8177 = vmatpush1.xpose.msra.mxu0 %v4939
  %8178 = vmatprep.subr.mxu0 %v5012
  %8179 = vmatpush1.xpose.msra.mxu0 %v5011
  %8180 = vmatprep.subr.mxu0 %v5084
  %8181 = vmatpush1.xpose.msra.mxu0 %v5083
  %8182 = vmatprep.subr.mxu0 %v5156
  %8183 = vmatpush1.xpose.msra.mxu0 %v5155
  %8184 = vmatprep.subr.mxu0 %v5228
  %8185 = vmatpush1.xpose.msra.mxu0 %v5227
  %8186 = vmatprep.subr.mxu0 0.0
  %8187 = vmatpush1.xpose.msra.mxu0 0.0
  %8188 = vmatprep.subr.mxu0 0.0
  %8189 = vmatpush1.xpose.msra.mxu0 0.0
  %8190 = vmatprep.subr.mxu0 0.0
  %8191 = vmatpush1.xpose.msra.mxu0 0.0
  %8192 = vmatprep.subr.mxu0 0.0
  %8193 = vmatpush1.xpose.msra.mxu0 0.0
  %8194 = vmatprep.subr.mxu0 0.0
  %8195 = vmatpush1.xpose.msra.mxu0 0.0
  %8196 = vmatprep.subr.mxu0 0.0
  %8197 = vmatpush1.xpose.msra.mxu0 0.0
  %8198 = vmatprep.subr.mxu0 0.0
  %8199 = vmatpush1.xpose.msra.mxu0 0.0
  %8200 = vmatprep.subr.mxu0 0.0
  %8201 = vmatpush1.xpose.msra.mxu0 0.0
  %8202 = vmatprep.subr.mxu0 0.0
  %8203 = vmatpush1.xpose.msra.mxu0 0.0
  %8204 = vmatprep.subr.mxu0 0.0
  %8205 = vmatpush1.xpose.msra.mxu0 0.0
  %8206 = vmatprep.subr.mxu0 0.0
  %8207 = vmatpush1.xpose.msra.mxu0 0.0
  %8208 = vmatprep.subr.mxu0 0.0
  %8209 = vmatpush1.xpose.msra.mxu0 0.0
  %8210 = vmatprep.subr.mxu0 0.0
  %8211 = vmatpush1.xpose.msra.mxu0 0.0
  %8212 = vmatprep.subr.mxu0 0.0
  %8213 = vmatpush1.xpose.msra.mxu0 0.0
  %8214 = vmatprep.subr.mxu0 0.0
  %8215 = vmatpush1.xpose.msra.mxu0 0.0
  %8216 = vmatprep.subr.mxu0 0.0
  %8217 = vmatpush1.xpose.msra.mxu0 0.0
  %8218 = vmatprep.subr.mxu0 0.0
  %8219 = vmatpush1.xpose.msra.mxu0 0.0
  %8220 = vmatprep.subr.mxu0 0.0
  %8221 = vmatpush1.xpose.msra.mxu0 0.0
  %8222 = vmatprep.subr.mxu0 0.0
  %8223 = vmatpush1.xpose.msra.mxu0 0.0
  %8224 = vmatprep.subr.mxu0 0.0
  %8225 = vmatpush1.xpose.msra.mxu0 0.0
  %8226 = vmatprep.subr.mxu0 0.0
  %8227 = vmatpush1.xpose.msra.mxu0 0.0
  %8228 = vmatprep.subr.mxu0 0.0
  %8229 = vmatpush1.xpose.msra.mxu0 0.0
  %8230 = vmatprep.subr.mxu0 0.0
  %8231 = vmatpush1.xpose.msra.mxu0 0.0
  %8232 = vmatprep.subr.mxu0 0.0
  %8233 = vmatpush1.xpose.msra.mxu0 0.0
  %8234 = vmatprep.mubr.f32.mxu0 %v5963
  %8235 = vmatmul.mubr.f32.gmra.mrb[0].mxu0 %v5962
  %v8236 = vpop.f32.mrb[0].mxu0
  %v8237 = vadd.f32 %v8147, %v8236
  %v8238 = vpop.f32.mrb[0].mxu0
  %8239 = vmatprep.mubr.f32.mxu0 %v6035
  %8240 = vmatmul.mubr.f32.gmra.mrb[0].mxu0 %v6034
  %v8241 = vpop.f32.mrb[0].mxu0
  %v8242 = vadd.f32 %v8152, %v8241
  %v8243 = vpop.f32.mrb[0].mxu0
  %8244 = vmatprep.mubr.f32.mxu0 %v6107
  %8245 = vmatmul.mubr.f32.gmra.mrb[0].mxu0 %v6106
  %v8246 = vpop.f32.mrb[0].mxu0
  %v8247 = vadd.f32 %v8157, %v8246
  %v8248 = vpop.f32.mrb[0].mxu0
  %8249 = vmatprep.mubr.f32.mxu0 %v6179
  %8250 = vmatmul.mubr.f32.gmra.mrb[0].mxu0 %v6178
  %v8251 = vpop.f32.mrb[0].mxu0
  %v8252 = vadd.f32 %v8162, %v8251
  %v8253 = vpop.f32.mrb[0].mxu0
  %8254 = vmatprep.mubr.f32.mxu0 %v6251
  %8255 = vmatmul.mubr.f32.gmra.mrb[0].mxu0 %v6250
  %v8256 = vpop.f32.mrb[0].mxu0
  %v8257 = vadd.f32 %v8167, %v8256
  %v8258 = vpop.f32.mrb[0].mxu0
  %8259 = vdwg.mxu0
  %8260 = vmatprep.subr.mxu0 %v4726
  %8261 = vmatpush1.xpose.msra.mxu0 %v4725
  %8262 = vmatprep.subr.mxu0 %v4798
  %8263 = vmatpush1.xpose.msra.mxu0 %v4797
  %8264 = vmatprep.subr.mxu0 %v4870
  %8265 = vmatpush1.xpose.msra.mxu0 %v4869
  %8266 = vmatprep.subr.mxu0 %v4942
  %8267 = vmatpush1.xpose.msra.mxu0 %v4941
  %8268 = vmatprep.subr.mxu0 %v5014
  %8269 = vmatpush1.xpose.msra.mxu0 %v5013
  %8270 = vmatprep.subr.mxu0 %v5086
  %8271 = vmatpush1.xpose.msra.mxu0 %v5085
  %8272 = vmatprep.subr.mxu0 %v5158
  %8273 = vmatpush1.xpose.msra.mxu0 %v5157
  %8274 = vmatprep.subr.mxu0 %v5230
  %8275 = vmatpush1.xpose.msra.mxu0 %v5229
  %8276 = vmatprep.subr.mxu0 0.0
  %8277 = vmatpush1.xpose.msra.mxu0 0.0
  %8278 = vmatprep.subr.mxu0 0.0
  %8279 = vmatpush1.xpose.msra.mxu0 0.0
  %8280 = vmatprep.subr.mxu0 0.0
  %8281 = vmatpush1.xpose.msra.mxu0 0.0
  %8282 = vmatprep.subr.mxu0 0.0
  %8283 = vmatpush1.xpose.msra.mxu0 0.0
  %8284 = vmatprep.subr.mxu0 0.0
  %8285 = vmatpush1.xpose.msra.mxu0 0.0
  %8286 = vmatprep.subr.mxu0 0.0
  %8287 = vmatpush1.xpose.msra.mxu0 0.0
  %8288 = vmatprep.subr.mxu0 0.0
  %8289 = vmatpush1.xpose.msra.mxu0 0.0
  %8290 = vmatprep.subr.mxu0 0.0
  %8291 = vmatpush1.xpose.msra.mxu0 0.0
  %8292 = vmatprep.subr.mxu0 0.0
  %8293 = vmatpush1.xpose.msra.mxu0 0.0
  %8294 = vmatprep.subr.mxu0 0.0
  %8295 = vmatpush1.xpose.msra.mxu0 0.0
  %8296 = vmatprep.subr.mxu0 0.0
  %8297 = vmatpush1.xpose.msra.mxu0 0.0
  %8298 = vmatprep.subr.mxu0 0.0
  %8299 = vmatpush1.xpose.msra.mxu0 0.0
  %8300 = vmatprep.subr.mxu0 0.0
  %8301 = vmatpush1.xpose.msra.mxu0 0.0
  %8302 = vmatprep.subr.mxu0 0.0
  %8303 = vmatpush1.xpose.msra.mxu0 0.0
  %8304 = vmatprep.subr.mxu0 0.0
  %8305 = vmatpush1.xpose.msra.mxu0 0.0
  %8306 = vmatprep.subr.mxu0 0.0
  %8307 = vmatpush1.xpose.msra.mxu0 0.0
  %8308 = vmatprep.subr.mxu0 0.0
  %8309 = vmatpush1.xpose.msra.mxu0 0.0
  %8310 = vmatprep.subr.mxu0 0.0
  %8311 = vmatpush1.xpose.msra.mxu0 0.0
  %8312 = vmatprep.subr.mxu0 0.0
  %8313 = vmatpush1.xpose.msra.mxu0 0.0
  %8314 = vmatprep.subr.mxu0 0.0
  %8315 = vmatpush1.xpose.msra.mxu0 0.0
  %8316 = vmatprep.subr.mxu0 0.0
  %8317 = vmatpush1.xpose.msra.mxu0 0.0
  %8318 = vmatprep.subr.mxu0 0.0
  %8319 = vmatpush1.xpose.msra.mxu0 0.0
  %8320 = vmatprep.subr.mxu0 0.0
  %8321 = vmatpush1.xpose.msra.mxu0 0.0
  %8322 = vmatprep.subr.mxu0 0.0
  %8323 = vmatpush1.xpose.msra.mxu0 0.0
  %8324 = vmatprep.mubr.f32.mxu0 %v5965
  %8325 = vmatmul.mubr.f32.gmra.mrb[0].mxu0 %v5964
  %v8326 = vpop.f32.mrb[0].mxu0
  %v8327 = vadd.f32 %v8237, %v8326
  %v8328 = vpop.f32.mrb[0].mxu0
  %8329 = vmatprep.mubr.f32.mxu0 %v6037
  %8330 = vmatmul.mubr.f32.gmra.mrb[0].mxu0 %v6036
  %v8331 = vpop.f32.mrb[0].mxu0
  %v8332 = vadd.f32 %v8242, %v8331
  %v8333 = vpop.f32.mrb[0].mxu0
  %8334 = vmatprep.mubr.f32.mxu0 %v6109
  %8335 = vmatmul.mubr.f32.gmra.mrb[0].mxu0 %v6108
  %v8336 = vpop.f32.mrb[0].mxu0
  %v8337 = vadd.f32 %v8247, %v8336
  %v8338 = vpop.f32.mrb[0].mxu0
  %8339 = vmatprep.mubr.f32.mxu0 %v6181
  %8340 = vmatmul.mubr.f32.gmra.mrb[0].mxu0 %v6180
  %v8341 = vpop.f32.mrb[0].mxu0
  %v8342 = vadd.f32 %v8252, %v8341
  %v8343 = vpop.f32.mrb[0].mxu0
  %8344 = vmatprep.mubr.f32.mxu0 %v6253
  %8345 = vmatmul.mubr.f32.gmra.mrb[0].mxu0 %v6252
  %v8346 = vpop.f32.mrb[0].mxu0
  %v8347 = vadd.f32 %v8257, %v8346
  %v8348 = vpop.f32.mrb[0].mxu0
  %8349 = vdwg.mxu0
  %8350 = vmatprep.subr.mxu0 %v4728
  %8351 = vmatpush1.xpose.msra.mxu0 %v4727
  %8352 = vmatprep.subr.mxu0 %v4800
  %8353 = vmatpush1.xpose.msra.mxu0 %v4799
  %8354 = vmatprep.subr.mxu0 %v4872
  %8355 = vmatpush1.xpose.msra.mxu0 %v4871
  %8356 = vmatprep.subr.mxu0 %v4944
  %8357 = vmatpush1.xpose.msra.mxu0 %v4943
  %8358 = vmatprep.subr.mxu0 %v5016
  %8359 = vmatpush1.xpose.msra.mxu0 %v5015
  %8360 = vmatprep.subr.mxu0 %v5088
  %8361 = vmatpush1.xpose.msra.mxu0 %v5087
  %8362 = vmatprep.subr.mxu0 %v5160
  %8363 = vmatpush1.xpose.msra.mxu0 %v5159
  %8364 = vmatprep.subr.mxu0 %v5232
  %8365 = vmatpush1.xpose.msra.mxu0 %v5231
  %8366 = vmatprep.subr.mxu0 0.0
  %8367 = vmatpush1.xpose.msra.mxu0 0.0
  %8368 = vmatprep.subr.mxu0 0.0
  %8369 = vmatpush1.xpose.msra.mxu0 0.0
  %8370 = vmatprep.subr.mxu0 0.0
  %8371 = vmatpush1.xpose.msra.mxu0 0.0
  %8372 = vmatprep.subr.mxu0 0.0
  %8373 = vmatpush1.xpose.msra.mxu0 0.0
  %8374 = vmatprep.subr.mxu0 0.0
  %8375 = vmatpush1.xpose.msra.mxu0 0.0
  %8376 = vmatprep.subr.mxu0 0.0
  %8377 = vmatpush1.xpose.msra.mxu0 0.0
  %8378 = vmatprep.subr.mxu0 0.0
  %8379 = vmatpush1.xpose.msra.mxu0 0.0
  %8380 = vmatprep.subr.mxu0 0.0
  %8381 = vmatpush1.xpose.msra.mxu0 0.0
  %8382 = vmatprep.subr.mxu0 0.0
  %8383 = vmatpush1.xpose.msra.mxu0 0.0
  %8384 = vmatprep.subr.mxu0 0.0
  %8385 = vmatpush1.xpose.msra.mxu0 0.0
  %8386 = vmatprep.subr.mxu0 0.0
  %8387 = vmatpush1.xpose.msra.mxu0 0.0
  %8388 = vmatprep.subr.mxu0 0.0
  %8389 = vmatpush1.xpose.msra.mxu0 0.0
  %8390 = vmatprep.subr.mxu0 0.0
  %8391 = vmatpush1.xpose.msra.mxu0 0.0
  %8392 = vmatprep.subr.mxu0 0.0
  %8393 = vmatpush1.xpose.msra.mxu0 0.0
  %8394 = vmatprep.subr.mxu0 0.0
  %8395 = vmatpush1.xpose.msra.mxu0 0.0
  %8396 = vmatprep.subr.mxu0 0.0
  %8397 = vmatpush1.xpose.msra.mxu0 0.0
  %8398 = vmatprep.subr.mxu0 0.0
  %8399 = vmatpush1.xpose.msra.mxu0 0.0
  %8400 = vmatprep.subr.mxu0 0.0
  %8401 = vmatpush1.xpose.msra.mxu0 0.0
  %8402 = vmatprep.subr.mxu0 0.0
  %8403 = vmatpush1.xpose.msra.mxu0 0.0
  %8404 = vmatprep.subr.mxu0 0.0
  %8405 = vmatpush1.xpose.msra.mxu0 0.0
  %8406 = vmatprep.subr.mxu0 0.0
  %8407 = vmatpush1.xpose.msra.mxu0 0.0
  %8408 = vmatprep.subr.mxu0 0.0
  %8409 = vmatpush1.xpose.msra.mxu0 0.0
  %8410 = vmatprep.subr.mxu0 0.0
  %8411 = vmatpush1.xpose.msra.mxu0 0.0
  %8412 = vmatprep.subr.mxu0 0.0
  %8413 = vmatpush1.xpose.msra.mxu0 0.0
  %8414 = vmatprep.mubr.f32.mxu0 %v5967
  %8415 = vmatmul.mubr.f32.gmra.mrb[0].mxu0 %v5966
  %v8416 = vpop.f32.mrb[0].mxu0
  %v8417 = vadd.f32 %v8327, %v8416
  %v8418 = vpop.f32.mrb[0].mxu0
  %8419 = vmatprep.mubr.f32.mxu0 %v6039
  %8420 = vmatmul.mubr.f32.gmra.mrb[0].mxu0 %v6038
  %v8421 = vpop.f32.mrb[0].mxu0
  %v8422 = vadd.f32 %v8332, %v8421
  %v8423 = vpop.f32.mrb[0].mxu0
  %8424 = vmatprep.mubr.f32.mxu0 %v6111
  %8425 = vmatmul.mubr.f32.gmra.mrb[0].mxu0 %v6110
  %v8426 = vpop.f32.mrb[0].mxu0
  %v8427 = vadd.f32 %v8337, %v8426
  %v8428 = vpop.f32.mrb[0].mxu0
  %8429 = vmatprep.mubr.f32.mxu0 %v6183
  %8430 = vmatmul.mubr.f32.gmra.mrb[0].mxu0 %v6182
  %v8431 = vpop.f32.mrb[0].mxu0
  %v8432 = vadd.f32 %v8342, %v8431
  %v8433 = vpop.f32.mrb[0].mxu0
  %8434 = vmatprep.mubr.f32.mxu0 %v6255
  %8435 = vmatmul.mubr.f32.gmra.mrb[0].mxu0 %v6254
  %v8436 = vpop.f32.mrb[0].mxu0
  %v8437 = vadd.f32 %v8347, %v8436
  %v8438 = vpop.f32.mrb[0].mxu0
  %8439 = vdwg.mxu0
  %8440 = vmatprep.subr.mxu0 %v4730
  %8441 = vmatpush1.xpose.msra.mxu0 %v4729
  %8442 = vmatprep.subr.mxu0 %v4802
  %8443 = vmatpush1.xpose.msra.mxu0 %v4801
  %8444 = vmatprep.subr.mxu0 %v4874
  %8445 = vmatpush1.xpose.msra.mxu0 %v4873
  %8446 = vmatprep.subr.mxu0 %v4946
  %8447 = vmatpush1.xpose.msra.mxu0 %v4945
  %8448 = vmatprep.subr.mxu0 %v5018
  %8449 = vmatpush1.xpose.msra.mxu0 %v5017
  %8450 = vmatprep.subr.mxu0 %v5090
  %8451 = vmatpush1.xpose.msra.mxu0 %v5089
  %8452 = vmatprep.subr.mxu0 %v5162
  %8453 = vmatpush1.xpose.msra.mxu0 %v5161
  %8454 = vmatprep.subr.mxu0 %v5234
  %8455 = vmatpush1.xpose.msra.mxu0 %v5233
  %8456 = vmatprep.subr.mxu0 0.0
  %8457 = vmatpush1.xpose.msra.mxu0 0.0
  %8458 = vmatprep.subr.mxu0 0.0
  %8459 = vmatpush1.xpose.msra.mxu0 0.0
  %8460 = vmatprep.subr.mxu0 0.0
  %8461 = vmatpush1.xpose.msra.mxu0 0.0
  %8462 = vmatprep.subr.mxu0 0.0
  %8463 = vmatpush1.xpose.msra.mxu0 0.0
  %8464 = vmatprep.subr.mxu0 0.0
  %8465 = vmatpush1.xpose.msra.mxu0 0.0
  %8466 = vmatprep.subr.mxu0 0.0
  %8467 = vmatpush1.xpose.msra.mxu0 0.0
  %8468 = vmatprep.subr.mxu0 0.0
  %8469 = vmatpush1.xpose.msra.mxu0 0.0
  %8470 = vmatprep.subr.mxu0 0.0
  %8471 = vmatpush1.xpose.msra.mxu0 0.0
  %8472 = vmatprep.subr.mxu0 0.0
  %8473 = vmatpush1.xpose.msra.mxu0 0.0
  %8474 = vmatprep.subr.mxu0 0.0
  %8475 = vmatpush1.xpose.msra.mxu0 0.0
  %8476 = vmatprep.subr.mxu0 0.0
  %8477 = vmatpush1.xpose.msra.mxu0 0.0
  %8478 = vmatprep.subr.mxu0 0.0
  %8479 = vmatpush1.xpose.msra.mxu0 0.0
  %8480 = vmatprep.subr.mxu0 0.0
  %8481 = vmatpush1.xpose.msra.mxu0 0.0
  %8482 = vmatprep.subr.mxu0 0.0
  %8483 = vmatpush1.xpose.msra.mxu0 0.0
  %8484 = vmatprep.subr.mxu0 0.0
  %8485 = vmatpush1.xpose.msra.mxu0 0.0
  %8486 = vmatprep.subr.mxu0 0.0
  %8487 = vmatpush1.xpose.msra.mxu0 0.0
  %8488 = vmatprep.subr.mxu0 0.0
  %8489 = vmatpush1.xpose.msra.mxu0 0.0
  %8490 = vmatprep.subr.mxu0 0.0
  %8491 = vmatpush1.xpose.msra.mxu0 0.0
  %8492 = vmatprep.subr.mxu0 0.0
  %8493 = vmatpush1.xpose.msra.mxu0 0.0
  %8494 = vmatprep.subr.mxu0 0.0
  %8495 = vmatpush1.xpose.msra.mxu0 0.0
  %8496 = vmatprep.subr.mxu0 0.0
  %8497 = vmatpush1.xpose.msra.mxu0 0.0
  %8498 = vmatprep.subr.mxu0 0.0
  %8499 = vmatpush1.xpose.msra.mxu0 0.0
  %8500 = vmatprep.subr.mxu0 0.0
  %8501 = vmatpush1.xpose.msra.mxu0 0.0
  %8502 = vmatprep.subr.mxu0 0.0
  %8503 = vmatpush1.xpose.msra.mxu0 0.0
  %8504 = vmatprep.mubr.f32.mxu0 %v5969
  %8505 = vmatmul.mubr.f32.gmra.mrb[0].mxu0 %v5968
  %v8506 = vpop.f32.mrb[0].mxu0
  %v8507 = vadd.f32 %v8417, %v8506
  %v8508 = vpop.f32.mrb[0].mxu0
  %8509 = vmatprep.mubr.f32.mxu0 %v6041
  %8510 = vmatmul.mubr.f32.gmra.mrb[0].mxu0 %v6040
  %v8511 = vpop.f32.mrb[0].mxu0
  %v8512 = vadd.f32 %v8422, %v8511
  %v8513 = vpop.f32.mrb[0].mxu0
  %8514 = vmatprep.mubr.f32.mxu0 %v6113
  %8515 = vmatmul.mubr.f32.gmra.mrb[0].mxu0 %v6112
  %v8516 = vpop.f32.mrb[0].mxu0
  %v8517 = vadd.f32 %v8427, %v8516
  %v8518 = vpop.f32.mrb[0].mxu0
  %8519 = vmatprep.mubr.f32.mxu0 %v6185
  %8520 = vmatmul.mubr.f32.gmra.mrb[0].mxu0 %v6184
  %v8521 = vpop.f32.mrb[0].mxu0
  %v8522 = vadd.f32 %v8432, %v8521
  %v8523 = vpop.f32.mrb[0].mxu0
  %8524 = vmatprep.mubr.f32.mxu0 %v6257
  %8525 = vmatmul.mubr.f32.gmra.mrb[0].mxu0 %v6256
  %v8526 = vpop.f32.mrb[0].mxu0
  %v8527 = vadd.f32 %v8437, %v8526
  %v8528 = vpop.f32.mrb[0].mxu0
  %8529 = vdwg.mxu0
  %8530 = vmatprep.subr.mxu0 %v4732
  %8531 = vmatpush1.xpose.msra.mxu0 %v4731
  %8532 = vmatprep.subr.mxu0 %v4804
  %8533 = vmatpush1.xpose.msra.mxu0 %v4803
  %8534 = vmatprep.subr.mxu0 %v4876
  %8535 = vmatpush1.xpose.msra.mxu0 %v4875
  %8536 = vmatprep.subr.mxu0 %v4948
  %8537 = vmatpush1.xpose.msra.mxu0 %v4947
  %8538 = vmatprep.subr.mxu0 %v5020
  %8539 = vmatpush1.xpose.msra.mxu0 %v5019
  %8540 = vmatprep.subr.mxu0 %v5092
  %8541 = vmatpush1.xpose.msra.mxu0 %v5091
  %8542 = vmatprep.subr.mxu0 %v5164
  %8543 = vmatpush1.xpose.msra.mxu0 %v5163
  %8544 = vmatprep.subr.mxu0 %v5236
  %8545 = vmatpush1.xpose.msra.mxu0 %v5235
  %8546 = vmatprep.subr.mxu0 0.0
  %8547 = vmatpush1.xpose.msra.mxu0 0.0
  %8548 = vmatprep.subr.mxu0 0.0
  %8549 = vmatpush1.xpose.msra.mxu0 0.0
  %8550 = vmatprep.subr.mxu0 0.0
  %8551 = vmatpush1.xpose.msra.mxu0 0.0
  %8552 = vmatprep.subr.mxu0 0.0
  %8553 = vmatpush1.xpose.msra.mxu0 0.0
  %8554 = vmatprep.subr.mxu0 0.0
  %8555 = vmatpush1.xpose.msra.mxu0 0.0
  %8556 = vmatprep.subr.mxu0 0.0
  %8557 = vmatpush1.xpose.msra.mxu0 0.0
  %8558 = vmatprep.subr.mxu0 0.0
  %8559 = vmatpush1.xpose.msra.mxu0 0.0
  %8560 = vmatprep.subr.mxu0 0.0
  %8561 = vmatpush1.xpose.msra.mxu0 0.0
  %8562 = vmatprep.subr.mxu0 0.0
  %8563 = vmatpush1.xpose.msra.mxu0 0.0
  %8564 = vmatprep.subr.mxu0 0.0
  %8565 = vmatpush1.xpose.msra.mxu0 0.0
  %8566 = vmatprep.subr.mxu0 0.0
  %8567 = vmatpush1.xpose.msra.mxu0 0.0
  %8568 = vmatprep.subr.mxu0 0.0
  %8569 = vmatpush1.xpose.msra.mxu0 0.0
  %8570 = vmatprep.subr.mxu0 0.0
  %8571 = vmatpush1.xpose.msra.mxu0 0.0
  %8572 = vmatprep.subr.mxu0 0.0
  %8573 = vmatpush1.xpose.msra.mxu0 0.0
  %8574 = vmatprep.subr.mxu0 0.0
  %8575 = vmatpush1.xpose.msra.mxu0 0.0
  %8576 = vmatprep.subr.mxu0 0.0
  %8577 = vmatpush1.xpose.msra.mxu0 0.0
  %8578 = vmatprep.subr.mxu0 0.0
  %8579 = vmatpush1.xpose.msra.mxu0 0.0
  %8580 = vmatprep.subr.mxu0 0.0
  %8581 = vmatpush1.xpose.msra.mxu0 0.0
  %8582 = vmatprep.subr.mxu0 0.0
  %8583 = vmatpush1.xpose.msra.mxu0 0.0
  %8584 = vmatprep.subr.mxu0 0.0
  %8585 = vmatpush1.xpose.msra.mxu0 0.0
  %8586 = vmatprep.subr.mxu0 0.0
  %8587 = vmatpush1.xpose.msra.mxu0 0.0
  %8588 = vmatprep.subr.mxu0 0.0
  %8589 = vmatpush1.xpose.msra.mxu0 0.0
  %8590 = vmatprep.subr.mxu0 0.0
  %8591 = vmatpush1.xpose.msra.mxu0 0.0
  %8592 = vmatprep.subr.mxu0 0.0
  %8593 = vmatpush1.xpose.msra.mxu0 0.0
  %8594 = vmatprep.mubr.f32.mxu0 %v5971
  %8595 = vmatmul.mubr.f32.gmra.mrb[0].mxu0 %v5970
  %v8596 = vpop.f32.mrb[0].mxu0
  %v8597 = vadd.f32 %v8507, %v8596
  %v8598 = vpop.f32.mrb[0].mxu0
  %8599 = vmatprep.mubr.f32.mxu0 %v6043
  %8600 = vmatmul.mubr.f32.gmra.mrb[0].mxu0 %v6042
  %v8601 = vpop.f32.mrb[0].mxu0
  %v8602 = vadd.f32 %v8512, %v8601
  %v8603 = vpop.f32.mrb[0].mxu0
  %8604 = vmatprep.mubr.f32.mxu0 %v6115
  %8605 = vmatmul.mubr.f32.gmra.mrb[0].mxu0 %v6114
  %v8606 = vpop.f32.mrb[0].mxu0
  %v8607 = vadd.f32 %v8517, %v8606
  %v8608 = vpop.f32.mrb[0].mxu0
  %8609 = vmatprep.mubr.f32.mxu0 %v6187
  %8610 = vmatmul.mubr.f32.gmra.mrb[0].mxu0 %v6186
  %v8611 = vpop.f32.mrb[0].mxu0
  %v8612 = vadd.f32 %v8522, %v8611
  %v8613 = vpop.f32.mrb[0].mxu0
  %8614 = vmatprep.mubr.f32.mxu0 %v6259
  %8615 = vmatmul.mubr.f32.gmra.mrb[0].mxu0 %v6258
  %v8616 = vpop.f32.mrb[0].mxu0
  %v8617 = vadd.f32 %v8527, %v8616
  %v8618 = vpop.f32.mrb[0].mxu0
  %8619 = vdwg.mxu0
  %8620 = vmatprep.subr.mxu0 %v4734
  %8621 = vmatpush1.xpose.msra.mxu0 %v4733
  %8622 = vmatprep.subr.mxu0 %v4806
  %8623 = vmatpush1.xpose.msra.mxu0 %v4805
  %8624 = vmatprep.subr.mxu0 %v4878
  %8625 = vmatpush1.xpose.msra.mxu0 %v4877
  %8626 = vmatprep.subr.mxu0 %v4950
  %8627 = vmatpush1.xpose.msra.mxu0 %v4949
  %8628 = vmatprep.subr.mxu0 %v5022
  %8629 = vmatpush1.xpose.msra.mxu0 %v5021
  %8630 = vmatprep.subr.mxu0 %v5094
  %8631 = vmatpush1.xpose.msra.mxu0 %v5093
  %8632 = vmatprep.subr.mxu0 %v5166
  %8633 = vmatpush1.xpose.msra.mxu0 %v5165
  %8634 = vmatprep.subr.mxu0 %v5238
  %8635 = vmatpush1.xpose.msra.mxu0 %v5237
  %8636 = vmatprep.subr.mxu0 0.0
  %8637 = vmatpush1.xpose.msra.mxu0 0.0
  %8638 = vmatprep.subr.mxu0 0.0
  %8639 = vmatpush1.xpose.msra.mxu0 0.0
  %8640 = vmatprep.subr.mxu0 0.0
  %8641 = vmatpush1.xpose.msra.mxu0 0.0
  %8642 = vmatprep.subr.mxu0 0.0
  %8643 = vmatpush1.xpose.msra.mxu0 0.0
  %8644 = vmatprep.subr.mxu0 0.0
  %8645 = vmatpush1.xpose.msra.mxu0 0.0
  %8646 = vmatprep.subr.mxu0 0.0
  %8647 = vmatpush1.xpose.msra.mxu0 0.0
  %8648 = vmatprep.subr.mxu0 0.0
  %8649 = vmatpush1.xpose.msra.mxu0 0.0
  %8650 = vmatprep.subr.mxu0 0.0
  %8651 = vmatpush1.xpose.msra.mxu0 0.0
  %8652 = vmatprep.subr.mxu0 0.0
  %8653 = vmatpush1.xpose.msra.mxu0 0.0
  %8654 = vmatprep.subr.mxu0 0.0
  %8655 = vmatpush1.xpose.msra.mxu0 0.0
  %8656 = vmatprep.subr.mxu0 0.0
  %8657 = vmatpush1.xpose.msra.mxu0 0.0
  %8658 = vmatprep.subr.mxu0 0.0
  %8659 = vmatpush1.xpose.msra.mxu0 0.0
  %8660 = vmatprep.subr.mxu0 0.0
  %8661 = vmatpush1.xpose.msra.mxu0 0.0
  %8662 = vmatprep.subr.mxu0 0.0
  %8663 = vmatpush1.xpose.msra.mxu0 0.0
  %8664 = vmatprep.subr.mxu0 0.0
  %8665 = vmatpush1.xpose.msra.mxu0 0.0
  %8666 = vmatprep.subr.mxu0 0.0
  %8667 = vmatpush1.xpose.msra.mxu0 0.0
  %8668 = vmatprep.subr.mxu0 0.0
  %8669 = vmatpush1.xpose.msra.mxu0 0.0
  %8670 = vmatprep.subr.mxu0 0.0
  %8671 = vmatpush1.xpose.msra.mxu0 0.0
  %8672 = vmatprep.subr.mxu0 0.0
  %8673 = vmatpush1.xpose.msra.mxu0 0.0
  %8674 = vmatprep.subr.mxu0 0.0
  %8675 = vmatpush1.xpose.msra.mxu0 0.0
  %8676 = vmatprep.subr.mxu0 0.0
  %8677 = vmatpush1.xpose.msra.mxu0 0.0
  %8678 = vmatprep.subr.mxu0 0.0
  %8679 = vmatpush1.xpose.msra.mxu0 0.0
  %8680 = vmatprep.subr.mxu0 0.0
  %8681 = vmatpush1.xpose.msra.mxu0 0.0
  %8682 = vmatprep.subr.mxu0 0.0
  %8683 = vmatpush1.xpose.msra.mxu0 0.0
  %8684 = vmatprep.mubr.f32.mxu0 %v5973
  %8685 = vmatmul.mubr.f32.gmra.mrb[0].mxu0 %v5972
  %v8686 = vpop.f32.mrb[0].mxu0
  %v8687 = vadd.f32 %v8597, %v8686
  %v8688 = vpop.f32.mrb[0].mxu0
  %8689 = vmatprep.mubr.f32.mxu0 %v6045
  %8690 = vmatmul.mubr.f32.gmra.mrb[0].mxu0 %v6044
  %v8691 = vpop.f32.mrb[0].mxu0
  %v8692 = vadd.f32 %v8602, %v8691
  %v8693 = vpop.f32.mrb[0].mxu0
  %8694 = vmatprep.mubr.f32.mxu0 %v6117
  %8695 = vmatmul.mubr.f32.gmra.mrb[0].mxu0 %v6116
  %v8696 = vpop.f32.mrb[0].mxu0
  %v8697 = vadd.f32 %v8607, %v8696
  %v8698 = vpop.f32.mrb[0].mxu0
  %8699 = vmatprep.mubr.f32.mxu0 %v6189
  %8700 = vmatmul.mubr.f32.gmra.mrb[0].mxu0 %v6188
  %v8701 = vpop.f32.mrb[0].mxu0
  %v8702 = vadd.f32 %v8612, %v8701
  %v8703 = vpop.f32.mrb[0].mxu0
  %8704 = vmatprep.mubr.f32.mxu0 %v6261
  %8705 = vmatmul.mubr.f32.gmra.mrb[0].mxu0 %v6260
  %v8706 = vpop.f32.mrb[0].mxu0
  %v8707 = vadd.f32 %v8617, %v8706
  %v8708 = vpop.f32.mrb[0].mxu0
  %8709 = vdwg.mxu0
  %8710 = vmatprep.subr.mxu0 %v4736
  %8711 = vmatpush1.xpose.msra.mxu0 %v4735
  %8712 = vmatprep.subr.mxu0 %v4808
  %8713 = vmatpush1.xpose.msra.mxu0 %v4807
  %8714 = vmatprep.subr.mxu0 %v4880
  %8715 = vmatpush1.xpose.msra.mxu0 %v4879
  %8716 = vmatprep.subr.mxu0 %v4952
  %8717 = vmatpush1.xpose.msra.mxu0 %v4951
  %8718 = vmatprep.subr.mxu0 %v5024
  %8719 = vmatpush1.xpose.msra.mxu0 %v5023
  %8720 = vmatprep.subr.mxu0 %v5096
  %8721 = vmatpush1.xpose.msra.mxu0 %v5095
  %8722 = vmatprep.subr.mxu0 %v5168
  %8723 = vmatpush1.xpose.msra.mxu0 %v5167
  %8724 = vmatprep.subr.mxu0 %v5240
  %8725 = vmatpush1.xpose.msra.mxu0 %v5239
  %8726 = vmatprep.subr.mxu0 0.0
  %8727 = vmatpush1.xpose.msra.mxu0 0.0
  %8728 = vmatprep.subr.mxu0 0.0
  %8729 = vmatpush1.xpose.msra.mxu0 0.0
  %8730 = vmatprep.subr.mxu0 0.0
  %8731 = vmatpush1.xpose.msra.mxu0 0.0
  %8732 = vmatprep.subr.mxu0 0.0
  %8733 = vmatpush1.xpose.msra.mxu0 0.0
  %8734 = vmatprep.subr.mxu0 0.0
  %8735 = vmatpush1.xpose.msra.mxu0 0.0
  %8736 = vmatprep.subr.mxu0 0.0
  %8737 = vmatpush1.xpose.msra.mxu0 0.0
  %8738 = vmatprep.subr.mxu0 0.0
  %8739 = vmatpush1.xpose.msra.mxu0 0.0
  %8740 = vmatprep.subr.mxu0 0.0
  %8741 = vmatpush1.xpose.msra.mxu0 0.0
  %8742 = vmatprep.subr.mxu0 0.0
  %8743 = vmatpush1.xpose.msra.mxu0 0.0
  %8744 = vmatprep.subr.mxu0 0.0
  %8745 = vmatpush1.xpose.msra.mxu0 0.0
  %8746 = vmatprep.subr.mxu0 0.0
  %8747 = vmatpush1.xpose.msra.mxu0 0.0
  %8748 = vmatprep.subr.mxu0 0.0
  %8749 = vmatpush1.xpose.msra.mxu0 0.0
  %8750 = vmatprep.subr.mxu0 0.0
  %8751 = vmatpush1.xpose.msra.mxu0 0.0
  %8752 = vmatprep.subr.mxu0 0.0
  %8753 = vmatpush1.xpose.msra.mxu0 0.0
  %8754 = vmatprep.subr.mxu0 0.0
  %8755 = vmatpush1.xpose.msra.mxu0 0.0
  %8756 = vmatprep.subr.mxu0 0.0
  %8757 = vmatpush1.xpose.msra.mxu0 0.0
  %8758 = vmatprep.subr.mxu0 0.0
  %8759 = vmatpush1.xpose.msra.mxu0 0.0
  %8760 = vmatprep.subr.mxu0 0.0
  %8761 = vmatpush1.xpose.msra.mxu0 0.0
  %8762 = vmatprep.subr.mxu0 0.0
  %8763 = vmatpush1.xpose.msra.mxu0 0.0
  %8764 = vmatprep.subr.mxu0 0.0
  %8765 = vmatpush1.xpose.msra.mxu0 0.0
  %8766 = vmatprep.subr.mxu0 0.0
  %8767 = vmatpush1.xpose.msra.mxu0 0.0
  %8768 = vmatprep.subr.mxu0 0.0
  %8769 = vmatpush1.xpose.msra.mxu0 0.0
  %8770 = vmatprep.subr.mxu0 0.0
  %8771 = vmatpush1.xpose.msra.mxu0 0.0
  %8772 = vmatprep.subr.mxu0 0.0
  %8773 = vmatpush1.xpose.msra.mxu0 0.0
  %8774 = vmatprep.mubr.f32.mxu0 %v5975
  %8775 = vmatmul.mubr.f32.gmra.mrb[0].mxu0 %v5974
  %v8776 = vpop.f32.mrb[0].mxu0
  %v8777 = vadd.f32 %v8687, %v8776
  %v8778 = vpop.f32.mrb[0].mxu0
  %8779 = vmatprep.mubr.f32.mxu0 %v6047
  %8780 = vmatmul.mubr.f32.gmra.mrb[0].mxu0 %v6046
  %v8781 = vpop.f32.mrb[0].mxu0
  %v8782 = vadd.f32 %v8692, %v8781
  %v8783 = vpop.f32.mrb[0].mxu0
  %8784 = vmatprep.mubr.f32.mxu0 %v6119
  %8785 = vmatmul.mubr.f32.gmra.mrb[0].mxu0 %v6118
  %v8786 = vpop.f32.mrb[0].mxu0
  %v8787 = vadd.f32 %v8697, %v8786
  %v8788 = vpop.f32.mrb[0].mxu0
  %8789 = vmatprep.mubr.f32.mxu0 %v6191
  %8790 = vmatmul.mubr.f32.gmra.mrb[0].mxu0 %v6190
  %v8791 = vpop.f32.mrb[0].mxu0
  %v8792 = vadd.f32 %v8702, %v8791
  %v8793 = vpop.f32.mrb[0].mxu0
  %8794 = vmatprep.mubr.f32.mxu0 %v6263
  %8795 = vmatmul.mubr.f32.gmra.mrb[0].mxu0 %v6262
  %v8796 = vpop.f32.mrb[0].mxu0
  %v8797 = vadd.f32 %v8707, %v8796
  %v8798 = vpop.f32.mrb[0].mxu0
  %8799 = vdwg.mxu0
  %8800 = vmatprep.subr.mxu0 %v4738
  %8801 = vmatpush1.xpose.msra.mxu0 %v4737
  %8802 = vmatprep.subr.mxu0 %v4810
  %8803 = vmatpush1.xpose.msra.mxu0 %v4809
  %8804 = vmatprep.subr.mxu0 %v4882
  %8805 = vmatpush1.xpose.msra.mxu0 %v4881
  %8806 = vmatprep.subr.mxu0 %v4954
  %8807 = vmatpush1.xpose.msra.mxu0 %v4953
  %8808 = vmatprep.subr.mxu0 %v5026
  %8809 = vmatpush1.xpose.msra.mxu0 %v5025
  %8810 = vmatprep.subr.mxu0 %v5098
  %8811 = vmatpush1.xpose.msra.mxu0 %v5097
  %8812 = vmatprep.subr.mxu0 %v5170
  %8813 = vmatpush1.xpose.msra.mxu0 %v5169
  %8814 = vmatprep.subr.mxu0 %v5242
  %8815 = vmatpush1.xpose.msra.mxu0 %v5241
  %8816 = vmatprep.subr.mxu0 0.0
  %8817 = vmatpush1.xpose.msra.mxu0 0.0
  %8818 = vmatprep.subr.mxu0 0.0
  %8819 = vmatpush1.xpose.msra.mxu0 0.0
  %8820 = vmatprep.subr.mxu0 0.0
  %8821 = vmatpush1.xpose.msra.mxu0 0.0
  %8822 = vmatprep.subr.mxu0 0.0
  %8823 = vmatpush1.xpose.msra.mxu0 0.0
  %8824 = vmatprep.subr.mxu0 0.0
  %8825 = vmatpush1.xpose.msra.mxu0 0.0
  %8826 = vmatprep.subr.mxu0 0.0
  %8827 = vmatpush1.xpose.msra.mxu0 0.0
  %8828 = vmatprep.subr.mxu0 0.0
  %8829 = vmatpush1.xpose.msra.mxu0 0.0
  %8830 = vmatprep.subr.mxu0 0.0
  %8831 = vmatpush1.xpose.msra.mxu0 0.0
  %8832 = vmatprep.subr.mxu0 0.0
  %8833 = vmatpush1.xpose.msra.mxu0 0.0
  %8834 = vmatprep.subr.mxu0 0.0
  %8835 = vmatpush1.xpose.msra.mxu0 0.0
  %8836 = vmatprep.subr.mxu0 0.0
  %8837 = vmatpush1.xpose.msra.mxu0 0.0
  %8838 = vmatprep.subr.mxu0 0.0
  %8839 = vmatpush1.xpose.msra.mxu0 0.0
  %8840 = vmatprep.subr.mxu0 0.0
  %8841 = vmatpush1.xpose.msra.mxu0 0.0
  %8842 = vmatprep.subr.mxu0 0.0
  %8843 = vmatpush1.xpose.msra.mxu0 0.0
  %8844 = vmatprep.subr.mxu0 0.0
  %8845 = vmatpush1.xpose.msra.mxu0 0.0
  %8846 = vmatprep.subr.mxu0 0.0
  %8847 = vmatpush1.xpose.msra.mxu0 0.0
  %8848 = vmatprep.subr.mxu0 0.0
  %8849 = vmatpush1.xpose.msra.mxu0 0.0
  %8850 = vmatprep.subr.mxu0 0.0
  %8851 = vmatpush1.xpose.msra.mxu0 0.0
  %8852 = vmatprep.subr.mxu0 0.0
  %8853 = vmatpush1.xpose.msra.mxu0 0.0
  %8854 = vmatprep.subr.mxu0 0.0
  %8855 = vmatpush1.xpose.msra.mxu0 0.0
  %8856 = vmatprep.subr.mxu0 0.0
  %8857 = vmatpush1.xpose.msra.mxu0 0.0
  %8858 = vmatprep.subr.mxu0 0.0
  %8859 = vmatpush1.xpose.msra.mxu0 0.0
  %8860 = vmatprep.subr.mxu0 0.0
  %8861 = vmatpush1.xpose.msra.mxu0 0.0
  %8862 = vmatprep.subr.mxu0 0.0
  %8863 = vmatpush1.xpose.msra.mxu0 0.0
  %8864 = vmatprep.mubr.f32.mxu0 %v5977
  %8865 = vmatmul.mubr.f32.gmra.mrb[0].mxu0 %v5976
  %v8866 = vpop.f32.mrb[0].mxu0
  %v8867 = vadd.f32 %v8777, %v8866
  %v8868 = vpop.f32.mrb[0].mxu0
  %8869 = vmatprep.mubr.f32.mxu0 %v6049
  %8870 = vmatmul.mubr.f32.gmra.mrb[0].mxu0 %v6048
  %v8871 = vpop.f32.mrb[0].mxu0
  %v8872 = vadd.f32 %v8782, %v8871
  %v8873 = vpop.f32.mrb[0].mxu0
  %8874 = vmatprep.mubr.f32.mxu0 %v6121
  %8875 = vmatmul.mubr.f32.gmra.mrb[0].mxu0 %v6120
  %v8876 = vpop.f32.mrb[0].mxu0
  %v8877 = vadd.f32 %v8787, %v8876
  %v8878 = vpop.f32.mrb[0].mxu0
  %8879 = vmatprep.mubr.f32.mxu0 %v6193
  %8880 = vmatmul.mubr.f32.gmra.mrb[0].mxu0 %v6192
  %v8881 = vpop.f32.mrb[0].mxu0
  %v8882 = vadd.f32 %v8792, %v8881
  %v8883 = vpop.f32.mrb[0].mxu0
  %8884 = vmatprep.mubr.f32.mxu0 %v6265
  %8885 = vmatmul.mubr.f32.gmra.mrb[0].mxu0 %v6264
  %v8886 = vpop.f32.mrb[0].mxu0
  %v8887 = vadd.f32 %v8797, %v8886
  %v8888 = vpop.f32.mrb[0].mxu0
  %8889 = vdwg.mxu0
  %8890 = vmatprep.subr.mxu0 %v4740
  %8891 = vmatpush1.xpose.msra.mxu0 %v4739
  %8892 = vmatprep.subr.mxu0 %v4812
  %8893 = vmatpush1.xpose.msra.mxu0 %v4811
  %8894 = vmatprep.subr.mxu0 %v4884
  %8895 = vmatpush1.xpose.msra.mxu0 %v4883
  %8896 = vmatprep.subr.mxu0 %v4956
  %8897 = vmatpush1.xpose.msra.mxu0 %v4955
  %8898 = vmatprep.subr.mxu0 %v5028
  %8899 = vmatpush1.xpose.msra.mxu0 %v5027
  %8900 = vmatprep.subr.mxu0 %v5100
  %8901 = vmatpush1.xpose.msra.mxu0 %v5099
  %8902 = vmatprep.subr.mxu0 %v5172
  %8903 = vmatpush1.xpose.msra.mxu0 %v5171
  %8904 = vmatprep.subr.mxu0 %v5244
  %8905 = vmatpush1.xpose.msra.mxu0 %v5243
  %8906 = vmatprep.subr.mxu0 0.0
  %8907 = vmatpush1.xpose.msra.mxu0 0.0
  %8908 = vmatprep.subr.mxu0 0.0
  %8909 = vmatpush1.xpose.msra.mxu0 0.0
  %8910 = vmatprep.subr.mxu0 0.0
  %8911 = vmatpush1.xpose.msra.mxu0 0.0
  %8912 = vmatprep.subr.mxu0 0.0
  %8913 = vmatpush1.xpose.msra.mxu0 0.0
  %8914 = vmatprep.subr.mxu0 0.0
  %8915 = vmatpush1.xpose.msra.mxu0 0.0
  %8916 = vmatprep.subr.mxu0 0.0
  %8917 = vmatpush1.xpose.msra.mxu0 0.0
  %8918 = vmatprep.subr.mxu0 0.0
  %8919 = vmatpush1.xpose.msra.mxu0 0.0
  %8920 = vmatprep.subr.mxu0 0.0
  %8921 = vmatpush1.xpose.msra.mxu0 0.0
  %8922 = vmatprep.subr.mxu0 0.0
  %8923 = vmatpush1.xpose.msra.mxu0 0.0
  %8924 = vmatprep.subr.mxu0 0.0
  %8925 = vmatpush1.xpose.msra.mxu0 0.0
  %8926 = vmatprep.subr.mxu0 0.0
  %8927 = vmatpush1.xpose.msra.mxu0 0.0
  %8928 = vmatprep.subr.mxu0 0.0
  %8929 = vmatpush1.xpose.msra.mxu0 0.0
  %8930 = vmatprep.subr.mxu0 0.0
  %8931 = vmatpush1.xpose.msra.mxu0 0.0
  %8932 = vmatprep.subr.mxu0 0.0
  %8933 = vmatpush1.xpose.msra.mxu0 0.0
  %8934 = vmatprep.subr.mxu0 0.0
  %8935 = vmatpush1.xpose.msra.mxu0 0.0
  %8936 = vmatprep.subr.mxu0 0.0
  %8937 = vmatpush1.xpose.msra.mxu0 0.0
  %8938 = vmatprep.subr.mxu0 0.0
  %8939 = vmatpush1.xpose.msra.mxu0 0.0
  %8940 = vmatprep.subr.mxu0 0.0
  %8941 = vmatpush1.xpose.msra.mxu0 0.0
  %8942 = vmatprep.subr.mxu0 0.0
  %8943 = vmatpush1.xpose.msra.mxu0 0.0
  %8944 = vmatprep.subr.mxu0 0.0
  %8945 = vmatpush1.xpose.msra.mxu0 0.0
  %8946 = vmatprep.subr.mxu0 0.0
  %8947 = vmatpush1.xpose.msra.mxu0 0.0
  %8948 = vmatprep.subr.mxu0 0.0
  %8949 = vmatpush1.xpose.msra.mxu0 0.0
  %8950 = vmatprep.subr.mxu0 0.0
  %8951 = vmatpush1.xpose.msra.mxu0 0.0
  %8952 = vmatprep.subr.mxu0 0.0
  %8953 = vmatpush1.xpose.msra.mxu0 0.0
  %8954 = vmatprep.mubr.f32.mxu0 %v5979
  %8955 = vmatmul.mubr.f32.gmra.mrb[0].mxu0 %v5978
  %v8956 = vpop.f32.mrb[0].mxu0
  %v8957 = vadd.f32 %v8867, %v8956
  %v8958 = vpop.f32.mrb[0].mxu0
  %8959 = vmatprep.mubr.f32.mxu0 %v6051
  %8960 = vmatmul.mubr.f32.gmra.mrb[0].mxu0 %v6050
  %v8961 = vpop.f32.mrb[0].mxu0
  %v8962 = vadd.f32 %v8872, %v8961
  %v8963 = vpop.f32.mrb[0].mxu0
  %8964 = vmatprep.mubr.f32.mxu0 %v6123
  %8965 = vmatmul.mubr.f32.gmra.mrb[0].mxu0 %v6122
  %v8966 = vpop.f32.mrb[0].mxu0
  %v8967 = vadd.f32 %v8877, %v8966
  %v8968 = vpop.f32.mrb[0].mxu0
  %8969 = vmatprep.mubr.f32.mxu0 %v6195
  %8970 = vmatmul.mubr.f32.gmra.mrb[0].mxu0 %v6194
  %v8971 = vpop.f32.mrb[0].mxu0
  %v8972 = vadd.f32 %v8882, %v8971
  %v8973 = vpop.f32.mrb[0].mxu0
  %8974 = vmatprep.mubr.f32.mxu0 %v6267
  %8975 = vmatmul.mubr.f32.gmra.mrb[0].mxu0 %v6266
  %v8976 = vpop.f32.mrb[0].mxu0
  %v8977 = vadd.f32 %v8887, %v8976
  %v8978 = vpop.f32.mrb[0].mxu0
  %8979 = vdwg.mxu0
  %8980 = vmatprep.subr.mxu0 %v4742
  %8981 = vmatpush1.xpose.msra.mxu0 %v4741
  %8982 = vmatprep.subr.mxu0 %v4814
  %8983 = vmatpush1.xpose.msra.mxu0 %v4813
  %8984 = vmatprep.subr.mxu0 %v4886
  %8985 = vmatpush1.xpose.msra.mxu0 %v4885
  %8986 = vmatprep.subr.mxu0 %v4958
  %8987 = vmatpush1.xpose.msra.mxu0 %v4957
  %8988 = vmatprep.subr.mxu0 %v5030
  %8989 = vmatpush1.xpose.msra.mxu0 %v5029
  %8990 = vmatprep.subr.mxu0 %v5102
  %8991 = vmatpush1.xpose.msra.mxu0 %v5101
  %8992 = vmatprep.subr.mxu0 %v5174
  %8993 = vmatpush1.xpose.msra.mxu0 %v5173
  %8994 = vmatprep.subr.mxu0 %v5246
  %8995 = vmatpush1.xpose.msra.mxu0 %v5245
  %8996 = vmatprep.subr.mxu0 0.0
  %8997 = vmatpush1.xpose.msra.mxu0 0.0
  %8998 = vmatprep.subr.mxu0 0.0
  %8999 = vmatpush1.xpose.msra.mxu0 0.0
  %9000 = vmatprep.subr.mxu0 0.0
  %9001 = vmatpush1.xpose.msra.mxu0 0.0
  %9002 = vmatprep.subr.mxu0 0.0
  %9003 = vmatpush1.xpose.msra.mxu0 0.0
  %9004 = vmatprep.subr.mxu0 0.0
  %9005 = vmatpush1.xpose.msra.mxu0 0.0
  %9006 = vmatprep.subr.mxu0 0.0
  %9007 = vmatpush1.xpose.msra.mxu0 0.0
  %9008 = vmatprep.subr.mxu0 0.0
  %9009 = vmatpush1.xpose.msra.mxu0 0.0
  %9010 = vmatprep.subr.mxu0 0.0
  %9011 = vmatpush1.xpose.msra.mxu0 0.0
  %9012 = vmatprep.subr.mxu0 0.0
  %9013 = vmatpush1.xpose.msra.mxu0 0.0
  %9014 = vmatprep.subr.mxu0 0.0
  %9015 = vmatpush1.xpose.msra.mxu0 0.0
  %9016 = vmatprep.subr.mxu0 0.0
  %9017 = vmatpush1.xpose.msra.mxu0 0.0
  %9018 = vmatprep.subr.mxu0 0.0
  %9019 = vmatpush1.xpose.msra.mxu0 0.0
  %9020 = vmatprep.subr.mxu0 0.0
  %9021 = vmatpush1.xpose.msra.mxu0 0.0
  %9022 = vmatprep.subr.mxu0 0.0
  %9023 = vmatpush1.xpose.msra.mxu0 0.0
  %9024 = vmatprep.subr.mxu0 0.0
  %9025 = vmatpush1.xpose.msra.mxu0 0.0
  %9026 = vmatprep.subr.mxu0 0.0
  %9027 = vmatpush1.xpose.msra.mxu0 0.0
  %9028 = vmatprep.subr.mxu0 0.0
  %9029 = vmatpush1.xpose.msra.mxu0 0.0
  %9030 = vmatprep.subr.mxu0 0.0
  %9031 = vmatpush1.xpose.msra.mxu0 0.0
  %9032 = vmatprep.subr.mxu0 0.0
  %9033 = vmatpush1.xpose.msra.mxu0 0.0
  %9034 = vmatprep.subr.mxu0 0.0
  %9035 = vmatpush1.xpose.msra.mxu0 0.0
  %9036 = vmatprep.subr.mxu0 0.0
  %9037 = vmatpush1.xpose.msra.mxu0 0.0
  %9038 = vmatprep.subr.mxu0 0.0
  %9039 = vmatpush1.xpose.msra.mxu0 0.0
  %9040 = vmatprep.subr.mxu0 0.0
  %9041 = vmatpush1.xpose.msra.mxu0 0.0
  %9042 = vmatprep.subr.mxu0 0.0
  %9043 = vmatpush1.xpose.msra.mxu0 0.0
  %9044 = vmatprep.mubr.f32.mxu0 %v5981
  %9045 = vmatmul.mubr.f32.gmra.mrb[0].mxu0 %v5980
  %v9046 = vpop.f32.mrb[0].mxu0
  %v9047 = vadd.f32 %v8957, %v9046
  %v9048 = vpop.f32.mrb[0].mxu0
  %9049 = vmatprep.mubr.f32.mxu0 %v6053
  %9050 = vmatmul.mubr.f32.gmra.mrb[0].mxu0 %v6052
  %v9051 = vpop.f32.mrb[0].mxu0
  %v9052 = vadd.f32 %v8962, %v9051
  %v9053 = vpop.f32.mrb[0].mxu0
  %9054 = vmatprep.mubr.f32.mxu0 %v6125
  %9055 = vmatmul.mubr.f32.gmra.mrb[0].mxu0 %v6124
  %v9056 = vpop.f32.mrb[0].mxu0
  %v9057 = vadd.f32 %v8967, %v9056
  %v9058 = vpop.f32.mrb[0].mxu0
  %9059 = vmatprep.mubr.f32.mxu0 %v6197
  %9060 = vmatmul.mubr.f32.gmra.mrb[0].mxu0 %v6196
  %v9061 = vpop.f32.mrb[0].mxu0
  %v9062 = vadd.f32 %v8972, %v9061
  %v9063 = vpop.f32.mrb[0].mxu0
  %9064 = vmatprep.mubr.f32.mxu0 %v6269
  %9065 = vmatmul.mubr.f32.gmra.mrb[0].mxu0 %v6268
  %v9066 = vpop.f32.mrb[0].mxu0
  %v9067 = vadd.f32 %v8977, %v9066
  %v9068 = vpop.f32.mrb[0].mxu0
  %9069 = vdwg.mxu0
  %9070 = vmatprep.subr.mxu0 %v4744
  %9071 = vmatpush1.xpose.msra.mxu0 %v4743
  %9072 = vmatprep.subr.mxu0 %v4816
  %9073 = vmatpush1.xpose.msra.mxu0 %v4815
  %9074 = vmatprep.subr.mxu0 %v4888
  %9075 = vmatpush1.xpose.msra.mxu0 %v4887
  %9076 = vmatprep.subr.mxu0 %v4960
  %9077 = vmatpush1.xpose.msra.mxu0 %v4959
  %9078 = vmatprep.subr.mxu0 %v5032
  %9079 = vmatpush1.xpose.msra.mxu0 %v5031
  %9080 = vmatprep.subr.mxu0 %v5104
  %9081 = vmatpush1.xpose.msra.mxu0 %v5103
  %9082 = vmatprep.subr.mxu0 %v5176
  %9083 = vmatpush1.xpose.msra.mxu0 %v5175
  %9084 = vmatprep.subr.mxu0 %v5248
  %9085 = vmatpush1.xpose.msra.mxu0 %v5247
  %9086 = vmatprep.subr.mxu0 0.0
  %9087 = vmatpush1.xpose.msra.mxu0 0.0
  %9088 = vmatprep.subr.mxu0 0.0
  %9089 = vmatpush1.xpose.msra.mxu0 0.0
  %9090 = vmatprep.subr.mxu0 0.0
  %9091 = vmatpush1.xpose.msra.mxu0 0.0
  %9092 = vmatprep.subr.mxu0 0.0
  %9093 = vmatpush1.xpose.msra.mxu0 0.0
  %9094 = vmatprep.subr.mxu0 0.0
  %9095 = vmatpush1.xpose.msra.mxu0 0.0
  %9096 = vmatprep.subr.mxu0 0.0
  %9097 = vmatpush1.xpose.msra.mxu0 0.0
  %9098 = vmatprep.subr.mxu0 0.0
  %9099 = vmatpush1.xpose.msra.mxu0 0.0
  %9100 = vmatprep.subr.mxu0 0.0
  %9101 = vmatpush1.xpose.msra.mxu0 0.0
  %9102 = vmatprep.subr.mxu0 0.0
  %9103 = vmatpush1.xpose.msra.mxu0 0.0
  %9104 = vmatprep.subr.mxu0 0.0
  %9105 = vmatpush1.xpose.msra.mxu0 0.0
  %9106 = vmatprep.subr.mxu0 0.0
  %9107 = vmatpush1.xpose.msra.mxu0 0.0
  %9108 = vmatprep.subr.mxu0 0.0
  %9109 = vmatpush1.xpose.msra.mxu0 0.0
  %9110 = vmatprep.subr.mxu0 0.0
  %9111 = vmatpush1.xpose.msra.mxu0 0.0
  %9112 = vmatprep.subr.mxu0 0.0
  %9113 = vmatpush1.xpose.msra.mxu0 0.0
  %9114 = vmatprep.subr.mxu0 0.0
  %9115 = vmatpush1.xpose.msra.mxu0 0.0
  %9116 = vmatprep.subr.mxu0 0.0
  %9117 = vmatpush1.xpose.msra.mxu0 0.0
  %9118 = vmatprep.subr.mxu0 0.0
  %9119 = vmatpush1.xpose.msra.mxu0 0.0
  %9120 = vmatprep.subr.mxu0 0.0
  %9121 = vmatpush1.xpose.msra.mxu0 0.0
  %9122 = vmatprep.subr.mxu0 0.0
  %9123 = vmatpush1.xpose.msra.mxu0 0.0
  %9124 = vmatprep.subr.mxu0 0.0
  %9125 = vmatpush1.xpose.msra.mxu0 0.0
  %9126 = vmatprep.subr.mxu0 0.0
  %9127 = vmatpush1.xpose.msra.mxu0 0.0
  %9128 = vmatprep.subr.mxu0 0.0
  %9129 = vmatpush1.xpose.msra.mxu0 0.0
  %9130 = vmatprep.subr.mxu0 0.0
  %9131 = vmatpush1.xpose.msra.mxu0 0.0
  %9132 = vmatprep.subr.mxu0 0.0
  %9133 = vmatpush1.xpose.msra.mxu0 0.0
  %9134 = vmatprep.mubr.f32.mxu0 %v5983
  %9135 = vmatmul.mubr.f32.gmra.mrb[0].mxu0 %v5982
  %v9136 = vpop.f32.mrb[0].mxu0
  %v9137 = vadd.f32 %v9047, %v9136
  %v9138 = vpop.f32.mrb[0].mxu0
  %9139 = vmatprep.mubr.f32.mxu0 %v6055
  %9140 = vmatmul.mubr.f32.gmra.mrb[0].mxu0 %v6054
  %v9141 = vpop.f32.mrb[0].mxu0
  %v9142 = vadd.f32 %v9052, %v9141
  %v9143 = vpop.f32.mrb[0].mxu0
  %9144 = vmatprep.mubr.f32.mxu0 %v6127
  %9145 = vmatmul.mubr.f32.gmra.mrb[0].mxu0 %v6126
  %v9146 = vpop.f32.mrb[0].mxu0
  %v9147 = vadd.f32 %v9057, %v9146
  %v9148 = vpop.f32.mrb[0].mxu0
  %9149 = vmatprep.mubr.f32.mxu0 %v6199
  %9150 = vmatmul.mubr.f32.gmra.mrb[0].mxu0 %v6198
  %v9151 = vpop.f32.mrb[0].mxu0
  %v9152 = vadd.f32 %v9062, %v9151
  %v9153 = vpop.f32.mrb[0].mxu0
  %9154 = vmatprep.mubr.f32.mxu0 %v6271
  %9155 = vmatmul.mubr.f32.gmra.mrb[0].mxu0 %v6270
  %v9156 = vpop.f32.mrb[0].mxu0
  %v9157 = vadd.f32 %v9067, %v9156
  %v9158 = vpop.f32.mrb[0].mxu0
  %9159 = vdwg.mxu0
  %9160 = vmatprep.subr.mxu0 %v4746
  %9161 = vmatpush1.xpose.msra.mxu0 %v4745
  %9162 = vmatprep.subr.mxu0 %v4818
  %9163 = vmatpush1.xpose.msra.mxu0 %v4817
  %9164 = vmatprep.subr.mxu0 %v4890
  %9165 = vmatpush1.xpose.msra.mxu0 %v4889
  %9166 = vmatprep.subr.mxu0 %v4962
  %9167 = vmatpush1.xpose.msra.mxu0 %v4961
  %9168 = vmatprep.subr.mxu0 %v5034
  %9169 = vmatpush1.xpose.msra.mxu0 %v5033
  %9170 = vmatprep.subr.mxu0 %v5106
  %9171 = vmatpush1.xpose.msra.mxu0 %v5105
  %9172 = vmatprep.subr.mxu0 %v5178
  %9173 = vmatpush1.xpose.msra.mxu0 %v5177
  %9174 = vmatprep.subr.mxu0 %v5250
  %9175 = vmatpush1.xpose.msra.mxu0 %v5249
  %9176 = vmatprep.subr.mxu0 0.0
  %9177 = vmatpush1.xpose.msra.mxu0 0.0
  %9178 = vmatprep.subr.mxu0 0.0
  %9179 = vmatpush1.xpose.msra.mxu0 0.0
  %9180 = vmatprep.subr.mxu0 0.0
  %9181 = vmatpush1.xpose.msra.mxu0 0.0
  %9182 = vmatprep.subr.mxu0 0.0
  %9183 = vmatpush1.xpose.msra.mxu0 0.0
  %9184 = vmatprep.subr.mxu0 0.0
  %9185 = vmatpush1.xpose.msra.mxu0 0.0
  %9186 = vmatprep.subr.mxu0 0.0
  %9187 = vmatpush1.xpose.msra.mxu0 0.0
  %9188 = vmatprep.subr.mxu0 0.0
  %9189 = vmatpush1.xpose.msra.mxu0 0.0
  %9190 = vmatprep.subr.mxu0 0.0
  %9191 = vmatpush1.xpose.msra.mxu0 0.0
  %9192 = vmatprep.subr.mxu0 0.0
  %9193 = vmatpush1.xpose.msra.mxu0 0.0
  %9194 = vmatprep.subr.mxu0 0.0
  %9195 = vmatpush1.xpose.msra.mxu0 0.0
  %9196 = vmatprep.subr.mxu0 0.0
  %9197 = vmatpush1.xpose.msra.mxu0 0.0
  %9198 = vmatprep.subr.mxu0 0.0
  %9199 = vmatpush1.xpose.msra.mxu0 0.0
  %9200 = vmatprep.subr.mxu0 0.0
  %9201 = vmatpush1.xpose.msra.mxu0 0.0
  %9202 = vmatprep.subr.mxu0 0.0
  %9203 = vmatpush1.xpose.msra.mxu0 0.0
  %9204 = vmatprep.subr.mxu0 0.0
  %9205 = vmatpush1.xpose.msra.mxu0 0.0
  %9206 = vmatprep.subr.mxu0 0.0
  %9207 = vmatpush1.xpose.msra.mxu0 0.0
  %9208 = vmatprep.subr.mxu0 0.0
  %9209 = vmatpush1.xpose.msra.mxu0 0.0
  %9210 = vmatprep.subr.mxu0 0.0
  %9211 = vmatpush1.xpose.msra.mxu0 0.0
  %9212 = vmatprep.subr.mxu0 0.0
  %9213 = vmatpush1.xpose.msra.mxu0 0.0
  %9214 = vmatprep.subr.mxu0 0.0
  %9215 = vmatpush1.xpose.msra.mxu0 0.0
  %9216 = vmatprep.subr.mxu0 0.0
  %9217 = vmatpush1.xpose.msra.mxu0 0.0
  %9218 = vmatprep.subr.mxu0 0.0
  %9219 = vmatpush1.xpose.msra.mxu0 0.0
  %9220 = vmatprep.subr.mxu0 0.0
  %9221 = vmatpush1.xpose.msra.mxu0 0.0
  %9222 = vmatprep.subr.mxu0 0.0
  %9223 = vmatpush1.xpose.msra.mxu0 0.0
  %9224 = vmatprep.mubr.f32.mxu0 %v5985
  %9225 = vmatmul.mubr.f32.gmra.mrb[0].mxu0 %v5984
  %v9226 = vpop.f32.mrb[0].mxu0
  %v9227 = vadd.f32 %v9137, %v9226
  %v9228 = vpop.f32.mrb[0].mxu0
  %9229 = vmatprep.mubr.f32.mxu0 %v6057
  %9230 = vmatmul.mubr.f32.gmra.mrb[0].mxu0 %v6056
  %v9231 = vpop.f32.mrb[0].mxu0
  %v9232 = vadd.f32 %v9142, %v9231
  %v9233 = vpop.f32.mrb[0].mxu0
  %9234 = vmatprep.mubr.f32.mxu0 %v6129
  %9235 = vmatmul.mubr.f32.gmra.mrb[0].mxu0 %v6128
  %v9236 = vpop.f32.mrb[0].mxu0
  %v9237 = vadd.f32 %v9147, %v9236
  %v9238 = vpop.f32.mrb[0].mxu0
  %9239 = vmatprep.mubr.f32.mxu0 %v6201
  %9240 = vmatmul.mubr.f32.gmra.mrb[0].mxu0 %v6200
  %v9241 = vpop.f32.mrb[0].mxu0
  %v9242 = vadd.f32 %v9152, %v9241
  %v9243 = vpop.f32.mrb[0].mxu0
  %9244 = vmatprep.mubr.f32.mxu0 %v6273
  %9245 = vmatmul.mubr.f32.gmra.mrb[0].mxu0 %v6272
  %v9246 = vpop.f32.mrb[0].mxu0
  %v9247 = vadd.f32 %v9157, %v9246
  %v9248 = vpop.f32.mrb[0].mxu0
  %9249 = vdwg.mxu0
  %9250 = vmatprep.subr.mxu0 %v4748
  %9251 = vmatpush1.xpose.msra.mxu0 %v4747
  %9252 = vmatprep.subr.mxu0 %v4820
  %9253 = vmatpush1.xpose.msra.mxu0 %v4819
  %9254 = vmatprep.subr.mxu0 %v4892
  %9255 = vmatpush1.xpose.msra.mxu0 %v4891
  %9256 = vmatprep.subr.mxu0 %v4964
  %9257 = vmatpush1.xpose.msra.mxu0 %v4963
  %9258 = vmatprep.subr.mxu0 %v5036
  %9259 = vmatpush1.xpose.msra.mxu0 %v5035
  %9260 = vmatprep.subr.mxu0 %v5108
  %9261 = vmatpush1.xpose.msra.mxu0 %v5107
  %9262 = vmatprep.subr.mxu0 %v5180
  %9263 = vmatpush1.xpose.msra.mxu0 %v5179
  %9264 = vmatprep.subr.mxu0 %v5252
  %9265 = vmatpush1.xpose.msra.mxu0 %v5251
  %9266 = vmatprep.subr.mxu0 0.0
  %9267 = vmatpush1.xpose.msra.mxu0 0.0
  %9268 = vmatprep.subr.mxu0 0.0
  %9269 = vmatpush1.xpose.msra.mxu0 0.0
  %9270 = vmatprep.subr.mxu0 0.0
  %9271 = vmatpush1.xpose.msra.mxu0 0.0
  %9272 = vmatprep.subr.mxu0 0.0
  %9273 = vmatpush1.xpose.msra.mxu0 0.0
  %9274 = vmatprep.subr.mxu0 0.0
  %9275 = vmatpush1.xpose.msra.mxu0 0.0
  %9276 = vmatprep.subr.mxu0 0.0
  %9277 = vmatpush1.xpose.msra.mxu0 0.0
  %9278 = vmatprep.subr.mxu0 0.0
  %9279 = vmatpush1.xpose.msra.mxu0 0.0
  %9280 = vmatprep.subr.mxu0 0.0
  %9281 = vmatpush1.xpose.msra.mxu0 0.0
  %9282 = vmatprep.subr.mxu0 0.0
  %9283 = vmatpush1.xpose.msra.mxu0 0.0
  %9284 = vmatprep.subr.mxu0 0.0
  %9285 = vmatpush1.xpose.msra.mxu0 0.0
  %9286 = vmatprep.subr.mxu0 0.0
  %9287 = vmatpush1.xpose.msra.mxu0 0.0
  %9288 = vmatprep.subr.mxu0 0.0
  %9289 = vmatpush1.xpose.msra.mxu0 0.0
  %9290 = vmatprep.subr.mxu0 0.0
  %9291 = vmatpush1.xpose.msra.mxu0 0.0
  %9292 = vmatprep.subr.mxu0 0.0
  %9293 = vmatpush1.xpose.msra.mxu0 0.0
  %9294 = vmatprep.subr.mxu0 0.0
  %9295 = vmatpush1.xpose.msra.mxu0 0.0
  %9296 = vmatprep.subr.mxu0 0.0
  %9297 = vmatpush1.xpose.msra.mxu0 0.0
  %9298 = vmatprep.subr.mxu0 0.0
  %9299 = vmatpush1.xpose.msra.mxu0 0.0
  %9300 = vmatprep.subr.mxu0 0.0
  %9301 = vmatpush1.xpose.msra.mxu0 0.0
  %9302 = vmatprep.subr.mxu0 0.0
  %9303 = vmatpush1.xpose.msra.mxu0 0.0
  %9304 = vmatprep.subr.mxu0 0.0
  %9305 = vmatpush1.xpose.msra.mxu0 0.0
  %9306 = vmatprep.subr.mxu0 0.0
  %9307 = vmatpush1.xpose.msra.mxu0 0.0
  %9308 = vmatprep.subr.mxu0 0.0
  %9309 = vmatpush1.xpose.msra.mxu0 0.0
  %9310 = vmatprep.subr.mxu0 0.0
  %9311 = vmatpush1.xpose.msra.mxu0 0.0
  %9312 = vmatprep.subr.mxu0 0.0
  %9313 = vmatpush1.xpose.msra.mxu0 0.0
  %9314 = vmatprep.mubr.f32.mxu0 %v5987
  %9315 = vmatmul.mubr.f32.gmra.mrb[0].mxu0 %v5986
  %v9316 = vpop.f32.mrb[0].mxu0
  %v9317 = vadd.f32 %v9227, %v9316
  %v9318 = vpop.f32.mrb[0].mxu0
  %9319 = vmatprep.mubr.f32.mxu0 %v6059
  %9320 = vmatmul.mubr.f32.gmra.mrb[0].mxu0 %v6058
  %v9321 = vpop.f32.mrb[0].mxu0
  %v9322 = vadd.f32 %v9232, %v9321
  %v9323 = vpop.f32.mrb[0].mxu0
  %9324 = vmatprep.mubr.f32.mxu0 %v6131
  %9325 = vmatmul.mubr.f32.gmra.mrb[0].mxu0 %v6130
  %v9326 = vpop.f32.mrb[0].mxu0
  %v9327 = vadd.f32 %v9237, %v9326
  %v9328 = vpop.f32.mrb[0].mxu0
  %9329 = vmatprep.mubr.f32.mxu0 %v6203
  %9330 = vmatmul.mubr.f32.gmra.mrb[0].mxu0 %v6202
  %v9331 = vpop.f32.mrb[0].mxu0
  %v9332 = vadd.f32 %v9242, %v9331
  %v9333 = vpop.f32.mrb[0].mxu0
  %9334 = vmatprep.mubr.f32.mxu0 %v6275
  %9335 = vmatmul.mubr.f32.gmra.mrb[0].mxu0 %v6274
  %v9336 = vpop.f32.mrb[0].mxu0
  %v9337 = vadd.f32 %v9247, %v9336
  %v9338 = vpop.f32.mrb[0].mxu0
  %9339 = vdwg.mxu0
  %9340 = vmatprep.subr.mxu0 %v4750
  %9341 = vmatpush1.xpose.msra.mxu0 %v4749
  %9342 = vmatprep.subr.mxu0 %v4822
  %9343 = vmatpush1.xpose.msra.mxu0 %v4821
  %9344 = vmatprep.subr.mxu0 %v4894
  %9345 = vmatpush1.xpose.msra.mxu0 %v4893
  %9346 = vmatprep.subr.mxu0 %v4966
  %9347 = vmatpush1.xpose.msra.mxu0 %v4965
  %9348 = vmatprep.subr.mxu0 %v5038
  %9349 = vmatpush1.xpose.msra.mxu0 %v5037
  %9350 = vmatprep.subr.mxu0 %v5110
  %9351 = vmatpush1.xpose.msra.mxu0 %v5109
  %9352 = vmatprep.subr.mxu0 %v5182
  %9353 = vmatpush1.xpose.msra.mxu0 %v5181
  %9354 = vmatprep.subr.mxu0 %v5254
  %9355 = vmatpush1.xpose.msra.mxu0 %v5253
  %9356 = vmatprep.subr.mxu0 0.0
  %9357 = vmatpush1.xpose.msra.mxu0 0.0
  %9358 = vmatprep.subr.mxu0 0.0
  %9359 = vmatpush1.xpose.msra.mxu0 0.0
  %9360 = vmatprep.subr.mxu0 0.0
  %9361 = vmatpush1.xpose.msra.mxu0 0.0
  %9362 = vmatprep.subr.mxu0 0.0
  %9363 = vmatpush1.xpose.msra.mxu0 0.0
  %9364 = vmatprep.subr.mxu0 0.0
  %9365 = vmatpush1.xpose.msra.mxu0 0.0
  %9366 = vmatprep.subr.mxu0 0.0
  %9367 = vmatpush1.xpose.msra.mxu0 0.0
  %9368 = vmatprep.subr.mxu0 0.0
  %9369 = vmatpush1.xpose.msra.mxu0 0.0
  %9370 = vmatprep.subr.mxu0 0.0
  %9371 = vmatpush1.xpose.msra.mxu0 0.0
  %9372 = vmatprep.subr.mxu0 0.0
  %9373 = vmatpush1.xpose.msra.mxu0 0.0
  %9374 = vmatprep.subr.mxu0 0.0
  %9375 = vmatpush1.xpose.msra.mxu0 0.0
  %9376 = vmatprep.subr.mxu0 0.0
  %9377 = vmatpush1.xpose.msra.mxu0 0.0
  %9378 = vmatprep.subr.mxu0 0.0
  %9379 = vmatpush1.xpose.msra.mxu0 0.0
  %9380 = vmatprep.subr.mxu0 0.0
  %9381 = vmatpush1.xpose.msra.mxu0 0.0
  %9382 = vmatprep.subr.mxu0 0.0
  %9383 = vmatpush1.xpose.msra.mxu0 0.0
  %9384 = vmatprep.subr.mxu0 0.0
  %9385 = vmatpush1.xpose.msra.mxu0 0.0
  %9386 = vmatprep.subr.mxu0 0.0
  %9387 = vmatpush1.xpose.msra.mxu0 0.0
  %9388 = vmatprep.subr.mxu0 0.0
  %9389 = vmatpush1.xpose.msra.mxu0 0.0
  %9390 = vmatprep.subr.mxu0 0.0
  %9391 = vmatpush1.xpose.msra.mxu0 0.0
  %9392 = vmatprep.subr.mxu0 0.0
  %9393 = vmatpush1.xpose.msra.mxu0 0.0
  %9394 = vmatprep.subr.mxu0 0.0
  %9395 = vmatpush1.xpose.msra.mxu0 0.0
  %9396 = vmatprep.subr.mxu0 0.0
  %9397 = vmatpush1.xpose.msra.mxu0 0.0
  %9398 = vmatprep.subr.mxu0 0.0
  %9399 = vmatpush1.xpose.msra.mxu0 0.0
  %9400 = vmatprep.subr.mxu0 0.0
  %9401 = vmatpush1.xpose.msra.mxu0 0.0
  %9402 = vmatprep.subr.mxu0 0.0
  %9403 = vmatpush1.xpose.msra.mxu0 0.0
  %9404 = vmatprep.mubr.f32.mxu0 %v5989
  %9405 = vmatmul.mubr.f32.gmra.mrb[0].mxu0 %v5988
  %v9406 = vpop.f32.mrb[0].mxu0
  %v9407 = vadd.f32 %v9317, %v9406
  %v9408 = vpop.f32.mrb[0].mxu0
  %9409 = vmatprep.mubr.f32.mxu0 %v6061
  %9410 = vmatmul.mubr.f32.gmra.mrb[0].mxu0 %v6060
  %v9411 = vpop.f32.mrb[0].mxu0
  %v9412 = vadd.f32 %v9322, %v9411
  %v9413 = vpop.f32.mrb[0].mxu0
  %9414 = vmatprep.mubr.f32.mxu0 %v6133
  %9415 = vmatmul.mubr.f32.gmra.mrb[0].mxu0 %v6132
  %v9416 = vpop.f32.mrb[0].mxu0
  %v9417 = vadd.f32 %v9327, %v9416
  %v9418 = vpop.f32.mrb[0].mxu0
  %9419 = vmatprep.mubr.f32.mxu0 %v6205
  %9420 = vmatmul.mubr.f32.gmra.mrb[0].mxu0 %v6204
  %v9421 = vpop.f32.mrb[0].mxu0
  %v9422 = vadd.f32 %v9332, %v9421
  %v9423 = vpop.f32.mrb[0].mxu0
  %9424 = vmatprep.mubr.f32.mxu0 %v6277
  %9425 = vmatmul.mubr.f32.gmra.mrb[0].mxu0 %v6276
  %v9426 = vpop.f32.mrb[0].mxu0
  %v9427 = vadd.f32 %v9337, %v9426
  %v9428 = vpop.f32.mrb[0].mxu0
  %9429 = vdwg.mxu0
  %9430 = vmatprep.subr.mxu0 %v4752
  %9431 = vmatpush1.xpose.msra.mxu0 %v4751
  %9432 = vmatprep.subr.mxu0 %v4824
  %9433 = vmatpush1.xpose.msra.mxu0 %v4823
  %9434 = vmatprep.subr.mxu0 %v4896
  %9435 = vmatpush1.xpose.msra.mxu0 %v4895
  %9436 = vmatprep.subr.mxu0 %v4968
  %9437 = vmatpush1.xpose.msra.mxu0 %v4967
  %9438 = vmatprep.subr.mxu0 %v5040
  %9439 = vmatpush1.xpose.msra.mxu0 %v5039
  %9440 = vmatprep.subr.mxu0 %v5112
  %9441 = vmatpush1.xpose.msra.mxu0 %v5111
  %9442 = vmatprep.subr.mxu0 %v5184
  %9443 = vmatpush1.xpose.msra.mxu0 %v5183
  %9444 = vmatprep.subr.mxu0 %v5256
  %9445 = vmatpush1.xpose.msra.mxu0 %v5255
  %9446 = vmatprep.subr.mxu0 0.0
  %9447 = vmatpush1.xpose.msra.mxu0 0.0
  %9448 = vmatprep.subr.mxu0 0.0
  %9449 = vmatpush1.xpose.msra.mxu0 0.0
  %9450 = vmatprep.subr.mxu0 0.0
  %9451 = vmatpush1.xpose.msra.mxu0 0.0
  %9452 = vmatprep.subr.mxu0 0.0
  %9453 = vmatpush1.xpose.msra.mxu0 0.0
  %9454 = vmatprep.subr.mxu0 0.0
  %9455 = vmatpush1.xpose.msra.mxu0 0.0
  %9456 = vmatprep.subr.mxu0 0.0
  %9457 = vmatpush1.xpose.msra.mxu0 0.0
  %9458 = vmatprep.subr.mxu0 0.0
  %9459 = vmatpush1.xpose.msra.mxu0 0.0
  %9460 = vmatprep.subr.mxu0 0.0
  %9461 = vmatpush1.xpose.msra.mxu0 0.0
  %9462 = vmatprep.subr.mxu0 0.0
  %9463 = vmatpush1.xpose.msra.mxu0 0.0
  %9464 = vmatprep.subr.mxu0 0.0
  %9465 = vmatpush1.xpose.msra.mxu0 0.0
  %9466 = vmatprep.subr.mxu0 0.0
  %9467 = vmatpush1.xpose.msra.mxu0 0.0
  %9468 = vmatprep.subr.mxu0 0.0
  %9469 = vmatpush1.xpose.msra.mxu0 0.0
  %9470 = vmatprep.subr.mxu0 0.0
  %9471 = vmatpush1.xpose.msra.mxu0 0.0
  %9472 = vmatprep.subr.mxu0 0.0
  %9473 = vmatpush1.xpose.msra.mxu0 0.0
  %9474 = vmatprep.subr.mxu0 0.0
  %9475 = vmatpush1.xpose.msra.mxu0 0.0
  %9476 = vmatprep.subr.mxu0 0.0
  %9477 = vmatpush1.xpose.msra.mxu0 0.0
  %9478 = vmatprep.subr.mxu0 0.0
  %9479 = vmatpush1.xpose.msra.mxu0 0.0
  %9480 = vmatprep.subr.mxu0 0.0
  %9481 = vmatpush1.xpose.msra.mxu0 0.0
  %9482 = vmatprep.subr.mxu0 0.0
  %9483 = vmatpush1.xpose.msra.mxu0 0.0
  %9484 = vmatprep.subr.mxu0 0.0
  %9485 = vmatpush1.xpose.msra.mxu0 0.0
  %9486 = vmatprep.subr.mxu0 0.0
  %9487 = vmatpush1.xpose.msra.mxu0 0.0
  %9488 = vmatprep.subr.mxu0 0.0
  %9489 = vmatpush1.xpose.msra.mxu0 0.0
  %9490 = vmatprep.subr.mxu0 0.0
  %9491 = vmatpush1.xpose.msra.mxu0 0.0
  %9492 = vmatprep.subr.mxu0 0.0
  %9493 = vmatpush1.xpose.msra.mxu0 0.0
  %9494 = vmatprep.mubr.f32.mxu0 %v5991
  %9495 = vmatmul.mubr.f32.gmra.mrb[0].mxu0 %v5990
  %v9496 = vpop.f32.mrb[0].mxu0
  %v9497 = vadd.f32 %v9407, %v9496
  %v9498 = vpop.f32.mrb[0].mxu0
  %9499 = vmatprep.mubr.f32.mxu0 %v6063
  %9500 = vmatmul.mubr.f32.gmra.mrb[0].mxu0 %v6062
  %v9501 = vpop.f32.mrb[0].mxu0
  %v9502 = vadd.f32 %v9412, %v9501
  %v9503 = vpop.f32.mrb[0].mxu0
  %9504 = vmatprep.mubr.f32.mxu0 %v6135
  %9505 = vmatmul.mubr.f32.gmra.mrb[0].mxu0 %v6134
  %v9506 = vpop.f32.mrb[0].mxu0
  %v9507 = vadd.f32 %v9417, %v9506
  %v9508 = vpop.f32.mrb[0].mxu0
  %9509 = vmatprep.mubr.f32.mxu0 %v6207
  %9510 = vmatmul.mubr.f32.gmra.mrb[0].mxu0 %v6206
  %v9511 = vpop.f32.mrb[0].mxu0
  %v9512 = vadd.f32 %v9422, %v9511
  %v9513 = vpop.f32.mrb[0].mxu0
  %9514 = vmatprep.mubr.f32.mxu0 %v6279
  %9515 = vmatmul.mubr.f32.gmra.mrb[0].mxu0 %v6278
  %v9516 = vpop.f32.mrb[0].mxu0
  %v9517 = vadd.f32 %v9427, %v9516
  %v9518 = vpop.f32.mrb[0].mxu0
  %9519 = vdwg.mxu0
  %v9520 = vrsqrt.pop %v9497
  %v9521 = vmul.f32 %v9497, %v9520
  %vm9522 = vcmp.eq.f32.partialorder %v9497, inf
  %v9523 = vsel %vm9522, %v9497, %v9521
  %vm9524 = vcmp.eq.f32.partialorder %v9497, 0.0
  %v9525 = vand.u32 %v9497, 2147483648
  %v9526 = vsel %vm9524, %v9525, %v9523
  %v9527 = vrsqrt.pop %v9502
  %v9528 = vmul.f32 %v9502, %v9527
  %vm9529 = vcmp.eq.f32.partialorder %v9502, inf
  %v9530 = vsel %vm9529, %v9502, %v9528
  %vm9531 = vcmp.eq.f32.partialorder %v9502, 0.0
  %v9532 = vand.u32 %v9502, 2147483648
  %v9533 = vsel %vm9531, %v9532, %v9530
  %v9534 = vrsqrt.pop %v9507
  %v9535 = vmul.f32 %v9507, %v9534
  %vm9536 = vcmp.eq.f32.partialorder %v9507, inf
  %v9537 = vsel %vm9536, %v9507, %v9535
  %vm9538 = vcmp.eq.f32.partialorder %v9507, 0.0
  %v9539 = vand.u32 %v9507, 2147483648
  %v9540 = vsel %vm9538, %v9539, %v9537
  %v9541 = vrsqrt.pop %v9512
  %v9542 = vmul.f32 %v9512, %v9541
  %vm9543 = vcmp.eq.f32.partialorder %v9512, inf
  %v9544 = vsel %vm9543, %v9512, %v9542
  %vm9545 = vcmp.eq.f32.partialorder %v9512, 0.0
  %v9546 = vand.u32 %v9512, 2147483648
  %v9547 = vsel %vm9545, %v9546, %v9544
  %v9548 = vrsqrt.pop %v9517
  %v9549 = vmul.f32 %v9517, %v9548
  %vm9550 = vcmp.eq.f32.partialorder %v9517, inf
  %v9551 = vsel %vm9550, %v9517, %v9549
  %vm9552 = vcmp.eq.f32.partialorder %v9517, 0.0
  %v9553 = vand.u32 %v9517, 2147483648
  %v9554 = vsel %vm9552, %v9553, %v9551
  %v9555 = vmul.f32 %v9526, %v9526
  %v9556 = vmul.f32 %v9533, %v9533
  %v9557 = vmul.f32 %v9540, %v9540
  %v9558 = vmul.f32 %v9547, %v9547
  %v9559 = vmul.f32 %v9554, %v9554
  %vm9560 = vcmask 523264
  %v9561 = vsel %vm9560, %v9555, 0.0
  %9562 = vadd.xlane.f32.xlu0 %v9561
  %v9563 = vpop.xlane.xlu0 %9562
  %v9564 = vsel %vm9560, %v9556, 0.0
  %9565 = vadd.xlane.f32.xlu0 %v9564
  %v9566 = vpop.xlane.xlu0 %9565
  %v9567 = vsel %vm9560, %v9557, 0.0
  %9568 = vadd.xlane.f32.xlu0 %v9567
  %v9569 = vpop.xlane.xlu0 %9568
  %v9570 = vsel %vm9560, %v9558, 0.0
  %9571 = vadd.xlane.f32.xlu0 %v9570
  %v9572 = vpop.xlane.xlu0 %9571
  %vm9573 = vcmask 519168
  %v9574 = vsel %vm9573, %v9559, 0.0
  %9575 = vadd.xlane.f32.xlu0 %v9574
  %v9576 = vpop.xlane.xlu0 %9575
  %v9577 = vrsqrt.pop %v9563
  %v9578 = vrsqrt.pop %v9566
  %v9579 = vrsqrt.pop %v9569
  %v9580 = vrsqrt.pop %v9572
  %v9581 = vrsqrt.pop %v9576
  %v9582 = vmul.f32 %v9526, %v9577
  %v9583 = vmul.f32 %v9533, %v9578
  %v9584 = vmul.f32 %v9540, %v9579
  %v9585 = vmul.f32 %v9547, %v9580
  %v9586 = vmul.f32 %v9554, %v9581
  %v9587 = vld [vmem:[%s5] sm:$0xff]
  %v9588 = vld [vmem:[%s5 + $0x8] sm:$0xf]
  %vm9589 = vcmask 293888
  %v9591 = vsel %vm9589, %v9587, 0
  %v9594 = vsel %vm9589, %v9588, 0
  %vm9596 = vcmask 1043456
  %v9598 = vsel %vm9596, %v9586, 0
  %9600 = vmatprep.subr.mxu0 0.0
  %9601 = vmatpush1.msra.mxu0 %v9582
  %9602 = vmatprep.subr.mxu0 0.0
  %9603 = vmatpush1.msra.mxu0 %v9583
  %9604 = vmatprep.subr.mxu0 0.0
  %9605 = vmatpush1.msra.mxu0 %v9584
  %9606 = vmatprep.subr.mxu0 0.0
  %9607 = vmatpush1.msra.mxu0 %v9585
  %9608 = vmatprep.subr.mxu0 0.0
  %9609 = vmatpush1.msra.mxu0 %v9598
  %9610 = vmatprep.subr.mxu0 0.0
  %9611 = vmatpush1.msra.mxu0 0.0
  %9612 = vmatprep.subr.mxu0 0.0
  %9613 = vmatpush1.msra.mxu0 0.0
  %9614 = vmatprep.subr.mxu0 0.0
  %9615 = vmatpush1.msra.mxu0 0.0
  %9616 = vmatprep.subr.mxu0 0.0
  %9617 = vmatpush1.msra.mxu0 0.0
  %9618 = vmatprep.subr.mxu0 0.0
  %9619 = vmatpush1.msra.mxu0 0.0
  %9620 = vmatprep.subr.mxu0 0.0
  %9621 = vmatpush1.msra.mxu0 0.0
  %9622 = vmatprep.subr.mxu0 0.0
  %9623 = vmatpush1.msra.mxu0 0.0
  %9624 = vmatprep.subr.mxu0 0.0
  %9625 = vmatpush1.msra.mxu0 0.0
  %9626 = vmatprep.subr.mxu0 0.0
  %9627 = vmatpush1.msra.mxu0 0.0
  %9628 = vmatprep.subr.mxu0 0.0
  %9629 = vmatpush1.msra.mxu0 0.0
  %9630 = vmatprep.subr.mxu0 0.0
  %9631 = vmatpush1.msra.mxu0 0.0
  %9632 = vmatprep.subr.mxu0 0.0
  %9633 = vmatpush1.msra.mxu0 0.0
  %9634 = vmatprep.subr.mxu0 0.0
  %9635 = vmatpush1.msra.mxu0 0.0
  %9636 = vmatprep.subr.mxu0 0.0
  %9637 = vmatpush1.msra.mxu0 0.0
  %9638 = vmatprep.subr.mxu0 0.0
  %9639 = vmatpush1.msra.mxu0 0.0
  %9640 = vmatprep.subr.mxu0 0.0
  %9641 = vmatpush1.msra.mxu0 0.0
  %9642 = vmatprep.subr.mxu0 0.0
  %9643 = vmatpush1.msra.mxu0 0.0
  %9644 = vmatprep.subr.mxu0 0.0
  %9645 = vmatpush1.msra.mxu0 0.0
  %9646 = vmatprep.subr.mxu0 0.0
  %9647 = vmatpush1.msra.mxu0 0.0
  %9648 = vmatprep.subr.mxu0 0.0
  %9649 = vmatpush1.msra.mxu0 0.0
  %9650 = vmatprep.subr.mxu0 0.0
  %9651 = vmatpush1.msra.mxu0 0.0
  %9652 = vmatprep.subr.mxu0 0.0
  %9653 = vmatpush1.msra.mxu0 0.0
  %9654 = vmatprep.subr.mxu0 0.0
  %9655 = vmatpush1.msra.mxu0 0.0
  %9656 = vmatprep.subr.mxu0 0.0
  %9657 = vmatpush1.msra.mxu0 0.0
  %9658 = vmatprep.subr.mxu0 0.0
  %9659 = vmatpush1.msra.mxu0 0.0
  %9660 = vmatprep.subr.mxu0 0.0
  %9661 = vmatpush1.msra.mxu0 0.0
  %9662 = vmatprep.subr.mxu0 0.0
  %9663 = vmatpush1.msra.mxu0 0.0
  %9664 = vmatprep.mubr.f32.mxu0 0.0
  %9665 = vmatmul.mubr.f32.gmra.mrb[0].mxu0 %v9591
  %v9666 = vpop.f32.mrb[0].mxu0
  %v9667 = vadd.f32 0.0, %v9666
  %v9668 = vpop.f32.mrb[0].mxu0
  %9669 = vmatprep.mubr.f32.mxu0 0.0
  %9670 = vmatmul.mubr.f32.gmra.mrb[0].mxu0 %v9594
  %v9671 = vpop.f32.mrb[0].mxu0
  %v9672 = vadd.f32 0.0, %v9671
  %v9673 = vpop.f32.mrb[0].mxu0
  %9674 = vdwg.mxu0
  %v9675 = vld [vmem:[%s6] sm:$0xff]
  %v9676 = vld [vmem:[%s6 + $0x8] sm:$0xff]
  %v9677 = vld [vmem:[%s6 + $0x10] sm:$0xff]
  %v9679 = vsel %vm9589, %v9675, 0
  %v9682 = vsel %vm9589, %v9676, 0
  %v9685 = vsel %vm9589, %v9677, 0
  %9687 = vmatprep.subr.mxu0 0.0
  %9688 = vmatpush1.msra.mxu0 %v9582
  %9689 = vmatprep.subr.mxu0 0.0
  %9690 = vmatpush1.msra.mxu0 %v9583
  %9691 = vmatprep.subr.mxu0 0.0
  %9692 = vmatpush1.msra.mxu0 %v9584
  %9693 = vmatprep.subr.mxu0 0.0
  %9694 = vmatpush1.msra.mxu0 %v9585
  %9695 = vmatprep.subr.mxu0 0.0
  %9696 = vmatpush1.msra.mxu0 %v9598
  %9697 = vmatprep.subr.mxu0 0.0
  %9698 = vmatpush1.msra.mxu0 0.0
  %9699 = vmatprep.subr.mxu0 0.0
  %9700 = vmatpush1.msra.mxu0 0.0
  %9701 = vmatprep.subr.mxu0 0.0
  %9702 = vmatpush1.msra.mxu0 0.0
  %9703 = vmatprep.subr.mxu0 0.0
  %9704 = vmatpush1.msra.mxu0 0.0
  %9705 = vmatprep.subr.mxu0 0.0
  %9706 = vmatpush1.msra.mxu0 0.0
  %9707 = vmatprep.subr.mxu0 0.0
  %9708 = vmatpush1.msra.mxu0 0.0
  %9709 = vmatprep.subr.mxu0 0.0
  %9710 = vmatpush1.msra.mxu0 0.0
  %9711 = vmatprep.subr.mxu0 0.0
  %9712 = vmatpush1.msra.mxu0 0.0
  %9713 = vmatprep.subr.mxu0 0.0
  %9714 = vmatpush1.msra.mxu0 0.0
  %9715 = vmatprep.subr.mxu0 0.0
  %9716 = vmatpush1.msra.mxu0 0.0
  %9717 = vmatprep.subr.mxu0 0.0
  %9718 = vmatpush1.msra.mxu0 0.0
  %9719 = vmatprep.subr.mxu0 0.0
  %9720 = vmatpush1.msra.mxu0 0.0
  %9721 = vmatprep.subr.mxu0 0.0
  %9722 = vmatpush1.msra.mxu0 0.0
  %9723 = vmatprep.subr.mxu0 0.0
  %9724 = vmatpush1.msra.mxu0 0.0
  %9725 = vmatprep.subr.mxu0 0.0
  %9726 = vmatpush1.msra.mxu0 0.0
  %9727 = vmatprep.subr.mxu0 0.0
  %9728 = vmatpush1.msra.mxu0 0.0
  %9729 = vmatprep.subr.mxu0 0.0
  %9730 = vmatpush1.msra.mxu0 0.0
  %9731 = vmatprep.subr.mxu0 0.0
  %9732 = vmatpush1.msra.mxu0 0.0
  %9733 = vmatprep.subr.mxu0 0.0
  %9734 = vmatpush1.msra.mxu0 0.0
  %9735 = vmatprep.subr.mxu0 0.0
  %9736 = vmatpush1.msra.mxu0 0.0
  %9737 = vmatprep.subr.mxu0 0.0
  %9738 = vmatpush1.msra.mxu0 0.0
  %9739 = vmatprep.subr.mxu0 0.0
  %9740 = vmatpush1.msra.mxu0 0.0
  %9741 = vmatprep.subr.mxu0 0.0
  %9742 = vmatpush1.msra.mxu0 0.0
  %9743 = vmatprep.subr.mxu0 0.0
  %9744 = vmatpush1.msra.mxu0 0.0
  %9745 = vmatprep.subr.mxu0 0.0
  %9746 = vmatpush1.msra.mxu0 0.0
  %9747 = vmatprep.subr.mxu0 0.0
  %9748 = vmatpush1.msra.mxu0 0.0
  %9749 = vmatprep.subr.mxu0 0.0
  %9750 = vmatpush1.msra.mxu0 0.0
  %9751 = vmatprep.mubr.f32.mxu0 0.0
  %9752 = vmatmul.mubr.f32.gmra.mrb[0].mxu0 %v9679
  %v9753 = vpop.f32.mrb[0].mxu0
  %v9754 = vadd.f32 0.0, %v9753
  %v9755 = vpop.f32.mrb[0].mxu0
  %9756 = vmatprep.mubr.f32.mxu0 0.0
  %9757 = vmatmul.mubr.f32.gmra.mrb[0].mxu0 %v9682
  %v9758 = vpop.f32.mrb[0].mxu0
  %v9759 = vadd.f32 0.0, %v9758
  %v9760 = vpop.f32.mrb[0].mxu0
  %9761 = vmatprep.mubr.f32.mxu0 0.0
  %9762 = vmatmul.mubr.f32.gmra.mrb[0].mxu0 %v9685
  %v9763 = vpop.f32.mrb[0].mxu0
  %v9764 = vadd.f32 0.0, %v9763
  %v9765 = vpop.f32.mrb[0].mxu0
  %9766 = vdwg.mxu0
  %v9767 = vlaneseq
  %v9768 = vand.u32 %v9767, 127
  %v9769 = vmul.u32 %v5258, 3
  %vm9770 = vcmp.ge.s32.totalorder %v9768, %v9769
  %v9771 = vadd.s32 %v5258, 1
  %v9772 = vmul.u32 %v9771, 3
  %vm9773 = vcmp.lt.s32.totalorder %v9768, %v9772
  %vm9774 = vmand %vm9770, %vm9773
  %v9775 = vsel %vm9774, 0.33333334, 0.0
  %vm9776 = vcmask 97280
  %v9778 = vsel %vm9776, %v9775, 0
  %v9781 = vsel %vm9596, %v9672, 0
  %9783 = vmatprep.subr.mxu0 0.0
  %9784 = vmatpush1.msra.mxu0 %v9667
  %9785 = vmatprep.subr.mxu0 0.0
  %9786 = vmatpush1.msra.mxu0 %v9781
  %9787 = vmatprep.subr.mxu0 0.0
  %9788 = vmatpush1.msra.mxu0 0.0
  %9789 = vmatprep.subr.mxu0 0.0
  %9790 = vmatpush1.msra.mxu0 0.0
  %9791 = vmatprep.subr.mxu0 0.0
  %9792 = vmatpush1.msra.mxu0 0.0
  %9793 = vmatprep.subr.mxu0 0.0
  %9794 = vmatpush1.msra.mxu0 0.0
  %9795 = vmatprep.subr.mxu0 0.0
  %9796 = vmatpush1.msra.mxu0 0.0
  %9797 = vmatprep.subr.mxu0 0.0
  %9798 = vmatpush1.msra.mxu0 0.0
  %9799 = vmatprep.subr.mxu0 0.0
  %9800 = vmatpush1.msra.mxu0 0.0
  %9801 = vmatprep.subr.mxu0 0.0
  %9802 = vmatpush1.msra.mxu0 0.0
  %9803 = vmatprep.subr.mxu0 0.0
  %9804 = vmatpush1.msra.mxu0 0.0
  %9805 = vmatprep.subr.mxu0 0.0
  %9806 = vmatpush1.msra.mxu0 0.0
  %9807 = vmatprep.subr.mxu0 0.0
  %9808 = vmatpush1.msra.mxu0 0.0
  %9809 = vmatprep.subr.mxu0 0.0
  %9810 = vmatpush1.msra.mxu0 0.0
  %9811 = vmatprep.subr.mxu0 0.0
  %9812 = vmatpush1.msra.mxu0 0.0
  %9813 = vmatprep.subr.mxu0 0.0
  %9814 = vmatpush1.msra.mxu0 0.0
  %9815 = vmatprep.subr.mxu0 0.0
  %9816 = vmatpush1.msra.mxu0 0.0
  %9817 = vmatprep.subr.mxu0 0.0
  %9818 = vmatpush1.msra.mxu0 0.0
  %9819 = vmatprep.subr.mxu0 0.0
  %9820 = vmatpush1.msra.mxu0 0.0
  %9821 = vmatprep.subr.mxu0 0.0
  %9822 = vmatpush1.msra.mxu0 0.0
  %9823 = vmatprep.subr.mxu0 0.0
  %9824 = vmatpush1.msra.mxu0 0.0
  %9825 = vmatprep.subr.mxu0 0.0
  %9826 = vmatpush1.msra.mxu0 0.0
  %9827 = vmatprep.subr.mxu0 0.0
  %9828 = vmatpush1.msra.mxu0 0.0
  %9829 = vmatprep.subr.mxu0 0.0
  %9830 = vmatpush1.msra.mxu0 0.0
  %9831 = vmatprep.subr.mxu0 0.0
  %9832 = vmatpush1.msra.mxu0 0.0
  %9833 = vmatprep.subr.mxu0 0.0
  %9834 = vmatpush1.msra.mxu0 0.0
  %9835 = vmatprep.subr.mxu0 0.0
  %9836 = vmatpush1.msra.mxu0 0.0
  %9837 = vmatprep.subr.mxu0 0.0
  %9838 = vmatpush1.msra.mxu0 0.0
  %9839 = vmatprep.subr.mxu0 0.0
  %9840 = vmatpush1.msra.mxu0 0.0
  %9841 = vmatprep.subr.mxu0 0.0
  %9842 = vmatpush1.msra.mxu0 0.0
  %9843 = vmatprep.subr.mxu0 0.0
  %9844 = vmatpush1.msra.mxu0 0.0
  %9845 = vmatprep.subr.mxu0 0.0
  %9846 = vmatpush1.msra.mxu0 0.0
  %9847 = vmatprep.mubr.f32.mxu0 0.0
  %9848 = vmatmul.mubr.f32.gmra.mrb[0].mxu0 %v9778
  %v9849 = vpop.f32.mrb[0].mxu0
  %v9850 = vadd.f32 0.0, %v9849
  %v9851 = vpop.f32.mrb[0].mxu0
  %9852 = vdwg.mxu0
  %v9853 = vmul.f32 %v9850, %v9850
  %v9854 = vsel %vm9573, %v9853, 0.0
  %9855 = vadd.xlane.f32.xlu0 %v9854
  %v9856 = vpop.xlane.xlu0 %9855
  %v9857 = vrsqrt.pop %v9856
  %v9858 = vmul.f32 %v9850, %v9857
  %v9860 = vsel %vm9560, %v9858, 0
  %v9863 = vsel %vm9560, %v9754, 0
  %v9866 = vsel %vm9560, %v9759, 0
  %v9869 = vsel %vm9560, %v9764, 0
  %9871 = vmatprep.subr.mxu0 0.0
  %9872 = vmatpush1.xpose.msra.mxu0 %v9863
  %9873 = vmatprep.subr.mxu0 0.0
  %9874 = vmatpush1.xpose.msra.mxu0 %v9866
  %9875 = vmatprep.subr.mxu0 0.0
  %9876 = vmatpush1.xpose.msra.mxu0 %v9869
  %9877 = vmatprep.subr.mxu0 0.0
  %9878 = vmatpush1.xpose.msra.mxu0 0.0
  %9879 = vmatprep.subr.mxu0 0.0
  %9880 = vmatpush1.xpose.msra.mxu0 0.0
  %9881 = vmatprep.subr.mxu0 0.0
  %9882 = vmatpush1.xpose.msra.mxu0 0.0
  %9883 = vmatprep.subr.mxu0 0.0
  %9884 = vmatpush1.xpose.msra.mxu0 0.0
  %9885 = vmatprep.subr.mxu0 0.0
  %9886 = vmatpush1.xpose.msra.mxu0 0.0
  %9887 = vmatprep.subr.mxu0 0.0
  %9888 = vmatpush1.xpose.msra.mxu0 0.0
  %9889 = vmatprep.subr.mxu0 0.0
  %9890 = vmatpush1.xpose.msra.mxu0 0.0
  %9891 = vmatprep.subr.mxu0 0.0
  %9892 = vmatpush1.xpose.msra.mxu0 0.0
  %9893 = vmatprep.subr.mxu0 0.0
  %9894 = vmatpush1.xpose.msra.mxu0 0.0
  %9895 = vmatprep.subr.mxu0 0.0
  %9896 = vmatpush1.xpose.msra.mxu0 0.0
  %9897 = vmatprep.subr.mxu0 0.0
  %9898 = vmatpush1.xpose.msra.mxu0 0.0
  %9899 = vmatprep.subr.mxu0 0.0
  %9900 = vmatpush1.xpose.msra.mxu0 0.0
  %9901 = vmatprep.subr.mxu0 0.0
  %9902 = vmatpush1.xpose.msra.mxu0 0.0
  %9903 = vmatprep.subr.mxu0 0.0
  %9904 = vmatpush1.xpose.msra.mxu0 0.0
  %9905 = vmatprep.subr.mxu0 0.0
  %9906 = vmatpush1.xpose.msra.mxu0 0.0
  %9907 = vmatprep.subr.mxu0 0.0
  %9908 = vmatpush1.xpose.msra.mxu0 0.0
  %9909 = vmatprep.subr.mxu0 0.0
  %9910 = vmatpush1.xpose.msra.mxu0 0.0
  %9911 = vmatprep.subr.mxu0 0.0
  %9912 = vmatpush1.xpose.msra.mxu0 0.0
  %9913 = vmatprep.subr.mxu0 0.0
  %9914 = vmatpush1.xpose.msra.mxu0 0.0
  %9915 = vmatprep.subr.mxu0 0.0
  %9916 = vmatpush1.xpose.msra.mxu0 0.0
  %9917 = vmatprep.subr.mxu0 0.0
  %9918 = vmatpush1.xpose.msra.mxu0 0.0
  %9919 = vmatprep.subr.mxu0 0.0
  %9920 = vmatpush1.xpose.msra.mxu0 0.0
  %9921 = vmatprep.subr.mxu0 0.0
  %9922 = vmatpush1.xpose.msra.mxu0 0.0
  %9923 = vmatprep.subr.mxu0 0.0
  %9924 = vmatpush1.xpose.msra.mxu0 0.0
  %9925 = vmatprep.subr.mxu0 0.0
  %9926 = vmatpush1.xpose.msra.mxu0 0.0
  %9927 = vmatprep.subr.mxu0 0.0
  %9928 = vmatpush1.xpose.msra.mxu0 0.0
  %9929 = vmatprep.subr.mxu0 0.0
  %9930 = vmatpush1.xpose.msra.mxu0 0.0
  %9931 = vmatprep.subr.mxu0 0.0
  %9932 = vmatpush1.xpose.msra.mxu0 0.0
  %9933 = vmatprep.subr.mxu0 0.0
  %9934 = vmatpush1.xpose.msra.mxu0 0.0
  %9935 = vmatprep.mubr.f32.mxu0 0.0
  %9936 = vmatmul.mubr.f32.gmra.mrb[0].mxu0 %v9860
  %v9937 = vpop.f32.mrb[0].mxu0
  %v9938 = vadd.f32 0.0, %v9937
  %v9939 = vpop.f32.mrb[0].mxu0
  %9940 = vdwg.mxu0
  %vm9941 = vcmask 191488
  %v9942 = vsel %vm9941, %v9938, -inf
  %v9943 = vrot.slane %v9942, 4
  %v9944 = vmax.f32 %v9942, %v9943
  %v9945 = vrot.slane %v9944, 2
  %v9946 = vmax.f32 %v9944, %v9945
  %v9947 = vrot.slane %v9946, 1
  %v9948 = vmax.f32 %v9946, %v9947
  %v9949 = vcvt.s32.f32 %v5258
  %vm9950 = vcmp.eq.f32.partialorder %v9938, %v9948
  %v9951 = vsel %vm9950, %v9949, 4.0
  %v9952 = vsel %vm9941, %v9951, inf
  %v9953 = vrot.slane %v9952, 4
  %v9954 = vmin.f32 %v9952, %v9953
  %v9955 = vrot.slane %v9954, 2
  %v9956 = vmin.f32 %v9954, %v9955
  %v9957 = vrot.slane %v9956, 1
  %v9958 = vmin.f32 %v9956, %v9957
  %vm9959 = vcmp.eq.f32.partialorder %v9949, %v9958
  %v9960 = vsel %vm9959, %v9938, -1e+30
  %v9962 = vsel %vm9560, %v9667, 0
  %v9964 = vsel %vm9560, %v9672, 0
  %9966 = vmatprep.subr.mxu0 0.0
  %9967 = vmatpush1.xpose.msra.mxu0 %v9962
  %9968 = vmatprep.subr.mxu0 0.0
  %9969 = vmatpush1.xpose.msra.mxu0 %v9964
  %9970 = vmatprep.subr.mxu0 0.0
  %9971 = vmatpush1.xpose.msra.mxu0 0.0
  %9972 = vmatprep.subr.mxu0 0.0
  %9973 = vmatpush1.xpose.msra.mxu0 0.0
  %9974 = vmatprep.subr.mxu0 0.0
  %9975 = vmatpush1.xpose.msra.mxu0 0.0
  %9976 = vmatprep.subr.mxu0 0.0
  %9977 = vmatpush1.xpose.msra.mxu0 0.0
  %9978 = vmatprep.subr.mxu0 0.0
  %9979 = vmatpush1.xpose.msra.mxu0 0.0
  %9980 = vmatprep.subr.mxu0 0.0
  %9981 = vmatpush1.xpose.msra.mxu0 0.0
  %9982 = vmatprep.subr.mxu0 0.0
  %9983 = vmatpush1.xpose.msra.mxu0 0.0
  %9984 = vmatprep.subr.mxu0 0.0
  %9985 = vmatpush1.xpose.msra.mxu0 0.0
  %9986 = vmatprep.subr.mxu0 0.0
  %9987 = vmatpush1.xpose.msra.mxu0 0.0
  %9988 = vmatprep.subr.mxu0 0.0
  %9989 = vmatpush1.xpose.msra.mxu0 0.0
  %9990 = vmatprep.subr.mxu0 0.0
  %9991 = vmatpush1.xpose.msra.mxu0 0.0
  %9992 = vmatprep.subr.mxu0 0.0
  %9993 = vmatpush1.xpose.msra.mxu0 0.0
  %9994 = vmatprep.subr.mxu0 0.0
  %9995 = vmatpush1.xpose.msra.mxu0 0.0
  %9996 = vmatprep.subr.mxu0 0.0
  %9997 = vmatpush1.xpose.msra.mxu0 0.0
  %9998 = vmatprep.subr.mxu0 0.0
  %9999 = vmatpush1.xpose.msra.mxu0 0.0
  %10000 = vmatprep.subr.mxu0 0.0
  %10001 = vmatpush1.xpose.msra.mxu0 0.0
  %10002 = vmatprep.subr.mxu0 0.0
  %10003 = vmatpush1.xpose.msra.mxu0 0.0
  %10004 = vmatprep.subr.mxu0 0.0
  %10005 = vmatpush1.xpose.msra.mxu0 0.0
  %10006 = vmatprep.subr.mxu0 0.0
  %10007 = vmatpush1.xpose.msra.mxu0 0.0
  %10008 = vmatprep.subr.mxu0 0.0
  %10009 = vmatpush1.xpose.msra.mxu0 0.0
  %10010 = vmatprep.subr.mxu0 0.0
  %10011 = vmatpush1.xpose.msra.mxu0 0.0
  %10012 = vmatprep.subr.mxu0 0.0
  %10013 = vmatpush1.xpose.msra.mxu0 0.0
  %10014 = vmatprep.subr.mxu0 0.0
  %10015 = vmatpush1.xpose.msra.mxu0 0.0
  %10016 = vmatprep.subr.mxu0 0.0
  %10017 = vmatpush1.xpose.msra.mxu0 0.0
  %10018 = vmatprep.subr.mxu0 0.0
  %10019 = vmatpush1.xpose.msra.mxu0 0.0
  %10020 = vmatprep.subr.mxu0 0.0
  %10021 = vmatpush1.xpose.msra.mxu0 0.0
  %10022 = vmatprep.subr.mxu0 0.0
  %10023 = vmatpush1.xpose.msra.mxu0 0.0
  %10024 = vmatprep.subr.mxu0 0.0
  %10025 = vmatpush1.xpose.msra.mxu0 0.0
  %10026 = vmatprep.subr.mxu0 0.0
  %10027 = vmatpush1.xpose.msra.mxu0 0.0
  %10028 = vmatprep.subr.mxu0 0.0
  %10029 = vmatpush1.xpose.msra.mxu0 0.0
  %10030 = vmatprep.mubr.f32.mxu0 0.0
  %10031 = vmatmul.mubr.f32.gmra.mrb[0].mxu0 %v9860
  %v10032 = vpop.f32.mrb[0].mxu0
  %v10033 = vadd.f32 0.0, %v10032
  %v10034 = vpop.f32.mrb[0].mxu0
  %10035 = vdwg.mxu0
  %v10036 = vsel %vm9774, %v10033, -1e+30
  %v10037 = vsel %vm9941, %v9960, -inf
  %10038 = vmax.xlane.f32.xlu0 %v10037
  %v10039 = vpop.xlane.xlu0 %10038
  %vm10040 = vcmask 93184
  %v10041 = vsel %vm10040, %v10036, -inf
  %10042 = vmax.xlane.f32.xlu0 %v10041
  %v10043 = vpop.xlane.xlu0 %10042
  %v10044 = vmax.f32 %v10039, %v10043
  %v10045 = vsub.f32 %v9960, %v10044
  %v10046 = vmul.f32 %v10045, 1.442695
  %v10047 = vpow.pop %v10046
  %v10048 = vsub.f32 %v10036, %v10044
  %v10049 = vmul.f32 %v10048, 1.442695
  %v10050 = vpow.pop %v10049
  %v10051 = vsel %vm9941, %v10047, 0.0
  %10052 = vadd.xlane.f32.xlu0 %v10051
  %v10053 = vpop.xlane.xlu0 %10052
  %v10054 = vsel %vm10040, %v10050, 0.0
  %10055 = vadd.xlane.f32.xlu0 %v10054
  %v10056 = vpop.xlane.xlu0 %10055
  %v10057 = vadd.f32 %v10053, %v10056
  %v10058 = vrcp.pop %v10057
  %v10059 = vmul.f32 %v10047, %v10058
  %v10060 = vmul.f32 %v10050, %v10058
  %v10062 = vsel %vm9776, %v10060, 0
  %10064 = vmatprep.subr.mxu0 0.0
  %10065 = vmatpush1.msra.mxu0 %v9667
  %10066 = vmatprep.subr.mxu0 0.0
  %10067 = vmatpush1.msra.mxu0 %v9781
  %10068 = vmatprep.subr.mxu0 0.0
  %10069 = vmatpush1.msra.mxu0 0.0
  %10070 = vmatprep.subr.mxu0 0.0
  %10071 = vmatpush1.msra.mxu0 0.0
  %10072 = vmatprep.subr.mxu0 0.0
  %10073 = vmatpush1.msra.mxu0 0.0
  %10074 = vmatprep.subr.mxu0 0.0
  %10075 = vmatpush1.msra.mxu0 0.0
  %10076 = vmatprep.subr.mxu0 0.0
  %10077 = vmatpush1.msra.mxu0 0.0
  %10078 = vmatprep.subr.mxu0 0.0
  %10079 = vmatpush1.msra.mxu0 0.0
  %10080 = vmatprep.subr.mxu0 0.0
  %10081 = vmatpush1.msra.mxu0 0.0
  %10082 = vmatprep.subr.mxu0 0.0
  %10083 = vmatpush1.msra.mxu0 0.0
  %10084 = vmatprep.subr.mxu0 0.0
  %10085 = vmatpush1.msra.mxu0 0.0
  %10086 = vmatprep.subr.mxu0 0.0
  %10087 = vmatpush1.msra.mxu0 0.0
  %10088 = vmatprep.subr.mxu0 0.0
  %10089 = vmatpush1.msra.mxu0 0.0
  %10090 = vmatprep.subr.mxu0 0.0
  %10091 = vmatpush1.msra.mxu0 0.0
  %10092 = vmatprep.subr.mxu0 0.0
  %10093 = vmatpush1.msra.mxu0 0.0
  %10094 = vmatprep.subr.mxu0 0.0
  %10095 = vmatpush1.msra.mxu0 0.0
  %10096 = vmatprep.subr.mxu0 0.0
  %10097 = vmatpush1.msra.mxu0 0.0
  %10098 = vmatprep.subr.mxu0 0.0
  %10099 = vmatpush1.msra.mxu0 0.0
  %10100 = vmatprep.subr.mxu0 0.0
  %10101 = vmatpush1.msra.mxu0 0.0
  %10102 = vmatprep.subr.mxu0 0.0
  %10103 = vmatpush1.msra.mxu0 0.0
  %10104 = vmatprep.subr.mxu0 0.0
  %10105 = vmatpush1.msra.mxu0 0.0
  %10106 = vmatprep.subr.mxu0 0.0
  %10107 = vmatpush1.msra.mxu0 0.0
  %10108 = vmatprep.subr.mxu0 0.0
  %10109 = vmatpush1.msra.mxu0 0.0
  %10110 = vmatprep.subr.mxu0 0.0
  %10111 = vmatpush1.msra.mxu0 0.0
  %10112 = vmatprep.subr.mxu0 0.0
  %10113 = vmatpush1.msra.mxu0 0.0
  %10114 = vmatprep.subr.mxu0 0.0
  %10115 = vmatpush1.msra.mxu0 0.0
  %10116 = vmatprep.subr.mxu0 0.0
  %10117 = vmatpush1.msra.mxu0 0.0
  %10118 = vmatprep.subr.mxu0 0.0
  %10119 = vmatpush1.msra.mxu0 0.0
  %10120 = vmatprep.subr.mxu0 0.0
  %10121 = vmatpush1.msra.mxu0 0.0
  %10122 = vmatprep.subr.mxu0 0.0
  %10123 = vmatpush1.msra.mxu0 0.0
  %10124 = vmatprep.subr.mxu0 0.0
  %10125 = vmatpush1.msra.mxu0 0.0
  %10126 = vmatprep.subr.mxu0 0.0
  %10127 = vmatpush1.msra.mxu0 0.0
  %10128 = vmatprep.mubr.f32.mxu0 0.0
  %10129 = vmatmul.mubr.f32.gmra.mrb[0].mxu0 %v10062
  %v10130 = vpop.f32.mrb[0].mxu0
  %v10131 = vadd.f32 0.0, %v10130
  %v10132 = vpop.f32.mrb[0].mxu0
  %10133 = vdwg.mxu0
  %vm10134 = vcmask 195584
  %v10136 = vsel %vm10134, %v10059, 0
  %10138 = vmatprep.subr.mxu0 0.0
  %10139 = vmatpush1.msra.mxu0 %v9754
  %10140 = vmatprep.subr.mxu0 0.0
  %10141 = vmatpush1.msra.mxu0 %v9759
  %10142 = vmatprep.subr.mxu0 0.0
  %10143 = vmatpush1.msra.mxu0 %v9764
  %10144 = vmatprep.subr.mxu0 0.0
  %10145 = vmatpush1.msra.mxu0 0.0
  %10146 = vmatprep.subr.mxu0 0.0
  %10147 = vmatpush1.msra.mxu0 0.0
  %10148 = vmatprep.subr.mxu0 0.0
  %10149 = vmatpush1.msra.mxu0 0.0
  %10150 = vmatprep.subr.mxu0 0.0
  %10151 = vmatpush1.msra.mxu0 0.0
  %10152 = vmatprep.subr.mxu0 0.0
  %10153 = vmatpush1.msra.mxu0 0.0
  %10154 = vmatprep.subr.mxu0 0.0
  %10155 = vmatpush1.msra.mxu0 0.0
  %10156 = vmatprep.subr.mxu0 0.0
  %10157 = vmatpush1.msra.mxu0 0.0
  %10158 = vmatprep.subr.mxu0 0.0
  %10159 = vmatpush1.msra.mxu0 0.0
  %10160 = vmatprep.subr.mxu0 0.0
  %10161 = vmatpush1.msra.mxu0 0.0
  %10162 = vmatprep.subr.mxu0 0.0
  %10163 = vmatpush1.msra.mxu0 0.0
  %10164 = vmatprep.subr.mxu0 0.0
  %10165 = vmatpush1.msra.mxu0 0.0
  %10166 = vmatprep.subr.mxu0 0.0
  %10167 = vmatpush1.msra.mxu0 0.0
  %10168 = vmatprep.subr.mxu0 0.0
  %10169 = vmatpush1.msra.mxu0 0.0
  %10170 = vmatprep.subr.mxu0 0.0
  %10171 = vmatpush1.msra.mxu0 0.0
  %10172 = vmatprep.subr.mxu0 0.0
  %10173 = vmatpush1.msra.mxu0 0.0
  %10174 = vmatprep.subr.mxu0 0.0
  %10175 = vmatpush1.msra.mxu0 0.0
  %10176 = vmatprep.subr.mxu0 0.0
  %10177 = vmatpush1.msra.mxu0 0.0
  %10178 = vmatprep.subr.mxu0 0.0
  %10179 = vmatpush1.msra.mxu0 0.0
  %10180 = vmatprep.subr.mxu0 0.0
  %10181 = vmatpush1.msra.mxu0 0.0
  %10182 = vmatprep.subr.mxu0 0.0
  %10183 = vmatpush1.msra.mxu0 0.0
  %10184 = vmatprep.subr.mxu0 0.0
  %10185 = vmatpush1.msra.mxu0 0.0
  %10186 = vmatprep.subr.mxu0 0.0
  %10187 = vmatpush1.msra.mxu0 0.0
  %10188 = vmatprep.subr.mxu0 0.0
  %10189 = vmatpush1.msra.mxu0 0.0
  %10190 = vmatprep.subr.mxu0 0.0
  %10191 = vmatpush1.msra.mxu0 0.0
  %10192 = vmatprep.subr.mxu0 0.0
  %10193 = vmatpush1.msra.mxu0 0.0
  %10194 = vmatprep.subr.mxu0 0.0
  %10195 = vmatpush1.msra.mxu0 0.0
  %10196 = vmatprep.subr.mxu0 0.0
  %10197 = vmatpush1.msra.mxu0 0.0
  %10198 = vmatprep.subr.mxu0 0.0
  %10199 = vmatpush1.msra.mxu0 0.0
  %10200 = vmatprep.subr.mxu0 0.0
  %10201 = vmatpush1.msra.mxu0 0.0
  %10202 = vmatprep.mubr.f32.mxu0 0.0
  %10203 = vmatmul.mubr.f32.gmra.mrb[0].mxu0 %v10136
  %v10204 = vpop.f32.mrb[0].mxu0
  %v10205 = vadd.f32 %v10131, %v10204
  %v10206 = vpop.f32.mrb[0].mxu0
  %10207 = vdwg.mxu0
  %10208 = vmatprep.subr.mxu0 0.0
  %10209 = vmatpush1.xpose.msra.mxu0 %v9863
  %10210 = vmatprep.subr.mxu0 0.0
  %10211 = vmatpush1.xpose.msra.mxu0 %v9866
  %10212 = vmatprep.subr.mxu0 0.0
  %10213 = vmatpush1.xpose.msra.mxu0 %v9869
  %10214 = vmatprep.subr.mxu0 0.0
  %10215 = vmatpush1.xpose.msra.mxu0 0.0
  %10216 = vmatprep.subr.mxu0 0.0
  %10217 = vmatpush1.xpose.msra.mxu0 0.0
  %10218 = vmatprep.subr.mxu0 0.0
  %10219 = vmatpush1.xpose.msra.mxu0 0.0
  %10220 = vmatprep.subr.mxu0 0.0
  %10221 = vmatpush1.xpose.msra.mxu0 0.0
  %10222 = vmatprep.subr.mxu0 0.0
  %10223 = vmatpush1.xpose.msra.mxu0 0.0
  %10224 = vmatprep.subr.mxu0 0.0
  %10225 = vmatpush1.xpose.msra.mxu0 0.0
  %10226 = vmatprep.subr.mxu0 0.0
  %10227 = vmatpush1.xpose.msra.mxu0 0.0
  %10228 = vmatprep.subr.mxu0 0.0
  %10229 = vmatpush1.xpose.msra.mxu0 0.0
  %10230 = vmatprep.subr.mxu0 0.0
  %10231 = vmatpush1.xpose.msra.mxu0 0.0
  %10232 = vmatprep.subr.mxu0 0.0
  %10233 = vmatpush1.xpose.msra.mxu0 0.0
  %10234 = vmatprep.subr.mxu0 0.0
  %10235 = vmatpush1.xpose.msra.mxu0 0.0
  %10236 = vmatprep.subr.mxu0 0.0
  %10237 = vmatpush1.xpose.msra.mxu0 0.0
  %10238 = vmatprep.subr.mxu0 0.0
  %10239 = vmatpush1.xpose.msra.mxu0 0.0
  %10240 = vmatprep.subr.mxu0 0.0
  %10241 = vmatpush1.xpose.msra.mxu0 0.0
  %10242 = vmatprep.subr.mxu0 0.0
  %10243 = vmatpush1.xpose.msra.mxu0 0.0
  %10244 = vmatprep.subr.mxu0 0.0
  %10245 = vmatpush1.xpose.msra.mxu0 0.0
  %10246 = vmatprep.subr.mxu0 0.0
  %10247 = vmatpush1.xpose.msra.mxu0 0.0
  %10248 = vmatprep.subr.mxu0 0.0
  %10249 = vmatpush1.xpose.msra.mxu0 0.0
  %10250 = vmatprep.subr.mxu0 0.0
  %10251 = vmatpush1.xpose.msra.mxu0 0.0
  %10252 = vmatprep.subr.mxu0 0.0
  %10253 = vmatpush1.xpose.msra.mxu0 0.0
  %10254 = vmatprep.subr.mxu0 0.0
  %10255 = vmatpush1.xpose.msra.mxu0 0.0
  %10256 = vmatprep.subr.mxu0 0.0
  %10257 = vmatpush1.xpose.msra.mxu0 0.0
  %10258 = vmatprep.subr.mxu0 0.0
  %10259 = vmatpush1.xpose.msra.mxu0 0.0
  %10260 = vmatprep.subr.mxu0 0.0
  %10261 = vmatpush1.xpose.msra.mxu0 0.0
  %10262 = vmatprep.subr.mxu0 0.0
  %10263 = vmatpush1.xpose.msra.mxu0 0.0
  %10264 = vmatprep.subr.mxu0 0.0
  %10265 = vmatpush1.xpose.msra.mxu0 0.0
  %10266 = vmatprep.subr.mxu0 0.0
  %10267 = vmatpush1.xpose.msra.mxu0 0.0
  %10268 = vmatprep.subr.mxu0 0.0
  %10269 = vmatpush1.xpose.msra.mxu0 0.0
  %10270 = vmatprep.subr.mxu0 0.0
  %10271 = vmatpush1.xpose.msra.mxu0 0.0
  %10272 = vmatprep.mubr.f32.mxu0 0.0
  %10273 = vmatmul.mubr.f32.gmra.mrb[0].mxu0 %v9863
  %v10274 = vpop.f32.mrb[0].mxu0
  %v10275 = vadd.f32 0.0, %v10274
  %v10276 = vpop.f32.mrb[0].mxu0
  %10277 = vmatprep.mubr.f32.mxu0 0.0
  %10278 = vmatmul.mubr.f32.gmra.mrb[0].mxu0 %v9866
  %v10279 = vpop.f32.mrb[0].mxu0
  %v10280 = vadd.f32 0.0, %v10279
  %v10281 = vpop.f32.mrb[0].mxu0
  %10282 = vmatprep.mubr.f32.mxu0 0.0
  %10283 = vmatmul.mubr.f32.gmra.mrb[0].mxu0 %v9869
  %v10284 = vpop.f32.mrb[0].mxu0
  %v10285 = vadd.f32 0.0, %v10284
  %v10286 = vpop.f32.mrb[0].mxu0
  %10287 = vdwg.mxu0
  %v10288 = vsel %vm10134, %v10275, -inf
  %10289 = vmax.xlane.f32.xlu0 %v10288
  %v10290 = vpop.xlane.xlu0 %10289
  %v10291 = vsel %vm10134, %v10280, -inf
  %10292 = vmax.xlane.f32.xlu0 %v10291
  %v10293 = vpop.xlane.xlu0 %10292
  %v10294 = vsel %vm10134, %v10285, -inf
  %10295 = vmax.xlane.f32.xlu0 %v10294
  %v10296 = vpop.xlane.xlu0 %10295
  %vm10297 = vcmp.eq.f32.partialorder %v10275, %v10290
  %vm10298 = vcmp.eq.f32.partialorder %v10280, %v10293
  %vm10299 = vcmp.eq.f32.partialorder %v10285, %v10296
  %v10300 = vsel %vm10297, -1e+30, %v10275
  %v10301 = vsel %vm10298, -1e+30, %v10280
  %v10302 = vsel %vm10299, -1e+30, %v10285
  %v10303 = vsel %vm10134, %v10300, -inf
  %10304 = vmax.xlane.f32.xlu0 %v10303
  %v10305 = vpop.xlane.xlu0 %10304
  %v10306 = vsel %vm10134, %v10301, -inf
  %10307 = vmax.xlane.f32.xlu0 %v10306
  %v10308 = vpop.xlane.xlu0 %10307
  %v10309 = vsel %vm10134, %v10302, -inf
  %10310 = vmax.xlane.f32.xlu0 %v10309
  %v10311 = vpop.xlane.xlu0 %10310
  %vm10312 = vcmp.eq.f32.partialorder %v10300, %v10305
  %vm10313 = vcmp.eq.f32.partialorder %v10301, %v10308
  %vm10314 = vcmp.eq.f32.partialorder %v10302, %v10311
  %v10315 = vsel %vm10312, -1e+30, %v10300
  %v10316 = vsel %vm10313, -1e+30, %v10301
  %v10317 = vsel %vm10314, -1e+30, %v10302
  %v10318 = vsel %vm10134, %v10315, -inf
  %10319 = vmax.xlane.f32.xlu0 %v10318
  %v10320 = vpop.xlane.xlu0 %10319
  %v10321 = vsel %vm10134, %v10316, -inf
  %10322 = vmax.xlane.f32.xlu0 %v10321
  %v10323 = vpop.xlane.xlu0 %10322
  %v10324 = vsel %vm10134, %v10317, -inf
  %10325 = vmax.xlane.f32.xlu0 %v10324
  %v10326 = vpop.xlane.xlu0 %10325
  %vm10327 = vcmp.eq.f32.partialorder %v10315, %v10320
  %vm10328 = vcmp.eq.f32.partialorder %v10316, %v10323
  %vm10329 = vcmp.eq.f32.partialorder %v10317, %v10326
  %v10330 = vsel %vm10327, -1e+30, %v10315
  %v10331 = vsel %vm10328, -1e+30, %v10316
  %v10332 = vsel %vm10329, -1e+30, %v10317
  %v10333 = vsel %vm10134, %v10330, -inf
  %10334 = vmax.xlane.f32.xlu0 %v10333
  %v10335 = vpop.xlane.xlu0 %10334
  %v10336 = vsel %vm10134, %v10331, -inf
  %10337 = vmax.xlane.f32.xlu0 %v10336
  %v10338 = vpop.xlane.xlu0 %10337
  %v10339 = vsel %vm10134, %v10332, -inf
  %10340 = vmax.xlane.f32.xlu0 %v10339
  %v10341 = vpop.xlane.xlu0 %10340
  %vm10342 = vcmp.eq.f32.partialorder %v10330, %v10335
  %vm10343 = vcmp.eq.f32.partialorder %v10331, %v10338
  %vm10344 = vcmp.eq.f32.partialorder %v10332, %v10341
  %v10345 = vsel %vm10342, -1e+30, %v10330
  %v10346 = vsel %vm10343, -1e+30, %v10331
  %v10347 = vsel %vm10344, -1e+30, %v10332
  %v10348 = vsel %vm10134, %v10345, -inf
  %10349 = vmax.xlane.f32.xlu0 %v10348
  %v10350 = vpop.xlane.xlu0 %10349
  %v10351 = vsel %vm10134, %v10346, -inf
  %10352 = vmax.xlane.f32.xlu0 %v10351
  %v10353 = vpop.xlane.xlu0 %10352
  %v10354 = vsel %vm10134, %v10347, -inf
  %10355 = vmax.xlane.f32.xlu0 %v10354
  %v10356 = vpop.xlane.xlu0 %10355
  %vm10357 = vcmp.eq.s32.totalorder %v5258, %v9768
  %vm10358 = vcmp.eq.s32.totalorder %v5259, %v9768
  %vm10359 = vcmp.eq.s32.totalorder %v5260, %v9768
  %v10360 = vsel %vm10357, %v10350, -1e+30
  %v10361 = vsel %vm10358, %v10353, -1e+30
  %v10362 = vsel %vm10359, %v10356, -1e+30
  %v10363 = vsel %vm10134, %v10360, -inf
  %v10364 = vsel %vm10134, %v10361, -inf
  %v10365 = vsel %vm10134, %v10362, -inf
  %v10366 = vmax.f32 %v10363, %v10364
  %v10367 = vmax.f32 %v10366, %v10365
  %v10368 = vrot.slane %v10367, 4
  %v10369 = vmax.f32 %v10367, %v10368
  %v10370 = vrot.slane %v10369, 2
  %v10371 = vmax.f32 %v10369, %v10370
  %v10372 = vrot.slane %v10371, 1
  %v10373 = vmax.f32 %v10371, %v10372
  %vm10374 = vcmp.ge.f32.partialorder %v10275, %v10350
  %vm10375 = vcmp.ge.f32.partialorder %v10280, %v10353
  %vm10376 = vcmp.ge.f32.partialorder %v10285, %v10356
  %vm10377 = vcmp.ge.f32.partialorder %v10275, %v10373
  %vm10378 = vcmp.ge.f32.partialorder %v10280, %v10373
  %vm10379 = vcmp.ge.f32.partialorder %v10285, %v10373
  %vm10380 = vmand %vm10374, %vm10377
  %vm10381 = vmand %vm10375, %vm10378
  %vm10382 = vmand %vm10376, %vm10379
  %v10383 = vsel %vm10380, %v10275, -1e+30
  %v10384 = vsel %vm10381, %v10280, -1e+30
  %v10385 = vsel %vm10382, %v10285, -1e+30
  %v10386 = vsel %vm10134, %v10383, -inf
  %10387 = vmax.xlane.f32.xlu0 %v10386
  %v10388 = vpop.xlane.xlu0 %10387
  %v10389 = vsel %vm10134, %v10384, -inf
  %10390 = vmax.xlane.f32.xlu0 %v10389
  %v10391 = vpop.xlane.xlu0 %10390
  %v10392 = vsel %vm10134, %v10385, -inf
  %10393 = vmax.xlane.f32.xlu0 %v10392
  %v10394 = vpop.xlane.xlu0 %10393
  %v10395 = vsub.f32 %v10383, %v10388
  %v10396 = vsub.f32 %v10384, %v10391
  %v10397 = vsub.f32 %v10385, %v10394
  %v10398 = vmul.f32 %v10395, 1.442695
  %v10399 = vpow.pop %v10398
  %v10400 = vmul.f32 %v10396, 1.442695
  %v10401 = vpow.pop %v10400
  %v10402 = vmul.f32 %v10397, 1.442695
  %v10403 = vpow.pop %v10402
  %v10404 = vsel %vm10134, %v10399, 0.0
  %10405 = vadd.xlane.f32.xlu0 %v10404
  %v10406 = vpop.xlane.xlu0 %10405
  %v10407 = vsel %vm10134, %v10401, 0.0
  %10408 = vadd.xlane.f32.xlu0 %v10407
  %v10409 = vpop.xlane.xlu0 %10408
  %v10410 = vsel %vm10134, %v10403, 0.0
  %10411 = vadd.xlane.f32.xlu0 %v10410
  %v10412 = vpop.xlane.xlu0 %10411
  %v10413 = vrcp.pop %v10406
  %v10414 = vmul.f32 %v10399, %v10413
  %v10415 = vrcp.pop %v10409
  %v10416 = vmul.f32 %v10401, %v10415
  %v10417 = vrcp.pop %v10412
  %v10418 = vmul.f32 %v10403, %v10417
  %v10420 = vsel %vm10134, %v10414, 0
  %v10423 = vsel %vm10134, %v10416, 0
  %v10426 = vsel %vm10134, %v10418, 0
  %10428 = vmatprep.subr.mxu0 0.0
  %10429 = vmatpush1.msra.mxu0 %v9754
  %10430 = vmatprep.subr.mxu0 0.0
  %10431 = vmatpush1.msra.mxu0 %v9759
  %10432 = vmatprep.subr.mxu0 0.0
  %10433 = vmatpush1.msra.mxu0 %v9764
  %10434 = vmatprep.subr.mxu0 0.0
  %10435 = vmatpush1.msra.mxu0 0.0
  %10436 = vmatprep.subr.mxu0 0.0
  %10437 = vmatpush1.msra.mxu0 0.0
  %10438 = vmatprep.subr.mxu0 0.0
  %10439 = vmatpush1.msra.mxu0 0.0
  %10440 = vmatprep.subr.mxu0 0.0
  %10441 = vmatpush1.msra.mxu0 0.0
  %10442 = vmatprep.subr.mxu0 0.0
  %10443 = vmatpush1.msra.mxu0 0.0
  %10444 = vmatprep.subr.mxu0 0.0
  %10445 = vmatpush1.msra.mxu0 0.0
  %10446 = vmatprep.subr.mxu0 0.0
  %10447 = vmatpush1.msra.mxu0 0.0
  %10448 = vmatprep.subr.mxu0 0.0
  %10449 = vmatpush1.msra.mxu0 0.0
  %10450 = vmatprep.subr.mxu0 0.0
  %10451 = vmatpush1.msra.mxu0 0.0
  %10452 = vmatprep.subr.mxu0 0.0
  %10453 = vmatpush1.msra.mxu0 0.0
  %10454 = vmatprep.subr.mxu0 0.0
  %10455 = vmatpush1.msra.mxu0 0.0
  %10456 = vmatprep.subr.mxu0 0.0
  %10457 = vmatpush1.msra.mxu0 0.0
  %10458 = vmatprep.subr.mxu0 0.0
  %10459 = vmatpush1.msra.mxu0 0.0
  %10460 = vmatprep.subr.mxu0 0.0
  %10461 = vmatpush1.msra.mxu0 0.0
  %10462 = vmatprep.subr.mxu0 0.0
  %10463 = vmatpush1.msra.mxu0 0.0
  %10464 = vmatprep.subr.mxu0 0.0
  %10465 = vmatpush1.msra.mxu0 0.0
  %10466 = vmatprep.subr.mxu0 0.0
  %10467 = vmatpush1.msra.mxu0 0.0
  %10468 = vmatprep.subr.mxu0 0.0
  %10469 = vmatpush1.msra.mxu0 0.0
  %10470 = vmatprep.subr.mxu0 0.0
  %10471 = vmatpush1.msra.mxu0 0.0
  %10472 = vmatprep.subr.mxu0 0.0
  %10473 = vmatpush1.msra.mxu0 0.0
  %10474 = vmatprep.subr.mxu0 0.0
  %10475 = vmatpush1.msra.mxu0 0.0
  %10476 = vmatprep.subr.mxu0 0.0
  %10477 = vmatpush1.msra.mxu0 0.0
  %10478 = vmatprep.subr.mxu0 0.0
  %10479 = vmatpush1.msra.mxu0 0.0
  %10480 = vmatprep.subr.mxu0 0.0
  %10481 = vmatpush1.msra.mxu0 0.0
  %10482 = vmatprep.subr.mxu0 0.0
  %10483 = vmatpush1.msra.mxu0 0.0
  %10484 = vmatprep.subr.mxu0 0.0
  %10485 = vmatpush1.msra.mxu0 0.0
  %10486 = vmatprep.subr.mxu0 0.0
  %10487 = vmatpush1.msra.mxu0 0.0
  %10488 = vmatprep.subr.mxu0 0.0
  %10489 = vmatpush1.msra.mxu0 0.0
  %10490 = vmatprep.subr.mxu0 0.0
  %10491 = vmatpush1.msra.mxu0 0.0
  %10492 = vmatprep.mubr.f32.mxu0 0.0
  %10493 = vmatmul.mubr.f32.gmra.mrb[0].mxu0 %v10420
  %v10494 = vpop.f32.mrb[0].mxu0
  %v10495 = vadd.f32 0.0, %v10494
  %v10496 = vpop.f32.mrb[0].mxu0
  %10497 = vmatprep.mubr.f32.mxu0 0.0
  %10498 = vmatmul.mubr.f32.gmra.mrb[0].mxu0 %v10423
  %v10499 = vpop.f32.mrb[0].mxu0
  %v10500 = vadd.f32 0.0, %v10499
  %v10501 = vpop.f32.mrb[0].mxu0
  %10502 = vmatprep.mubr.f32.mxu0 0.0
  %10503 = vmatmul.mubr.f32.gmra.mrb[0].mxu0 %v10426
  %v10504 = vpop.f32.mrb[0].mxu0
  %v10505 = vadd.f32 0.0, %v10504
  %v10506 = vpop.f32.mrb[0].mxu0
  %10507 = vdwg.mxu0
  %v10508 = vmul.f32 %v10495, %v10495
  %v10509 = vmul.f32 %v10500, %v10500
  %v10510 = vmul.f32 %v10505, %v10505
  %v10511 = vsel %vm9560, %v10508, 0.0
  %10512 = vadd.xlane.f32.xlu0 %v10511
  %v10513 = vpop.xlane.xlu0 %10512
  %v10514 = vsel %vm9560, %v10509, 0.0
  %10515 = vadd.xlane.f32.xlu0 %v10514
  %v10516 = vpop.xlane.xlu0 %10515
  %v10517 = vsel %vm9560, %v10510, 0.0
  %10518 = vadd.xlane.f32.xlu0 %v10517
  %v10519 = vpop.xlane.xlu0 %10518
  %v10520 = vrsqrt.pop %v10513
  %v10521 = vrsqrt.pop %v10516
  %v10522 = vrsqrt.pop %v10519
  %v10523 = vmul.f32 %v10495, %v10520
  %v10524 = vmul.f32 %v10500, %v10521
  %v10525 = vmul.f32 %v10505, %v10522
  %v10526 = vmul.f32 %v10205, %v10205
  %v10527 = vsel %vm9573, %v10526, 0.0
  %10528 = vadd.xlane.f32.xlu0 %v10527
  %v10529 = vpop.xlane.xlu0 %10528
  %v10530 = vrsqrt.pop %v10529
  %v10531 = vmul.f32 %v10205, %v10530
  %v10533 = vsel %vm9560, %v10523, 0
  %v10536 = vsel %vm9560, %v10524, 0
  %v10539 = vsel %vm9560, %v10525, 0
  %v10542 = vsel %vm9560, %v10531, 0
  %10544 = vmatprep.subr.mxu0 0.0
  %10545 = vmatpush1.xpose.msra.mxu0 %v10542
  %10546 = vmatprep.subr.mxu0 0.0
  %10547 = vmatpush1.xpose.msra.mxu0 0.0
  %10548 = vmatprep.subr.mxu0 0.0
  %10549 = vmatpush1.xpose.msra.mxu0 0.0
  %10550 = vmatprep.subr.mxu0 0.0
  %10551 = vmatpush1.xpose.msra.mxu0 0.0
  %10552 = vmatprep.subr.mxu0 0.0
  %10553 = vmatpush1.xpose.msra.mxu0 0.0
  %10554 = vmatprep.subr.mxu0 0.0
  %10555 = vmatpush1.xpose.msra.mxu0 0.0
  %10556 = vmatprep.subr.mxu0 0.0
  %10557 = vmatpush1.xpose.msra.mxu0 0.0
  %10558 = vmatprep.subr.mxu0 0.0
  %10559 = vmatpush1.xpose.msra.mxu0 0.0
  %10560 = vmatprep.subr.mxu0 0.0
  %10561 = vmatpush1.xpose.msra.mxu0 0.0
  %10562 = vmatprep.subr.mxu0 0.0
  %10563 = vmatpush1.xpose.msra.mxu0 0.0
  %10564 = vmatprep.subr.mxu0 0.0
  %10565 = vmatpush1.xpose.msra.mxu0 0.0
  %10566 = vmatprep.subr.mxu0 0.0
  %10567 = vmatpush1.xpose.msra.mxu0 0.0
  %10568 = vmatprep.subr.mxu0 0.0
  %10569 = vmatpush1.xpose.msra.mxu0 0.0
  %10570 = vmatprep.subr.mxu0 0.0
  %10571 = vmatpush1.xpose.msra.mxu0 0.0
  %10572 = vmatprep.subr.mxu0 0.0
  %10573 = vmatpush1.xpose.msra.mxu0 0.0
  %10574 = vmatprep.subr.mxu0 0.0
  %10575 = vmatpush1.xpose.msra.mxu0 0.0
  %10576 = vmatprep.subr.mxu0 0.0
  %10577 = vmatpush1.xpose.msra.mxu0 0.0
  %10578 = vmatprep.subr.mxu0 0.0
  %10579 = vmatpush1.xpose.msra.mxu0 0.0
  %10580 = vmatprep.subr.mxu0 0.0
  %10581 = vmatpush1.xpose.msra.mxu0 0.0
  %10582 = vmatprep.subr.mxu0 0.0
  %10583 = vmatpush1.xpose.msra.mxu0 0.0
  %10584 = vmatprep.subr.mxu0 0.0
  %10585 = vmatpush1.xpose.msra.mxu0 0.0
  %10586 = vmatprep.subr.mxu0 0.0
  %10587 = vmatpush1.xpose.msra.mxu0 0.0
  %10588 = vmatprep.subr.mxu0 0.0
  %10589 = vmatpush1.xpose.msra.mxu0 0.0
  %10590 = vmatprep.subr.mxu0 0.0
  %10591 = vmatpush1.xpose.msra.mxu0 0.0
  %10592 = vmatprep.subr.mxu0 0.0
  %10593 = vmatpush1.xpose.msra.mxu0 0.0
  %10594 = vmatprep.subr.mxu0 0.0
  %10595 = vmatpush1.xpose.msra.mxu0 0.0
  %10596 = vmatprep.subr.mxu0 0.0
  %10597 = vmatpush1.xpose.msra.mxu0 0.0
  %10598 = vmatprep.subr.mxu0 0.0
  %10599 = vmatpush1.xpose.msra.mxu0 0.0
  %10600 = vmatprep.subr.mxu0 0.0
  %10601 = vmatpush1.xpose.msra.mxu0 0.0
  %10602 = vmatprep.subr.mxu0 0.0
  %10603 = vmatpush1.xpose.msra.mxu0 0.0
  %10604 = vmatprep.subr.mxu0 0.0
  %10605 = vmatpush1.xpose.msra.mxu0 0.0
  %10606 = vmatprep.subr.mxu0 0.0
  %10607 = vmatpush1.xpose.msra.mxu0 0.0
  %10608 = vmatprep.mubr.f32.mxu0 0.0
  %10609 = vmatmul.mubr.f32.gmra.mrb[0].mxu0 %v10533
  %v10610 = vpop.f32.mrb[0].mxu0
  %v10611 = vadd.f32 0.0, %v10610
  %v10612 = vpop.f32.mrb[0].mxu0
  %10613 = vmatprep.mubr.f32.mxu0 0.0
  %10614 = vmatmul.mubr.f32.gmra.mrb[0].mxu0 %v10536
  %v10615 = vpop.f32.mrb[0].mxu0
  %v10616 = vadd.f32 0.0, %v10615
  %v10617 = vpop.f32.mrb[0].mxu0
  %10618 = vmatprep.mubr.f32.mxu0 0.0
  %10619 = vmatmul.mubr.f32.gmra.mrb[0].mxu0 %v10539
  %v10620 = vpop.f32.mrb[0].mxu0
  %v10621 = vadd.f32 0.0, %v10620
  %v10622 = vpop.f32.mrb[0].mxu0
  %10623 = vdwg.mxu0
  %s10624 = sld [smem:[#allocation2]]
  %v10625 = vstv %s10624
  %v10626 = vmul.f32 %v10625, %v10611
  %v10627 = vmul.f32 %v10625, %v10616
  %v10628 = vmul.f32 %v10625, %v10621
  %vm10629 = vcmask 31744
  %10630 = vst.msk [vmem:[%s7] sm:$0xff] %vm10629, %v10626
  %10631 = vst.msk [vmem:[%s7 + $0x8] sm:$0xff] %vm10629, %v10627
  %10632 = vst.msk [vmem:[%s7 + $0x10] sm:$0xff] %vm10629, %v10628
  // Predicated region
  $region30: #{pt_paper_forward.1} parent=0 // pred_check
    _
  $region31: #{pt_paper_forward.1} parent=0 // pred_check_branch
    %10634 = sbr.rel (0) target = $region33
  $region32: #{pt_paper_forward.1} parent=0 // pred_region
    _
  $region33: #{pt_paper_forward.1} parent=0 // pred_fallthru
    _
  // Predicated region
  $region34: #{pt_paper_forward.1} parent=0 // pred_check
    _
  $region35: #{pt_paper_forward.1} parent=0 // pred_check_branch
    %10636 = sbr.rel (0) target = $region37
  $region36: #{pt_paper_forward.1} parent=0 // pred_region
    _
  $region37: #{pt_paper_forward.1} parent=0 // pred_fallthru
    _

</llo_original>
